<compile_context>
chip_gen: v7x
topology: tpu7x:2x2x1
jax: 0.10.0
libtpu: 0.0.40
codegen_flags: <defaults>
</compile_context>

<pallas_src>
import functools
import math

import jax
import jax.numpy as jnp
from jax.experimental import pallas as pl
from jax.experimental.pallas import tpu as pltpu


def _round_up(x, m):
    return (x + m - 1) // m * m


# ---------------------------------------------------------------------------
# Pallas kernel 1: matmul + bias + optional ReLU (every conv / conv-transpose)
#   full-K / full-N blocks, single MXU accumulation, bf16 in / f32 accumulate
# ---------------------------------------------------------------------------
def _matmul_bias_kernel(a_ref, w_ref, b_ref, o_ref, *, relu):
    out = jnp.dot(a_ref[...], w_ref[...], preferred_element_type=jnp.float32)
    out = out + b_ref[...]
    if relu:
        out = jnp.maximum(out, 0.0)
    o_ref[...] = out.astype(o_ref.dtype)


def matmul_bias(a, w, b2, *, relu, out_dtype, tm_max=1024):
    """out = [ReLU](a @ w + b);  a:[M,K] bf16, w:[K,N] bf16, b2:[1,N] f32."""
    M, K = a.shape
    _, N = w.shape
    Mp = _round_up(M, 8)
    if Mp >= 256:
        # >=2 M-blocks so both v7x TensorCores get work on the "parallel" axis.
        g = max(2, pl.cdiv(Mp, tm_max))
        tm = _round_up(pl.cdiv(Mp, g), 8)
        Mp = _round_up(Mp, tm)
    else:
        tm = Mp
    if Mp != M:
        # Padded rows give relu(bias) != 0; they are sliced off below and must
        # never be consumed by callers.
        a = jnp.pad(a, ((0, Mp - M), (0, 0)))

    out = pl.pallas_call(
        functools.partial(_matmul_bias_kernel, relu=relu),
        out_shape=jax.ShapeDtypeStruct((Mp, N), out_dtype),
        grid=(Mp // tm,),
        in_specs=[
            pl.BlockSpec((tm, K), lambda i: (i, 0)),   # A tile
            pl.BlockSpec((K, N), lambda i: (0, 0)),    # full weight (resident)
            pl.BlockSpec((1, N), lambda i: (0, 0)),    # bias
        ],
        out_specs=pl.BlockSpec((tm, N), lambda i: (i, 0)),
        compiler_params=pltpu.CompilerParams(
            dimension_semantics=("parallel",)),
    )(a, w, b2)
    return out[:M] if Mp != M else out


# ---------------------------------------------------------------------------
# Pallas kernel 2: fused middle of the network
#   enc5 (4x4 valid conv) -> enc head (1x1) -> reparametrize ->
#   group sin/cos embedding -> dec head (1x1 + ReLU) -> dect1 (1x1 -> 4x4)
# Everything is tiny ([B,1024] at most); one un-gridded call, all in VMEM.
# ---------------------------------------------------------------------------
def _mid_kernel(h4_ref, w5_ref, b5_ref, wmu_ref, wlv_ref, bmu_ref, blv_ref,
                eps_ref, wdr_ref, wdi_ref, bd_ref, wt1_ref, bt1_ref,
                mu_ref, lv_ref, z_ref, t1_ref, *, n_group):
    # enc conv5 (4x4 valid conv flattened to a dense matmul) + ReLU
    h5 = jnp.dot(h4_ref[...], w5_ref[...],
                 preferred_element_type=jnp.float32) + b5_ref[...]
    h5 = jnp.maximum(h5, 0.0).astype(jnp.bfloat16)
    # enc head (1x1 conv) -> mu / logvar
    mu = jnp.dot(h5, wmu_ref[...],
                 preferred_element_type=jnp.float32) + bmu_ref[...]
    lv = jnp.dot(h5, wlv_ref[...],
                 preferred_element_type=jnp.float32) + blv_ref[...]
    # reparametrize
    z = eps_ref[...] * jnp.exp(0.5 * lv) + mu
    # group sin/cos embedding (real = sin, imag = cos, as in the reference)
    ang = (2.0 * math.pi / float(n_group)) * z
    real = jnp.sin(ang).astype(jnp.bfloat16)
    imag = jnp.cos(ang).astype(jnp.bfloat16)
    # dec head (1x1 conv on cat([real, imag])) + ReLU
    d0 = (jnp.dot(real, wdr_ref[...], preferred_element_type=jnp.float32)
          + jnp.dot(imag, wdi_ref[...], preferred_element_type=jnp.float32)
          + bd_ref[...])
    d0 = jnp.maximum(d0, 0.0).astype(jnp.bfloat16)
    # dect1: ConvTranspose2d(128, 64, 4) on a 1x1 input == dense matmul, + ReLU
    t1 = jnp.dot(d0, wt1_ref[...],
                 preferred_element_type=jnp.float32) + bt1_ref[...]
    t1_ref[...] = jnp.maximum(t1, 0.0).astype(t1_ref.dtype)
    mu_ref[...] = mu
    lv_ref[...] = lv
    z_ref[...] = z


def mid_fused(h4, mid, eps, *, z_dim, n_group):
    B = h4.shape[0]
    return pl.pallas_call(
        functools.partial(_mid_kernel, n_group=n_group),
        out_shape=(jax.ShapeDtypeStruct((B, z_dim), jnp.float32),
                   jax.ShapeDtypeStruct((B, z_dim), jnp.float32),
                   jax.ShapeDtypeStruct((B, z_dim), jnp.float32),
                   jax.ShapeDtypeStruct((B, mid['wt1'].shape[1]), jnp.bfloat16)),
    )(h4, mid['w5'], mid['b5'], mid['wmu'], mid['wlv'], mid['bmu'], mid['blv'],
      eps, mid['wdr'], mid['wdi'], mid['bd'], mid['wt1'], mid['bt1'])


# ---------------------------------------------------------------------------
# Conv / ConvTranspose wrappers (light im2col glue + the Pallas matmul kernel)
# ---------------------------------------------------------------------------
def conv2d(x, w2, b2, *, k, stride, pad, relu, out_dtype):
    """x: [B,H,W,Cin] bf16; w2: [k*k*Cin, Cout] bf16 (kh,kw,ci ordering)."""
    B, H, W, Cin = x.shape
    Cout = w2.shape[1]
    Ho = (H + 2 * pad - k) // stride + 1
    Wo = (W + 2 * pad - k) // stride + 1
    xp = jnp.pad(x, ((0, 0), (pad, pad), (pad, pad), (0, 0)))
    cols = [xp[:, ki:ki + stride * Ho:stride, kj:kj + stride * Wo:stride, :]
            for ki in range(k) for kj in range(k)]
    patches = jnp.concatenate(cols, axis=-1).reshape(B * Ho * Wo, k * k * Cin)
    out = matmul_bias(patches, w2, b2, relu=relu, out_dtype=out_dtype)
    return out.reshape(B, Ho, Wo, Cout)


def conv_transpose_s2(x, wf, b4, cout, *, relu, out_dtype):
    """ConvTranspose2d(k=4, stride=2, pad=1) via sub-pixel decomposition.

    x: [B,H,W,Cin] -> [B,2H,2W,cout].  wf: [9*Cin, 4*cout] folded weight with
    row ordering (u,v,ci) over a 3x3 window of the un-dilated input and column
    ordering (py,px,co) over the 4 output phases.
    """
    B, H, W, Cin = x.shape
    xp = jnp.pad(x, ((0, 0), (1, 1), (1, 1), (0, 0)))
    cols = [xp[:, u:u + H, v:v + W, :] for u in range(3) for v in range(3)]
    patches = jnp.concatenate(cols, axis=-1).reshape(B * H * W, 9 * Cin)
    out = matmul_bias(patches, wf, b4, relu=relu, out_dtype=out_dtype)
    out = out.reshape(B, H, W, 2, 2, cout)
    out = jnp.transpose(out, (0, 1, 3, 2, 4, 5)).reshape(B, 2 * H, 2 * W, cout)
    return out


# ---------------------------------------------------------------------------
# FactorVAE parameters (normal_init: weight ~ N(0, 0.02), bias = 0),
# kept in PyTorch layouts, then converted ONCE into kernel-ready matrices.
# ---------------------------------------------------------------------------
def init_params(key, z_dim=10, nc=1):
    def w_conv(k, cout, cin, ks):
        return 0.02 * jax.random.normal(k, (cout, cin, ks, ks), jnp.float32)

    def w_convt(k, cin, cout, ks):
        return 0.02 * jax.random.normal(k, (cin, cout, ks, ks), jnp.float32)

    ks = jax.random.split(key, 12)
    enc_convs = [  # (weight, bias, stride, pad) — all followed by ReLU
        (w_conv(ks[0], 32, nc, 4), jnp.zeros(32, jnp.float32), 2, 1),
        (w_conv(ks[1], 32, 32, 4), jnp.zeros(32, jnp.float32), 2, 1),
        (w_conv(ks[2], 64, 32, 4), jnp.zeros(64, jnp.float32), 2, 1),
        (w_conv(ks[3], 64, 64, 4), jnp.zeros(64, jnp.float32), 2, 1),
        (w_conv(ks[4], 128, 64, 4), jnp.zeros(128, jnp.float32), 1, 0),
    ]
    enc_head = (w_conv(ks[5], 2 * z_dim, 128, 1),
                jnp.zeros(2 * z_dim, jnp.float32))        # Conv2d(128, 2z, 1)
    dec_head = (w_conv(ks[6], 128, 2 * z_dim, 1),
                jnp.zeros(128, jnp.float32))              # Conv2d(2z, 128, 1)
    dec_convts = [  # (weight, bias, stride, pad); ReLU after all but the last
        (w_convt(ks[7], 128, 64, 4), jnp.zeros(64, jnp.float32), 1, 0),
        (w_convt(ks[8], 64, 64, 4), jnp.zeros(64, jnp.float32), 2, 1),
        (w_convt(ks[9], 64, 32, 4), jnp.zeros(32, jnp.float32), 2, 1),
        (w_convt(ks[10], 32, 32, 4), jnp.zeros(32, jnp.float32), 2, 1),
        (w_convt(ks[11], 32, nc, 4), jnp.zeros(nc, jnp.float32), 2, 1),
    ]
    return enc_convs, enc_head, dec_head, dec_convts


def prepare_params(params, z_dim):
    """One-time conversion of PyTorch-layout f32 params into kernel matrices."""
    enc_convs, enc_head, dec_head, dec_convts = params

    # --- encoder convs 1..4 (4x4, stride 2, pad 1, ReLU) ---
    enc = []
    for (w, b, s, p) in enc_convs[:4]:
        Cout, Cin, k, _ = w.shape
        w2 = jnp.transpose(w, (2, 3, 1, 0)).reshape(k * k * Cin, Cout)
        enc.append((w2.astype(jnp.bfloat16),
                    b.reshape(1, Cout).astype(jnp.float32), s, p, k))

    # --- fused middle ---
    # enc5: Conv2d(64,128,4) valid on the 4x4 map == dense [4*4*64, 128]
    w5, b5, _, _ = enc_convs[4]
    w5m = jnp.transpose(w5, (2, 3, 1, 0)).reshape(4 * 4 * 64, 128)
    # enc head Conv2d(128, 2z, 1)
    we, be = enc_head
    we2 = we[:, :, 0, 0].T                                   # [128, 2z]
    # dec head Conv2d(2z, 128, 1); channels 0..z-1 = real, z..2z-1 = imag
    wd, bd = dec_head
    wd2 = wd[:, :, 0, 0].T                                   # [2z, 128]
    # dect1: ConvTranspose2d(128, 64, 4) on a 1x1 input -> out[oy,ox,co] uses
    # only w[ci, co, oy, ox]: dense [128, 4*4*64] with (oy,ox,co) columns.
    wt1, bt1, _, _ = dec_convts[0]
    wt1m = jnp.transpose(wt1, (0, 2, 3, 1)).reshape(128, 4 * 4 * 64)
    bt1m = jnp.tile(bt1, (16,)).reshape(1, 4 * 4 * 64)
    mid = dict(
        w5=w5m.astype(jnp.bfloat16),
        b5=b5.reshape(1, 128).astype(jnp.float32),
        wmu=we2[:, :z_dim].astype(jnp.bfloat16),
        wlv=we2[:, z_dim:].astype(jnp.bfloat16),
        bmu=be[:z_dim].reshape(1, z_dim).astype(jnp.float32),
        blv=be[z_dim:].reshape(1, z_dim).astype(jnp.float32),
        wdr=wd2[:z_dim, :].astype(jnp.bfloat16),
        wdi=wd2[z_dim:, :].astype(jnp.bfloat16),
        bd=bd.reshape(1, 128).astype(jnp.float32),
        wt1=wt1m.astype(jnp.bfloat16),
        bt1=bt1m.astype(jnp.float32))

    # --- decoder stride-2 transposed convs (dect2..dect5): sub-pixel fold ---
    # out[b, 2j+py, 2i+px, co] = b[co] +
    #   sum_{dy,dx in {0,1}} sum_ci x_pad[b, j+py+dy, i+px+dx, ci]
    #                               * w[ci, co, 3-(py+2dy), 3-(px+2dx)]
    dec = []
    for (w, b, s, p) in dec_convts[1:]:
        Cin, Cout, k, _ = w.shape
        assert s == 2 and p == 1 and k == 4
        wf = jnp.zeros((3, 3, Cin, 2, 2, Cout), jnp.float32)
        for py in range(2):
            for px in range(2):
                for dy in range(2):
                    for dx in range(2):
                        u, v = py + dy, px + dx
                        kh, kw = 3 - (py + 2 * dy), 3 - (px + 2 * dx)
                        wf = wf.at[u, v, :, py, px, :].set(w[:, :, kh, kw])
        wf = wf.reshape(9 * Cin, 4 * Cout).astype(jnp.bfloat16)
        b4 = jnp.tile(b, (4,)).reshape(1, 4 * Cout).astype(jnp.float32)
        dec.append((wf, b4, Cout))

    return dict(enc=enc, mid=mid, dec=dec)


# ---------------------------------------------------------------------------
# FactorVAE forward (group=True branch)
# ---------------------------------------------------------------------------
def factorvae_forward(x_nchw, kp, eps, *, z_dim=10, n_group=10):
    x = jnp.transpose(x_nchw, (0, 2, 3, 1)).astype(jnp.bfloat16)  # NCHW->NHWC
    h = x
    for (w2, b2, s, p, k) in kp['enc']:
        h = conv2d(h, w2, b2, k=k, stride=s, pad=p, relu=True,
                   out_dtype=jnp.bfloat16)
    B = h.shape[0]
    h4 = h.reshape(B, -1)                                  # [B, 4*4*64]

    # TODO(synk): torch's in-place `.normal_()` RNG has no Pallas equivalent;
    # eps is sampled with jax.random outside (same distribution, diff. stream).
    mu, logvar, z, t1 = mid_fused(h4, kp['mid'], eps,
                                  z_dim=z_dim, n_group=n_group)

    d = t1.reshape(B, 4, 4, 64)                            # dect1 output (bf16)
    n_dec = len(kp['dec'])
    for li, (wf, b4, cout) in enumerate(kp['dec']):
        last = li == n_dec - 1
        d = conv_transpose_s2(d, wf, b4, cout, relu=not last,
                              out_dtype=jnp.float32 if last else jnp.bfloat16)

    x_recon = jnp.transpose(d, (0, 3, 1, 2)).reshape(x_nchw.shape)
    return (x_recon,
            mu.reshape(B, z_dim, 1, 1),
            logvar.reshape(B, z_dim, 1, 1),
            z)                                             # z.squeeze() -> [B,z]


if __name__ == "__main__":
    z_dim, nc, N = 10, 1, 10
    key = jax.random.PRNGKey(0)
    k_x, k_eps, k_params = jax.random.split(key, 3)

    # 64x64 input is required by the architecture (final 4x4 valid conv -> 1x1)
    x = jax.random.normal(k_x, (2, nc, 64, 64), jnp.float32)
    eps = jax.random.normal(k_eps, (2, z_dim), jnp.float32)
    params = init_params(k_params, z_dim=z_dim, nc=nc)
    kp = prepare_params(params, z_dim=z_dim)

    fwd = jax.jit(lambda xx, ee: factorvae_forward(
        xx, kp, ee, z_dim=z_dim, n_group=N))

    x_recon, mu, logvar, z = fwd(x, eps)
    jax.block_until_ready((x_recon, mu, logvar, z))

    assert x_recon.shape == x.shape and x_recon.dtype == jnp.float32
    assert mu.shape == (2, z_dim, 1, 1) and logvar.shape == (2, z_dim, 1, 1)
    assert z.shape == (2, z_dim)
    print("KERNEL_OK")
</pallas_src>

<mosaic_0001>
module attributes {stable_mosaic.version = 11 : i64} {
  func.func @_matmul_bias_kernel(%arg0: i32, %arg1: memref<1024x16xbf16, #tpu.memory_space<vmem>>, %arg2: memref<16x32xbf16, #tpu.memory_space<vmem>>, %arg3: memref<1x32xf32, #tpu.memory_space<vmem>>, %arg4: memref<1024x32xbf16, #tpu.memory_space<vmem>>) attributes {dimension_semantics = [#tpu.dimension_semantics<parallel>], iteration_bounds = array<i64: 2>, scalar_prefetch = 0 : i64, scratch_operands = 0 : i64, tpu.core_type = #tpu.core_type<tc>, window_params = [{transform_indices = @transform_0, window_bounds = array<i64: 1024, 16>}, {pipeline_mode = #tpu.pipeline_mode<synchronous>, transform_indices = @transform_1, window_bounds = array<i64: 16, 32>}, {pipeline_mode = #tpu.pipeline_mode<synchronous>, transform_indices = @transform_2, window_bounds = array<i64: 1, 32>}, {transform_indices = @transform_3, window_bounds = array<i64: 1024, 32>}]} {
    %c0 = arith.constant 0 : index
    %c0_0 = arith.constant 0 : index
    %0 = vector.load %arg1[%c0, %c0_0] : memref<1024x16xbf16, #tpu.memory_space<vmem>>, vector<1024x16xbf16>
    %c0_1 = arith.constant 0 : index
    %c0_2 = arith.constant 0 : index
    %1 = vector.load %arg2[%c0_1, %c0_2] : memref<16x32xbf16, #tpu.memory_space<vmem>>, vector<16x32xbf16>
    %cst = arith.constant dense<0.000000e+00> : vector<1024x32xf32>
    %2 = tpu.matmul %0, %1, %cst {dimension_numbers = #tpu.dot_dimension_numbers<[1], [0], [0], [1], [0, 0, 1, 1], [], []>} : vector<1024x16xbf16>, vector<16x32xbf16>, vector<1024x32xf32> -> vector<1024x32xf32>
    %c0_3 = arith.constant 0 : index
    %c0_4 = arith.constant 0 : index
    %3 = vector.load %arg3[%c0_3, %c0_4] : memref<1x32xf32, #tpu.memory_space<vmem>>, vector<1x32xf32>
    %4 = vector.broadcast %3 : vector<1x32xf32> to vector<1024x32xf32>
    %5 = arith.addf %2, %4 : vector<1024x32xf32>
    %cst_5 = arith.constant 0.000000e+00 : f32
    %6 = vector.broadcast %cst_5 : f32 to vector<1024x32xf32>
    %7 = arith.maximumf %5, %6 : vector<1024x32xf32>
    %8 = arith.truncf %7 : vector<1024x32xf32> to vector<1024x32xbf16>
    %c0_6 = arith.constant 0 : index
    %c0_7 = arith.constant 0 : index
    %9 = vector.load %arg4[%c0_6, %c0_7] : memref<1024x32xbf16, #tpu.memory_space<vmem>>, vector<1024x32xbf16>
    tpu.vector_store %arg4[%c0_6, %c0_7], %8 {strides = array<i32>} : memref<1024x32xbf16, #tpu.memory_space<vmem>>, vector<1024x32xbf16>,
    return
  }
  func.func @transform_0(%arg0: i32) -> (i32, i32) {
    %c0_i32 = arith.constant 0 : i32
    %c0_i32_0 = arith.constant 0 : i32
    return %arg0, %c0_i32 : i32, i32
  }
  func.func @transform_1(%arg0: i32) -> (i32, i32) {
    %c0_i32 = arith.constant 0 : i32
    %c0_i32_0 = arith.constant 0 : i32
    %c0_i32_1 = arith.constant 0 : i32
    return %c0_i32, %c0_i32_0 : i32, i32
  }
  func.func @transform_2(%arg0: i32) -> (i32, i32) {
    %c0_i32 = arith.constant 0 : i32
    %c0_i32_0 = arith.constant 0 : i32
    %c0_i32_1 = arith.constant 0 : i32
    return %c0_i32, %c0_i32_0 : i32, i32
  }
  func.func @transform_3(%arg0: i32) -> (i32, i32) {
    %c0_i32 = arith.constant 0 : i32
    %c0_i32_0 = arith.constant 0 : i32
    return %arg0, %c0_i32 : i32, i32
  }
}

module attributes {stable_mosaic.version = 11 : i64} {
  func.func @_matmul_bias_kernel(%arg0: i32, %arg1: memref<256x512xbf16, #tpu.memory_space<vmem>>, %arg2: memref<512x32xbf16, #tpu.memory_space<vmem>>, %arg3: memref<1x32xf32, #tpu.memory_space<vmem>>, %arg4: memref<256x32xbf16, #tpu.memory_space<vmem>>) attributes {dimension_semantics = [#tpu.dimension_semantics<parallel>], iteration_bounds = array<i64: 2>, scalar_prefetch = 0 : i64, scratch_operands = 0 : i64, tpu.core_type = #tpu.core_type<tc>, window_params = [{transform_indices = @transform_0, window_bounds = array<i64: 256, 512>}, {pipeline_mode = #tpu.pipeline_mode<synchronous>, transform_indices = @transform_1, window_bounds = array<i64: 512, 32>}, {pipeline_mode = #tpu.pipeline_mode<synchronous>, transform_indices = @transform_2, window_bounds = array<i64: 1, 32>}, {transform_indices = @transform_3, window_bounds = array<i64: 256, 32>}]} {
    %c0 = arith.constant 0 : index
    %c0_0 = arith.constant 0 : index
    %0 = vector.load %arg1[%c0, %c0_0] : memref<256x512xbf16, #tpu.memory_space<vmem>>, vector<256x512xbf16>
    %c0_1 = arith.constant 0 : index
    %c0_2 = arith.constant 0 : index
    %1 = vector.load %arg2[%c0_1, %c0_2] : memref<512x32xbf16, #tpu.memory_space<vmem>>, vector<512x32xbf16>
    %cst = arith.constant dense<0.000000e+00> : vector<256x32xf32>
    %2 = tpu.matmul %0, %1, %cst {dimension_numbers = #tpu.dot_dimension_numbers<[1], [0], [0], [1], [0, 0, 1, 1], [], []>} : vector<256x512xbf16>, vector<512x32xbf16>, vector<256x32xf32> -> vector<256x32xf32>
    %c0_3 = arith.constant 0 : index
    %c0_4 = arith.constant 0 : index
    %3 = vector.load %arg3[%c0_3, %c0_4] : memref<1x32xf32, #tpu.memory_space<vmem>>, vector<1x32xf32>
    %4 = vector.broadcast %3 : vector<1x32xf32> to vector<256x32xf32>
    %5 = arith.addf %2, %4 : vector<256x32xf32>
    %cst_5 = arith.constant 0.000000e+00 : f32
    %6 = vector.broadcast %cst_5 : f32 to vector<256x32xf32>
    %7 = arith.maximumf %5, %6 : vector<256x32xf32>
    %8 = arith.truncf %7 : vector<256x32xf32> to vector<256x32xbf16>
    %c0_6 = arith.constant 0 : index
    %c0_7 = arith.constant 0 : index
    %9 = vector.load %arg4[%c0_6, %c0_7] : memref<256x32xbf16, #tpu.memory_space<vmem>>, vector<256x32xbf16>
    tpu.vector_store %arg4[%c0_6, %c0_7], %8 {strides = array<i32>} : memref<256x32xbf16, #tpu.memory_space<vmem>>, vector<256x32xbf16>,
    return
  }
  func.func @transform_0(%arg0: i32) -> (i32, i32) {
    %c0_i32 = arith.constant 0 : i32
    %c0_i32_0 = arith.constant 0 : i32
    return %arg0, %c0_i32 : i32, i32
  }
  func.func @transform_1(%arg0: i32) -> (i32, i32) {
    %c0_i32 = arith.constant 0 : i32
    %c0_i32_0 = arith.constant 0 : i32
    %c0_i32_1 = arith.constant 0 : i32
    return %c0_i32, %c0_i32_0 : i32, i32
  }
  func.func @transform_2(%arg0: i32) -> (i32, i32) {
    %c0_i32 = arith.constant 0 : i32
    %c0_i32_0 = arith.constant 0 : i32
    %c0_i32_1 = arith.constant 0 : i32
    return %c0_i32, %c0_i32_0 : i32, i32
  }
  func.func @transform_3(%arg0: i32) -> (i32, i32) {
    %c0_i32 = arith.constant 0 : i32
    %c0_i32_0 = arith.constant 0 : i32
    return %arg0, %c0_i32 : i32, i32
  }
}

module attributes {stable_mosaic.version = 11 : i64} {
  func.func @_matmul_bias_kernel(%arg0: i32, %arg1: memref<128x512xbf16, #tpu.memory_space<vmem>>, %arg2: memref<512x64xbf16, #tpu.memory_space<vmem>>, %arg3: memref<1x64xf32, #tpu.memory_space<vmem>>, %arg4: memref<128x64xbf16, #tpu.memory_space<vmem>>) attributes {dimension_semantics = [#tpu.dimension_semantics<parallel>], iteration_bounds = array<i64: 1>, scalar_prefetch = 0 : i64, scratch_operands = 0 : i64, tpu.core_type = #tpu.core_type<tc>, window_params = [{transform_indices = @transform_0, window_bounds = array<i64: 128, 512>}, {pipeline_mode = #tpu.pipeline_mode<synchronous>, transform_indices = @transform_1, window_bounds = array<i64: 512, 64>}, {pipeline_mode = #tpu.pipeline_mode<synchronous>, transform_indices = @transform_2, window_bounds = array<i64: 1, 64>}, {transform_indices = @transform_3, window_bounds = array<i64: 128, 64>}]} {
    %c0 = arith.constant 0 : index
    %c0_0 = arith.constant 0 : index
    %0 = vector.load %arg1[%c0, %c0_0] : memref<128x512xbf16, #tpu.memory_space<vmem>>, vector<128x512xbf16>
    %c0_1 = arith.constant 0 : index
    %c0_2 = arith.constant 0 : index
    %1 = vector.load %arg2[%c0_1, %c0_2] : memref<512x64xbf16, #tpu.memory_space<vmem>>, vector<512x64xbf16>
    %cst = arith.constant dense<0.000000e+00> : vector<128x64xf32>
    %2 = tpu.matmul %0, %1, %cst {dimension_numbers = #tpu.dot_dimension_numbers<[1], [0], [0], [1], [0, 0, 1, 1], [], []>} : vector<128x512xbf16>, vector<512x64xbf16>, vector<128x64xf32> -> vector<128x64xf32>
    %c0_3 = arith.constant 0 : index
    %c0_4 = arith.constant 0 : index
    %3 = vector.load %arg3[%c0_3, %c0_4] : memref<1x64xf32, #tpu.memory_space<vmem>>, vector<1x64xf32>
    %4 = vector.broadcast %3 : vector<1x64xf32> to vector<128x64xf32>
    %5 = arith.addf %2, %4 : vector<128x64xf32>
    %cst_5 = arith.constant 0.000000e+00 : f32
    %6 = vector.broadcast %cst_5 : f32 to vector<128x64xf32>
    %7 = arith.maximumf %5, %6 : vector<128x64xf32>
    %8 = arith.truncf %7 : vector<128x64xf32> to vector<128x64xbf16>
    %c0_6 = arith.constant 0 : index
    %c0_7 = arith.constant 0 : index
    %9 = vector.load %arg4[%c0_6, %c0_7] : memref<128x64xbf16, #tpu.memory_space<vmem>>, vector<128x64xbf16>
    tpu.vector_store %arg4[%c0_6, %c0_7], %8 {strides = array<i32>} : memref<128x64xbf16, #tpu.memory_space<vmem>>, vector<128x64xbf16>,
    return
  }
  func.func @transform_0(%arg0: i32) -> (i32, i32) {
    %c0_i32 = arith.constant 0 : i32
    %c0_i32_0 = arith.constant 0 : i32
    return %arg0, %c0_i32 : i32, i32
  }
  func.func @transform_1(%arg0: i32) -> (i32, i32) {
    %c0_i32 = arith.constant 0 : i32
    %c0_i32_0 = arith.constant 0 : i32
    %c0_i32_1 = arith.constant 0 : i32
    return %c0_i32, %c0_i32_0 : i32, i32
  }
  func.func @transform_2(%arg0: i32) -> (i32, i32) {
    %c0_i32 = arith.constant 0 : i32
    %c0_i32_0 = arith.constant 0 : i32
    %c0_i32_1 = arith.constant 0 : i32
    return %c0_i32, %c0_i32_0 : i32, i32
  }
  func.func @transform_3(%arg0: i32) -> (i32, i32) {
    %c0_i32 = arith.constant 0 : i32
    %c0_i32_0 = arith.constant 0 : i32
    return %arg0, %c0_i32 : i32, i32
  }
}

module attributes {stable_mosaic.version = 11 : i64} {
  func.func @_matmul_bias_kernel(%arg0: i32, %arg1: memref<32x1024xbf16, #tpu.memory_space<vmem>>, %arg2: memref<1024x64xbf16, #tpu.memory_space<vmem>>, %arg3: memref<1x64xf32, #tpu.memory_space<vmem>>, %arg4: memref<32x64xbf16, #tpu.memory_space<vmem>>) attributes {dimension_semantics = [#tpu.dimension_semantics<parallel>], iteration_bounds = array<i64: 1>, scalar_prefetch = 0 : i64, scratch_operands = 0 : i64, tpu.core_type = #tpu.core_type<tc>, window_params = [{transform_indices = @transform_0, window_bounds = array<i64: 32, 1024>}, {pipeline_mode = #tpu.pipeline_mode<synchronous>, transform_indices = @transform_1, window_bounds = array<i64: 1024, 64>}, {pipeline_mode = #tpu.pipeline_mode<synchronous>, transform_indices = @transform_2, window_bounds = array<i64: 1, 64>}, {transform_indices = @transform_3, window_bounds = array<i64: 32, 64>}]} {
    %c0 = arith.constant 0 : index
    %c0_0 = arith.constant 0 : index
    %0 = vector.load %arg1[%c0, %c0_0] : memref<32x1024xbf16, #tpu.memory_space<vmem>>, vector<32x1024xbf16>
    %c0_1 = arith.constant 0 : index
    %c0_2 = arith.constant 0 : index
    %1 = vector.load %arg2[%c0_1, %c0_2] : memref<1024x64xbf16, #tpu.memory_space<vmem>>, vector<1024x64xbf16>
    %cst = arith.constant dense<0.000000e+00> : vector<32x64xf32>
    %2 = tpu.matmul %0, %1, %cst {dimension_numbers = #tpu.dot_dimension_numbers<[1], [0], [0], [1], [0, 0, 1, 1], [], []>} : vector<32x1024xbf16>, vector<1024x64xbf16>, vector<32x64xf32> -> vector<32x64xf32>
    %c0_3 = arith.constant 0 : index
    %c0_4 = arith.constant 0 : index
    %3 = vector.load %arg3[%c0_3, %c0_4] : memref<1x64xf32, #tpu.memory_space<vmem>>, vector<1x64xf32>
    %4 = vector.broadcast %3 : vector<1x64xf32> to vector<32x64xf32>
    %5 = arith.addf %2, %4 : vector<32x64xf32>
    %cst_5 = arith.constant 0.000000e+00 : f32
    %6 = vector.broadcast %cst_5 : f32 to vector<32x64xf32>
    %7 = arith.maximumf %5, %6 : vector<32x64xf32>
    %8 = arith.truncf %7 : vector<32x64xf32> to vector<32x64xbf16>
    %c0_6 = arith.constant 0 : index
    %c0_7 = arith.constant 0 : index
    %9 = vector.load %arg4[%c0_6, %c0_7] : memref<32x64xbf16, #tpu.memory_space<vmem>>, vector<32x64xbf16>
    tpu.vector_store %arg4[%c0_6, %c0_7], %8 {strides = array<i32>} : memref<32x64xbf16, #tpu.memory_space<vmem>>, vector<32x64xbf16>,
    return
  }
  func.func @transform_0(%arg0: i32) -> (i32, i32) {
    %c0_i32 = arith.constant 0 : i32
    %c0_i32_0 = arith.constant 0 : i32
    return %arg0, %c0_i32 : i32, i32
  }
  func.func @transform_1(%arg0: i32) -> (i32, i32) {
    %c0_i32 = arith.constant 0 : i32
    %c0_i32_0 = arith.constant 0 : i32
    %c0_i32_1 = arith.constant 0 : i32
    return %c0_i32, %c0_i32_0 : i32, i32
  }
  func.func @transform_2(%arg0: i32) -> (i32, i32) {
    %c0_i32 = arith.constant 0 : i32
    %c0_i32_0 = arith.constant 0 : i32
    %c0_i32_1 = arith.constant 0 : i32
    return %c0_i32, %c0_i32_0 : i32, i32
  }
  func.func @transform_3(%arg0: i32) -> (i32, i32) {
    %c0_i32 = arith.constant 0 : i32
    %c0_i32_0 = arith.constant 0 : i32
    return %arg0, %c0_i32 : i32, i32
  }
}

module attributes {stable_mosaic.version = 11 : i64} {
  func.func @_mid_kernel(%arg0: memref<2x1024xbf16, #tpu.memory_space<vmem>>, %arg1: memref<1024x128xbf16, #tpu.memory_space<vmem>>, %arg2: memref<1x128xf32, #tpu.memory_space<vmem>>, %arg3: memref<128x10xbf16, #tpu.memory_space<vmem>>, %arg4: memref<128x10xbf16, #tpu.memory_space<vmem>>, %arg5: memref<1x10xf32, #tpu.memory_space<vmem>>, %arg6: memref<1x10xf32, #tpu.memory_space<vmem>>, %arg7: memref<2x10xf32, #tpu.memory_space<vmem>>, %arg8: memref<10x128xbf16, #tpu.memory_space<vmem>>, %arg9: memref<10x128xbf16, #tpu.memory_space<vmem>>, %arg10: memref<1x128xf32, #tpu.memory_space<vmem>>, %arg11: memref<128x1024xbf16, #tpu.memory_space<vmem>>, %arg12: memref<1x1024xf32, #tpu.memory_space<vmem>>, %arg13: memref<2x10xf32, #tpu.memory_space<vmem>>, %arg14: memref<2x10xf32, #tpu.memory_space<vmem>>, %arg15: memref<2x10xf32, #tpu.memory_space<vmem>>, %arg16: memref<2x1024xbf16, #tpu.memory_space<vmem>>) attributes {dimension_semantics = [], scalar_prefetch = 0 : i64, scratch_operands = 0 : i64, tpu.core_type = #tpu.core_type<tc>} {
    %c0 = arith.constant 0 : index
    %c0_0 = arith.constant 0 : index
    %0 = vector.load %arg0[%c0, %c0_0] : memref<2x1024xbf16, #tpu.memory_space<vmem>>, vector<2x1024xbf16>
    %c0_1 = arith.constant 0 : index
    %c0_2 = arith.constant 0 : index
    %1 = vector.load %arg1[%c0_1, %c0_2] : memref<1024x128xbf16, #tpu.memory_space<vmem>>, vector<1024x128xbf16>
    %cst = arith.constant dense<0.000000e+00> : vector<2x128xf32>
    %2 = tpu.matmul %0, %1, %cst {dimension_numbers = #tpu.dot_dimension_numbers<[1], [0], [0], [1], [0, 0, 1, 1], [], []>} : vector<2x1024xbf16>, vector<1024x128xbf16>, vector<2x128xf32> -> vector<2x128xf32>
    %c0_3 = arith.constant 0 : index
    %c0_4 = arith.constant 0 : index
    %3 = vector.load %arg2[%c0_3, %c0_4] : memref<1x128xf32, #tpu.memory_space<vmem>>, vector<1x128xf32>
    %4 = vector.broadcast %3 : vector<1x128xf32> to vector<2x128xf32>
    %5 = arith.addf %2, %4 : vector<2x128xf32>
    %cst_5 = arith.constant 0.000000e+00 : f32
    %6 = vector.broadcast %cst_5 : f32 to vector<2x128xf32>
    %7 = arith.maximumf %5, %6 : vector<2x128xf32>
    %8 = arith.truncf %7 : vector<2x128xf32> to vector<2x128xbf16>
    %c0_6 = arith.constant 0 : index
    %c0_7 = arith.constant 0 : index
    %9 = vector.load %arg3[%c0_6, %c0_7] : memref<128x10xbf16, #tpu.memory_space<vmem>>, vector<128x10xbf16>
    %cst_8 = arith.constant dense<0.000000e+00> : vector<2x10xf32>
    %10 = tpu.matmul %8, %9, %cst_8 {dimension_numbers = #tpu.dot_dimension_numbers<[1], [0], [0], [1], [0, 0, 1, 1], [], []>} : vector<2x128xbf16>, vector<128x10xbf16>, vector<2x10xf32> -> vector<2x10xf32>
    %c0_9 = arith.constant 0 : index
    %c0_10 = arith.constant 0 : index
    %11 = vector.load %arg5[%c0_9, %c0_10] : memref<1x10xf32, #tpu.memory_space<vmem>>, vector<1x10xf32>
    %12 = vector.broadcast %11 : vector<1x10xf32> to vector<2x10xf32>
    %13 = arith.addf %10, %12 : vector<2x10xf32>
    %c0_11 = arith.constant 0 : index
    %c0_12 = arith.constant 0 : index
    %14 = vector.load %arg4[%c0_11, %c0_12] : memref<128x10xbf16, #tpu.memory_space<vmem>>, vector<128x10xbf16>
    %cst_13 = arith.constant dense<0.000000e+00> : vector<2x10xf32>
    %15 = tpu.matmul %8, %14, %cst_13 {dimension_numbers = #tpu.dot_dimension_numbers<[1], [0], [0], [1], [0, 0, 1, 1], [], []>} : vector<2x128xbf16>, vector<128x10xbf16>, vector<2x10xf32> -> vector<2x10xf32>
    %c0_14 = arith.constant 0 : index
    %c0_15 = arith.constant 0 : index
    %16 = vector.load %arg6[%c0_14, %c0_15] : memref<1x10xf32, #tpu.memory_space<vmem>>, vector<1x10xf32>
    %17 = vector.broadcast %16 : vector<1x10xf32> to vector<2x10xf32>
    %18 = arith.addf %15, %17 : vector<2x10xf32>
    %c0_16 = arith.constant 0 : index
    %c0_17 = arith.constant 0 : index
    %19 = vector.load %arg7[%c0_16, %c0_17] : memref<2x10xf32, #tpu.memory_space<vmem>>, vector<2x10xf32>
    %cst_18 = arith.constant 5.000000e-01 : f32
    %20 = vector.broadcast %cst_18 : f32 to vector<2x10xf32>
    %21 = arith.mulf %20, %18 : vector<2x10xf32>
    %22 = math.exp %21 : vector<2x10xf32>
    %23 = arith.mulf %19, %22 : vector<2x10xf32>
    %24 = arith.addf %23, %13 : vector<2x10xf32>
    %cst_19 = arith.constant 0.628318548 : f32
    %25 = vector.broadcast %cst_19 : f32 to vector<2x10xf32>
    %26 = arith.mulf %25, %24 : vector<2x10xf32>
    %27 = math.sin %26 : vector<2x10xf32>
    %28 = arith.truncf %27 : vector<2x10xf32> to vector<2x10xbf16>
    %29 = math.cos %26 : vector<2x10xf32>
    %30 = arith.truncf %29 : vector<2x10xf32> to vector<2x10xbf16>
    %c0_20 = arith.constant 0 : index
    %c0_21 = arith.constant 0 : index
    %31 = vector.load %arg8[%c0_20, %c0_21] : memref<10x128xbf16, #tpu.memory_space<vmem>>, vector<10x128xbf16>
    %cst_22 = arith.constant dense<0.000000e+00> : vector<2x128xf32>
    %32 = tpu.matmul %28, %31, %cst_22 {dimension_numbers = #tpu.dot_dimension_numbers<[1], [0], [0], [1], [0, 0, 1, 1], [], []>} : vector<2x10xbf16>, vector<10x128xbf16>, vector<2x128xf32> -> vector<2x128xf32>
    %c0_23 = arith.constant 0 : index
    %c0_24 = arith.constant 0 : index
    %33 = vector.load %arg9[%c0_23, %c0_24] : memref<10x128xbf16, #tpu.memory_space<vmem>>, vector<10x128xbf16>
    %cst_25 = arith.constant dense<0.000000e+00> : vector<2x128xf32>
    %34 = tpu.matmul %30, %33, %cst_25 {dimension_numbers = #tpu.dot_dimension_numbers<[1], [0], [0], [1], [0, 0, 1, 1], [], []>} : vector<2x10xbf16>, vector<10x128xbf16>, vector<2x128xf32> -> vector<2x128xf32>
    %35 = arith.addf %32, %34 : vector<2x128xf32>
    %c0_26 = arith.constant 0 : index
    %c0_27 = arith.constant 0 : index
    %36 = vector.load %arg10[%c0_26, %c0_27] : memref<1x128xf32, #tpu.memory_space<vmem>>, vector<1x128xf32>
    %37 = vector.broadcast %36 : vector<1x128xf32> to vector<2x128xf32>
    %38 = arith.addf %35, %37 : vector<2x128xf32>
    %cst_28 = arith.constant 0.000000e+00 : f32
    %39 = vector.broadcast %cst_28 : f32 to vector<2x128xf32>
    %40 = arith.maximumf %38, %39 : vector<2x128xf32>
    %41 = arith.truncf %40 : vector<2x128xf32> to vector<2x128xbf16>
    %c0_29 = arith.constant 0 : index
    %c0_30 = arith.constant 0 : index
    %42 = vector.load %arg11[%c0_29, %c0_30] : memref<128x1024xbf16, #tpu.memory_space<vmem>>, vector<128x1024xbf16>
    %cst_31 = arith.constant dense<0.000000e+00> : vector<2x1024xf32>
    %43 = tpu.matmul %41, %42, %cst_31 {dimension_numbers = #tpu.dot_dimension_numbers<[1], [0], [0], [1], [0, 0, 1, 1], [], []>} : vector<2x128xbf16>, vector<128x1024xbf16>, vector<2x1024xf32> -> vector<2x1024xf32>
    %c0_32 = arith.constant 0 : index
    %c0_33 = arith.constant 0 : index
    %44 = vector.load %arg12[%c0_32, %c0_33] : memref<1x1024xf32, #tpu.memory_space<vmem>>, vector<1x1024xf32>
    %45 = vector.broadcast %44 : vector<1x1024xf32> to vector<2x1024xf32>
    %46 = arith.addf %43, %45 : vector<2x1024xf32>
    %cst_34 = arith.constant 0.000000e+00 : f32
    %47 = vector.broadcast %cst_34 : f32 to vector<2x1024xf32>
    %48 = arith.maximumf %46, %47 : vector<2x1024xf32>
    %49 = arith.truncf %48 : vector<2x1024xf32> to vector<2x1024xbf16>
    %c0_35 = arith.constant 0 : index
    %c0_36 = arith.constant 0 : index
    %50 = vector.load %arg16[%c0_35, %c0_36] : memref<2x1024xbf16, #tpu.memory_space<vmem>>, vector<2x1024xbf16>
    tpu.vector_store %arg16[%c0_35, %c0_36], %49 {strides = array<i32>} : memref<2x1024xbf16, #tpu.memory_space<vmem>>, vector<2x1024xbf16>,
    %c0_37 = arith.constant 0 : index
    %c0_38 = arith.constant 0 : index
    %51 = vector.load %arg13[%c0_37, %c0_38] : memref<2x10xf32, #tpu.memory_space<vmem>>, vector<2x10xf32>
    tpu.vector_store %arg13[%c0_37, %c0_38], %13 {strides = array<i32>} : memref<2x10xf32, #tpu.memory_space<vmem>>, vector<2x10xf32>,
    %c0_39 = arith.constant 0 : index
    %c0_40 = arith.constant 0 : index
    %52 = vector.load %arg14[%c0_39, %c0_40] : memref<2x10xf32, #tpu.memory_space<vmem>>, vector<2x10xf32>
    tpu.vector_store %arg14[%c0_39, %c0_40], %18 {strides = array<i32>} : memref<2x10xf32, #tpu.memory_space<vmem>>, vector<2x10xf32>,
    %c0_41 = arith.constant 0 : index
    %c0_42 = arith.constant 0 : index
    %53 = vector.load %arg15[%c0_41, %c0_42] : memref<2x10xf32, #tpu.memory_space<vmem>>, vector<2x10xf32>
    tpu.vector_store %arg15[%c0_41, %c0_42], %24 {strides = array<i32>} : memref<2x10xf32, #tpu.memory_space<vmem>>, vector<2x10xf32>,
    return
  }
}

module attributes {stable_mosaic.version = 11 : i64} {
  func.func @_matmul_bias_kernel(%arg0: i32, %arg1: memref<32x576xbf16, #tpu.memory_space<vmem>>, %arg2: memref<576x256xbf16, #tpu.memory_space<vmem>>, %arg3: memref<1x256xf32, #tpu.memory_space<vmem>>, %arg4: memref<32x256xbf16, #tpu.memory_space<vmem>>) attributes {dimension_semantics = [#tpu.dimension_semantics<parallel>], iteration_bounds = array<i64: 1>, scalar_prefetch = 0 : i64, scratch_operands = 0 : i64, tpu.core_type = #tpu.core_type<tc>, window_params = [{transform_indices = @transform_0, window_bounds = array<i64: 32, 576>}, {pipeline_mode = #tpu.pipeline_mode<synchronous>, transform_indices = @transform_1, window_bounds = array<i64: 576, 256>}, {pipeline_mode = #tpu.pipeline_mode<synchronous>, transform_indices = @transform_2, window_bounds = array<i64: 1, 256>}, {transform_indices = @transform_3, window_bounds = array<i64: 32, 256>}]} {
    %c0 = arith.constant 0 : index
    %c0_0 = arith.constant 0 : index
    %0 = vector.load %arg1[%c0, %c0_0] : memref<32x576xbf16, #tpu.memory_space<vmem>>, vector<32x576xbf16>
    %c0_1 = arith.constant 0 : index
    %c0_2 = arith.constant 0 : index
    %1 = vector.load %arg2[%c0_1, %c0_2] : memref<576x256xbf16, #tpu.memory_space<vmem>>, vector<576x256xbf16>
    %cst = arith.constant dense<0.000000e+00> : vector<32x256xf32>
    %2 = tpu.matmul %0, %1, %cst {dimension_numbers = #tpu.dot_dimension_numbers<[1], [0], [0], [1], [0, 0, 1, 1], [], []>} : vector<32x576xbf16>, vector<576x256xbf16>, vector<32x256xf32> -> vector<32x256xf32>
    %c0_3 = arith.constant 0 : index
    %c0_4 = arith.constant 0 : index
    %3 = vector.load %arg3[%c0_3, %c0_4] : memref<1x256xf32, #tpu.memory_space<vmem>>, vector<1x256xf32>
    %4 = vector.broadcast %3 : vector<1x256xf32> to vector<32x256xf32>
    %5 = arith.addf %2, %4 : vector<32x256xf32>
    %cst_5 = arith.constant 0.000000e+00 : f32
    %6 = vector.broadcast %cst_5 : f32 to vector<32x256xf32>
    %7 = arith.maximumf %5, %6 : vector<32x256xf32>
    %8 = arith.truncf %7 : vector<32x256xf32> to vector<32x256xbf16>
    %c0_6 = arith.constant 0 : index
    %c0_7 = arith.constant 0 : index
    %9 = vector.load %arg4[%c0_6, %c0_7] : memref<32x256xbf16, #tpu.memory_space<vmem>>, vector<32x256xbf16>
    tpu.vector_store %arg4[%c0_6, %c0_7], %8 {strides = array<i32>} : memref<32x256xbf16, #tpu.memory_space<vmem>>, vector<32x256xbf16>,
    return
  }
  func.func @transform_0(%arg0: i32) -> (i32, i32) {
    %c0_i32 = arith.constant 0 : i32
    %c0_i32_0 = arith.constant 0 : i32
    return %arg0, %c0_i32 : i32, i32
  }
  func.func @transform_1(%arg0: i32) -> (i32, i32) {
    %c0_i32 = arith.constant 0 : i32
    %c0_i32_0 = arith.constant 0 : i32
    %c0_i32_1 = arith.constant 0 : i32
    return %c0_i32, %c0_i32_0 : i32, i32
  }
  func.func @transform_2(%arg0: i32) -> (i32, i32) {
    %c0_i32 = arith.constant 0 : i32
    %c0_i32_0 = arith.constant 0 : i32
    %c0_i32_1 = arith.constant 0 : i32
    return %c0_i32, %c0_i32_0 : i32, i32
  }
  func.func @transform_3(%arg0: i32) -> (i32, i32) {
    %c0_i32 = arith.constant 0 : i32
    %c0_i32_0 = arith.constant 0 : i32
    return %arg0, %c0_i32 : i32, i32
  }
}

module attributes {stable_mosaic.version = 11 : i64} {
  func.func @_matmul_bias_kernel(%arg0: i32, %arg1: memref<128x576xbf16, #tpu.memory_space<vmem>>, %arg2: memref<576x128xbf16, #tpu.memory_space<vmem>>, %arg3: memref<1x128xf32, #tpu.memory_space<vmem>>, %arg4: memref<128x128xbf16, #tpu.memory_space<vmem>>) attributes {dimension_semantics = [#tpu.dimension_semantics<parallel>], iteration_bounds = array<i64: 1>, scalar_prefetch = 0 : i64, scratch_operands = 0 : i64, tpu.core_type = #tpu.core_type<tc>, window_params = [{transform_indices = @transform_0, window_bounds = array<i64: 128, 576>}, {pipeline_mode = #tpu.pipeline_mode<synchronous>, transform_indices = @transform_1, window_bounds = array<i64: 576, 128>}, {pipeline_mode = #tpu.pipeline_mode<synchronous>, transform_indices = @transform_2, window_bounds = array<i64: 1, 128>}, {transform_indices = @transform_3, window_bounds = array<i64: 128, 128>}]} {
    %c0 = arith.constant 0 : index
    %c0_0 = arith.constant 0 : index
    %0 = vector.load %arg1[%c0, %c0_0] : memref<128x576xbf16, #tpu.memory_space<vmem>>, vector<128x576xbf16>
    %c0_1 = arith.constant 0 : index
    %c0_2 = arith.constant 0 : index
    %1 = vector.load %arg2[%c0_1, %c0_2] : memref<576x128xbf16, #tpu.memory_space<vmem>>, vector<576x128xbf16>
    %cst = arith.constant dense<0.000000e+00> : vector<128x128xf32>
    %2 = tpu.matmul %0, %1, %cst {dimension_numbers = #tpu.dot_dimension_numbers<[1], [0], [0], [1], [0, 0, 1, 1], [], []>} : vector<128x576xbf16>, vector<576x128xbf16>, vector<128x128xf32> -> vector<128x128xf32>
    %c0_3 = arith.constant 0 : index
    %c0_4 = arith.constant 0 : index
    %3 = vector.load %arg3[%c0_3, %c0_4] : memref<1x128xf32, #tpu.memory_space<vmem>>, vector<1x128xf32>
    %4 = vector.broadcast %3 : vector<1x128xf32> to vector<128x128xf32>
    %5 = arith.addf %2, %4 : vector<128x128xf32>
    %cst_5 = arith.constant 0.000000e+00 : f32
    %6 = vector.broadcast %cst_5 : f32 to vector<128x128xf32>
    %7 = arith.maximumf %5, %6 : vector<128x128xf32>
    %8 = arith.truncf %7 : vector<128x128xf32> to vector<128x128xbf16>
    %c0_6 = arith.constant 0 : index
    %c0_7 = arith.constant 0 : index
    %9 = vector.load %arg4[%c0_6, %c0_7] : memref<128x128xbf16, #tpu.memory_space<vmem>>, vector<128x128xbf16>
    tpu.vector_store %arg4[%c0_6, %c0_7], %8 {strides = array<i32>} : memref<128x128xbf16, #tpu.memory_space<vmem>>, vector<128x128xbf16>,
    return
  }
  func.func @transform_0(%arg0: i32) -> (i32, i32) {
    %c0_i32 = arith.constant 0 : i32
    %c0_i32_0 = arith.constant 0 : i32
    return %arg0, %c0_i32 : i32, i32
  }
  func.func @transform_1(%arg0: i32) -> (i32, i32) {
    %c0_i32 = arith.constant 0 : i32
    %c0_i32_0 = arith.constant 0 : i32
    %c0_i32_1 = arith.constant 0 : i32
    return %c0_i32, %c0_i32_0 : i32, i32
  }
  func.func @transform_2(%arg0: i32) -> (i32, i32) {
    %c0_i32 = arith.constant 0 : i32
    %c0_i32_0 = arith.constant 0 : i32
    %c0_i32_1 = arith.constant 0 : i32
    return %c0_i32, %c0_i32_0 : i32, i32
  }
  func.func @transform_3(%arg0: i32) -> (i32, i32) {
    %c0_i32 = arith.constant 0 : i32
    %c0_i32_0 = arith.constant 0 : i32
    return %arg0, %c0_i32 : i32, i32
  }
}

module attributes {stable_mosaic.version = 11 : i64} {
  func.func @_matmul_bias_kernel(%arg0: i32, %arg1: memref<256x288xbf16, #tpu.memory_space<vmem>>, %arg2: memref<288x128xbf16, #tpu.memory_space<vmem>>, %arg3: memref<1x128xf32, #tpu.memory_space<vmem>>, %arg4: memref<256x128xbf16, #tpu.memory_space<vmem>>) attributes {dimension_semantics = [#tpu.dimension_semantics<parallel>], iteration_bounds = array<i64: 2>, scalar_prefetch = 0 : i64, scratch_operands = 0 : i64, tpu.core_type = #tpu.core_type<tc>, window_params = [{transform_indices = @transform_0, window_bounds = array<i64: 256, 288>}, {pipeline_mode = #tpu.pipeline_mode<synchronous>, transform_indices = @transform_1, window_bounds = array<i64: 288, 128>}, {pipeline_mode = #tpu.pipeline_mode<synchronous>, transform_indices = @transform_2, window_bounds = array<i64: 1, 128>}, {transform_indices = @transform_3, window_bounds = array<i64: 256, 128>}]} {
    %c0 = arith.constant 0 : index
    %c0_0 = arith.constant 0 : index
    %0 = vector.load %arg1[%c0, %c0_0] : memref<256x288xbf16, #tpu.memory_space<vmem>>, vector<256x288xbf16>
    %c0_1 = arith.constant 0 : index
    %c0_2 = arith.constant 0 : index
    %1 = vector.load %arg2[%c0_1, %c0_2] : memref<288x128xbf16, #tpu.memory_space<vmem>>, vector<288x128xbf16>
    %cst = arith.constant dense<0.000000e+00> : vector<256x128xf32>
    %2 = tpu.matmul %0, %1, %cst {dimension_numbers = #tpu.dot_dimension_numbers<[1], [0], [0], [1], [0, 0, 1, 1], [], []>} : vector<256x288xbf16>, vector<288x128xbf16>, vector<256x128xf32> -> vector<256x128xf32>
    %c0_3 = arith.constant 0 : index
    %c0_4 = arith.constant 0 : index
    %3 = vector.load %arg3[%c0_3, %c0_4] : memref<1x128xf32, #tpu.memory_space<vmem>>, vector<1x128xf32>
    %4 = vector.broadcast %3 : vector<1x128xf32> to vector<256x128xf32>
    %5 = arith.addf %2, %4 : vector<256x128xf32>
    %cst_5 = arith.constant 0.000000e+00 : f32
    %6 = vector.broadcast %cst_5 : f32 to vector<256x128xf32>
    %7 = arith.maximumf %5, %6 : vector<256x128xf32>
    %8 = arith.truncf %7 : vector<256x128xf32> to vector<256x128xbf16>
    %c0_6 = arith.constant 0 : index
    %c0_7 = arith.constant 0 : index
    %9 = vector.load %arg4[%c0_6, %c0_7] : memref<256x128xbf16, #tpu.memory_space<vmem>>, vector<256x128xbf16>
    tpu.vector_store %arg4[%c0_6, %c0_7], %8 {strides = array<i32>} : memref<256x128xbf16, #tpu.memory_space<vmem>>, vector<256x128xbf16>,
    return
  }
  func.func @transform_0(%arg0: i32) -> (i32, i32) {
    %c0_i32 = arith.constant 0 : i32
    %c0_i32_0 = arith.constant 0 : i32
    return %arg0, %c0_i32 : i32, i32
  }
  func.func @transform_1(%arg0: i32) -> (i32, i32) {
    %c0_i32 = arith.constant 0 : i32
    %c0_i32_0 = arith.constant 0 : i32
    %c0_i32_1 = arith.constant 0 : i32
    return %c0_i32, %c0_i32_0 : i32, i32
  }
  func.func @transform_2(%arg0: i32) -> (i32, i32) {
    %c0_i32 = arith.constant 0 : i32
    %c0_i32_0 = arith.constant 0 : i32
    %c0_i32_1 = arith.constant 0 : i32
    return %c0_i32, %c0_i32_0 : i32, i32
  }
  func.func @transform_3(%arg0: i32) -> (i32, i32) {
    %c0_i32 = arith.constant 0 : i32
    %c0_i32_0 = arith.constant 0 : i32
    return %arg0, %c0_i32 : i32, i32
  }
}

module attributes {stable_mosaic.version = 11 : i64} {
  func.func @_matmul_bias_kernel(%arg0: i32, %arg1: memref<1024x288xbf16, #tpu.memory_space<vmem>>, %arg2: memref<288x4xbf16, #tpu.memory_space<vmem>>, %arg3: memref<1x4xf32, #tpu.memory_space<vmem>>, %arg4: memref<1024x4xf32, #tpu.memory_space<vmem>>) attributes {dimension_semantics = [#tpu.dimension_semantics<parallel>], iteration_bounds = array<i64: 2>, scalar_prefetch = 0 : i64, scratch_operands = 0 : i64, tpu.core_type = #tpu.core_type<tc>, window_params = [{transform_indices = @transform_0, window_bounds = array<i64: 1024, 288>}, {pipeline_mode = #tpu.pipeline_mode<synchronous>, transform_indices = @transform_1, window_bounds = array<i64: 288, 4>}, {pipeline_mode = #tpu.pipeline_mode<synchronous>, transform_indices = @transform_2, window_bounds = array<i64: 1, 4>}, {transform_indices = @transform_3, window_bounds = array<i64: 1024, 4>}]} {
    %c0 = arith.constant 0 : index
    %c0_0 = arith.constant 0 : index
    %0 = vector.load %arg1[%c0, %c0_0] : memref<1024x288xbf16, #tpu.memory_space<vmem>>, vector<1024x288xbf16>
    %c0_1 = arith.constant 0 : index
    %c0_2 = arith.constant 0 : index
    %1 = vector.load %arg2[%c0_1, %c0_2] : memref<288x4xbf16, #tpu.memory_space<vmem>>, vector<288x4xbf16>
    %cst = arith.constant dense<0.000000e+00> : vector<1024x4xf32>
    %2 = tpu.matmul %0, %1, %cst {dimension_numbers = #tpu.dot_dimension_numbers<[1], [0], [0], [1], [0, 0, 1, 1], [], []>} : vector<1024x288xbf16>, vector<288x4xbf16>, vector<1024x4xf32> -> vector<1024x4xf32>
    %c0_3 = arith.constant 0 : index
    %c0_4 = arith.constant 0 : index
    %3 = vector.load %arg3[%c0_3, %c0_4] : memref<1x4xf32, #tpu.memory_space<vmem>>, vector<1x4xf32>
    %4 = vector.broadcast %3 : vector<1x4xf32> to vector<1024x4xf32>
    %5 = arith.addf %2, %4 : vector<1024x4xf32>
    %c0_5 = arith.constant 0 : index
    %c0_6 = arith.constant 0 : index
    %6 = vector.load %arg4[%c0_5, %c0_6] : memref<1024x4xf32, #tpu.memory_space<vmem>>, vector<1024x4xf32>
    tpu.vector_store %arg4[%c0_5, %c0_6], %5 {strides = array<i32>} : memref<1024x4xf32, #tpu.memory_space<vmem>>, vector<1024x4xf32>,
    return
  }
  func.func @transform_0(%arg0: i32) -> (i32, i32) {
    %c0_i32 = arith.constant 0 : i32
    %c0_i32_0 = arith.constant 0 : i32
    return %arg0, %c0_i32 : i32, i32
  }
  func.func @transform_1(%arg0: i32) -> (i32, i32) {
    %c0_i32 = arith.constant 0 : i32
    %c0_i32_0 = arith.constant 0 : i32
    %c0_i32_1 = arith.constant 0 : i32
    return %c0_i32, %c0_i32_0 : i32, i32
  }
  func.func @transform_2(%arg0: i32) -> (i32, i32) {
    %c0_i32 = arith.constant 0 : i32
    %c0_i32_0 = arith.constant 0 : i32
    %c0_i32_1 = arith.constant 0 : i32
    return %c0_i32, %c0_i32_0 : i32, i32
  }
  func.func @transform_3(%arg0: i32) -> (i32, i32) {
    %c0_i32 = arith.constant 0 : i32
    %c0_i32_0 = arith.constant 0 : i32
    return %arg0, %c0_i32 : i32, i32
  }
}

</mosaic_0001>

<llo_original>
// kernel: _lambda_.9
$region0: #{_lambda_.9}
  #allocation0 [shape = 'u32[]', space=smem, size = 0x4, offset = 0x4, fixed_abs, tag = 'smem constant byte address 0x4 - core index']
  #allocation1 [shape = 'u32[144,128]{1,0:T(1,128)}', space=vmem, size = 0x12000, scoped, tag = 'internal scratch']
  %s0 = inlined_call_operand.vmem [shape: bf16[2048,16], index: 0, kind: input, shape index: {}]
  %s1 = inlined_call_operand.hbm [shape: bf16[16,32], index: 1, kind: input, shape index: {}]
  %s2 = inlined_call_operand.vmem [shape: f32[1,32], index: 2, kind: input, shape index: {}]
  %s3 = inlined_call_operand.vmem [shape: bf16[2048,32], index: 3, kind: output, shape index: {}]
  %s4 = sld [smem:[#allocation0]]
  $region49: #{_lambda_.9} parent=0
    _
  %s6 = ssub.s32 1, %s4
  %s7 = scalar_select 0, %s6, %s4
  $region1: #{_lambda_.9} parent=0
    #allocation2 [shape = 'u8[4096]{0}', space=vmem, size = 0x1000, scoped, tag = 'input window, operand 1, single buffered']
    #allocation3 [shape = 's32[2]{0}', space=sflag, size = 0x8, scoped, tag = 'scoped memory for _lambda_.9']
    %8 = vsyncpa [#allocation3], 0
    loop: start=0, step=1, limit=4
    $region2: #{_lambda_.9} parent=1 // loop_pre_header
      _
    $region3: #{_lambda_.9} parent=1 // loop_header
      %s10 = sphi 0, %s14
      %p11 = scmp.ge.s32.totalorder %s10, 4
      %s20 = sphi 0, %s22
      %s23 = sphi 0, %s20
      %s24 = sphi 0, %s23
      %s40 = sphi 0, %s24
      %s44 = sphi 0, %s44
      %s46 = sphi 0, %s44
      %s47 = sphi 0, %s46
      %s61 = sphi 0, %s47
      %s65 = sphi 0, %s65
      %s67 = sphi 0, %s65
      %s68 = sphi 0, %s67
      %s82 = sphi 0, %s68
      %s88 = sphi 0, %s90
      %s91 = sphi 0, %s88
      %s92 = sphi 0, %s91
      %s108 = sphi 0, %s92
    $region4: #{_lambda_.9} parent=1 // loop_header_branch
      %13 = sbr.rel (%p11) target = $region8
    $region5: #{_lambda_.9} parent=1 // loop_body
      %s15 = ssub.s32 %s10, 1
      %s16 = ssub.s32 %s10, 2
      %s17 = sadd.s32 %s10, 1
      %s18 = ssub.s32 %s10, %s17
      %p19 = scmp.eq.s32.totalorder %s18, 0
      %s21 = sadd.s32 %s20, 1
      %s22 = scalar_select %p19, %s20, %s21
      %p25 = pneg %p19
      %p26 = scmp.eq.s32.totalorder %s10, 1
      %p27 = por %p25, %p26
      %p28 = scmp.ne.s32.totalorder %s20, %s23
      %p29 = scmp.eq.s32.totalorder %s10, 0
      %p30 = por %p28, %p29
      %p31 = scmp.ne.s32.totalorder %s20, %s23
      %p32 = scmp.eq.s32.totalorder %s15, 1
      %p33 = por %p31, %p32
      %p34 = scmp.ne.s32.totalorder %s23, %s24
      %p35 = scmp.eq.s32.totalorder %s15, 0
      %p36 = por %p34, %p35
      %p37 = scmp.ne.s32.totalorder %s23, %s24
      %p38 = scmp.eq.s32.totalorder %s16, 1
      %p39 = por %p37, %p38
      %p41 = scmp.ne.s32.totalorder %s24, %s40
      %p42 = scmp.eq.s32.totalorder %s16, 0
      %p43 = por %p41, %p42
      %s45 = sadd.s32 %s44, 1
      %p48 = scmp.eq.s32.totalorder %s10, 1
      %p49 = scmp.ne.s32.totalorder %s44, %s46
      %p50 = scmp.eq.s32.totalorder %s10, 0
      %p51 = por %p49, %p50
      %p52 = scmp.ne.s32.totalorder %s44, %s46
      %p53 = scmp.eq.s32.totalorder %s15, 1
      %p54 = por %p52, %p53
      %p55 = scmp.ne.s32.totalorder %s46, %s47
      %p56 = scmp.eq.s32.totalorder %s15, 0
      %p57 = por %p55, %p56
      %p58 = scmp.ne.s32.totalorder %s46, %s47
      %p59 = scmp.eq.s32.totalorder %s16, 1
      %p60 = por %p58, %p59
      %p62 = scmp.ne.s32.totalorder %s47, %s61
      %p63 = scmp.eq.s32.totalorder %s16, 0
      %p64 = por %p62, %p63
      %s66 = sadd.s32 %s65, 1
      %p69 = scmp.eq.s32.totalorder %s10, 1
      %p70 = scmp.ne.s32.totalorder %s65, %s67
      %p71 = scmp.eq.s32.totalorder %s10, 0
      %p72 = por %p70, %p71
      %p73 = scmp.ne.s32.totalorder %s65, %s67
      %p74 = scmp.eq.s32.totalorder %s15, 1
      %p75 = por %p73, %p74
      %p76 = scmp.ne.s32.totalorder %s67, %s68
      %p77 = scmp.eq.s32.totalorder %s15, 0
      %p78 = por %p76, %p77
      %p79 = scmp.ne.s32.totalorder %s67, %s68
      %p80 = scmp.eq.s32.totalorder %s16, 1
      %p81 = por %p79, %p80
      %p83 = scmp.ne.s32.totalorder %s68, %s82
      %p84 = scmp.eq.s32.totalorder %s16, 0
      %p85 = por %p83, %p84
      %s86 = ssub.s32 %s10, %s17
      %p87 = scmp.eq.s32.totalorder %s86, 0
      %s89 = sadd.s32 %s88, 1
      %s90 = scalar_select %p87, %s88, %s89
      %p93 = pneg %p87
      %p94 = scmp.eq.s32.totalorder %s10, 1
      %p95 = por %p93, %p94
      %p96 = scmp.ne.s32.totalorder %s88, %s91
      %p97 = scmp.eq.s32.totalorder %s10, 0
      %p98 = por %p96, %p97
      %p99 = scmp.ne.s32.totalorder %s88, %s91
      %p100 = scmp.eq.s32.totalorder %s15, 1
      %p101 = por %p99, %p100
      %p102 = scmp.ne.s32.totalorder %s91, %s92
      %p103 = scmp.eq.s32.totalorder %s15, 0
      %p104 = por %p102, %p103
      %p105 = scmp.ne.s32.totalorder %s91, %s92
      %p106 = scmp.eq.s32.totalorder %s16, 1
      %p107 = por %p105, %p106
      %p109 = scmp.ne.s32.totalorder %s92, %s108
      %p110 = scmp.eq.s32.totalorder %s16, 0
      %p111 = por %p109, %p110
      %p112 = scmp.le.s32.totalorder 1, %s10
      %p113 = scmp.lt.s32.totalorder %s10, 3
      %p114 = pnand %p112, %p113
      %p115 = pneg %p114
      // Predicated region
      $region9: #{_lambda_.9} parent=5 // pred_check
        _
      $region10: #{_lambda_.9} parent=5 // pred_check_branch
        %117 = sbr.rel (%p114) target = $region12
      $region11: #{_lambda_.9} parent=5 // pred_region
        %s118 = ssub.s32 %s10, 1
        // Predicated region
        $region13: #{_lambda_.9} parent=11 // pred_check
          %p119 = pneg %p57
        $region14: #{_lambda_.9} parent=11 // pred_check_branch
          %121 = sbr.rel (%p119) target = $region16
        $region15: #{_lambda_.9} parent=11 // pred_region
          %s123 = ssub.s32 128, 128
          %124 = vsyncadd [#allocation3], %s123
          %s125 = sshll.u32 [#allocation2], 4
          %s126 = int_to_ptr.vmem [resolvable:$true] %s125
          %131 = dma.hbm_to_vmem [thread:$0]  %s1, 128, %s126, [#allocation3], 64, 64, 4
        $region16: #{_lambda_.9} parent=11 // pred_fallthru
          _
        // Predicated region
        $region17: #{_lambda_.9} parent=11 // pred_check
          %p132 = pneg %p78
        $region18: #{_lambda_.9} parent=11 // pred_check_branch
          %134 = sbr.rel (%p132) target = $region20
        $region19: #{_lambda_.9} parent=11 // pred_region
          _
        $region20: #{_lambda_.9} parent=11 // pred_fallthru
          _
      $region12: #{_lambda_.9} parent=5 // pred_fallthru
        _
      %p135 = scmp.lt.s32.totalorder %s10, 2
      // Predicated region
      $region21: #{_lambda_.9} parent=5 // pred_check
        %p136 = pneg %p135
      $region22: #{_lambda_.9} parent=5 // pred_check_branch
        %138 = sbr.rel (%p136) target = $region24
      $region23: #{_lambda_.9} parent=5 // pred_region
        // Predicated region
        $region25: #{_lambda_.9} parent=23 // pred_check
          %p139 = pneg %p30
        $region26: #{_lambda_.9} parent=23 // pred_check_branch
          %141 = sbr.rel (%p139) target = $region28
        $region27: #{_lambda_.9} parent=23 // pred_region
          %s142 = smul.u32 128, %s10
          %p143 = scmp.lt.s32.totalorder %s142, 255
          %s144 = scalar_select %p143, %s142, 255
          %s145 = smul.addr %s144, 4
          %s146 = scalar_lea.vmem %s0, %s145
          %s147 = smul.u32 128, %s10
        $region28: #{_lambda_.9} parent=23 // pred_fallthru
          _
      $region24: #{_lambda_.9} parent=5 // pred_fallthru
        _
      %p148 = scmp.le.s32.totalorder 1, %s10
      %p149 = scmp.lt.s32.totalorder %s10, 3
      %p150 = pnand %p148, %p149
      %p151 = pneg %p150
      // Predicated region
      $region29: #{_lambda_.9} parent=5 // pred_check
        _
      $region30: #{_lambda_.9} parent=5 // pred_check_branch
        %153 = sbr.rel (%p150) target = $region32
      $region31: #{_lambda_.9} parent=5 // pred_region
        %s154 = ssub.s32 %s10, 1
        // Predicated region
        $region33: #{_lambda_.9} parent=31 // pred_check
          %p155 = pneg %p57
        $region34: #{_lambda_.9} parent=31 // pred_check_branch
          %157 = sbr.rel (%p155) target = $region36
        $region35: #{_lambda_.9} parent=31 // pred_region
          %158 = dma.done [#allocation3], 128
        $region36: #{_lambda_.9} parent=31 // pred_fallthru
          _
        %s159 = smul.u32 128, %s15
        %p160 = scmp.lt.s32.totalorder %s159, 255
        %s161 = scalar_select %p160, %s159, 255
        %s162 = smul.addr %s161, 4
        %s163 = scalar_lea.vmem %s0, %s162
        %p164 = pneg %p36
        %p165 = pneg %p33
        %p166 = pneg %p57
        %p167 = pneg %p54
        %p168 = pneg %p78
        %p169 = pneg %p75
        %p170 = pneg %p104
        %p171 = pneg %p101
        %s172 = smul.u32 128, %s15
        %p173 = scmp.lt.s32.totalorder %s172, 255
        %s174 = scalar_select %p173, %s172, 255
        %s175 = smul.addr %s174, 4
        %s176 = scalar_lea.vmem %s3, %s175
        %s177 = smul.u32 128, %s15
        %p178 = scmp.lt.s32.totalorder %s177, 255
        %s179 = scalar_select %p178, %s177, 255
        %s180 = smul.addr %s179, 4
        %s181 = scalar_lea.vmem %s0, %s180
        %s182 = smul.u32 128, %s15
        %s183 = smul.u32 128, %s15
        %p184 = scmp.lt.s32.totalorder %s183, 255
        %s185 = scalar_select %p184, %s183, 255
        %s186 = smul.addr %s185, 4
        %s187 = scalar_lea.vmem %s3, %s186
        %s188 = smul.u32 128, %s15
        %v190 = vld [vmem:[%s181] sm:$0xf]
        %v191 = vld [vmem:[%s181 + $0x4] sm:$0xf]
        %v192 = vld [vmem:[%s181 + $0x8] sm:$0xf]
        %v193 = vld [vmem:[%s181 + $0xc] sm:$0xf]
        %v194 = vld [vmem:[%s181 + $0x10] sm:$0xf]
        %v195 = vld [vmem:[%s181 + $0x14] sm:$0xf]
        %v196 = vld [vmem:[%s181 + $0x18] sm:$0xf]
        %v197 = vld [vmem:[%s181 + $0x1c] sm:$0xf]
        %v198 = vld [vmem:[%s181 + $0x20] sm:$0xf]
        %v199 = vld [vmem:[%s181 + $0x24] sm:$0xf]
        %v200 = vld [vmem:[%s181 + $0x28] sm:$0xf]
        %v201 = vld [vmem:[%s181 + $0x2c] sm:$0xf]
        %v202 = vld [vmem:[%s181 + $0x30] sm:$0xf]
        %v203 = vld [vmem:[%s181 + $0x34] sm:$0xf]
        %v204 = vld [vmem:[%s181 + $0x38] sm:$0xf]
        %v205 = vld [vmem:[%s181 + $0x3c] sm:$0xf]
        %v206 = vld [vmem:[%s181 + $0x40] sm:$0xf]
        %v207 = vld [vmem:[%s181 + $0x44] sm:$0xf]
        %v208 = vld [vmem:[%s181 + $0x48] sm:$0xf]
        %v209 = vld [vmem:[%s181 + $0x4c] sm:$0xf]
        %v210 = vld [vmem:[%s181 + $0x50] sm:$0xf]
        %v211 = vld [vmem:[%s181 + $0x54] sm:$0xf]
        %v212 = vld [vmem:[%s181 + $0x58] sm:$0xf]
        %v213 = vld [vmem:[%s181 + $0x5c] sm:$0xf]
        %v214 = vld [vmem:[%s181 + $0x60] sm:$0xf]
        %v215 = vld [vmem:[%s181 + $0x64] sm:$0xf]
        %v216 = vld [vmem:[%s181 + $0x68] sm:$0xf]
        %v217 = vld [vmem:[%s181 + $0x6c] sm:$0xf]
        %v218 = vld [vmem:[%s181 + $0x70] sm:$0xf]
        %v219 = vld [vmem:[%s181 + $0x74] sm:$0xf]
        %v220 = vld [vmem:[%s181 + $0x78] sm:$0xf]
        %v221 = vld [vmem:[%s181 + $0x7c] sm:$0xf]
        %v222 = vld [vmem:[%s181 + $0x80] sm:$0xf]
        %v223 = vld [vmem:[%s181 + $0x84] sm:$0xf]
        %v224 = vld [vmem:[%s181 + $0x88] sm:$0xf]
        %v225 = vld [vmem:[%s181 + $0x8c] sm:$0xf]
        %v226 = vld [vmem:[%s181 + $0x90] sm:$0xf]
        %v227 = vld [vmem:[%s181 + $0x94] sm:$0xf]
        %v228 = vld [vmem:[%s181 + $0x98] sm:$0xf]
        %v229 = vld [vmem:[%s181 + $0x9c] sm:$0xf]
        %v230 = vld [vmem:[%s181 + $0xa0] sm:$0xf]
        %v231 = vld [vmem:[%s181 + $0xa4] sm:$0xf]
        %v232 = vld [vmem:[%s181 + $0xa8] sm:$0xf]
        %v233 = vld [vmem:[%s181 + $0xac] sm:$0xf]
        %v234 = vld [vmem:[%s181 + $0xb0] sm:$0xf]
        %v235 = vld [vmem:[%s181 + $0xb4] sm:$0xf]
        %v236 = vld [vmem:[%s181 + $0xb8] sm:$0xf]
        %v237 = vld [vmem:[%s181 + $0xbc] sm:$0xf]
        %v238 = vld [vmem:[%s181 + $0xc0] sm:$0xf]
        %v239 = vld [vmem:[%s181 + $0xc4] sm:$0xf]
        %v240 = vld [vmem:[%s181 + $0xc8] sm:$0xf]
        %v241 = vld [vmem:[%s181 + $0xcc] sm:$0xf]
        %v242 = vld [vmem:[%s181 + $0xd0] sm:$0xf]
        %v243 = vld [vmem:[%s181 + $0xd4] sm:$0xf]
        %v244 = vld [vmem:[%s181 + $0xd8] sm:$0xf]
        %v245 = vld [vmem:[%s181 + $0xdc] sm:$0xf]
        %v246 = vld [vmem:[%s181 + $0xe0] sm:$0xf]
        %v247 = vld [vmem:[%s181 + $0xe4] sm:$0xf]
        %v248 = vld [vmem:[%s181 + $0xe8] sm:$0xf]
        %v249 = vld [vmem:[%s181 + $0xec] sm:$0xf]
        %v250 = vld [vmem:[%s181 + $0xf0] sm:$0xf]
        %v251 = vld [vmem:[%s181 + $0xf4] sm:$0xf]
        %v252 = vld [vmem:[%s181 + $0xf8] sm:$0xf]
        %v253 = vld [vmem:[%s181 + $0xfc] sm:$0xf]
        %v254 = vld [vmem:[%s181 + $0x100] sm:$0xf]
        %v255 = vld [vmem:[%s181 + $0x104] sm:$0xf]
        %v256 = vld [vmem:[%s181 + $0x108] sm:$0xf]
        %v257 = vld [vmem:[%s181 + $0x10c] sm:$0xf]
        %v258 = vld [vmem:[%s181 + $0x110] sm:$0xf]
        %v259 = vld [vmem:[%s181 + $0x114] sm:$0xf]
        %v260 = vld [vmem:[%s181 + $0x118] sm:$0xf]
        %v261 = vld [vmem:[%s181 + $0x11c] sm:$0xf]
        %v262 = vld [vmem:[%s181 + $0x120] sm:$0xf]
        %v263 = vld [vmem:[%s181 + $0x124] sm:$0xf]
        %v264 = vld [vmem:[%s181 + $0x128] sm:$0xf]
        %v265 = vld [vmem:[%s181 + $0x12c] sm:$0xf]
        %v266 = vld [vmem:[%s181 + $0x130] sm:$0xf]
        %v267 = vld [vmem:[%s181 + $0x134] sm:$0xf]
        %v268 = vld [vmem:[%s181 + $0x138] sm:$0xf]
        %v269 = vld [vmem:[%s181 + $0x13c] sm:$0xf]
        %v270 = vld [vmem:[%s181 + $0x140] sm:$0xf]
        %v271 = vld [vmem:[%s181 + $0x144] sm:$0xf]
        %v272 = vld [vmem:[%s181 + $0x148] sm:$0xf]
        %v273 = vld [vmem:[%s181 + $0x14c] sm:$0xf]
        %v274 = vld [vmem:[%s181 + $0x150] sm:$0xf]
        %v275 = vld [vmem:[%s181 + $0x154] sm:$0xf]
        %v276 = vld [vmem:[%s181 + $0x158] sm:$0xf]
        %v277 = vld [vmem:[%s181 + $0x15c] sm:$0xf]
        %v278 = vld [vmem:[%s181 + $0x160] sm:$0xf]
        %v279 = vld [vmem:[%s181 + $0x164] sm:$0xf]
        %v280 = vld [vmem:[%s181 + $0x168] sm:$0xf]
        %v281 = vld [vmem:[%s181 + $0x16c] sm:$0xf]
        %v282 = vld [vmem:[%s181 + $0x170] sm:$0xf]
        %v283 = vld [vmem:[%s181 + $0x174] sm:$0xf]
        %v284 = vld [vmem:[%s181 + $0x178] sm:$0xf]
        %v285 = vld [vmem:[%s181 + $0x17c] sm:$0xf]
        %v286 = vld [vmem:[%s181 + $0x180] sm:$0xf]
        %v287 = vld [vmem:[%s181 + $0x184] sm:$0xf]
        %v288 = vld [vmem:[%s181 + $0x188] sm:$0xf]
        %v289 = vld [vmem:[%s181 + $0x18c] sm:$0xf]
        %v290 = vld [vmem:[%s181 + $0x190] sm:$0xf]
        %v291 = vld [vmem:[%s181 + $0x194] sm:$0xf]
        %v292 = vld [vmem:[%s181 + $0x198] sm:$0xf]
        %v293 = vld [vmem:[%s181 + $0x19c] sm:$0xf]
        %v294 = vld [vmem:[%s181 + $0x1a0] sm:$0xf]
        %v295 = vld [vmem:[%s181 + $0x1a4] sm:$0xf]
        %v296 = vld [vmem:[%s181 + $0x1a8] sm:$0xf]
        %v297 = vld [vmem:[%s181 + $0x1ac] sm:$0xf]
        %v298 = vld [vmem:[%s181 + $0x1b0] sm:$0xf]
        %v299 = vld [vmem:[%s181 + $0x1b4] sm:$0xf]
        %v300 = vld [vmem:[%s181 + $0x1b8] sm:$0xf]
        %v301 = vld [vmem:[%s181 + $0x1bc] sm:$0xf]
        %v302 = vld [vmem:[%s181 + $0x1c0] sm:$0xf]
        %v303 = vld [vmem:[%s181 + $0x1c4] sm:$0xf]
        %v304 = vld [vmem:[%s181 + $0x1c8] sm:$0xf]
        %v305 = vld [vmem:[%s181 + $0x1cc] sm:$0xf]
        %v306 = vld [vmem:[%s181 + $0x1d0] sm:$0xf]
        %v307 = vld [vmem:[%s181 + $0x1d4] sm:$0xf]
        %v308 = vld [vmem:[%s181 + $0x1d8] sm:$0xf]
        %v309 = vld [vmem:[%s181 + $0x1dc] sm:$0xf]
        %v310 = vld [vmem:[%s181 + $0x1e0] sm:$0xf]
        %v311 = vld [vmem:[%s181 + $0x1e4] sm:$0xf]
        %v312 = vld [vmem:[%s181 + $0x1e8] sm:$0xf]
        %v313 = vld [vmem:[%s181 + $0x1ec] sm:$0xf]
        %v314 = vld [vmem:[%s181 + $0x1f0] sm:$0xf]
        %v315 = vld [vmem:[%s181 + $0x1f4] sm:$0xf]
        %v316 = vld [vmem:[%s181 + $0x1f8] sm:$0xf]
        %v317 = vld [vmem:[%s181 + $0x1fc] sm:$0xf]
        %v318 = vld [vmem:[#allocation2] sm:$0xf]
        %v319 = vld [vmem:[#allocation2 + $0x4] sm:$0xf]
        %v320 = vld [vmem:[%s2] sm:$0x1]
        %v322 = vlaneseq
        %v323 = vshrl.u32 %v322, 7
        %v324 = vsub.s32 0, %v323
        %v325 = vrot.slane %v320, %v324
        %v455 = vunpack.c.l.b16 %v190
        %v456 = vunpack.c.l.b16 %v191
        %v457 = vunpack.c.l.b16 %v192
        %v458 = vunpack.c.l.b16 %v193
        %v459 = vunpack.c.l.b16 %v194
        %v460 = vunpack.c.l.b16 %v195
        %v461 = vunpack.c.l.b16 %v196
        %v462 = vunpack.c.l.b16 %v197
        %v463 = vunpack.c.l.b16 %v198
        %v464 = vunpack.c.l.b16 %v199
        %v465 = vunpack.c.l.b16 %v200
        %v466 = vunpack.c.l.b16 %v201
        %v467 = vunpack.c.l.b16 %v202
        %v468 = vunpack.c.l.b16 %v203
        %v469 = vunpack.c.l.b16 %v204
        %v470 = vunpack.c.l.b16 %v205
        %v471 = vunpack.c.l.b16 %v206
        %v472 = vunpack.c.l.b16 %v207
        %v473 = vunpack.c.l.b16 %v208
        %v474 = vunpack.c.l.b16 %v209
        %v475 = vunpack.c.l.b16 %v210
        %v476 = vunpack.c.l.b16 %v211
        %v477 = vunpack.c.l.b16 %v212
        %v478 = vunpack.c.l.b16 %v213
        %v479 = vunpack.c.l.b16 %v214
        %v480 = vunpack.c.l.b16 %v215
        %v481 = vunpack.c.l.b16 %v216
        %v482 = vunpack.c.l.b16 %v217
        %v483 = vunpack.c.l.b16 %v218
        %v484 = vunpack.c.l.b16 %v219
        %v485 = vunpack.c.l.b16 %v220
        %v486 = vunpack.c.l.b16 %v221
        %v487 = vunpack.c.l.b16 %v222
        %v488 = vunpack.c.l.b16 %v223
        %v489 = vunpack.c.l.b16 %v224
        %v490 = vunpack.c.l.b16 %v225
        %v491 = vunpack.c.l.b16 %v226
        %v492 = vunpack.c.l.b16 %v227
        %v493 = vunpack.c.l.b16 %v228
        %v494 = vunpack.c.l.b16 %v229
        %v495 = vunpack.c.l.b16 %v230
        %v496 = vunpack.c.l.b16 %v231
        %v497 = vunpack.c.l.b16 %v232
        %v498 = vunpack.c.l.b16 %v233
        %v499 = vunpack.c.l.b16 %v234
        %v500 = vunpack.c.l.b16 %v235
        %v501 = vunpack.c.l.b16 %v236
        %v502 = vunpack.c.l.b16 %v237
        %v503 = vunpack.c.l.b16 %v238
        %v504 = vunpack.c.l.b16 %v239
        %v505 = vunpack.c.l.b16 %v240
        %v506 = vunpack.c.l.b16 %v241
        %v507 = vunpack.c.l.b16 %v242
        %v508 = vunpack.c.l.b16 %v243
        %v509 = vunpack.c.l.b16 %v244
        %v510 = vunpack.c.l.b16 %v245
        %v511 = vunpack.c.l.b16 %v246
        %v512 = vunpack.c.l.b16 %v247
        %v513 = vunpack.c.l.b16 %v248
        %v514 = vunpack.c.l.b16 %v249
        %v515 = vunpack.c.l.b16 %v250
        %v516 = vunpack.c.l.b16 %v251
        %v517 = vunpack.c.l.b16 %v252
        %v518 = vunpack.c.l.b16 %v253
        %v519 = vunpack.c.l.b16 %v254
        %v520 = vunpack.c.l.b16 %v255
        %v521 = vunpack.c.l.b16 %v256
        %v522 = vunpack.c.l.b16 %v257
        %v523 = vunpack.c.l.b16 %v258
        %v524 = vunpack.c.l.b16 %v259
        %v525 = vunpack.c.l.b16 %v260
        %v526 = vunpack.c.l.b16 %v261
        %v527 = vunpack.c.l.b16 %v262
        %v528 = vunpack.c.l.b16 %v263
        %v529 = vunpack.c.l.b16 %v264
        %v530 = vunpack.c.l.b16 %v265
        %v531 = vunpack.c.l.b16 %v266
        %v532 = vunpack.c.l.b16 %v267
        %v533 = vunpack.c.l.b16 %v268
        %v534 = vunpack.c.l.b16 %v269
        %v535 = vunpack.c.l.b16 %v270
        %v536 = vunpack.c.l.b16 %v271
        %v537 = vunpack.c.l.b16 %v272
        %v538 = vunpack.c.l.b16 %v273
        %v539 = vunpack.c.l.b16 %v274
        %v540 = vunpack.c.l.b16 %v275
        %v541 = vunpack.c.l.b16 %v276
        %v542 = vunpack.c.l.b16 %v277
        %v543 = vunpack.c.l.b16 %v278
        %v544 = vunpack.c.l.b16 %v279
        %v545 = vunpack.c.l.b16 %v280
        %v546 = vunpack.c.l.b16 %v281
        %v547 = vunpack.c.l.b16 %v282
        %v548 = vunpack.c.l.b16 %v283
        %v549 = vunpack.c.l.b16 %v284
        %v550 = vunpack.c.l.b16 %v285
        %v551 = vunpack.c.l.b16 %v286
        %v552 = vunpack.c.l.b16 %v287
        %v553 = vunpack.c.l.b16 %v288
        %v554 = vunpack.c.l.b16 %v289
        %v555 = vunpack.c.l.b16 %v290
        %v556 = vunpack.c.l.b16 %v291
        %v557 = vunpack.c.l.b16 %v292
        %v558 = vunpack.c.l.b16 %v293
        %v559 = vunpack.c.l.b16 %v294
        %v560 = vunpack.c.l.b16 %v295
        %v561 = vunpack.c.l.b16 %v296
        %v562 = vunpack.c.l.b16 %v297
        %v563 = vunpack.c.l.b16 %v298
        %v564 = vunpack.c.l.b16 %v299
        %v565 = vunpack.c.l.b16 %v300
        %v566 = vunpack.c.l.b16 %v301
        %v567 = vunpack.c.l.b16 %v302
        %v568 = vunpack.c.l.b16 %v303
        %v569 = vunpack.c.l.b16 %v304
        %v570 = vunpack.c.l.b16 %v305
        %v571 = vunpack.c.l.b16 %v306
        %v572 = vunpack.c.l.b16 %v307
        %v573 = vunpack.c.l.b16 %v308
        %v574 = vunpack.c.l.b16 %v309
        %v575 = vunpack.c.l.b16 %v310
        %v576 = vunpack.c.l.b16 %v311
        %v577 = vunpack.c.l.b16 %v312
        %v578 = vunpack.c.l.b16 %v313
        %v579 = vunpack.c.l.b16 %v314
        %v580 = vunpack.c.l.b16 %v315
        %v581 = vunpack.c.l.b16 %v316
        %v582 = vunpack.c.l.b16 %v317
        %v583 = vpack.c.b16 %v456, %v455
        %v584 = vpack.c.b16 %v458, %v457
        %v585 = vpack.c.b16 %v460, %v459
        %v586 = vpack.c.b16 %v462, %v461
        %v587 = vpack.c.b16 %v464, %v463
        %v588 = vpack.c.b16 %v466, %v465
        %v589 = vpack.c.b16 %v468, %v467
        %v590 = vpack.c.b16 %v470, %v469
        %v591 = vpack.c.b16 %v472, %v471
        %v592 = vpack.c.b16 %v474, %v473
        %v593 = vpack.c.b16 %v476, %v475
        %v594 = vpack.c.b16 %v478, %v477
        %v595 = vpack.c.b16 %v480, %v479
        %v596 = vpack.c.b16 %v482, %v481
        %v597 = vpack.c.b16 %v484, %v483
        %v598 = vpack.c.b16 %v486, %v485
        %v599 = vpack.c.b16 %v488, %v487
        %v600 = vpack.c.b16 %v490, %v489
        %v601 = vpack.c.b16 %v492, %v491
        %v602 = vpack.c.b16 %v494, %v493
        %v603 = vpack.c.b16 %v496, %v495
        %v604 = vpack.c.b16 %v498, %v497
        %v605 = vpack.c.b16 %v500, %v499
        %v606 = vpack.c.b16 %v502, %v501
        %v607 = vpack.c.b16 %v504, %v503
        %v608 = vpack.c.b16 %v506, %v505
        %v609 = vpack.c.b16 %v508, %v507
        %v610 = vpack.c.b16 %v510, %v509
        %v611 = vpack.c.b16 %v512, %v511
        %v612 = vpack.c.b16 %v514, %v513
        %v613 = vpack.c.b16 %v516, %v515
        %v614 = vpack.c.b16 %v518, %v517
        %v615 = vpack.c.b16 %v520, %v519
        %v616 = vpack.c.b16 %v522, %v521
        %v617 = vpack.c.b16 %v524, %v523
        %v618 = vpack.c.b16 %v526, %v525
        %v619 = vpack.c.b16 %v528, %v527
        %v620 = vpack.c.b16 %v530, %v529
        %v621 = vpack.c.b16 %v532, %v531
        %v622 = vpack.c.b16 %v534, %v533
        %v623 = vpack.c.b16 %v536, %v535
        %v624 = vpack.c.b16 %v538, %v537
        %v625 = vpack.c.b16 %v540, %v539
        %v626 = vpack.c.b16 %v542, %v541
        %v627 = vpack.c.b16 %v544, %v543
        %v628 = vpack.c.b16 %v546, %v545
        %v629 = vpack.c.b16 %v548, %v547
        %v630 = vpack.c.b16 %v550, %v549
        %v631 = vpack.c.b16 %v552, %v551
        %v632 = vpack.c.b16 %v554, %v553
        %v633 = vpack.c.b16 %v556, %v555
        %v634 = vpack.c.b16 %v558, %v557
        %v635 = vpack.c.b16 %v560, %v559
        %v636 = vpack.c.b16 %v562, %v561
        %v637 = vpack.c.b16 %v564, %v563
        %v638 = vpack.c.b16 %v566, %v565
        %v639 = vpack.c.b16 %v568, %v567
        %v640 = vpack.c.b16 %v570, %v569
        %v641 = vpack.c.b16 %v572, %v571
        %v642 = vpack.c.b16 %v574, %v573
        %v643 = vpack.c.b16 %v576, %v575
        %v644 = vpack.c.b16 %v578, %v577
        %v645 = vpack.c.b16 %v580, %v579
        %v646 = vpack.c.b16 %v582, %v581
        %v649 = vunpack.c.l.b16 %v318
        %v650 = vunpack.c.l.b16 %v319
        %v651 = vpack.c.b16 %v650, %v649
        %vm653 = vcmask 130048
        %v655 = vsel %vm653, %v583, 0
        %v658 = vsel %vm653, %v584, 0
        %v661 = vsel %vm653, %v585, 0
        %v664 = vsel %vm653, %v586, 0
        %v667 = vsel %vm653, %v587, 0
        %v670 = vsel %vm653, %v588, 0
        %v673 = vsel %vm653, %v589, 0
        %v676 = vsel %vm653, %v590, 0
        %v679 = vsel %vm653, %v591, 0
        %v682 = vsel %vm653, %v592, 0
        %v685 = vsel %vm653, %v593, 0
        %v688 = vsel %vm653, %v594, 0
        %v691 = vsel %vm653, %v595, 0
        %v694 = vsel %vm653, %v596, 0
        %v697 = vsel %vm653, %v597, 0
        %v700 = vsel %vm653, %v598, 0
        %v703 = vsel %vm653, %v599, 0
        %v706 = vsel %vm653, %v600, 0
        %v709 = vsel %vm653, %v601, 0
        %v712 = vsel %vm653, %v602, 0
        %v715 = vsel %vm653, %v603, 0
        %v718 = vsel %vm653, %v604, 0
        %v721 = vsel %vm653, %v605, 0
        %v724 = vsel %vm653, %v606, 0
        %v727 = vsel %vm653, %v607, 0
        %v730 = vsel %vm653, %v608, 0
        %v733 = vsel %vm653, %v609, 0
        %v736 = vsel %vm653, %v610, 0
        %v739 = vsel %vm653, %v611, 0
        %v742 = vsel %vm653, %v612, 0
        %v745 = vsel %vm653, %v613, 0
        %v748 = vsel %vm653, %v614, 0
        %v751 = vsel %vm653, %v615, 0
        %v754 = vsel %vm653, %v616, 0
        %v757 = vsel %vm653, %v617, 0
        %v760 = vsel %vm653, %v618, 0
        %v763 = vsel %vm653, %v619, 0
        %v766 = vsel %vm653, %v620, 0
        %v769 = vsel %vm653, %v621, 0
        %v772 = vsel %vm653, %v622, 0
        %v775 = vsel %vm653, %v623, 0
        %v778 = vsel %vm653, %v624, 0
        %v781 = vsel %vm653, %v625, 0
        %v784 = vsel %vm653, %v626, 0
        %v787 = vsel %vm653, %v627, 0
        %v790 = vsel %vm653, %v628, 0
        %v793 = vsel %vm653, %v629, 0
        %v796 = vsel %vm653, %v630, 0
        %v799 = vsel %vm653, %v631, 0
        %v802 = vsel %vm653, %v632, 0
        %v805 = vsel %vm653, %v633, 0
        %v808 = vsel %vm653, %v634, 0
        %v811 = vsel %vm653, %v635, 0
        %v814 = vsel %vm653, %v636, 0
        %v817 = vsel %vm653, %v637, 0
        %v820 = vsel %vm653, %v638, 0
        %v823 = vsel %vm653, %v639, 0
        %v826 = vsel %vm653, %v640, 0
        %v829 = vsel %vm653, %v641, 0
        %v832 = vsel %vm653, %v642, 0
        %v835 = vsel %vm653, %v643, 0
        %v838 = vsel %vm653, %v644, 0
        %v841 = vsel %vm653, %v645, 0
        %v844 = vsel %vm653, %v646, 0
        %846 = vmatprep.subr.bf16.mxu0 0
        %847 = vmatpush1.bf16.msra.mxu0 %v651
        %848 = vmatprep.subr.bf16.mxu0 0
        %849 = vmatpush1.bf16.msra.mxu0 0
        %850 = vmatprep.subr.bf16.mxu0 0
        %851 = vmatpush1.bf16.msra.mxu0 0
        %852 = vmatprep.subr.bf16.mxu0 0
        %853 = vmatpush1.bf16.msra.mxu0 0
        %854 = vmatprep.subr.bf16.mxu0 0
        %855 = vmatpush1.bf16.msra.mxu0 0
        %856 = vmatprep.subr.bf16.mxu0 0
        %857 = vmatpush1.bf16.msra.mxu0 0
        %858 = vmatprep.subr.bf16.mxu0 0
        %859 = vmatpush1.bf16.msra.mxu0 0
        %860 = vmatprep.subr.bf16.mxu0 0
        %861 = vmatpush1.bf16.msra.mxu0 0
        %862 = vmatprep.subr.bf16.mxu0 0
        %863 = vmatpush1.bf16.msra.mxu0 0
        %864 = vmatprep.subr.bf16.mxu0 0
        %865 = vmatpush1.bf16.msra.mxu0 0
        %866 = vmatprep.subr.bf16.mxu0 0
        %867 = vmatpush1.bf16.msra.mxu0 0
        %868 = vmatprep.subr.bf16.mxu0 0
        %869 = vmatpush1.bf16.msra.mxu0 0
        %870 = vmatprep.subr.bf16.mxu0 0
        %871 = vmatpush1.bf16.msra.mxu0 0
        %872 = vmatprep.subr.bf16.mxu0 0
        %873 = vmatpush1.bf16.msra.mxu0 0
        %874 = vmatprep.subr.bf16.mxu0 0
        %875 = vmatpush1.bf16.msra.mxu0 0
        %876 = vmatprep.subr.bf16.mxu0 0
        %877 = vmatpush1.bf16.msra.mxu0 0
        %878 = vmatprep.mubr.bf16.mxu0 0
        %879 = vmatmul.mubr.bf16.gmra.mrb[0].mxu0 %v655
        %v880 = vpop.f32.mrb[0].mxu0
        %v881 = vadd.f32 %v325, %v880
        %v882 = vpop.f32.mrb[0].mxu0
        %v883 = vpop.f32.mrb[0].mxu0
        %v884 = vadd.f32 %v325, %v883
        %v885 = vpop.f32.mrb[0].mxu0
        %886 = vmatprep.mubr.bf16.mxu0 0
        %887 = vmatmul.mubr.bf16.gmra.mrb[0].mxu0 %v658
        %v888 = vpop.f32.mrb[0].mxu0
        %v889 = vadd.f32 %v325, %v888
        %v890 = vpop.f32.mrb[0].mxu0
        %v891 = vpop.f32.mrb[0].mxu0
        %v892 = vadd.f32 %v325, %v891
        %v893 = vpop.f32.mrb[0].mxu0
        %894 = vmatprep.mubr.bf16.mxu0 0
        %895 = vmatmul.mubr.bf16.gmra.mrb[0].mxu0 %v661
        %v896 = vpop.f32.mrb[0].mxu0
        %v897 = vadd.f32 %v325, %v896
        %v898 = vpop.f32.mrb[0].mxu0
        %v899 = vpop.f32.mrb[0].mxu0
        %v900 = vadd.f32 %v325, %v899
        %v901 = vpop.f32.mrb[0].mxu0
        %902 = vmatprep.mubr.bf16.mxu0 0
        %903 = vmatmul.mubr.bf16.gmra.mrb[0].mxu0 %v664
        %v904 = vpop.f32.mrb[0].mxu0
        %v905 = vadd.f32 %v325, %v904
        %v906 = vpop.f32.mrb[0].mxu0
        %v907 = vpop.f32.mrb[0].mxu0
        %v908 = vadd.f32 %v325, %v907
        %v909 = vpop.f32.mrb[0].mxu0
        %910 = vmatprep.mubr.bf16.mxu0 0
        %911 = vmatmul.mubr.bf16.gmra.mrb[0].mxu0 %v667
        %v912 = vpop.f32.mrb[0].mxu0
        %v913 = vadd.f32 %v325, %v912
        %v914 = vpop.f32.mrb[0].mxu0
        %v915 = vpop.f32.mrb[0].mxu0
        %v916 = vadd.f32 %v325, %v915
        %v917 = vpop.f32.mrb[0].mxu0
        %918 = vmatprep.mubr.bf16.mxu0 0
        %919 = vmatmul.mubr.bf16.gmra.mrb[0].mxu0 %v670
        %v920 = vpop.f32.mrb[0].mxu0
        %v921 = vadd.f32 %v325, %v920
        %v922 = vpop.f32.mrb[0].mxu0
        %v923 = vpop.f32.mrb[0].mxu0
        %v924 = vadd.f32 %v325, %v923
        %v925 = vpop.f32.mrb[0].mxu0
        %926 = vmatprep.mubr.bf16.mxu0 0
        %927 = vmatmul.mubr.bf16.gmra.mrb[0].mxu0 %v673
        %v928 = vpop.f32.mrb[0].mxu0
        %v929 = vadd.f32 %v325, %v928
        %v930 = vpop.f32.mrb[0].mxu0
        %v931 = vpop.f32.mrb[0].mxu0
        %v932 = vadd.f32 %v325, %v931
        %v933 = vpop.f32.mrb[0].mxu0
        %934 = vmatprep.mubr.bf16.mxu0 0
        %935 = vmatmul.mubr.bf16.gmra.mrb[0].mxu0 %v676
        %v936 = vpop.f32.mrb[0].mxu0
        %v937 = vadd.f32 %v325, %v936
        %v938 = vpop.f32.mrb[0].mxu0
        %v939 = vpop.f32.mrb[0].mxu0
        %v940 = vadd.f32 %v325, %v939
        %v941 = vpop.f32.mrb[0].mxu0
        %942 = vmatprep.mubr.bf16.mxu0 0
        %943 = vmatmul.mubr.bf16.gmra.mrb[0].mxu0 %v679
        %v944 = vpop.f32.mrb[0].mxu0
        %v945 = vadd.f32 %v325, %v944
        %v946 = vpop.f32.mrb[0].mxu0
        %v947 = vpop.f32.mrb[0].mxu0
        %v948 = vadd.f32 %v325, %v947
        %v949 = vpop.f32.mrb[0].mxu0
        %950 = vmatprep.mubr.bf16.mxu0 0
        %951 = vmatmul.mubr.bf16.gmra.mrb[0].mxu0 %v682
        %v952 = vpop.f32.mrb[0].mxu0
        %v953 = vadd.f32 %v325, %v952
        %v954 = vpop.f32.mrb[0].mxu0
        %v955 = vpop.f32.mrb[0].mxu0
        %v956 = vadd.f32 %v325, %v955
        %v957 = vpop.f32.mrb[0].mxu0
        %958 = vmatprep.mubr.bf16.mxu0 0
        %959 = vmatmul.mubr.bf16.gmra.mrb[0].mxu0 %v685
        %v960 = vpop.f32.mrb[0].mxu0
        %v961 = vadd.f32 %v325, %v960
        %v962 = vpop.f32.mrb[0].mxu0
        %v963 = vpop.f32.mrb[0].mxu0
        %v964 = vadd.f32 %v325, %v963
        %v965 = vpop.f32.mrb[0].mxu0
        %966 = vmatprep.mubr.bf16.mxu0 0
        %967 = vmatmul.mubr.bf16.gmra.mrb[0].mxu0 %v688
        %v968 = vpop.f32.mrb[0].mxu0
        %v969 = vadd.f32 %v325, %v968
        %v970 = vpop.f32.mrb[0].mxu0
        %v971 = vpop.f32.mrb[0].mxu0
        %v972 = vadd.f32 %v325, %v971
        %v973 = vpop.f32.mrb[0].mxu0
        %974 = vmatprep.mubr.bf16.mxu0 0
        %975 = vmatmul.mubr.bf16.gmra.mrb[0].mxu0 %v691
        %v976 = vpop.f32.mrb[0].mxu0
        %v977 = vadd.f32 %v325, %v976
        %v978 = vpop.f32.mrb[0].mxu0
        %v979 = vpop.f32.mrb[0].mxu0
        %v980 = vadd.f32 %v325, %v979
        %v981 = vpop.f32.mrb[0].mxu0
        %982 = vmatprep.mubr.bf16.mxu0 0
        %983 = vmatmul.mubr.bf16.gmra.mrb[0].mxu0 %v694
        %v984 = vpop.f32.mrb[0].mxu0
        %v985 = vadd.f32 %v325, %v984
        %v986 = vpop.f32.mrb[0].mxu0
        %v987 = vpop.f32.mrb[0].mxu0
        %v988 = vadd.f32 %v325, %v987
        %v989 = vpop.f32.mrb[0].mxu0
        %990 = vmatprep.mubr.bf16.mxu0 0
        %991 = vmatmul.mubr.bf16.gmra.mrb[0].mxu0 %v697
        %v992 = vpop.f32.mrb[0].mxu0
        %v993 = vadd.f32 %v325, %v992
        %v994 = vpop.f32.mrb[0].mxu0
        %v995 = vpop.f32.mrb[0].mxu0
        %v996 = vadd.f32 %v325, %v995
        %v997 = vpop.f32.mrb[0].mxu0
        %998 = vmatprep.mubr.bf16.mxu0 0
        %999 = vmatmul.mubr.bf16.gmra.mrb[0].mxu0 %v700
        %v1000 = vpop.f32.mrb[0].mxu0
        %v1001 = vadd.f32 %v325, %v1000
        %v1002 = vpop.f32.mrb[0].mxu0
        %v1003 = vpop.f32.mrb[0].mxu0
        %v1004 = vadd.f32 %v325, %v1003
        %v1005 = vpop.f32.mrb[0].mxu0
        %1006 = vmatprep.mubr.bf16.mxu0 0
        %1007 = vmatmul.mubr.bf16.gmra.mrb[0].mxu0 %v703
        %v1008 = vpop.f32.mrb[0].mxu0
        %v1009 = vadd.f32 %v325, %v1008
        %v1010 = vpop.f32.mrb[0].mxu0
        %v1011 = vpop.f32.mrb[0].mxu0
        %v1012 = vadd.f32 %v325, %v1011
        %v1013 = vpop.f32.mrb[0].mxu0
        %1014 = vmatprep.mubr.bf16.mxu0 0
        %1015 = vmatmul.mubr.bf16.gmra.mrb[0].mxu0 %v706
        %v1016 = vpop.f32.mrb[0].mxu0
        %v1017 = vadd.f32 %v325, %v1016
        %v1018 = vpop.f32.mrb[0].mxu0
        %v1019 = vpop.f32.mrb[0].mxu0
        %v1020 = vadd.f32 %v325, %v1019
        %v1021 = vpop.f32.mrb[0].mxu0
        %1022 = vmatprep.mubr.bf16.mxu0 0
        %1023 = vmatmul.mubr.bf16.gmra.mrb[0].mxu0 %v709
        %v1024 = vpop.f32.mrb[0].mxu0
        %v1025 = vadd.f32 %v325, %v1024
        %v1026 = vpop.f32.mrb[0].mxu0
        %v1027 = vpop.f32.mrb[0].mxu0
        %v1028 = vadd.f32 %v325, %v1027
        %v1029 = vpop.f32.mrb[0].mxu0
        %1030 = vmatprep.mubr.bf16.mxu0 0
        %1031 = vmatmul.mubr.bf16.gmra.mrb[0].mxu0 %v712
        %v1032 = vpop.f32.mrb[0].mxu0
        %v1033 = vadd.f32 %v325, %v1032
        %v1034 = vpop.f32.mrb[0].mxu0
        %v1035 = vpop.f32.mrb[0].mxu0
        %v1036 = vadd.f32 %v325, %v1035
        %v1037 = vpop.f32.mrb[0].mxu0
        %1038 = vmatprep.mubr.bf16.mxu0 0
        %1039 = vmatmul.mubr.bf16.gmra.mrb[0].mxu0 %v715
        %v1040 = vpop.f32.mrb[0].mxu0
        %v1041 = vadd.f32 %v325, %v1040
        %v1042 = vpop.f32.mrb[0].mxu0
        %v1043 = vpop.f32.mrb[0].mxu0
        %v1044 = vadd.f32 %v325, %v1043
        %v1045 = vpop.f32.mrb[0].mxu0
        %1046 = vmatprep.mubr.bf16.mxu0 0
        %1047 = vmatmul.mubr.bf16.gmra.mrb[0].mxu0 %v718
        %v1048 = vpop.f32.mrb[0].mxu0
        %v1049 = vadd.f32 %v325, %v1048
        %v1050 = vpop.f32.mrb[0].mxu0
        %v1051 = vpop.f32.mrb[0].mxu0
        %v1052 = vadd.f32 %v325, %v1051
        %v1053 = vpop.f32.mrb[0].mxu0
        %1054 = vmatprep.mubr.bf16.mxu0 0
        %1055 = vmatmul.mubr.bf16.gmra.mrb[0].mxu0 %v721
        %v1056 = vpop.f32.mrb[0].mxu0
        %v1057 = vadd.f32 %v325, %v1056
        %v1058 = vpop.f32.mrb[0].mxu0
        %v1059 = vpop.f32.mrb[0].mxu0
        %v1060 = vadd.f32 %v325, %v1059
        %v1061 = vpop.f32.mrb[0].mxu0
        %1062 = vmatprep.mubr.bf16.mxu0 0
        %1063 = vmatmul.mubr.bf16.gmra.mrb[0].mxu0 %v724
        %v1064 = vpop.f32.mrb[0].mxu0
        %v1065 = vadd.f32 %v325, %v1064
        %v1066 = vpop.f32.mrb[0].mxu0
        %v1067 = vpop.f32.mrb[0].mxu0
        %v1068 = vadd.f32 %v325, %v1067
        %v1069 = vpop.f32.mrb[0].mxu0
        %1070 = vmatprep.mubr.bf16.mxu0 0
        %1071 = vmatmul.mubr.bf16.gmra.mrb[0].mxu0 %v727
        %v1072 = vpop.f32.mrb[0].mxu0
        %v1073 = vadd.f32 %v325, %v1072
        %v1074 = vpop.f32.mrb[0].mxu0
        %v1075 = vpop.f32.mrb[0].mxu0
        %v1076 = vadd.f32 %v325, %v1075
        %v1077 = vpop.f32.mrb[0].mxu0
        %1078 = vmatprep.mubr.bf16.mxu0 0
        %1079 = vmatmul.mubr.bf16.gmra.mrb[0].mxu0 %v730
        %v1080 = vpop.f32.mrb[0].mxu0
        %v1081 = vadd.f32 %v325, %v1080
        %v1082 = vpop.f32.mrb[0].mxu0
        %v1083 = vpop.f32.mrb[0].mxu0
        %v1084 = vadd.f32 %v325, %v1083
        %v1085 = vpop.f32.mrb[0].mxu0
        %1086 = vmatprep.mubr.bf16.mxu0 0
        %1087 = vmatmul.mubr.bf16.gmra.mrb[0].mxu0 %v733
        %v1088 = vpop.f32.mrb[0].mxu0
        %v1089 = vadd.f32 %v325, %v1088
        %v1090 = vpop.f32.mrb[0].mxu0
        %v1091 = vpop.f32.mrb[0].mxu0
        %v1092 = vadd.f32 %v325, %v1091
        %v1093 = vpop.f32.mrb[0].mxu0
        %1094 = vmatprep.mubr.bf16.mxu0 0
        %1095 = vmatmul.mubr.bf16.gmra.mrb[0].mxu0 %v736
        %v1096 = vpop.f32.mrb[0].mxu0
        %v1097 = vadd.f32 %v325, %v1096
        %v1098 = vpop.f32.mrb[0].mxu0
        %v1099 = vpop.f32.mrb[0].mxu0
        %v1100 = vadd.f32 %v325, %v1099
        %v1101 = vpop.f32.mrb[0].mxu0
        %1102 = vmatprep.mubr.bf16.mxu0 0
        %1103 = vmatmul.mubr.bf16.gmra.mrb[0].mxu0 %v739
        %v1104 = vpop.f32.mrb[0].mxu0
        %v1105 = vadd.f32 %v325, %v1104
        %v1106 = vpop.f32.mrb[0].mxu0
        %v1107 = vpop.f32.mrb[0].mxu0
        %v1108 = vadd.f32 %v325, %v1107
        %v1109 = vpop.f32.mrb[0].mxu0
        %1110 = vmatprep.mubr.bf16.mxu0 0
        %1111 = vmatmul.mubr.bf16.gmra.mrb[0].mxu0 %v742
        %v1112 = vpop.f32.mrb[0].mxu0
        %v1113 = vadd.f32 %v325, %v1112
        %v1114 = vpop.f32.mrb[0].mxu0
        %v1115 = vpop.f32.mrb[0].mxu0
        %v1116 = vadd.f32 %v325, %v1115
        %v1117 = vpop.f32.mrb[0].mxu0
        %1118 = vmatprep.mubr.bf16.mxu0 0
        %1119 = vmatmul.mubr.bf16.gmra.mrb[0].mxu0 %v745
        %v1120 = vpop.f32.mrb[0].mxu0
        %v1121 = vadd.f32 %v325, %v1120
        %v1122 = vpop.f32.mrb[0].mxu0
        %v1123 = vpop.f32.mrb[0].mxu0
        %v1124 = vadd.f32 %v325, %v1123
        %v1125 = vpop.f32.mrb[0].mxu0
        %1126 = vmatprep.mubr.bf16.mxu0 0
        %1127 = vmatmul.mubr.bf16.gmra.mrb[0].mxu0 %v748
        %v1128 = vpop.f32.mrb[0].mxu0
        %v1129 = vadd.f32 %v325, %v1128
        %v1130 = vpop.f32.mrb[0].mxu0
        %v1131 = vpop.f32.mrb[0].mxu0
        %v1132 = vadd.f32 %v325, %v1131
        %v1133 = vpop.f32.mrb[0].mxu0
        %1134 = vmatprep.mubr.bf16.mxu0 0
        %1135 = vmatmul.mubr.bf16.gmra.mrb[0].mxu0 %v751
        %v1136 = vpop.f32.mrb[0].mxu0
        %v1137 = vadd.f32 %v325, %v1136
        %v1138 = vpop.f32.mrb[0].mxu0
        %v1139 = vpop.f32.mrb[0].mxu0
        %v1140 = vadd.f32 %v325, %v1139
        %v1141 = vpop.f32.mrb[0].mxu0
        %1142 = vmatprep.mubr.bf16.mxu0 0
        %1143 = vmatmul.mubr.bf16.gmra.mrb[0].mxu0 %v754
        %v1144 = vpop.f32.mrb[0].mxu0
        %v1145 = vadd.f32 %v325, %v1144
        %v1146 = vpop.f32.mrb[0].mxu0
        %v1147 = vpop.f32.mrb[0].mxu0
        %v1148 = vadd.f32 %v325, %v1147
        %v1149 = vpop.f32.mrb[0].mxu0
        %1150 = vmatprep.mubr.bf16.mxu0 0
        %1151 = vmatmul.mubr.bf16.gmra.mrb[0].mxu0 %v757
        %v1152 = vpop.f32.mrb[0].mxu0
        %v1153 = vadd.f32 %v325, %v1152
        %v1154 = vpop.f32.mrb[0].mxu0
        %v1155 = vpop.f32.mrb[0].mxu0
        %v1156 = vadd.f32 %v325, %v1155
        %v1157 = vpop.f32.mrb[0].mxu0
        %1158 = vmatprep.mubr.bf16.mxu0 0
        %1159 = vmatmul.mubr.bf16.gmra.mrb[0].mxu0 %v760
        %v1160 = vpop.f32.mrb[0].mxu0
        %v1161 = vadd.f32 %v325, %v1160
        %v1162 = vpop.f32.mrb[0].mxu0
        %v1163 = vpop.f32.mrb[0].mxu0
        %v1164 = vadd.f32 %v325, %v1163
        %v1165 = vpop.f32.mrb[0].mxu0
        %1166 = vmatprep.mubr.bf16.mxu0 0
        %1167 = vmatmul.mubr.bf16.gmra.mrb[0].mxu0 %v763
        %v1168 = vpop.f32.mrb[0].mxu0
        %v1169 = vadd.f32 %v325, %v1168
        %v1170 = vpop.f32.mrb[0].mxu0
        %v1171 = vpop.f32.mrb[0].mxu0
        %v1172 = vadd.f32 %v325, %v1171
        %v1173 = vpop.f32.mrb[0].mxu0
        %1174 = vmatprep.mubr.bf16.mxu0 0
        %1175 = vmatmul.mubr.bf16.gmra.mrb[0].mxu0 %v766
        %v1176 = vpop.f32.mrb[0].mxu0
        %v1177 = vadd.f32 %v325, %v1176
        %v1178 = vpop.f32.mrb[0].mxu0
        %v1179 = vpop.f32.mrb[0].mxu0
        %v1180 = vadd.f32 %v325, %v1179
        %v1181 = vpop.f32.mrb[0].mxu0
        %1182 = vmatprep.mubr.bf16.mxu0 0
        %1183 = vmatmul.mubr.bf16.gmra.mrb[0].mxu0 %v769
        %v1184 = vpop.f32.mrb[0].mxu0
        %v1185 = vadd.f32 %v325, %v1184
        %v1186 = vpop.f32.mrb[0].mxu0
        %v1187 = vpop.f32.mrb[0].mxu0
        %v1188 = vadd.f32 %v325, %v1187
        %v1189 = vpop.f32.mrb[0].mxu0
        %1190 = vmatprep.mubr.bf16.mxu0 0
        %1191 = vmatmul.mubr.bf16.gmra.mrb[0].mxu0 %v772
        %v1192 = vpop.f32.mrb[0].mxu0
        %v1193 = vadd.f32 %v325, %v1192
        %v1194 = vpop.f32.mrb[0].mxu0
        %v1195 = vpop.f32.mrb[0].mxu0
        %v1196 = vadd.f32 %v325, %v1195
        %v1197 = vpop.f32.mrb[0].mxu0
        %1198 = vmatprep.mubr.bf16.mxu0 0
        %1199 = vmatmul.mubr.bf16.gmra.mrb[0].mxu0 %v775
        %v1200 = vpop.f32.mrb[0].mxu0
        %v1201 = vadd.f32 %v325, %v1200
        %v1202 = vpop.f32.mrb[0].mxu0
        %v1203 = vpop.f32.mrb[0].mxu0
        %v1204 = vadd.f32 %v325, %v1203
        %v1205 = vpop.f32.mrb[0].mxu0
        %1206 = vmatprep.mubr.bf16.mxu0 0
        %1207 = vmatmul.mubr.bf16.gmra.mrb[0].mxu0 %v778
        %v1208 = vpop.f32.mrb[0].mxu0
        %v1209 = vadd.f32 %v325, %v1208
        %v1210 = vpop.f32.mrb[0].mxu0
        %v1211 = vpop.f32.mrb[0].mxu0
        %v1212 = vadd.f32 %v325, %v1211
        %v1213 = vpop.f32.mrb[0].mxu0
        %1214 = vmatprep.mubr.bf16.mxu0 0
        %1215 = vmatmul.mubr.bf16.gmra.mrb[0].mxu0 %v781
        %v1216 = vpop.f32.mrb[0].mxu0
        %v1217 = vadd.f32 %v325, %v1216
        %v1218 = vpop.f32.mrb[0].mxu0
        %v1219 = vpop.f32.mrb[0].mxu0
        %v1220 = vadd.f32 %v325, %v1219
        %v1221 = vpop.f32.mrb[0].mxu0
        %1222 = vmatprep.mubr.bf16.mxu0 0
        %1223 = vmatmul.mubr.bf16.gmra.mrb[0].mxu0 %v784
        %v1224 = vpop.f32.mrb[0].mxu0
        %v1225 = vadd.f32 %v325, %v1224
        %v1226 = vpop.f32.mrb[0].mxu0
        %v1227 = vpop.f32.mrb[0].mxu0
        %v1228 = vadd.f32 %v325, %v1227
        %v1229 = vpop.f32.mrb[0].mxu0
        %1230 = vmatprep.mubr.bf16.mxu0 0
        %1231 = vmatmul.mubr.bf16.gmra.mrb[0].mxu0 %v787
        %v1232 = vpop.f32.mrb[0].mxu0
        %v1233 = vadd.f32 %v325, %v1232
        %v1234 = vpop.f32.mrb[0].mxu0
        %v1235 = vpop.f32.mrb[0].mxu0
        %v1236 = vadd.f32 %v325, %v1235
        %v1237 = vpop.f32.mrb[0].mxu0
        %1238 = vmatprep.mubr.bf16.mxu0 0
        %1239 = vmatmul.mubr.bf16.gmra.mrb[0].mxu0 %v790
        %v1240 = vpop.f32.mrb[0].mxu0
        %v1241 = vadd.f32 %v325, %v1240
        %v1242 = vpop.f32.mrb[0].mxu0
        %v1243 = vpop.f32.mrb[0].mxu0
        %v1244 = vadd.f32 %v325, %v1243
        %v1245 = vpop.f32.mrb[0].mxu0
        %1246 = vmatprep.mubr.bf16.mxu0 0
        %1247 = vmatmul.mubr.bf16.gmra.mrb[0].mxu0 %v793
        %v1248 = vpop.f32.mrb[0].mxu0
        %v1249 = vadd.f32 %v325, %v1248
        %v1250 = vpop.f32.mrb[0].mxu0
        %v1251 = vpop.f32.mrb[0].mxu0
        %v1252 = vadd.f32 %v325, %v1251
        %v1253 = vpop.f32.mrb[0].mxu0
        %1254 = vmatprep.mubr.bf16.mxu0 0
        %1255 = vmatmul.mubr.bf16.gmra.mrb[0].mxu0 %v796
        %v1256 = vpop.f32.mrb[0].mxu0
        %v1257 = vadd.f32 %v325, %v1256
        %v1258 = vpop.f32.mrb[0].mxu0
        %v1259 = vpop.f32.mrb[0].mxu0
        %v1260 = vadd.f32 %v325, %v1259
        %v1261 = vpop.f32.mrb[0].mxu0
        %1262 = vmatprep.mubr.bf16.mxu0 0
        %1263 = vmatmul.mubr.bf16.gmra.mrb[0].mxu0 %v799
        %v1264 = vpop.f32.mrb[0].mxu0
        %v1265 = vadd.f32 %v325, %v1264
        %v1266 = vpop.f32.mrb[0].mxu0
        %v1267 = vpop.f32.mrb[0].mxu0
        %v1268 = vadd.f32 %v325, %v1267
        %v1269 = vpop.f32.mrb[0].mxu0
        %1270 = vmatprep.mubr.bf16.mxu0 0
        %1271 = vmatmul.mubr.bf16.gmra.mrb[0].mxu0 %v802
        %v1272 = vpop.f32.mrb[0].mxu0
        %v1273 = vadd.f32 %v325, %v1272
        %v1274 = vpop.f32.mrb[0].mxu0
        %v1275 = vpop.f32.mrb[0].mxu0
        %v1276 = vadd.f32 %v325, %v1275
        %v1277 = vpop.f32.mrb[0].mxu0
        %1278 = vmatprep.mubr.bf16.mxu0 0
        %1279 = vmatmul.mubr.bf16.gmra.mrb[0].mxu0 %v805
        %v1280 = vpop.f32.mrb[0].mxu0
        %v1281 = vadd.f32 %v325, %v1280
        %v1282 = vpop.f32.mrb[0].mxu0
        %v1283 = vpop.f32.mrb[0].mxu0
        %v1284 = vadd.f32 %v325, %v1283
        %v1285 = vpop.f32.mrb[0].mxu0
        %1286 = vmatprep.mubr.bf16.mxu0 0
        %1287 = vmatmul.mubr.bf16.gmra.mrb[0].mxu0 %v808
        %v1288 = vpop.f32.mrb[0].mxu0
        %v1289 = vadd.f32 %v325, %v1288
        %v1290 = vpop.f32.mrb[0].mxu0
        %v1291 = vpop.f32.mrb[0].mxu0
        %v1292 = vadd.f32 %v325, %v1291
        %v1293 = vpop.f32.mrb[0].mxu0
        %1294 = vmatprep.mubr.bf16.mxu0 0
        %1295 = vmatmul.mubr.bf16.gmra.mrb[0].mxu0 %v811
        %v1296 = vpop.f32.mrb[0].mxu0
        %v1297 = vadd.f32 %v325, %v1296
        %v1298 = vpop.f32.mrb[0].mxu0
        %v1299 = vpop.f32.mrb[0].mxu0
        %v1300 = vadd.f32 %v325, %v1299
        %v1301 = vpop.f32.mrb[0].mxu0
        %1302 = vmatprep.mubr.bf16.mxu0 0
        %1303 = vmatmul.mubr.bf16.gmra.mrb[0].mxu0 %v814
        %v1304 = vpop.f32.mrb[0].mxu0
        %v1305 = vadd.f32 %v325, %v1304
        %v1306 = vpop.f32.mrb[0].mxu0
        %v1307 = vpop.f32.mrb[0].mxu0
        %v1308 = vadd.f32 %v325, %v1307
        %v1309 = vpop.f32.mrb[0].mxu0
        %1310 = vmatprep.mubr.bf16.mxu0 0
        %1311 = vmatmul.mubr.bf16.gmra.mrb[0].mxu0 %v817
        %v1312 = vpop.f32.mrb[0].mxu0
        %v1313 = vadd.f32 %v325, %v1312
        %v1314 = vpop.f32.mrb[0].mxu0
        %v1315 = vpop.f32.mrb[0].mxu0
        %v1316 = vadd.f32 %v325, %v1315
        %v1317 = vpop.f32.mrb[0].mxu0
        %1318 = vmatprep.mubr.bf16.mxu0 0
        %1319 = vmatmul.mubr.bf16.gmra.mrb[0].mxu0 %v820
        %v1320 = vpop.f32.mrb[0].mxu0
        %v1321 = vadd.f32 %v325, %v1320
        %v1322 = vpop.f32.mrb[0].mxu0
        %v1323 = vpop.f32.mrb[0].mxu0
        %v1324 = vadd.f32 %v325, %v1323
        %v1325 = vpop.f32.mrb[0].mxu0
        %1326 = vmatprep.mubr.bf16.mxu0 0
        %1327 = vmatmul.mubr.bf16.gmra.mrb[0].mxu0 %v823
        %v1328 = vpop.f32.mrb[0].mxu0
        %v1329 = vadd.f32 %v325, %v1328
        %v1330 = vpop.f32.mrb[0].mxu0
        %v1331 = vpop.f32.mrb[0].mxu0
        %v1332 = vadd.f32 %v325, %v1331
        %v1333 = vpop.f32.mrb[0].mxu0
        %1334 = vmatprep.mubr.bf16.mxu0 0
        %1335 = vmatmul.mubr.bf16.gmra.mrb[0].mxu0 %v826
        %v1336 = vpop.f32.mrb[0].mxu0
        %v1337 = vadd.f32 %v325, %v1336
        %v1338 = vpop.f32.mrb[0].mxu0
        %v1339 = vpop.f32.mrb[0].mxu0
        %v1340 = vadd.f32 %v325, %v1339
        %v1341 = vpop.f32.mrb[0].mxu0
        %1342 = vmatprep.mubr.bf16.mxu0 0
        %1343 = vmatmul.mubr.bf16.gmra.mrb[0].mxu0 %v829
        %v1344 = vpop.f32.mrb[0].mxu0
        %v1345 = vadd.f32 %v325, %v1344
        %v1346 = vpop.f32.mrb[0].mxu0
        %v1347 = vpop.f32.mrb[0].mxu0
        %v1348 = vadd.f32 %v325, %v1347
        %v1349 = vpop.f32.mrb[0].mxu0
        %1350 = vmatprep.mubr.bf16.mxu0 0
        %1351 = vmatmul.mubr.bf16.gmra.mrb[0].mxu0 %v832
        %v1352 = vpop.f32.mrb[0].mxu0
        %v1353 = vadd.f32 %v325, %v1352
        %v1354 = vpop.f32.mrb[0].mxu0
        %v1355 = vpop.f32.mrb[0].mxu0
        %v1356 = vadd.f32 %v325, %v1355
        %v1357 = vpop.f32.mrb[0].mxu0
        %1358 = vmatprep.mubr.bf16.mxu0 0
        %1359 = vmatmul.mubr.bf16.gmra.mrb[0].mxu0 %v835
        %v1360 = vpop.f32.mrb[0].mxu0
        %v1361 = vadd.f32 %v325, %v1360
        %v1362 = vpop.f32.mrb[0].mxu0
        %v1363 = vpop.f32.mrb[0].mxu0
        %v1364 = vadd.f32 %v325, %v1363
        %v1365 = vpop.f32.mrb[0].mxu0
        %1366 = vmatprep.mubr.bf16.mxu0 0
        %1367 = vmatmul.mubr.bf16.gmra.mrb[0].mxu0 %v838
        %v1368 = vpop.f32.mrb[0].mxu0
        %v1369 = vadd.f32 %v325, %v1368
        %v1370 = vpop.f32.mrb[0].mxu0
        %v1371 = vpop.f32.mrb[0].mxu0
        %v1372 = vadd.f32 %v325, %v1371
        %v1373 = vpop.f32.mrb[0].mxu0
        %1374 = vmatprep.mubr.bf16.mxu0 0
        %1375 = vmatmul.mubr.bf16.gmra.mrb[0].mxu0 %v841
        %v1376 = vpop.f32.mrb[0].mxu0
        %v1377 = vadd.f32 %v325, %v1376
        %v1378 = vpop.f32.mrb[0].mxu0
        %v1379 = vpop.f32.mrb[0].mxu0
        %v1380 = vadd.f32 %v325, %v1379
        %v1381 = vpop.f32.mrb[0].mxu0
        %1382 = vmatprep.mubr.bf16.mxu0 0
        %1383 = vmatmul.mubr.bf16.gmra.mrb[0].mxu0 %v844
        %v1384 = vpop.f32.mrb[0].mxu0
        %v1385 = vadd.f32 %v325, %v1384
        %v1386 = vpop.f32.mrb[0].mxu0
        %v1387 = vpop.f32.mrb[0].mxu0
        %v1388 = vadd.f32 %v325, %v1387
        %v1389 = vpop.f32.mrb[0].mxu0
        %1390 = vdwg.mxu0
        %v1391 = vmax.f32 %v881, 0.0
        %v1392 = vmax.f32 %v884, 0.0
        %v1393 = vmax.f32 %v889, 0.0
        %v1394 = vmax.f32 %v892, 0.0
        %v1395 = vmax.f32 %v897, 0.0
        %v1396 = vmax.f32 %v900, 0.0
        %v1397 = vmax.f32 %v905, 0.0
        %v1398 = vmax.f32 %v908, 0.0
        %v1399 = vmax.f32 %v913, 0.0
        %v1400 = vmax.f32 %v916, 0.0
        %v1401 = vmax.f32 %v921, 0.0
        %v1402 = vmax.f32 %v924, 0.0
        %v1403 = vmax.f32 %v929, 0.0
        %v1404 = vmax.f32 %v932, 0.0
        %v1405 = vmax.f32 %v937, 0.0
        %v1406 = vmax.f32 %v940, 0.0
        %v1407 = vmax.f32 %v945, 0.0
        %v1408 = vmax.f32 %v948, 0.0
        %v1409 = vmax.f32 %v953, 0.0
        %v1410 = vmax.f32 %v956, 0.0
        %v1411 = vmax.f32 %v961, 0.0
        %v1412 = vmax.f32 %v964, 0.0
        %v1413 = vmax.f32 %v969, 0.0
        %v1414 = vmax.f32 %v972, 0.0
        %v1415 = vmax.f32 %v977, 0.0
        %v1416 = vmax.f32 %v980, 0.0
        %v1417 = vmax.f32 %v985, 0.0
        %v1418 = vmax.f32 %v988, 0.0
        %v1419 = vmax.f32 %v993, 0.0
        %v1420 = vmax.f32 %v996, 0.0
        %v1421 = vmax.f32 %v1001, 0.0
        %v1422 = vmax.f32 %v1004, 0.0
        %v1423 = vmax.f32 %v1009, 0.0
        %v1424 = vmax.f32 %v1012, 0.0
        %v1425 = vmax.f32 %v1017, 0.0
        %v1426 = vmax.f32 %v1020, 0.0
        %v1427 = vmax.f32 %v1025, 0.0
        %v1428 = vmax.f32 %v1028, 0.0
        %v1429 = vmax.f32 %v1033, 0.0
        %v1430 = vmax.f32 %v1036, 0.0
        %v1431 = vmax.f32 %v1041, 0.0
        %v1432 = vmax.f32 %v1044, 0.0
        %v1433 = vmax.f32 %v1049, 0.0
        %v1434 = vmax.f32 %v1052, 0.0
        %v1435 = vmax.f32 %v1057, 0.0
        %v1436 = vmax.f32 %v1060, 0.0
        %v1437 = vmax.f32 %v1065, 0.0
        %v1438 = vmax.f32 %v1068, 0.0
        %v1439 = vmax.f32 %v1073, 0.0
        %v1440 = vmax.f32 %v1076, 0.0
        %v1441 = vmax.f32 %v1081, 0.0
        %v1442 = vmax.f32 %v1084, 0.0
        %v1443 = vmax.f32 %v1089, 0.0
        %v1444 = vmax.f32 %v1092, 0.0
        %v1445 = vmax.f32 %v1097, 0.0
        %v1446 = vmax.f32 %v1100, 0.0
        %v1447 = vmax.f32 %v1105, 0.0
        %v1448 = vmax.f32 %v1108, 0.0
        %v1449 = vmax.f32 %v1113, 0.0
        %v1450 = vmax.f32 %v1116, 0.0
        %v1451 = vmax.f32 %v1121, 0.0
        %v1452 = vmax.f32 %v1124, 0.0
        %v1453 = vmax.f32 %v1129, 0.0
        %v1454 = vmax.f32 %v1132, 0.0
        %v1455 = vmax.f32 %v1137, 0.0
        %v1456 = vmax.f32 %v1140, 0.0
        %v1457 = vmax.f32 %v1145, 0.0
        %v1458 = vmax.f32 %v1148, 0.0
        %v1459 = vmax.f32 %v1153, 0.0
        %v1460 = vmax.f32 %v1156, 0.0
        %v1461 = vmax.f32 %v1161, 0.0
        %v1462 = vmax.f32 %v1164, 0.0
        %v1463 = vmax.f32 %v1169, 0.0
        %v1464 = vmax.f32 %v1172, 0.0
        %v1465 = vmax.f32 %v1177, 0.0
        %v1466 = vmax.f32 %v1180, 0.0
        %v1467 = vmax.f32 %v1185, 0.0
        %v1468 = vmax.f32 %v1188, 0.0
        %v1469 = vmax.f32 %v1193, 0.0
        %v1470 = vmax.f32 %v1196, 0.0
        %v1471 = vmax.f32 %v1201, 0.0
        %v1472 = vmax.f32 %v1204, 0.0
        %v1473 = vmax.f32 %v1209, 0.0
        %v1474 = vmax.f32 %v1212, 0.0
        %v1475 = vmax.f32 %v1217, 0.0
        %v1476 = vmax.f32 %v1220, 0.0
        %v1477 = vmax.f32 %v1225, 0.0
        %v1478 = vmax.f32 %v1228, 0.0
        %v1479 = vmax.f32 %v1233, 0.0
        %v1480 = vmax.f32 %v1236, 0.0
        %v1481 = vmax.f32 %v1241, 0.0
        %v1482 = vmax.f32 %v1244, 0.0
        %v1483 = vmax.f32 %v1249, 0.0
        %v1484 = vmax.f32 %v1252, 0.0
        %v1485 = vmax.f32 %v1257, 0.0
        %v1486 = vmax.f32 %v1260, 0.0
        %v1487 = vmax.f32 %v1265, 0.0
        %v1488 = vmax.f32 %v1268, 0.0
        %v1489 = vmax.f32 %v1273, 0.0
        %v1490 = vmax.f32 %v1276, 0.0
        %v1491 = vmax.f32 %v1281, 0.0
        %v1492 = vmax.f32 %v1284, 0.0
        %v1493 = vmax.f32 %v1289, 0.0
        %v1494 = vmax.f32 %v1292, 0.0
        %v1495 = vmax.f32 %v1297, 0.0
        %v1496 = vmax.f32 %v1300, 0.0
        %v1497 = vmax.f32 %v1305, 0.0
        %v1498 = vmax.f32 %v1308, 0.0
        %v1499 = vmax.f32 %v1313, 0.0
        %v1500 = vmax.f32 %v1316, 0.0
        %v1501 = vmax.f32 %v1321, 0.0
        %v1502 = vmax.f32 %v1324, 0.0
        %v1503 = vmax.f32 %v1329, 0.0
        %v1504 = vmax.f32 %v1332, 0.0
        %v1505 = vmax.f32 %v1337, 0.0
        %v1506 = vmax.f32 %v1340, 0.0
        %v1507 = vmax.f32 %v1345, 0.0
        %v1508 = vmax.f32 %v1348, 0.0
        %v1509 = vmax.f32 %v1353, 0.0
        %v1510 = vmax.f32 %v1356, 0.0
        %v1511 = vmax.f32 %v1361, 0.0
        %v1512 = vmax.f32 %v1364, 0.0
        %v1513 = vmax.f32 %v1369, 0.0
        %v1514 = vmax.f32 %v1372, 0.0
        %v1515 = vmax.f32 %v1377, 0.0
        %v1516 = vmax.f32 %v1380, 0.0
        %v1517 = vmax.f32 %v1385, 0.0
        %v1518 = vmax.f32 %v1388, 0.0
        %v1519 = vpack.c.bf16 %v1392, %v1391
        %v1520 = vpack.c.bf16 %v1394, %v1393
        %v1521 = vpack.c.bf16 %v1396, %v1395
        %v1522 = vpack.c.bf16 %v1398, %v1397
        %v1523 = vpack.c.bf16 %v1400, %v1399
        %v1524 = vpack.c.bf16 %v1402, %v1401
        %v1525 = vpack.c.bf16 %v1404, %v1403
        %v1526 = vpack.c.bf16 %v1406, %v1405
        %v1527 = vpack.c.bf16 %v1408, %v1407
        %v1528 = vpack.c.bf16 %v1410, %v1409
        %v1529 = vpack.c.bf16 %v1412, %v1411
        %v1530 = vpack.c.bf16 %v1414, %v1413
        %v1531 = vpack.c.bf16 %v1416, %v1415
        %v1532 = vpack.c.bf16 %v1418, %v1417
        %v1533 = vpack.c.bf16 %v1420, %v1419
        %v1534 = vpack.c.bf16 %v1422, %v1421
        %v1535 = vpack.c.bf16 %v1424, %v1423
        %v1536 = vpack.c.bf16 %v1426, %v1425
        %v1537 = vpack.c.bf16 %v1428, %v1427
        %v1538 = vpack.c.bf16 %v1430, %v1429
        %v1539 = vpack.c.bf16 %v1432, %v1431
        %v1540 = vpack.c.bf16 %v1434, %v1433
        %v1541 = vpack.c.bf16 %v1436, %v1435
        %v1542 = vpack.c.bf16 %v1438, %v1437
        %v1543 = vpack.c.bf16 %v1440, %v1439
        %v1544 = vpack.c.bf16 %v1442, %v1441
        %v1545 = vpack.c.bf16 %v1444, %v1443
        %v1546 = vpack.c.bf16 %v1446, %v1445
        %v1547 = vpack.c.bf16 %v1448, %v1447
        %v1548 = vpack.c.bf16 %v1450, %v1449
        %v1549 = vpack.c.bf16 %v1452, %v1451
        %v1550 = vpack.c.bf16 %v1454, %v1453
        %v1551 = vpack.c.bf16 %v1456, %v1455
        %v1552 = vpack.c.bf16 %v1458, %v1457
        %v1553 = vpack.c.bf16 %v1460, %v1459
        %v1554 = vpack.c.bf16 %v1462, %v1461
        %v1555 = vpack.c.bf16 %v1464, %v1463
        %v1556 = vpack.c.bf16 %v1466, %v1465
        %v1557 = vpack.c.bf16 %v1468, %v1467
        %v1558 = vpack.c.bf16 %v1470, %v1469
        %v1559 = vpack.c.bf16 %v1472, %v1471
        %v1560 = vpack.c.bf16 %v1474, %v1473
        %v1561 = vpack.c.bf16 %v1476, %v1475
        %v1562 = vpack.c.bf16 %v1478, %v1477
        %v1563 = vpack.c.bf16 %v1480, %v1479
        %v1564 = vpack.c.bf16 %v1482, %v1481
        %v1565 = vpack.c.bf16 %v1484, %v1483
        %v1566 = vpack.c.bf16 %v1486, %v1485
        %v1567 = vpack.c.bf16 %v1488, %v1487
        %v1568 = vpack.c.bf16 %v1490, %v1489
        %v1569 = vpack.c.bf16 %v1492, %v1491
        %v1570 = vpack.c.bf16 %v1494, %v1493
        %v1571 = vpack.c.bf16 %v1496, %v1495
        %v1572 = vpack.c.bf16 %v1498, %v1497
        %v1573 = vpack.c.bf16 %v1500, %v1499
        %v1574 = vpack.c.bf16 %v1502, %v1501
        %v1575 = vpack.c.bf16 %v1504, %v1503
        %v1576 = vpack.c.bf16 %v1506, %v1505
        %v1577 = vpack.c.bf16 %v1508, %v1507
        %v1578 = vpack.c.bf16 %v1510, %v1509
        %v1579 = vpack.c.bf16 %v1512, %v1511
        %v1580 = vpack.c.bf16 %v1514, %v1513
        %v1581 = vpack.c.bf16 %v1516, %v1515
        %v1582 = vpack.c.bf16 %v1518, %v1517
        %v1647 = vunpack.c.l.b16 %v1519
        %v1648 = vunpack.c.h.b16 %v1519
        %v1649 = vunpack.c.l.b16 %v1520
        %v1650 = vunpack.c.h.b16 %v1520
        %v1651 = vunpack.c.l.b16 %v1521
        %v1652 = vunpack.c.h.b16 %v1521
        %v1653 = vunpack.c.l.b16 %v1522
        %v1654 = vunpack.c.h.b16 %v1522
        %v1655 = vunpack.c.l.b16 %v1523
        %v1656 = vunpack.c.h.b16 %v1523
        %v1657 = vunpack.c.l.b16 %v1524
        %v1658 = vunpack.c.h.b16 %v1524
        %v1659 = vunpack.c.l.b16 %v1525
        %v1660 = vunpack.c.h.b16 %v1525
        %v1661 = vunpack.c.l.b16 %v1526
        %v1662 = vunpack.c.h.b16 %v1526
        %v1663 = vunpack.c.l.b16 %v1527
        %v1664 = vunpack.c.h.b16 %v1527
        %v1665 = vunpack.c.l.b16 %v1528
        %v1666 = vunpack.c.h.b16 %v1528
        %v1667 = vunpack.c.l.b16 %v1529
        %v1668 = vunpack.c.h.b16 %v1529
        %v1669 = vunpack.c.l.b16 %v1530
        %v1670 = vunpack.c.h.b16 %v1530
        %v1671 = vunpack.c.l.b16 %v1531
        %v1672 = vunpack.c.h.b16 %v1531
        %v1673 = vunpack.c.l.b16 %v1532
        %v1674 = vunpack.c.h.b16 %v1532
        %v1675 = vunpack.c.l.b16 %v1533
        %v1676 = vunpack.c.h.b16 %v1533
        %v1677 = vunpack.c.l.b16 %v1534
        %v1678 = vunpack.c.h.b16 %v1534
        %v1679 = vunpack.c.l.b16 %v1535
        %v1680 = vunpack.c.h.b16 %v1535
        %v1681 = vunpack.c.l.b16 %v1536
        %v1682 = vunpack.c.h.b16 %v1536
        %v1683 = vunpack.c.l.b16 %v1537
        %v1684 = vunpack.c.h.b16 %v1537
        %v1685 = vunpack.c.l.b16 %v1538
        %v1686 = vunpack.c.h.b16 %v1538
        %v1687 = vunpack.c.l.b16 %v1539
        %v1688 = vunpack.c.h.b16 %v1539
        %v1689 = vunpack.c.l.b16 %v1540
        %v1690 = vunpack.c.h.b16 %v1540
        %v1691 = vunpack.c.l.b16 %v1541
        %v1692 = vunpack.c.h.b16 %v1541
        %v1693 = vunpack.c.l.b16 %v1542
        %v1694 = vunpack.c.h.b16 %v1542
        %v1695 = vunpack.c.l.b16 %v1543
        %v1696 = vunpack.c.h.b16 %v1543
        %v1697 = vunpack.c.l.b16 %v1544
        %v1698 = vunpack.c.h.b16 %v1544
        %v1699 = vunpack.c.l.b16 %v1545
        %v1700 = vunpack.c.h.b16 %v1545
        %v1701 = vunpack.c.l.b16 %v1546
        %v1702 = vunpack.c.h.b16 %v1546
        %v1703 = vunpack.c.l.b16 %v1547
        %v1704 = vunpack.c.h.b16 %v1547
        %v1705 = vunpack.c.l.b16 %v1548
        %v1706 = vunpack.c.h.b16 %v1548
        %v1707 = vunpack.c.l.b16 %v1549
        %v1708 = vunpack.c.h.b16 %v1549
        %v1709 = vunpack.c.l.b16 %v1550
        %v1710 = vunpack.c.h.b16 %v1550
        %v1711 = vunpack.c.l.b16 %v1551
        %v1712 = vunpack.c.h.b16 %v1551
        %v1713 = vunpack.c.l.b16 %v1552
        %v1714 = vunpack.c.h.b16 %v1552
        %v1715 = vunpack.c.l.b16 %v1553
        %v1716 = vunpack.c.h.b16 %v1553
        %v1717 = vunpack.c.l.b16 %v1554
        %v1718 = vunpack.c.h.b16 %v1554
        %v1719 = vunpack.c.l.b16 %v1555
        %v1720 = vunpack.c.h.b16 %v1555
        %v1721 = vunpack.c.l.b16 %v1556
        %v1722 = vunpack.c.h.b16 %v1556
        %v1723 = vunpack.c.l.b16 %v1557
        %v1724 = vunpack.c.h.b16 %v1557
        %v1725 = vunpack.c.l.b16 %v1558
        %v1726 = vunpack.c.h.b16 %v1558
        %v1727 = vunpack.c.l.b16 %v1559
        %v1728 = vunpack.c.h.b16 %v1559
        %v1729 = vunpack.c.l.b16 %v1560
        %v1730 = vunpack.c.h.b16 %v1560
        %v1731 = vunpack.c.l.b16 %v1561
        %v1732 = vunpack.c.h.b16 %v1561
        %v1733 = vunpack.c.l.b16 %v1562
        %v1734 = vunpack.c.h.b16 %v1562
        %v1735 = vunpack.c.l.b16 %v1563
        %v1736 = vunpack.c.h.b16 %v1563
        %v1737 = vunpack.c.l.b16 %v1564
        %v1738 = vunpack.c.h.b16 %v1564
        %v1739 = vunpack.c.l.b16 %v1565
        %v1740 = vunpack.c.h.b16 %v1565
        %v1741 = vunpack.c.l.b16 %v1566
        %v1742 = vunpack.c.h.b16 %v1566
        %v1743 = vunpack.c.l.b16 %v1567
        %v1744 = vunpack.c.h.b16 %v1567
        %v1745 = vunpack.c.l.b16 %v1568
        %v1746 = vunpack.c.h.b16 %v1568
        %v1747 = vunpack.c.l.b16 %v1569
        %v1748 = vunpack.c.h.b16 %v1569
        %v1749 = vunpack.c.l.b16 %v1570
        %v1750 = vunpack.c.h.b16 %v1570
        %v1751 = vunpack.c.l.b16 %v1571
        %v1752 = vunpack.c.h.b16 %v1571
        %v1753 = vunpack.c.l.b16 %v1572
        %v1754 = vunpack.c.h.b16 %v1572
        %v1755 = vunpack.c.l.b16 %v1573
        %v1756 = vunpack.c.h.b16 %v1573
        %v1757 = vunpack.c.l.b16 %v1574
        %v1758 = vunpack.c.h.b16 %v1574
        %v1759 = vunpack.c.l.b16 %v1575
        %v1760 = vunpack.c.h.b16 %v1575
        %v1761 = vunpack.c.l.b16 %v1576
        %v1762 = vunpack.c.h.b16 %v1576
        %v1763 = vunpack.c.l.b16 %v1577
        %v1764 = vunpack.c.h.b16 %v1577
        %v1765 = vunpack.c.l.b16 %v1578
        %v1766 = vunpack.c.h.b16 %v1578
        %v1767 = vunpack.c.l.b16 %v1579
        %v1768 = vunpack.c.h.b16 %v1579
        %v1769 = vunpack.c.l.b16 %v1580
        %v1770 = vunpack.c.h.b16 %v1580
        %v1771 = vunpack.c.l.b16 %v1581
        %v1772 = vunpack.c.h.b16 %v1581
        %v1773 = vunpack.c.l.b16 %v1582
        %v1774 = vunpack.c.h.b16 %v1582
        %v1775 = vpack.c.b16 %v1647, %v1647
        %v1776 = vpack.c.b16 %v1648, %v1648
        %v1777 = vpack.c.b16 %v1649, %v1649
        %v1778 = vpack.c.b16 %v1650, %v1650
        %v1779 = vpack.c.b16 %v1651, %v1651
        %v1780 = vpack.c.b16 %v1652, %v1652
        %v1781 = vpack.c.b16 %v1653, %v1653
        %v1782 = vpack.c.b16 %v1654, %v1654
        %v1783 = vpack.c.b16 %v1655, %v1655
        %v1784 = vpack.c.b16 %v1656, %v1656
        %v1785 = vpack.c.b16 %v1657, %v1657
        %v1786 = vpack.c.b16 %v1658, %v1658
        %v1787 = vpack.c.b16 %v1659, %v1659
        %v1788 = vpack.c.b16 %v1660, %v1660
        %v1789 = vpack.c.b16 %v1661, %v1661
        %v1790 = vpack.c.b16 %v1662, %v1662
        %v1791 = vpack.c.b16 %v1663, %v1663
        %v1792 = vpack.c.b16 %v1664, %v1664
        %v1793 = vpack.c.b16 %v1665, %v1665
        %v1794 = vpack.c.b16 %v1666, %v1666
        %v1795 = vpack.c.b16 %v1667, %v1667
        %v1796 = vpack.c.b16 %v1668, %v1668
        %v1797 = vpack.c.b16 %v1669, %v1669
        %v1798 = vpack.c.b16 %v1670, %v1670
        %v1799 = vpack.c.b16 %v1671, %v1671
        %v1800 = vpack.c.b16 %v1672, %v1672
        %v1801 = vpack.c.b16 %v1673, %v1673
        %v1802 = vpack.c.b16 %v1674, %v1674
        %v1803 = vpack.c.b16 %v1675, %v1675
        %v1804 = vpack.c.b16 %v1676, %v1676
        %v1805 = vpack.c.b16 %v1677, %v1677
        %v1806 = vpack.c.b16 %v1678, %v1678
        %v1807 = vpack.c.b16 %v1679, %v1679
        %v1808 = vpack.c.b16 %v1680, %v1680
        %v1809 = vpack.c.b16 %v1681, %v1681
        %v1810 = vpack.c.b16 %v1682, %v1682
        %v1811 = vpack.c.b16 %v1683, %v1683
        %v1812 = vpack.c.b16 %v1684, %v1684
        %v1813 = vpack.c.b16 %v1685, %v1685
        %v1814 = vpack.c.b16 %v1686, %v1686
        %v1815 = vpack.c.b16 %v1687, %v1687
        %v1816 = vpack.c.b16 %v1688, %v1688
        %v1817 = vpack.c.b16 %v1689, %v1689
        %v1818 = vpack.c.b16 %v1690, %v1690
        %v1819 = vpack.c.b16 %v1691, %v1691
        %v1820 = vpack.c.b16 %v1692, %v1692
        %v1821 = vpack.c.b16 %v1693, %v1693
        %v1822 = vpack.c.b16 %v1694, %v1694
        %v1823 = vpack.c.b16 %v1695, %v1695
        %v1824 = vpack.c.b16 %v1696, %v1696
        %v1825 = vpack.c.b16 %v1697, %v1697
        %v1826 = vpack.c.b16 %v1698, %v1698
        %v1827 = vpack.c.b16 %v1699, %v1699
        %v1828 = vpack.c.b16 %v1700, %v1700
        %v1829 = vpack.c.b16 %v1701, %v1701
        %v1830 = vpack.c.b16 %v1702, %v1702
        %v1831 = vpack.c.b16 %v1703, %v1703
        %v1832 = vpack.c.b16 %v1704, %v1704
        %v1833 = vpack.c.b16 %v1705, %v1705
        %v1834 = vpack.c.b16 %v1706, %v1706
        %v1835 = vpack.c.b16 %v1707, %v1707
        %v1836 = vpack.c.b16 %v1708, %v1708
        %v1837 = vpack.c.b16 %v1709, %v1709
        %v1838 = vpack.c.b16 %v1710, %v1710
        %v1839 = vpack.c.b16 %v1711, %v1711
        %v1840 = vpack.c.b16 %v1712, %v1712
        %v1841 = vpack.c.b16 %v1713, %v1713
        %v1842 = vpack.c.b16 %v1714, %v1714
        %v1843 = vpack.c.b16 %v1715, %v1715
        %v1844 = vpack.c.b16 %v1716, %v1716
        %v1845 = vpack.c.b16 %v1717, %v1717
        %v1846 = vpack.c.b16 %v1718, %v1718
        %v1847 = vpack.c.b16 %v1719, %v1719
        %v1848 = vpack.c.b16 %v1720, %v1720
        %v1849 = vpack.c.b16 %v1721, %v1721
        %v1850 = vpack.c.b16 %v1722, %v1722
        %v1851 = vpack.c.b16 %v1723, %v1723
        %v1852 = vpack.c.b16 %v1724, %v1724
        %v1853 = vpack.c.b16 %v1725, %v1725
        %v1854 = vpack.c.b16 %v1726, %v1726
        %v1855 = vpack.c.b16 %v1727, %v1727
        %v1856 = vpack.c.b16 %v1728, %v1728
        %v1857 = vpack.c.b16 %v1729, %v1729
        %v1858 = vpack.c.b16 %v1730, %v1730
        %v1859 = vpack.c.b16 %v1731, %v1731
        %v1860 = vpack.c.b16 %v1732, %v1732
        %v1861 = vpack.c.b16 %v1733, %v1733
        %v1862 = vpack.c.b16 %v1734, %v1734
        %v1863 = vpack.c.b16 %v1735, %v1735
        %v1864 = vpack.c.b16 %v1736, %v1736
        %v1865 = vpack.c.b16 %v1737, %v1737
        %v1866 = vpack.c.b16 %v1738, %v1738
        %v1867 = vpack.c.b16 %v1739, %v1739
        %v1868 = vpack.c.b16 %v1740, %v1740
        %v1869 = vpack.c.b16 %v1741, %v1741
        %v1870 = vpack.c.b16 %v1742, %v1742
        %v1871 = vpack.c.b16 %v1743, %v1743
        %v1872 = vpack.c.b16 %v1744, %v1744
        %v1873 = vpack.c.b16 %v1745, %v1745
        %v1874 = vpack.c.b16 %v1746, %v1746
        %v1875 = vpack.c.b16 %v1747, %v1747
        %v1876 = vpack.c.b16 %v1748, %v1748
        %v1877 = vpack.c.b16 %v1749, %v1749
        %v1878 = vpack.c.b16 %v1750, %v1750
        %v1879 = vpack.c.b16 %v1751, %v1751
        %v1880 = vpack.c.b16 %v1752, %v1752
        %v1881 = vpack.c.b16 %v1753, %v1753
        %v1882 = vpack.c.b16 %v1754, %v1754
        %v1883 = vpack.c.b16 %v1755, %v1755
        %v1884 = vpack.c.b16 %v1756, %v1756
        %v1885 = vpack.c.b16 %v1757, %v1757
        %v1886 = vpack.c.b16 %v1758, %v1758
        %v1887 = vpack.c.b16 %v1759, %v1759
        %v1888 = vpack.c.b16 %v1760, %v1760
        %v1889 = vpack.c.b16 %v1761, %v1761
        %v1890 = vpack.c.b16 %v1762, %v1762
        %v1891 = vpack.c.b16 %v1763, %v1763
        %v1892 = vpack.c.b16 %v1764, %v1764
        %v1893 = vpack.c.b16 %v1765, %v1765
        %v1894 = vpack.c.b16 %v1766, %v1766
        %v1895 = vpack.c.b16 %v1767, %v1767
        %v1896 = vpack.c.b16 %v1768, %v1768
        %v1897 = vpack.c.b16 %v1769, %v1769
        %v1898 = vpack.c.b16 %v1770, %v1770
        %v1899 = vpack.c.b16 %v1771, %v1771
        %v1900 = vpack.c.b16 %v1772, %v1772
        %v1901 = vpack.c.b16 %v1773, %v1773
        %v1902 = vpack.c.b16 %v1774, %v1774
        %vm2031 = vcmask 257024
        %2032 = vst.msk [vmem:[%s187] sm:$0xf] %vm2031, %v1775
        %2033 = vst.msk [vmem:[%s187 + $0x4] sm:$0xf] %vm2031, %v1776
        %2034 = vst.msk [vmem:[%s187 + $0x8] sm:$0xf] %vm2031, %v1777
        %2035 = vst.msk [vmem:[%s187 + $0xc] sm:$0xf] %vm2031, %v1778
        %2036 = vst.msk [vmem:[%s187 + $0x10] sm:$0xf] %vm2031, %v1779
        %2037 = vst.msk [vmem:[%s187 + $0x14] sm:$0xf] %vm2031, %v1780
        %2038 = vst.msk [vmem:[%s187 + $0x18] sm:$0xf] %vm2031, %v1781
        %2039 = vst.msk [vmem:[%s187 + $0x1c] sm:$0xf] %vm2031, %v1782
        %2040 = vst.msk [vmem:[%s187 + $0x20] sm:$0xf] %vm2031, %v1783
        %2041 = vst.msk [vmem:[%s187 + $0x24] sm:$0xf] %vm2031, %v1784
        %2042 = vst.msk [vmem:[%s187 + $0x28] sm:$0xf] %vm2031, %v1785
        %2043 = vst.msk [vmem:[%s187 + $0x2c] sm:$0xf] %vm2031, %v1786
        %2044 = vst.msk [vmem:[%s187 + $0x30] sm:$0xf] %vm2031, %v1787
        %2045 = vst.msk [vmem:[%s187 + $0x34] sm:$0xf] %vm2031, %v1788
        %2046 = vst.msk [vmem:[%s187 + $0x38] sm:$0xf] %vm2031, %v1789
        %2047 = vst.msk [vmem:[%s187 + $0x3c] sm:$0xf] %vm2031, %v1790
        %2048 = vst.msk [vmem:[%s187 + $0x40] sm:$0xf] %vm2031, %v1791
        %2049 = vst.msk [vmem:[%s187 + $0x44] sm:$0xf] %vm2031, %v1792
        %2050 = vst.msk [vmem:[%s187 + $0x48] sm:$0xf] %vm2031, %v1793
        %2051 = vst.msk [vmem:[%s187 + $0x4c] sm:$0xf] %vm2031, %v1794
        %2052 = vst.msk [vmem:[%s187 + $0x50] sm:$0xf] %vm2031, %v1795
        %2053 = vst.msk [vmem:[%s187 + $0x54] sm:$0xf] %vm2031, %v1796
        %2054 = vst.msk [vmem:[%s187 + $0x58] sm:$0xf] %vm2031, %v1797
        %2055 = vst.msk [vmem:[%s187 + $0x5c] sm:$0xf] %vm2031, %v1798
        %2056 = vst.msk [vmem:[%s187 + $0x60] sm:$0xf] %vm2031, %v1799
        %2057 = vst.msk [vmem:[%s187 + $0x64] sm:$0xf] %vm2031, %v1800
        %2058 = vst.msk [vmem:[%s187 + $0x68] sm:$0xf] %vm2031, %v1801
        %2059 = vst.msk [vmem:[%s187 + $0x6c] sm:$0xf] %vm2031, %v1802
        %2060 = vst.msk [vmem:[%s187 + $0x70] sm:$0xf] %vm2031, %v1803
        %2061 = vst.msk [vmem:[%s187 + $0x74] sm:$0xf] %vm2031, %v1804
        %2062 = vst.msk [vmem:[%s187 + $0x78] sm:$0xf] %vm2031, %v1805
        %2063 = vst.msk [vmem:[%s187 + $0x7c] sm:$0xf] %vm2031, %v1806
        %2064 = vst.msk [vmem:[%s187 + $0x80] sm:$0xf] %vm2031, %v1807
        %2065 = vst.msk [vmem:[%s187 + $0x84] sm:$0xf] %vm2031, %v1808
        %2066 = vst.msk [vmem:[%s187 + $0x88] sm:$0xf] %vm2031, %v1809
        %2067 = vst.msk [vmem:[%s187 + $0x8c] sm:$0xf] %vm2031, %v1810
        %2068 = vst.msk [vmem:[%s187 + $0x90] sm:$0xf] %vm2031, %v1811
        %2069 = vst.msk [vmem:[%s187 + $0x94] sm:$0xf] %vm2031, %v1812
        %2070 = vst.msk [vmem:[%s187 + $0x98] sm:$0xf] %vm2031, %v1813
        %2071 = vst.msk [vmem:[%s187 + $0x9c] sm:$0xf] %vm2031, %v1814
        %2072 = vst.msk [vmem:[%s187 + $0xa0] sm:$0xf] %vm2031, %v1815
        %2073 = vst.msk [vmem:[%s187 + $0xa4] sm:$0xf] %vm2031, %v1816
        %2074 = vst.msk [vmem:[%s187 + $0xa8] sm:$0xf] %vm2031, %v1817
        %2075 = vst.msk [vmem:[%s187 + $0xac] sm:$0xf] %vm2031, %v1818
        %2076 = vst.msk [vmem:[%s187 + $0xb0] sm:$0xf] %vm2031, %v1819
        %2077 = vst.msk [vmem:[%s187 + $0xb4] sm:$0xf] %vm2031, %v1820
        %2078 = vst.msk [vmem:[%s187 + $0xb8] sm:$0xf] %vm2031, %v1821
        %2079 = vst.msk [vmem:[%s187 + $0xbc] sm:$0xf] %vm2031, %v1822
        %2080 = vst.msk [vmem:[%s187 + $0xc0] sm:$0xf] %vm2031, %v1823
        %2081 = vst.msk [vmem:[%s187 + $0xc4] sm:$0xf] %vm2031, %v1824
        %2082 = vst.msk [vmem:[%s187 + $0xc8] sm:$0xf] %vm2031, %v1825
        %2083 = vst.msk [vmem:[%s187 + $0xcc] sm:$0xf] %vm2031, %v1826
        %2084 = vst.msk [vmem:[%s187 + $0xd0] sm:$0xf] %vm2031, %v1827
        %2085 = vst.msk [vmem:[%s187 + $0xd4] sm:$0xf] %vm2031, %v1828
        %2086 = vst.msk [vmem:[%s187 + $0xd8] sm:$0xf] %vm2031, %v1829
        %2087 = vst.msk [vmem:[%s187 + $0xdc] sm:$0xf] %vm2031, %v1830
        %2088 = vst.msk [vmem:[%s187 + $0xe0] sm:$0xf] %vm2031, %v1831
        %2089 = vst.msk [vmem:[%s187 + $0xe4] sm:$0xf] %vm2031, %v1832
        %2090 = vst.msk [vmem:[%s187 + $0xe8] sm:$0xf] %vm2031, %v1833
        %2091 = vst.msk [vmem:[%s187 + $0xec] sm:$0xf] %vm2031, %v1834
        %2092 = vst.msk [vmem:[%s187 + $0xf0] sm:$0xf] %vm2031, %v1835
        %2093 = vst.msk [vmem:[%s187 + $0xf4] sm:$0xf] %vm2031, %v1836
        %2094 = vst.msk [vmem:[%s187 + $0xf8] sm:$0xf] %vm2031, %v1837
        %2095 = vst.msk [vmem:[%s187 + $0xfc] sm:$0xf] %vm2031, %v1838
        %2096 = vst.msk [vmem:[%s187 + $0x100] sm:$0xf] %vm2031, %v1839
        %2097 = vst.msk [vmem:[%s187 + $0x104] sm:$0xf] %vm2031, %v1840
        %2098 = vst.msk [vmem:[%s187 + $0x108] sm:$0xf] %vm2031, %v1841
        %2099 = vst.msk [vmem:[%s187 + $0x10c] sm:$0xf] %vm2031, %v1842
        %2100 = vst.msk [vmem:[%s187 + $0x110] sm:$0xf] %vm2031, %v1843
        %2101 = vst.msk [vmem:[%s187 + $0x114] sm:$0xf] %vm2031, %v1844
        %2102 = vst.msk [vmem:[%s187 + $0x118] sm:$0xf] %vm2031, %v1845
        %2103 = vst.msk [vmem:[%s187 + $0x11c] sm:$0xf] %vm2031, %v1846
        %2104 = vst.msk [vmem:[%s187 + $0x120] sm:$0xf] %vm2031, %v1847
        %2105 = vst.msk [vmem:[%s187 + $0x124] sm:$0xf] %vm2031, %v1848
        %2106 = vst.msk [vmem:[%s187 + $0x128] sm:$0xf] %vm2031, %v1849
        %2107 = vst.msk [vmem:[%s187 + $0x12c] sm:$0xf] %vm2031, %v1850
        %2108 = vst.msk [vmem:[%s187 + $0x130] sm:$0xf] %vm2031, %v1851
        %2109 = vst.msk [vmem:[%s187 + $0x134] sm:$0xf] %vm2031, %v1852
        %2110 = vst.msk [vmem:[%s187 + $0x138] sm:$0xf] %vm2031, %v1853
        %2111 = vst.msk [vmem:[%s187 + $0x13c] sm:$0xf] %vm2031, %v1854
        %2112 = vst.msk [vmem:[%s187 + $0x140] sm:$0xf] %vm2031, %v1855
        %2113 = vst.msk [vmem:[%s187 + $0x144] sm:$0xf] %vm2031, %v1856
        %2114 = vst.msk [vmem:[%s187 + $0x148] sm:$0xf] %vm2031, %v1857
        %2115 = vst.msk [vmem:[%s187 + $0x14c] sm:$0xf] %vm2031, %v1858
        %2116 = vst.msk [vmem:[%s187 + $0x150] sm:$0xf] %vm2031, %v1859
        %2117 = vst.msk [vmem:[%s187 + $0x154] sm:$0xf] %vm2031, %v1860
        %2118 = vst.msk [vmem:[%s187 + $0x158] sm:$0xf] %vm2031, %v1861
        %2119 = vst.msk [vmem:[%s187 + $0x15c] sm:$0xf] %vm2031, %v1862
        %2120 = vst.msk [vmem:[%s187 + $0x160] sm:$0xf] %vm2031, %v1863
        %2121 = vst.msk [vmem:[%s187 + $0x164] sm:$0xf] %vm2031, %v1864
        %2122 = vst.msk [vmem:[%s187 + $0x168] sm:$0xf] %vm2031, %v1865
        %2123 = vst.msk [vmem:[%s187 + $0x16c] sm:$0xf] %vm2031, %v1866
        %2124 = vst.msk [vmem:[%s187 + $0x170] sm:$0xf] %vm2031, %v1867
        %2125 = vst.msk [vmem:[%s187 + $0x174] sm:$0xf] %vm2031, %v1868
        %2126 = vst.msk [vmem:[%s187 + $0x178] sm:$0xf] %vm2031, %v1869
        %2127 = vst.msk [vmem:[%s187 + $0x17c] sm:$0xf] %vm2031, %v1870
        %2128 = vst.msk [vmem:[%s187 + $0x180] sm:$0xf] %vm2031, %v1871
        %2129 = vst.msk [vmem:[%s187 + $0x184] sm:$0xf] %vm2031, %v1872
        %2130 = vst.msk [vmem:[%s187 + $0x188] sm:$0xf] %vm2031, %v1873
        %2131 = vst.msk [vmem:[%s187 + $0x18c] sm:$0xf] %vm2031, %v1874
        %2132 = vst.msk [vmem:[%s187 + $0x190] sm:$0xf] %vm2031, %v1875
        %2133 = vst.msk [vmem:[%s187 + $0x194] sm:$0xf] %vm2031, %v1876
        %2134 = vst.msk [vmem:[%s187 + $0x198] sm:$0xf] %vm2031, %v1877
        %2135 = vst.msk [vmem:[%s187 + $0x19c] sm:$0xf] %vm2031, %v1878
        %2136 = vst.msk [vmem:[%s187 + $0x1a0] sm:$0xf] %vm2031, %v1879
        %2137 = vst.msk [vmem:[%s187 + $0x1a4] sm:$0xf] %vm2031, %v1880
        %2138 = vst.msk [vmem:[%s187 + $0x1a8] sm:$0xf] %vm2031, %v1881
        %2139 = vst.msk [vmem:[%s187 + $0x1ac] sm:$0xf] %vm2031, %v1882
        %2140 = vst.msk [vmem:[%s187 + $0x1b0] sm:$0xf] %vm2031, %v1883
        %2141 = vst.msk [vmem:[%s187 + $0x1b4] sm:$0xf] %vm2031, %v1884
        %2142 = vst.msk [vmem:[%s187 + $0x1b8] sm:$0xf] %vm2031, %v1885
        %2143 = vst.msk [vmem:[%s187 + $0x1bc] sm:$0xf] %vm2031, %v1886
        %2144 = vst.msk [vmem:[%s187 + $0x1c0] sm:$0xf] %vm2031, %v1887
        %2145 = vst.msk [vmem:[%s187 + $0x1c4] sm:$0xf] %vm2031, %v1888
        %2146 = vst.msk [vmem:[%s187 + $0x1c8] sm:$0xf] %vm2031, %v1889
        %2147 = vst.msk [vmem:[%s187 + $0x1cc] sm:$0xf] %vm2031, %v1890
        %2148 = vst.msk [vmem:[%s187 + $0x1d0] sm:$0xf] %vm2031, %v1891
        %2149 = vst.msk [vmem:[%s187 + $0x1d4] sm:$0xf] %vm2031, %v1892
        %2150 = vst.msk [vmem:[%s187 + $0x1d8] sm:$0xf] %vm2031, %v1893
        %2151 = vst.msk [vmem:[%s187 + $0x1dc] sm:$0xf] %vm2031, %v1894
        %2152 = vst.msk [vmem:[%s187 + $0x1e0] sm:$0xf] %vm2031, %v1895
        %2153 = vst.msk [vmem:[%s187 + $0x1e4] sm:$0xf] %vm2031, %v1896
        %2154 = vst.msk [vmem:[%s187 + $0x1e8] sm:$0xf] %vm2031, %v1897
        %2155 = vst.msk [vmem:[%s187 + $0x1ec] sm:$0xf] %vm2031, %v1898
        %2156 = vst.msk [vmem:[%s187 + $0x1f0] sm:$0xf] %vm2031, %v1899
        %2157 = vst.msk [vmem:[%s187 + $0x1f4] sm:$0xf] %vm2031, %v1900
        %2158 = vst.msk [vmem:[%s187 + $0x1f8] sm:$0xf] %vm2031, %v1901
        %2159 = vst.msk [vmem:[%s187 + $0x1fc] sm:$0xf] %vm2031, %v1902
        %s2160 = smul.u32 128, %s15
        %p2161 = scmp.lt.s32.totalorder %s2160, 255
        %s2162 = scalar_select %p2161, %s2160, 255
        %s2163 = smul.addr %s2162, 4
        %s2164 = scalar_lea.vmem %s3, %s2163
        // Predicated region
        $region37: #{_lambda_.9} parent=31 // pred_check
          %p2165 = pneg %p101
        $region38: #{_lambda_.9} parent=31 // pred_check_branch
          %2167 = sbr.rel (%p2165) target = $region40
        $region39: #{_lambda_.9} parent=31 // pred_region
          %s2168 = smul.u32 128, %s15
        $region40: #{_lambda_.9} parent=31 // pred_fallthru
          _
      $region32: #{_lambda_.9} parent=5 // pred_fallthru
        _
      %p2169 = scmp.le.s32.totalorder 2, %s10
      // Predicated region
      $region41: #{_lambda_.9} parent=5 // pred_check
        %p2170 = pneg %p2169
      $region42: #{_lambda_.9} parent=5 // pred_check_branch
        %2172 = sbr.rel (%p2170) target = $region44
      $region43: #{_lambda_.9} parent=5 // pred_region
        %s2173 = ssub.s32 %s10, 2
        // Predicated region
        $region45: #{_lambda_.9} parent=43 // pred_check
          %p2174 = pneg %p107
        $region46: #{_lambda_.9} parent=43 // pred_check_branch
          %2176 = sbr.rel (%p2174) target = $region48
        $region47: #{_lambda_.9} parent=43 // pred_region
          %s2177 = smul.u32 128, %s16
          %p2178 = scmp.lt.s32.totalorder %s2177, 255
          %s2179 = scalar_select %p2178, %s2177, 255
          %s2180 = smul.addr %s2179, 4
          %s2181 = scalar_lea.vmem %s3, %s2180
        $region48: #{_lambda_.9} parent=43 // pred_fallthru
          _
      $region44: #{_lambda_.9} parent=5 // pred_fallthru
        _
    $region6: #{_lambda_.9} parent=1 // loop_footer
      %s14 = sadd.s32 1, %s10
    $region7: #{_lambda_.9} parent=1 // loop_footer_branch
      %9 = sbr.rel target = $region3
    $region8: #{_lambda_.9} parent=1 // loop_exit
      _
    %2182 = vsyncpa [#allocation3], 1
    %s2183 = scalar_lea.sflag [#allocation3], 1
    %2184 = vsyncpa %s2183, 1

// kernel: _lambda_.10
$region0: #{_lambda_.10}
  #allocation0 [shape = 'u32[]', space=smem, size = 0x4, offset = 0x4, fixed_abs, tag = 'smem constant byte address 0x4 - core index']
  #allocation1 [shape = 'u32[144,128]{1,0:T(1,128)}', space=vmem, size = 0x12000, scoped, tag = 'internal scratch']
  %s0 = inlined_call_operand.vmem [shape: bf16[512,512], index: 0, kind: input, shape index: {}]
  %s1 = inlined_call_operand.vmem [shape: bf16[512,32], index: 1, kind: input, shape index: {}]
  %s2 = inlined_call_operand.vmem [shape: f32[1,32], index: 2, kind: input, shape index: {}]
  %s3 = inlined_call_operand.vmem [shape: bf16[512,32], index: 3, kind: output, shape index: {}]
  %s4 = sld [smem:[#allocation0]]
  $region45: #{_lambda_.10} parent=0
    _
  %s6 = ssub.s32 1, %s4
  %s7 = scalar_select 0, %s6, %s4
  loop: start=0, step=1, limit=4
  $region2: #{_lambda_.10} parent=0 // loop_pre_header
    _
  $region3: #{_lambda_.10} parent=0 // loop_header
    %s9 = sphi 0, %s13
    %p10 = scmp.ge.s32.totalorder %s9, 4
    %s19 = sphi 0, %s21
    %s22 = sphi 0, %s19
    %s23 = sphi 0, %s22
    %s39 = sphi 0, %s23
    %s43 = sphi 0, %s43
    %s45 = sphi 0, %s43
    %s46 = sphi 0, %s45
    %s60 = sphi 0, %s46
    %s64 = sphi 0, %s64
    %s66 = sphi 0, %s64
    %s67 = sphi 0, %s66
    %s81 = sphi 0, %s67
    %s87 = sphi 0, %s89
    %s90 = sphi 0, %s87
    %s91 = sphi 0, %s90
    %s107 = sphi 0, %s91
  $region4: #{_lambda_.10} parent=0 // loop_header_branch
    %12 = sbr.rel (%p10) target = $region8
  $region5: #{_lambda_.10} parent=0 // loop_body
    %s14 = ssub.s32 %s9, 1
    %s15 = ssub.s32 %s9, 2
    %s16 = sadd.s32 %s9, 1
    %s17 = ssub.s32 %s9, %s16
    %p18 = scmp.eq.s32.totalorder %s17, 0
    %s20 = sadd.s32 %s19, 1
    %s21 = scalar_select %p18, %s19, %s20
    %p24 = pneg %p18
    %p25 = scmp.eq.s32.totalorder %s9, 1
    %p26 = por %p24, %p25
    %p27 = scmp.ne.s32.totalorder %s19, %s22
    %p28 = scmp.eq.s32.totalorder %s9, 0
    %p29 = por %p27, %p28
    %p30 = scmp.ne.s32.totalorder %s19, %s22
    %p31 = scmp.eq.s32.totalorder %s14, 1
    %p32 = por %p30, %p31
    %p33 = scmp.ne.s32.totalorder %s22, %s23
    %p34 = scmp.eq.s32.totalorder %s14, 0
    %p35 = por %p33, %p34
    %p36 = scmp.ne.s32.totalorder %s22, %s23
    %p37 = scmp.eq.s32.totalorder %s15, 1
    %p38 = por %p36, %p37
    %p40 = scmp.ne.s32.totalorder %s23, %s39
    %p41 = scmp.eq.s32.totalorder %s15, 0
    %p42 = por %p40, %p41
    %s44 = sadd.s32 %s43, 1
    %p47 = scmp.eq.s32.totalorder %s9, 1
    %p48 = scmp.ne.s32.totalorder %s43, %s45
    %p49 = scmp.eq.s32.totalorder %s9, 0
    %p50 = por %p48, %p49
    %p51 = scmp.ne.s32.totalorder %s43, %s45
    %p52 = scmp.eq.s32.totalorder %s14, 1
    %p53 = por %p51, %p52
    %p54 = scmp.ne.s32.totalorder %s45, %s46
    %p55 = scmp.eq.s32.totalorder %s14, 0
    %p56 = por %p54, %p55
    %p57 = scmp.ne.s32.totalorder %s45, %s46
    %p58 = scmp.eq.s32.totalorder %s15, 1
    %p59 = por %p57, %p58
    %p61 = scmp.ne.s32.totalorder %s46, %s60
    %p62 = scmp.eq.s32.totalorder %s15, 0
    %p63 = por %p61, %p62
    %s65 = sadd.s32 %s64, 1
    %p68 = scmp.eq.s32.totalorder %s9, 1
    %p69 = scmp.ne.s32.totalorder %s64, %s66
    %p70 = scmp.eq.s32.totalorder %s9, 0
    %p71 = por %p69, %p70
    %p72 = scmp.ne.s32.totalorder %s64, %s66
    %p73 = scmp.eq.s32.totalorder %s14, 1
    %p74 = por %p72, %p73
    %p75 = scmp.ne.s32.totalorder %s66, %s67
    %p76 = scmp.eq.s32.totalorder %s14, 0
    %p77 = por %p75, %p76
    %p78 = scmp.ne.s32.totalorder %s66, %s67
    %p79 = scmp.eq.s32.totalorder %s15, 1
    %p80 = por %p78, %p79
    %p82 = scmp.ne.s32.totalorder %s67, %s81
    %p83 = scmp.eq.s32.totalorder %s15, 0
    %p84 = por %p82, %p83
    %s85 = ssub.s32 %s9, %s16
    %p86 = scmp.eq.s32.totalorder %s85, 0
    %s88 = sadd.s32 %s87, 1
    %s89 = scalar_select %p86, %s87, %s88
    %p92 = pneg %p86
    %p93 = scmp.eq.s32.totalorder %s9, 1
    %p94 = por %p92, %p93
    %p95 = scmp.ne.s32.totalorder %s87, %s90
    %p96 = scmp.eq.s32.totalorder %s9, 0
    %p97 = por %p95, %p96
    %p98 = scmp.ne.s32.totalorder %s87, %s90
    %p99 = scmp.eq.s32.totalorder %s14, 1
    %p100 = por %p98, %p99
    %p101 = scmp.ne.s32.totalorder %s90, %s91
    %p102 = scmp.eq.s32.totalorder %s14, 0
    %p103 = por %p101, %p102
    %p104 = scmp.ne.s32.totalorder %s90, %s91
    %p105 = scmp.eq.s32.totalorder %s15, 1
    %p106 = por %p104, %p105
    %p108 = scmp.ne.s32.totalorder %s91, %s107
    %p109 = scmp.eq.s32.totalorder %s15, 0
    %p110 = por %p108, %p109
    %p111 = scmp.le.s32.totalorder 1, %s9
    %p112 = scmp.lt.s32.totalorder %s9, 3
    %p113 = pnand %p111, %p112
    %p114 = pneg %p113
    // Predicated region
    $region9: #{_lambda_.10} parent=5 // pred_check
      _
    $region10: #{_lambda_.10} parent=5 // pred_check_branch
      %116 = sbr.rel (%p113) target = $region12
    $region11: #{_lambda_.10} parent=5 // pred_region
      %s117 = ssub.s32 %s9, 1
      // Predicated region
      $region13: #{_lambda_.10} parent=11 // pred_check
        %p118 = pneg %p56
      $region14: #{_lambda_.10} parent=11 // pred_check_branch
        %120 = sbr.rel (%p118) target = $region16
      $region15: #{_lambda_.10} parent=11 // pred_region
        _
      $region16: #{_lambda_.10} parent=11 // pred_fallthru
        _
      // Predicated region
      $region17: #{_lambda_.10} parent=11 // pred_check
        %p121 = pneg %p77
      $region18: #{_lambda_.10} parent=11 // pred_check_branch
        %123 = sbr.rel (%p121) target = $region20
      $region19: #{_lambda_.10} parent=11 // pred_region
        _
      $region20: #{_lambda_.10} parent=11 // pred_fallthru
        _
    $region12: #{_lambda_.10} parent=5 // pred_fallthru
      _
    %p124 = scmp.lt.s32.totalorder %s9, 2
    // Predicated region
    $region21: #{_lambda_.10} parent=5 // pred_check
      %p125 = pneg %p124
    $region22: #{_lambda_.10} parent=5 // pred_check_branch
      %127 = sbr.rel (%p125) target = $region24
    $region23: #{_lambda_.10} parent=5 // pred_region
      // Predicated region
      $region25: #{_lambda_.10} parent=23 // pred_check
        %p128 = pneg %p29
      $region26: #{_lambda_.10} parent=23 // pred_check_branch
        %130 = sbr.rel (%p128) target = $region28
      $region27: #{_lambda_.10} parent=23 // pred_region
        %s131 = smul.u32 32, %s9
        %p132 = scmp.lt.s32.totalorder %s131, 63
        %s133 = scalar_select %p132, %s131, 63
        %s134 = smul.addr %s133, 4
        %s135 = smul.addr %s134, 4
        %s136 = scalar_lea.vmem %s0, %s135
        %s137 = smul.u32 32, %s9
      $region28: #{_lambda_.10} parent=23 // pred_fallthru
        _
    $region24: #{_lambda_.10} parent=5 // pred_fallthru
      _
    %p138 = scmp.le.s32.totalorder 1, %s9
    %p139 = scmp.lt.s32.totalorder %s9, 3
    %p140 = pnand %p138, %p139
    %p141 = pneg %p140
    // Predicated region
    $region29: #{_lambda_.10} parent=5 // pred_check
      _
    $region30: #{_lambda_.10} parent=5 // pred_check_branch
      %143 = sbr.rel (%p140) target = $region32
    $region31: #{_lambda_.10} parent=5 // pred_region
      %s144 = ssub.s32 %s9, 1
      %s145 = smul.u32 32, %s14
      %p146 = scmp.lt.s32.totalorder %s145, 63
      %s147 = scalar_select %p146, %s145, 63
      %s148 = smul.addr %s147, 4
      %s149 = smul.addr %s148, 4
      %s150 = scalar_lea.vmem %s0, %s149
      %p151 = pneg %p35
      %p152 = pneg %p32
      %p153 = pneg %p56
      %p154 = pneg %p53
      %p155 = pneg %p77
      %p156 = pneg %p74
      %p157 = pneg %p103
      %p158 = pneg %p100
      %s159 = smul.u32 32, %s14
      %p160 = scmp.lt.s32.totalorder %s159, 63
      %s161 = scalar_select %p160, %s159, 63
      %s162 = smul.addr %s161, 4
      %s163 = scalar_lea.vmem %s3, %s162
      %s164 = smul.u32 32, %s14
      %p165 = scmp.lt.s32.totalorder %s164, 63
      %s166 = scalar_select %p165, %s164, 63
      %s167 = smul.addr %s166, 4
      %s168 = smul.addr %s167, 4
      %s169 = scalar_lea.vmem %s0, %s168
      %s170 = smul.u32 32, %s14
      %s171 = smul.u32 32, %s14
      %p172 = scmp.lt.s32.totalorder %s171, 63
      %s173 = scalar_select %p172, %s171, 63
      %s174 = smul.addr %s173, 4
      %s175 = scalar_lea.vmem %s3, %s174
      %s176 = smul.u32 32, %s14
      %v178 = vld [vmem:[%s169] sm:$0xff]
      %v179 = vld [vmem:[%s169 + $0x8] sm:$0xff]
      %v180 = vld [vmem:[%s169 + $0x10] sm:$0xff]
      %v181 = vld [vmem:[%s169 + $0x18] sm:$0xff]
      %v182 = vld [vmem:[%s169 + $0x20] sm:$0xff]
      %v183 = vld [vmem:[%s169 + $0x28] sm:$0xff]
      %v184 = vld [vmem:[%s169 + $0x30] sm:$0xff]
      %v185 = vld [vmem:[%s169 + $0x38] sm:$0xff]
      %v186 = vld [vmem:[%s169 + $0x40] sm:$0xff]
      %v187 = vld [vmem:[%s169 + $0x48] sm:$0xff]
      %v188 = vld [vmem:[%s169 + $0x50] sm:$0xff]
      %v189 = vld [vmem:[%s169 + $0x58] sm:$0xff]
      %v190 = vld [vmem:[%s169 + $0x60] sm:$0xff]
      %v191 = vld [vmem:[%s169 + $0x68] sm:$0xff]
      %v192 = vld [vmem:[%s169 + $0x70] sm:$0xff]
      %v193 = vld [vmem:[%s169 + $0x78] sm:$0xff]
      %v194 = vld [vmem:[%s169 + $0x80] sm:$0xff]
      %v195 = vld [vmem:[%s169 + $0x88] sm:$0xff]
      %v196 = vld [vmem:[%s169 + $0x90] sm:$0xff]
      %v197 = vld [vmem:[%s169 + $0x98] sm:$0xff]
      %v198 = vld [vmem:[%s169 + $0xa0] sm:$0xff]
      %v199 = vld [vmem:[%s169 + $0xa8] sm:$0xff]
      %v200 = vld [vmem:[%s169 + $0xb0] sm:$0xff]
      %v201 = vld [vmem:[%s169 + $0xb8] sm:$0xff]
      %v202 = vld [vmem:[%s169 + $0xc0] sm:$0xff]
      %v203 = vld [vmem:[%s169 + $0xc8] sm:$0xff]
      %v204 = vld [vmem:[%s169 + $0xd0] sm:$0xff]
      %v205 = vld [vmem:[%s169 + $0xd8] sm:$0xff]
      %v206 = vld [vmem:[%s169 + $0xe0] sm:$0xff]
      %v207 = vld [vmem:[%s169 + $0xe8] sm:$0xff]
      %v208 = vld [vmem:[%s169 + $0xf0] sm:$0xff]
      %v209 = vld [vmem:[%s169 + $0xf8] sm:$0xff]
      %v210 = vld [vmem:[%s169 + $0x100] sm:$0xff]
      %v211 = vld [vmem:[%s169 + $0x108] sm:$0xff]
      %v212 = vld [vmem:[%s169 + $0x110] sm:$0xff]
      %v213 = vld [vmem:[%s169 + $0x118] sm:$0xff]
      %v214 = vld [vmem:[%s169 + $0x120] sm:$0xff]
      %v215 = vld [vmem:[%s169 + $0x128] sm:$0xff]
      %v216 = vld [vmem:[%s169 + $0x130] sm:$0xff]
      %v217 = vld [vmem:[%s169 + $0x138] sm:$0xff]
      %v218 = vld [vmem:[%s169 + $0x140] sm:$0xff]
      %v219 = vld [vmem:[%s169 + $0x148] sm:$0xff]
      %v220 = vld [vmem:[%s169 + $0x150] sm:$0xff]
      %v221 = vld [vmem:[%s169 + $0x158] sm:$0xff]
      %v222 = vld [vmem:[%s169 + $0x160] sm:$0xff]
      %v223 = vld [vmem:[%s169 + $0x168] sm:$0xff]
      %v224 = vld [vmem:[%s169 + $0x170] sm:$0xff]
      %v225 = vld [vmem:[%s169 + $0x178] sm:$0xff]
      %v226 = vld [vmem:[%s169 + $0x180] sm:$0xff]
      %v227 = vld [vmem:[%s169 + $0x188] sm:$0xff]
      %v228 = vld [vmem:[%s169 + $0x190] sm:$0xff]
      %v229 = vld [vmem:[%s169 + $0x198] sm:$0xff]
      %v230 = vld [vmem:[%s169 + $0x1a0] sm:$0xff]
      %v231 = vld [vmem:[%s169 + $0x1a8] sm:$0xff]
      %v232 = vld [vmem:[%s169 + $0x1b0] sm:$0xff]
      %v233 = vld [vmem:[%s169 + $0x1b8] sm:$0xff]
      %v234 = vld [vmem:[%s169 + $0x1c0] sm:$0xff]
      %v235 = vld [vmem:[%s169 + $0x1c8] sm:$0xff]
      %v236 = vld [vmem:[%s169 + $0x1d0] sm:$0xff]
      %v237 = vld [vmem:[%s169 + $0x1d8] sm:$0xff]
      %v238 = vld [vmem:[%s169 + $0x1e0] sm:$0xff]
      %v239 = vld [vmem:[%s169 + $0x1e8] sm:$0xff]
      %v240 = vld [vmem:[%s169 + $0x1f0] sm:$0xff]
      %v241 = vld [vmem:[%s169 + $0x1f8] sm:$0xff]
      %v242 = vld [vmem:[%s1] sm:$0xf]
      %v243 = vld [vmem:[%s1 + $0x4] sm:$0xf]
      %v244 = vld [vmem:[%s1 + $0x8] sm:$0xf]
      %v245 = vld [vmem:[%s1 + $0xc] sm:$0xf]
      %v246 = vld [vmem:[%s1 + $0x10] sm:$0xf]
      %v247 = vld [vmem:[%s1 + $0x14] sm:$0xf]
      %v248 = vld [vmem:[%s1 + $0x18] sm:$0xf]
      %v249 = vld [vmem:[%s1 + $0x1c] sm:$0xf]
      %v250 = vld [vmem:[%s1 + $0x20] sm:$0xf]
      %v251 = vld [vmem:[%s1 + $0x24] sm:$0xf]
      %v252 = vld [vmem:[%s1 + $0x28] sm:$0xf]
      %v253 = vld [vmem:[%s1 + $0x2c] sm:$0xf]
      %v254 = vld [vmem:[%s1 + $0x30] sm:$0xf]
      %v255 = vld [vmem:[%s1 + $0x34] sm:$0xf]
      %v256 = vld [vmem:[%s1 + $0x38] sm:$0xf]
      %v257 = vld [vmem:[%s1 + $0x3c] sm:$0xf]
      %v258 = vld [vmem:[%s1 + $0x40] sm:$0xf]
      %v259 = vld [vmem:[%s1 + $0x44] sm:$0xf]
      %v260 = vld [vmem:[%s1 + $0x48] sm:$0xf]
      %v261 = vld [vmem:[%s1 + $0x4c] sm:$0xf]
      %v262 = vld [vmem:[%s1 + $0x50] sm:$0xf]
      %v263 = vld [vmem:[%s1 + $0x54] sm:$0xf]
      %v264 = vld [vmem:[%s1 + $0x58] sm:$0xf]
      %v265 = vld [vmem:[%s1 + $0x5c] sm:$0xf]
      %v266 = vld [vmem:[%s1 + $0x60] sm:$0xf]
      %v267 = vld [vmem:[%s1 + $0x64] sm:$0xf]
      %v268 = vld [vmem:[%s1 + $0x68] sm:$0xf]
      %v269 = vld [vmem:[%s1 + $0x6c] sm:$0xf]
      %v270 = vld [vmem:[%s1 + $0x70] sm:$0xf]
      %v271 = vld [vmem:[%s1 + $0x74] sm:$0xf]
      %v272 = vld [vmem:[%s1 + $0x78] sm:$0xf]
      %v273 = vld [vmem:[%s1 + $0x7c] sm:$0xf]
      %v274 = vld [vmem:[%s1 + $0x80] sm:$0xf]
      %v275 = vld [vmem:[%s1 + $0x84] sm:$0xf]
      %v276 = vld [vmem:[%s1 + $0x88] sm:$0xf]
      %v277 = vld [vmem:[%s1 + $0x8c] sm:$0xf]
      %v278 = vld [vmem:[%s1 + $0x90] sm:$0xf]
      %v279 = vld [vmem:[%s1 + $0x94] sm:$0xf]
      %v280 = vld [vmem:[%s1 + $0x98] sm:$0xf]
      %v281 = vld [vmem:[%s1 + $0x9c] sm:$0xf]
      %v282 = vld [vmem:[%s1 + $0xa0] sm:$0xf]
      %v283 = vld [vmem:[%s1 + $0xa4] sm:$0xf]
      %v284 = vld [vmem:[%s1 + $0xa8] sm:$0xf]
      %v285 = vld [vmem:[%s1 + $0xac] sm:$0xf]
      %v286 = vld [vmem:[%s1 + $0xb0] sm:$0xf]
      %v287 = vld [vmem:[%s1 + $0xb4] sm:$0xf]
      %v288 = vld [vmem:[%s1 + $0xb8] sm:$0xf]
      %v289 = vld [vmem:[%s1 + $0xbc] sm:$0xf]
      %v290 = vld [vmem:[%s1 + $0xc0] sm:$0xf]
      %v291 = vld [vmem:[%s1 + $0xc4] sm:$0xf]
      %v292 = vld [vmem:[%s1 + $0xc8] sm:$0xf]
      %v293 = vld [vmem:[%s1 + $0xcc] sm:$0xf]
      %v294 = vld [vmem:[%s1 + $0xd0] sm:$0xf]
      %v295 = vld [vmem:[%s1 + $0xd4] sm:$0xf]
      %v296 = vld [vmem:[%s1 + $0xd8] sm:$0xf]
      %v297 = vld [vmem:[%s1 + $0xdc] sm:$0xf]
      %v298 = vld [vmem:[%s1 + $0xe0] sm:$0xf]
      %v299 = vld [vmem:[%s1 + $0xe4] sm:$0xf]
      %v300 = vld [vmem:[%s1 + $0xe8] sm:$0xf]
      %v301 = vld [vmem:[%s1 + $0xec] sm:$0xf]
      %v302 = vld [vmem:[%s1 + $0xf0] sm:$0xf]
      %v303 = vld [vmem:[%s1 + $0xf4] sm:$0xf]
      %v304 = vld [vmem:[%s1 + $0xf8] sm:$0xf]
      %v305 = vld [vmem:[%s1 + $0xfc] sm:$0xf]
      %v306 = vld [vmem:[%s2] sm:$0x1]
      %v308 = vlaneseq
      %v309 = vshrl.u32 %v308, 7
      %v310 = vsub.s32 0, %v309
      %v311 = vrot.slane %v306, %v310
      %v377 = vunpack.c.l.b16 %v178
      %v378 = vunpack.c.h.b16 %v178
      %v379 = vunpack.c.l.b16 %v179
      %v380 = vunpack.c.h.b16 %v179
      %v381 = vunpack.c.l.b16 %v180
      %v382 = vunpack.c.h.b16 %v180
      %v383 = vunpack.c.l.b16 %v181
      %v384 = vunpack.c.h.b16 %v181
      %v385 = vunpack.c.l.b16 %v182
      %v386 = vunpack.c.h.b16 %v182
      %v387 = vunpack.c.l.b16 %v183
      %v388 = vunpack.c.h.b16 %v183
      %v389 = vunpack.c.l.b16 %v184
      %v390 = vunpack.c.h.b16 %v184
      %v391 = vunpack.c.l.b16 %v185
      %v392 = vunpack.c.h.b16 %v185
      %v393 = vunpack.c.l.b16 %v186
      %v394 = vunpack.c.h.b16 %v186
      %v395 = vunpack.c.l.b16 %v187
      %v396 = vunpack.c.h.b16 %v187
      %v397 = vunpack.c.l.b16 %v188
      %v398 = vunpack.c.h.b16 %v188
      %v399 = vunpack.c.l.b16 %v189
      %v400 = vunpack.c.h.b16 %v189
      %v401 = vunpack.c.l.b16 %v190
      %v402 = vunpack.c.h.b16 %v190
      %v403 = vunpack.c.l.b16 %v191
      %v404 = vunpack.c.h.b16 %v191
      %v405 = vunpack.c.l.b16 %v192
      %v406 = vunpack.c.h.b16 %v192
      %v407 = vunpack.c.l.b16 %v193
      %v408 = vunpack.c.h.b16 %v193
      %v409 = vunpack.c.l.b16 %v194
      %v410 = vunpack.c.h.b16 %v194
      %v411 = vunpack.c.l.b16 %v195
      %v412 = vunpack.c.h.b16 %v195
      %v413 = vunpack.c.l.b16 %v196
      %v414 = vunpack.c.h.b16 %v196
      %v415 = vunpack.c.l.b16 %v197
      %v416 = vunpack.c.h.b16 %v197
      %v417 = vunpack.c.l.b16 %v198
      %v418 = vunpack.c.h.b16 %v198
      %v419 = vunpack.c.l.b16 %v199
      %v420 = vunpack.c.h.b16 %v199
      %v421 = vunpack.c.l.b16 %v200
      %v422 = vunpack.c.h.b16 %v200
      %v423 = vunpack.c.l.b16 %v201
      %v424 = vunpack.c.h.b16 %v201
      %v425 = vunpack.c.l.b16 %v202
      %v426 = vunpack.c.h.b16 %v202
      %v427 = vunpack.c.l.b16 %v203
      %v428 = vunpack.c.h.b16 %v203
      %v429 = vunpack.c.l.b16 %v204
      %v430 = vunpack.c.h.b16 %v204
      %v431 = vunpack.c.l.b16 %v205
      %v432 = vunpack.c.h.b16 %v205
      %v433 = vunpack.c.l.b16 %v206
      %v434 = vunpack.c.h.b16 %v206
      %v435 = vunpack.c.l.b16 %v207
      %v436 = vunpack.c.h.b16 %v207
      %v437 = vunpack.c.l.b16 %v208
      %v438 = vunpack.c.h.b16 %v208
      %v439 = vunpack.c.l.b16 %v209
      %v440 = vunpack.c.h.b16 %v209
      %v441 = vunpack.c.l.b16 %v210
      %v442 = vunpack.c.h.b16 %v210
      %v443 = vunpack.c.l.b16 %v211
      %v444 = vunpack.c.h.b16 %v211
      %v445 = vunpack.c.l.b16 %v212
      %v446 = vunpack.c.h.b16 %v212
      %v447 = vunpack.c.l.b16 %v213
      %v448 = vunpack.c.h.b16 %v213
      %v449 = vunpack.c.l.b16 %v214
      %v450 = vunpack.c.h.b16 %v214
      %v451 = vunpack.c.l.b16 %v215
      %v452 = vunpack.c.h.b16 %v215
      %v453 = vunpack.c.l.b16 %v216
      %v454 = vunpack.c.h.b16 %v216
      %v455 = vunpack.c.l.b16 %v217
      %v456 = vunpack.c.h.b16 %v217
      %v457 = vunpack.c.l.b16 %v218
      %v458 = vunpack.c.h.b16 %v218
      %v459 = vunpack.c.l.b16 %v219
      %v460 = vunpack.c.h.b16 %v219
      %v461 = vunpack.c.l.b16 %v220
      %v462 = vunpack.c.h.b16 %v220
      %v463 = vunpack.c.l.b16 %v221
      %v464 = vunpack.c.h.b16 %v221
      %v465 = vunpack.c.l.b16 %v222
      %v466 = vunpack.c.h.b16 %v222
      %v467 = vunpack.c.l.b16 %v223
      %v468 = vunpack.c.h.b16 %v223
      %v469 = vunpack.c.l.b16 %v224
      %v470 = vunpack.c.h.b16 %v224
      %v471 = vunpack.c.l.b16 %v225
      %v472 = vunpack.c.h.b16 %v225
      %v473 = vunpack.c.l.b16 %v226
      %v474 = vunpack.c.h.b16 %v226
      %v475 = vunpack.c.l.b16 %v227
      %v476 = vunpack.c.h.b16 %v227
      %v477 = vunpack.c.l.b16 %v228
      %v478 = vunpack.c.h.b16 %v228
      %v479 = vunpack.c.l.b16 %v229
      %v480 = vunpack.c.h.b16 %v229
      %v481 = vunpack.c.l.b16 %v230
      %v482 = vunpack.c.h.b16 %v230
      %v483 = vunpack.c.l.b16 %v231
      %v484 = vunpack.c.h.b16 %v231
      %v485 = vunpack.c.l.b16 %v232
      %v486 = vunpack.c.h.b16 %v232
      %v487 = vunpack.c.l.b16 %v233
      %v488 = vunpack.c.h.b16 %v233
      %v489 = vunpack.c.l.b16 %v234
      %v490 = vunpack.c.h.b16 %v234
      %v491 = vunpack.c.l.b16 %v235
      %v492 = vunpack.c.h.b16 %v235
      %v493 = vunpack.c.l.b16 %v236
      %v494 = vunpack.c.h.b16 %v236
      %v495 = vunpack.c.l.b16 %v237
      %v496 = vunpack.c.h.b16 %v237
      %v497 = vunpack.c.l.b16 %v238
      %v498 = vunpack.c.h.b16 %v238
      %v499 = vunpack.c.l.b16 %v239
      %v500 = vunpack.c.h.b16 %v239
      %v501 = vunpack.c.l.b16 %v240
      %v502 = vunpack.c.h.b16 %v240
      %v503 = vunpack.c.l.b16 %v241
      %v504 = vunpack.c.h.b16 %v241
      %v505 = vpack.c.b16 %v381, %v377
      %v506 = vpack.c.b16 %v382, %v378
      %v507 = vpack.c.b16 %v383, %v379
      %v508 = vpack.c.b16 %v384, %v380
      %v509 = vpack.c.b16 %v389, %v385
      %v510 = vpack.c.b16 %v390, %v386
      %v511 = vpack.c.b16 %v391, %v387
      %v512 = vpack.c.b16 %v392, %v388
      %v513 = vpack.c.b16 %v397, %v393
      %v514 = vpack.c.b16 %v398, %v394
      %v515 = vpack.c.b16 %v399, %v395
      %v516 = vpack.c.b16 %v400, %v396
      %v517 = vpack.c.b16 %v405, %v401
      %v518 = vpack.c.b16 %v406, %v402
      %v519 = vpack.c.b16 %v407, %v403
      %v520 = vpack.c.b16 %v408, %v404
      %v521 = vpack.c.b16 %v413, %v409
      %v522 = vpack.c.b16 %v414, %v410
      %v523 = vpack.c.b16 %v415, %v411
      %v524 = vpack.c.b16 %v416, %v412
      %v525 = vpack.c.b16 %v421, %v417
      %v526 = vpack.c.b16 %v422, %v418
      %v527 = vpack.c.b16 %v423, %v419
      %v528 = vpack.c.b16 %v424, %v420
      %v529 = vpack.c.b16 %v429, %v425
      %v530 = vpack.c.b16 %v430, %v426
      %v531 = vpack.c.b16 %v431, %v427
      %v532 = vpack.c.b16 %v432, %v428
      %v533 = vpack.c.b16 %v437, %v433
      %v534 = vpack.c.b16 %v438, %v434
      %v535 = vpack.c.b16 %v439, %v435
      %v536 = vpack.c.b16 %v440, %v436
      %v537 = vpack.c.b16 %v445, %v441
      %v538 = vpack.c.b16 %v446, %v442
      %v539 = vpack.c.b16 %v447, %v443
      %v540 = vpack.c.b16 %v448, %v444
      %v541 = vpack.c.b16 %v453, %v449
      %v542 = vpack.c.b16 %v454, %v450
      %v543 = vpack.c.b16 %v455, %v451
      %v544 = vpack.c.b16 %v456, %v452
      %v545 = vpack.c.b16 %v461, %v457
      %v546 = vpack.c.b16 %v462, %v458
      %v547 = vpack.c.b16 %v463, %v459
      %v548 = vpack.c.b16 %v464, %v460
      %v549 = vpack.c.b16 %v469, %v465
      %v550 = vpack.c.b16 %v470, %v466
      %v551 = vpack.c.b16 %v471, %v467
      %v552 = vpack.c.b16 %v472, %v468
      %v553 = vpack.c.b16 %v477, %v473
      %v554 = vpack.c.b16 %v478, %v474
      %v555 = vpack.c.b16 %v479, %v475
      %v556 = vpack.c.b16 %v480, %v476
      %v557 = vpack.c.b16 %v485, %v481
      %v558 = vpack.c.b16 %v486, %v482
      %v559 = vpack.c.b16 %v487, %v483
      %v560 = vpack.c.b16 %v488, %v484
      %v561 = vpack.c.b16 %v493, %v489
      %v562 = vpack.c.b16 %v494, %v490
      %v563 = vpack.c.b16 %v495, %v491
      %v564 = vpack.c.b16 %v496, %v492
      %v565 = vpack.c.b16 %v501, %v497
      %v566 = vpack.c.b16 %v502, %v498
      %v567 = vpack.c.b16 %v503, %v499
      %v568 = vpack.c.b16 %v504, %v500
      %v697 = vunpack.c.l.b16 %v242
      %v698 = vunpack.c.l.b16 %v243
      %v699 = vunpack.c.l.b16 %v244
      %v700 = vunpack.c.l.b16 %v245
      %v701 = vunpack.c.l.b16 %v246
      %v702 = vunpack.c.l.b16 %v247
      %v703 = vunpack.c.l.b16 %v248
      %v704 = vunpack.c.l.b16 %v249
      %v705 = vunpack.c.l.b16 %v250
      %v706 = vunpack.c.l.b16 %v251
      %v707 = vunpack.c.l.b16 %v252
      %v708 = vunpack.c.l.b16 %v253
      %v709 = vunpack.c.l.b16 %v254
      %v710 = vunpack.c.l.b16 %v255
      %v711 = vunpack.c.l.b16 %v256
      %v712 = vunpack.c.l.b16 %v257
      %v713 = vunpack.c.l.b16 %v258
      %v714 = vunpack.c.l.b16 %v259
      %v715 = vunpack.c.l.b16 %v260
      %v716 = vunpack.c.l.b16 %v261
      %v717 = vunpack.c.l.b16 %v262
      %v718 = vunpack.c.l.b16 %v263
      %v719 = vunpack.c.l.b16 %v264
      %v720 = vunpack.c.l.b16 %v265
      %v721 = vunpack.c.l.b16 %v266
      %v722 = vunpack.c.l.b16 %v267
      %v723 = vunpack.c.l.b16 %v268
      %v724 = vunpack.c.l.b16 %v269
      %v725 = vunpack.c.l.b16 %v270
      %v726 = vunpack.c.l.b16 %v271
      %v727 = vunpack.c.l.b16 %v272
      %v728 = vunpack.c.l.b16 %v273
      %v729 = vunpack.c.l.b16 %v274
      %v730 = vunpack.c.l.b16 %v275
      %v731 = vunpack.c.l.b16 %v276
      %v732 = vunpack.c.l.b16 %v277
      %v733 = vunpack.c.l.b16 %v278
      %v734 = vunpack.c.l.b16 %v279
      %v735 = vunpack.c.l.b16 %v280
      %v736 = vunpack.c.l.b16 %v281
      %v737 = vunpack.c.l.b16 %v282
      %v738 = vunpack.c.l.b16 %v283
      %v739 = vunpack.c.l.b16 %v284
      %v740 = vunpack.c.l.b16 %v285
      %v741 = vunpack.c.l.b16 %v286
      %v742 = vunpack.c.l.b16 %v287
      %v743 = vunpack.c.l.b16 %v288
      %v744 = vunpack.c.l.b16 %v289
      %v745 = vunpack.c.l.b16 %v290
      %v746 = vunpack.c.l.b16 %v291
      %v747 = vunpack.c.l.b16 %v292
      %v748 = vunpack.c.l.b16 %v293
      %v749 = vunpack.c.l.b16 %v294
      %v750 = vunpack.c.l.b16 %v295
      %v751 = vunpack.c.l.b16 %v296
      %v752 = vunpack.c.l.b16 %v297
      %v753 = vunpack.c.l.b16 %v298
      %v754 = vunpack.c.l.b16 %v299
      %v755 = vunpack.c.l.b16 %v300
      %v756 = vunpack.c.l.b16 %v301
      %v757 = vunpack.c.l.b16 %v302
      %v758 = vunpack.c.l.b16 %v303
      %v759 = vunpack.c.l.b16 %v304
      %v760 = vunpack.c.l.b16 %v305
      %v761 = vpack.c.b16 %v698, %v697
      %v762 = vpack.c.b16 %v700, %v699
      %v763 = vpack.c.b16 %v702, %v701
      %v764 = vpack.c.b16 %v704, %v703
      %v765 = vpack.c.b16 %v706, %v705
      %v766 = vpack.c.b16 %v708, %v707
      %v767 = vpack.c.b16 %v710, %v709
      %v768 = vpack.c.b16 %v712, %v711
      %v769 = vpack.c.b16 %v714, %v713
      %v770 = vpack.c.b16 %v716, %v715
      %v771 = vpack.c.b16 %v718, %v717
      %v772 = vpack.c.b16 %v720, %v719
      %v773 = vpack.c.b16 %v722, %v721
      %v774 = vpack.c.b16 %v724, %v723
      %v775 = vpack.c.b16 %v726, %v725
      %v776 = vpack.c.b16 %v728, %v727
      %v777 = vpack.c.b16 %v730, %v729
      %v778 = vpack.c.b16 %v732, %v731
      %v779 = vpack.c.b16 %v734, %v733
      %v780 = vpack.c.b16 %v736, %v735
      %v781 = vpack.c.b16 %v738, %v737
      %v782 = vpack.c.b16 %v740, %v739
      %v783 = vpack.c.b16 %v742, %v741
      %v784 = vpack.c.b16 %v744, %v743
      %v785 = vpack.c.b16 %v746, %v745
      %v786 = vpack.c.b16 %v748, %v747
      %v787 = vpack.c.b16 %v750, %v749
      %v788 = vpack.c.b16 %v752, %v751
      %v789 = vpack.c.b16 %v754, %v753
      %v790 = vpack.c.b16 %v756, %v755
      %v791 = vpack.c.b16 %v758, %v757
      %v792 = vpack.c.b16 %v760, %v759
      %825 = vmatprep.subr.bf16.mxu0 0
      %826 = vmatpush1.bf16.msra.mxu0 %v761
      %827 = vmatprep.subr.bf16.mxu0 0
      %828 = vmatpush1.bf16.msra.mxu0 %v762
      %829 = vmatprep.subr.bf16.mxu0 0
      %830 = vmatpush1.bf16.msra.mxu0 %v763
      %831 = vmatprep.subr.bf16.mxu0 0
      %832 = vmatpush1.bf16.msra.mxu0 %v764
      %833 = vmatprep.subr.bf16.mxu0 0
      %834 = vmatpush1.bf16.msra.mxu0 %v765
      %835 = vmatprep.subr.bf16.mxu0 0
      %836 = vmatpush1.bf16.msra.mxu0 %v766
      %837 = vmatprep.subr.bf16.mxu0 0
      %838 = vmatpush1.bf16.msra.mxu0 %v767
      %839 = vmatprep.subr.bf16.mxu0 0
      %840 = vmatpush1.bf16.msra.mxu0 %v768
      %841 = vmatprep.subr.bf16.mxu0 0
      %842 = vmatpush1.bf16.msra.mxu0 %v769
      %843 = vmatprep.subr.bf16.mxu0 0
      %844 = vmatpush1.bf16.msra.mxu0 %v770
      %845 = vmatprep.subr.bf16.mxu0 0
      %846 = vmatpush1.bf16.msra.mxu0 %v771
      %847 = vmatprep.subr.bf16.mxu0 0
      %848 = vmatpush1.bf16.msra.mxu0 %v772
      %849 = vmatprep.subr.bf16.mxu0 0
      %850 = vmatpush1.bf16.msra.mxu0 %v773
      %851 = vmatprep.subr.bf16.mxu0 0
      %852 = vmatpush1.bf16.msra.mxu0 %v774
      %853 = vmatprep.subr.bf16.mxu0 0
      %854 = vmatpush1.bf16.msra.mxu0 %v775
      %855 = vmatprep.subr.bf16.mxu0 0
      %856 = vmatpush1.bf16.msra.mxu0 %v776
      %857 = vmatprep.mubr.bf16.mxu0 %v506
      %858 = vmatmul.mubr.bf16.gmra.mrb[0].mxu0 %v505
      %v859 = vpop.f32.mrb[0].mxu0
      %v860 = vadd.f32 %v311, %v859
      %v861 = vpop.f32.mrb[0].mxu0
      %v862 = vpop.f32.mrb[0].mxu0
      %v863 = vadd.f32 %v311, %v862
      %v864 = vpop.f32.mrb[0].mxu0
      %865 = vmatprep.mubr.bf16.mxu0 %v510
      %866 = vmatmul.mubr.bf16.gmra.mrb[0].mxu0 %v509
      %v867 = vpop.f32.mrb[0].mxu0
      %v868 = vadd.f32 %v311, %v867
      %v869 = vpop.f32.mrb[0].mxu0
      %v870 = vpop.f32.mrb[0].mxu0
      %v871 = vadd.f32 %v311, %v870
      %v872 = vpop.f32.mrb[0].mxu0
      %873 = vmatprep.mubr.bf16.mxu0 %v514
      %874 = vmatmul.mubr.bf16.gmra.mrb[0].mxu0 %v513
      %v875 = vpop.f32.mrb[0].mxu0
      %v876 = vadd.f32 %v311, %v875
      %v877 = vpop.f32.mrb[0].mxu0
      %v878 = vpop.f32.mrb[0].mxu0
      %v879 = vadd.f32 %v311, %v878
      %v880 = vpop.f32.mrb[0].mxu0
      %881 = vmatprep.mubr.bf16.mxu0 %v518
      %882 = vmatmul.mubr.bf16.gmra.mrb[0].mxu0 %v517
      %v883 = vpop.f32.mrb[0].mxu0
      %v884 = vadd.f32 %v311, %v883
      %v885 = vpop.f32.mrb[0].mxu0
      %v886 = vpop.f32.mrb[0].mxu0
      %v887 = vadd.f32 %v311, %v886
      %v888 = vpop.f32.mrb[0].mxu0
      %889 = vmatprep.mubr.bf16.mxu0 %v522
      %890 = vmatmul.mubr.bf16.gmra.mrb[0].mxu0 %v521
      %v891 = vpop.f32.mrb[0].mxu0
      %v892 = vadd.f32 %v311, %v891
      %v893 = vpop.f32.mrb[0].mxu0
      %v894 = vpop.f32.mrb[0].mxu0
      %v895 = vadd.f32 %v311, %v894
      %v896 = vpop.f32.mrb[0].mxu0
      %897 = vmatprep.mubr.bf16.mxu0 %v526
      %898 = vmatmul.mubr.bf16.gmra.mrb[0].mxu0 %v525
      %v899 = vpop.f32.mrb[0].mxu0
      %v900 = vadd.f32 %v311, %v899
      %v901 = vpop.f32.mrb[0].mxu0
      %v902 = vpop.f32.mrb[0].mxu0
      %v903 = vadd.f32 %v311, %v902
      %v904 = vpop.f32.mrb[0].mxu0
      %905 = vmatprep.mubr.bf16.mxu0 %v530
      %906 = vmatmul.mubr.bf16.gmra.mrb[0].mxu0 %v529
      %v907 = vpop.f32.mrb[0].mxu0
      %v908 = vadd.f32 %v311, %v907
      %v909 = vpop.f32.mrb[0].mxu0
      %v910 = vpop.f32.mrb[0].mxu0
      %v911 = vadd.f32 %v311, %v910
      %v912 = vpop.f32.mrb[0].mxu0
      %913 = vmatprep.mubr.bf16.mxu0 %v534
      %914 = vmatmul.mubr.bf16.gmra.mrb[0].mxu0 %v533
      %v915 = vpop.f32.mrb[0].mxu0
      %v916 = vadd.f32 %v311, %v915
      %v917 = vpop.f32.mrb[0].mxu0
      %v918 = vpop.f32.mrb[0].mxu0
      %v919 = vadd.f32 %v311, %v918
      %v920 = vpop.f32.mrb[0].mxu0
      %921 = vmatprep.mubr.bf16.mxu0 %v538
      %922 = vmatmul.mubr.bf16.gmra.mrb[0].mxu0 %v537
      %v923 = vpop.f32.mrb[0].mxu0
      %v924 = vadd.f32 %v311, %v923
      %v925 = vpop.f32.mrb[0].mxu0
      %v926 = vpop.f32.mrb[0].mxu0
      %v927 = vadd.f32 %v311, %v926
      %v928 = vpop.f32.mrb[0].mxu0
      %929 = vmatprep.mubr.bf16.mxu0 %v542
      %930 = vmatmul.mubr.bf16.gmra.mrb[0].mxu0 %v541
      %v931 = vpop.f32.mrb[0].mxu0
      %v932 = vadd.f32 %v311, %v931
      %v933 = vpop.f32.mrb[0].mxu0
      %v934 = vpop.f32.mrb[0].mxu0
      %v935 = vadd.f32 %v311, %v934
      %v936 = vpop.f32.mrb[0].mxu0
      %937 = vmatprep.mubr.bf16.mxu0 %v546
      %938 = vmatmul.mubr.bf16.gmra.mrb[0].mxu0 %v545
      %v939 = vpop.f32.mrb[0].mxu0
      %v940 = vadd.f32 %v311, %v939
      %v941 = vpop.f32.mrb[0].mxu0
      %v942 = vpop.f32.mrb[0].mxu0
      %v943 = vadd.f32 %v311, %v942
      %v944 = vpop.f32.mrb[0].mxu0
      %945 = vmatprep.mubr.bf16.mxu0 %v550
      %946 = vmatmul.mubr.bf16.gmra.mrb[0].mxu0 %v549
      %v947 = vpop.f32.mrb[0].mxu0
      %v948 = vadd.f32 %v311, %v947
      %v949 = vpop.f32.mrb[0].mxu0
      %v950 = vpop.f32.mrb[0].mxu0
      %v951 = vadd.f32 %v311, %v950
      %v952 = vpop.f32.mrb[0].mxu0
      %953 = vmatprep.mubr.bf16.mxu0 %v554
      %954 = vmatmul.mubr.bf16.gmra.mrb[0].mxu0 %v553
      %v955 = vpop.f32.mrb[0].mxu0
      %v956 = vadd.f32 %v311, %v955
      %v957 = vpop.f32.mrb[0].mxu0
      %v958 = vpop.f32.mrb[0].mxu0
      %v959 = vadd.f32 %v311, %v958
      %v960 = vpop.f32.mrb[0].mxu0
      %961 = vmatprep.mubr.bf16.mxu0 %v558
      %962 = vmatmul.mubr.bf16.gmra.mrb[0].mxu0 %v557
      %v963 = vpop.f32.mrb[0].mxu0
      %v964 = vadd.f32 %v311, %v963
      %v965 = vpop.f32.mrb[0].mxu0
      %v966 = vpop.f32.mrb[0].mxu0
      %v967 = vadd.f32 %v311, %v966
      %v968 = vpop.f32.mrb[0].mxu0
      %969 = vmatprep.mubr.bf16.mxu0 %v562
      %970 = vmatmul.mubr.bf16.gmra.mrb[0].mxu0 %v561
      %v971 = vpop.f32.mrb[0].mxu0
      %v972 = vadd.f32 %v311, %v971
      %v973 = vpop.f32.mrb[0].mxu0
      %v974 = vpop.f32.mrb[0].mxu0
      %v975 = vadd.f32 %v311, %v974
      %v976 = vpop.f32.mrb[0].mxu0
      %977 = vmatprep.mubr.bf16.mxu0 %v566
      %978 = vmatmul.mubr.bf16.gmra.mrb[0].mxu0 %v565
      %v979 = vpop.f32.mrb[0].mxu0
      %v980 = vadd.f32 %v311, %v979
      %v981 = vpop.f32.mrb[0].mxu0
      %v982 = vpop.f32.mrb[0].mxu0
      %v983 = vadd.f32 %v311, %v982
      %v984 = vpop.f32.mrb[0].mxu0
      %985 = vdwg.mxu0
      %986 = vmatprep.subr.bf16.mxu0 0
      %987 = vmatpush1.bf16.msra.mxu0 %v777
      %988 = vmatprep.subr.bf16.mxu0 0
      %989 = vmatpush1.bf16.msra.mxu0 %v778
      %990 = vmatprep.subr.bf16.mxu0 0
      %991 = vmatpush1.bf16.msra.mxu0 %v779
      %992 = vmatprep.subr.bf16.mxu0 0
      %993 = vmatpush1.bf16.msra.mxu0 %v780
      %994 = vmatprep.subr.bf16.mxu0 0
      %995 = vmatpush1.bf16.msra.mxu0 %v781
      %996 = vmatprep.subr.bf16.mxu0 0
      %997 = vmatpush1.bf16.msra.mxu0 %v782
      %998 = vmatprep.subr.bf16.mxu0 0
      %999 = vmatpush1.bf16.msra.mxu0 %v783
      %1000 = vmatprep.subr.bf16.mxu0 0
      %1001 = vmatpush1.bf16.msra.mxu0 %v784
      %1002 = vmatprep.subr.bf16.mxu0 0
      %1003 = vmatpush1.bf16.msra.mxu0 %v785
      %1004 = vmatprep.subr.bf16.mxu0 0
      %1005 = vmatpush1.bf16.msra.mxu0 %v786
      %1006 = vmatprep.subr.bf16.mxu0 0
      %1007 = vmatpush1.bf16.msra.mxu0 %v787
      %1008 = vmatprep.subr.bf16.mxu0 0
      %1009 = vmatpush1.bf16.msra.mxu0 %v788
      %1010 = vmatprep.subr.bf16.mxu0 0
      %1011 = vmatpush1.bf16.msra.mxu0 %v789
      %1012 = vmatprep.subr.bf16.mxu0 0
      %1013 = vmatpush1.bf16.msra.mxu0 %v790
      %1014 = vmatprep.subr.bf16.mxu0 0
      %1015 = vmatpush1.bf16.msra.mxu0 %v791
      %1016 = vmatprep.subr.bf16.mxu0 0
      %1017 = vmatpush1.bf16.msra.mxu0 %v792
      %1018 = vmatprep.mubr.bf16.mxu0 %v508
      %1019 = vmatmul.mubr.bf16.gmra.mrb[0].mxu0 %v507
      %v1020 = vpop.f32.mrb[0].mxu0
      %v1021 = vadd.f32 %v860, %v1020
      %v1022 = vpop.f32.mrb[0].mxu0
      %v1023 = vpop.f32.mrb[0].mxu0
      %v1024 = vadd.f32 %v863, %v1023
      %v1025 = vpop.f32.mrb[0].mxu0
      %1026 = vmatprep.mubr.bf16.mxu0 %v512
      %1027 = vmatmul.mubr.bf16.gmra.mrb[0].mxu0 %v511
      %v1028 = vpop.f32.mrb[0].mxu0
      %v1029 = vadd.f32 %v868, %v1028
      %v1030 = vpop.f32.mrb[0].mxu0
      %v1031 = vpop.f32.mrb[0].mxu0
      %v1032 = vadd.f32 %v871, %v1031
      %v1033 = vpop.f32.mrb[0].mxu0
      %1034 = vmatprep.mubr.bf16.mxu0 %v516
      %1035 = vmatmul.mubr.bf16.gmra.mrb[0].mxu0 %v515
      %v1036 = vpop.f32.mrb[0].mxu0
      %v1037 = vadd.f32 %v876, %v1036
      %v1038 = vpop.f32.mrb[0].mxu0
      %v1039 = vpop.f32.mrb[0].mxu0
      %v1040 = vadd.f32 %v879, %v1039
      %v1041 = vpop.f32.mrb[0].mxu0
      %1042 = vmatprep.mubr.bf16.mxu0 %v520
      %1043 = vmatmul.mubr.bf16.gmra.mrb[0].mxu0 %v519
      %v1044 = vpop.f32.mrb[0].mxu0
      %v1045 = vadd.f32 %v884, %v1044
      %v1046 = vpop.f32.mrb[0].mxu0
      %v1047 = vpop.f32.mrb[0].mxu0
      %v1048 = vadd.f32 %v887, %v1047
      %v1049 = vpop.f32.mrb[0].mxu0
      %1050 = vmatprep.mubr.bf16.mxu0 %v524
      %1051 = vmatmul.mubr.bf16.gmra.mrb[0].mxu0 %v523
      %v1052 = vpop.f32.mrb[0].mxu0
      %v1053 = vadd.f32 %v892, %v1052
      %v1054 = vpop.f32.mrb[0].mxu0
      %v1055 = vpop.f32.mrb[0].mxu0
      %v1056 = vadd.f32 %v895, %v1055
      %v1057 = vpop.f32.mrb[0].mxu0
      %1058 = vmatprep.mubr.bf16.mxu0 %v528
      %1059 = vmatmul.mubr.bf16.gmra.mrb[0].mxu0 %v527
      %v1060 = vpop.f32.mrb[0].mxu0
      %v1061 = vadd.f32 %v900, %v1060
      %v1062 = vpop.f32.mrb[0].mxu0
      %v1063 = vpop.f32.mrb[0].mxu0
      %v1064 = vadd.f32 %v903, %v1063
      %v1065 = vpop.f32.mrb[0].mxu0
      %1066 = vmatprep.mubr.bf16.mxu0 %v532
      %1067 = vmatmul.mubr.bf16.gmra.mrb[0].mxu0 %v531
      %v1068 = vpop.f32.mrb[0].mxu0
      %v1069 = vadd.f32 %v908, %v1068
      %v1070 = vpop.f32.mrb[0].mxu0
      %v1071 = vpop.f32.mrb[0].mxu0
      %v1072 = vadd.f32 %v911, %v1071
      %v1073 = vpop.f32.mrb[0].mxu0
      %1074 = vmatprep.mubr.bf16.mxu0 %v536
      %1075 = vmatmul.mubr.bf16.gmra.mrb[0].mxu0 %v535
      %v1076 = vpop.f32.mrb[0].mxu0
      %v1077 = vadd.f32 %v916, %v1076
      %v1078 = vpop.f32.mrb[0].mxu0
      %v1079 = vpop.f32.mrb[0].mxu0
      %v1080 = vadd.f32 %v919, %v1079
      %v1081 = vpop.f32.mrb[0].mxu0
      %1082 = vmatprep.mubr.bf16.mxu0 %v540
      %1083 = vmatmul.mubr.bf16.gmra.mrb[0].mxu0 %v539
      %v1084 = vpop.f32.mrb[0].mxu0
      %v1085 = vadd.f32 %v924, %v1084
      %v1086 = vpop.f32.mrb[0].mxu0
      %v1087 = vpop.f32.mrb[0].mxu0
      %v1088 = vadd.f32 %v927, %v1087
      %v1089 = vpop.f32.mrb[0].mxu0
      %1090 = vmatprep.mubr.bf16.mxu0 %v544
      %1091 = vmatmul.mubr.bf16.gmra.mrb[0].mxu0 %v543
      %v1092 = vpop.f32.mrb[0].mxu0
      %v1093 = vadd.f32 %v932, %v1092
      %v1094 = vpop.f32.mrb[0].mxu0
      %v1095 = vpop.f32.mrb[0].mxu0
      %v1096 = vadd.f32 %v935, %v1095
      %v1097 = vpop.f32.mrb[0].mxu0
      %1098 = vmatprep.mubr.bf16.mxu0 %v548
      %1099 = vmatmul.mubr.bf16.gmra.mrb[0].mxu0 %v547
      %v1100 = vpop.f32.mrb[0].mxu0
      %v1101 = vadd.f32 %v940, %v1100
      %v1102 = vpop.f32.mrb[0].mxu0
      %v1103 = vpop.f32.mrb[0].mxu0
      %v1104 = vadd.f32 %v943, %v1103
      %v1105 = vpop.f32.mrb[0].mxu0
      %1106 = vmatprep.mubr.bf16.mxu0 %v552
      %1107 = vmatmul.mubr.bf16.gmra.mrb[0].mxu0 %v551
      %v1108 = vpop.f32.mrb[0].mxu0
      %v1109 = vadd.f32 %v948, %v1108
      %v1110 = vpop.f32.mrb[0].mxu0
      %v1111 = vpop.f32.mrb[0].mxu0
      %v1112 = vadd.f32 %v951, %v1111
      %v1113 = vpop.f32.mrb[0].mxu0
      %1114 = vmatprep.mubr.bf16.mxu0 %v556
      %1115 = vmatmul.mubr.bf16.gmra.mrb[0].mxu0 %v555
      %v1116 = vpop.f32.mrb[0].mxu0
      %v1117 = vadd.f32 %v956, %v1116
      %v1118 = vpop.f32.mrb[0].mxu0
      %v1119 = vpop.f32.mrb[0].mxu0
      %v1120 = vadd.f32 %v959, %v1119
      %v1121 = vpop.f32.mrb[0].mxu0
      %1122 = vmatprep.mubr.bf16.mxu0 %v560
      %1123 = vmatmul.mubr.bf16.gmra.mrb[0].mxu0 %v559
      %v1124 = vpop.f32.mrb[0].mxu0
      %v1125 = vadd.f32 %v964, %v1124
      %v1126 = vpop.f32.mrb[0].mxu0
      %v1127 = vpop.f32.mrb[0].mxu0
      %v1128 = vadd.f32 %v967, %v1127
      %v1129 = vpop.f32.mrb[0].mxu0
      %1130 = vmatprep.mubr.bf16.mxu0 %v564
      %1131 = vmatmul.mubr.bf16.gmra.mrb[0].mxu0 %v563
      %v1132 = vpop.f32.mrb[0].mxu0
      %v1133 = vadd.f32 %v972, %v1132
      %v1134 = vpop.f32.mrb[0].mxu0
      %v1135 = vpop.f32.mrb[0].mxu0
      %v1136 = vadd.f32 %v975, %v1135
      %v1137 = vpop.f32.mrb[0].mxu0
      %1138 = vmatprep.mubr.bf16.mxu0 %v568
      %1139 = vmatmul.mubr.bf16.gmra.mrb[0].mxu0 %v567
      %v1140 = vpop.f32.mrb[0].mxu0
      %v1141 = vadd.f32 %v980, %v1140
      %v1142 = vpop.f32.mrb[0].mxu0
      %v1143 = vpop.f32.mrb[0].mxu0
      %v1144 = vadd.f32 %v983, %v1143
      %v1145 = vpop.f32.mrb[0].mxu0
      %1146 = vdwg.mxu0
      %v1147 = vmax.f32 %v1021, 0.0
      %v1148 = vmax.f32 %v1024, 0.0
      %v1149 = vmax.f32 %v1029, 0.0
      %v1150 = vmax.f32 %v1032, 0.0
      %v1151 = vmax.f32 %v1037, 0.0
      %v1152 = vmax.f32 %v1040, 0.0
      %v1153 = vmax.f32 %v1045, 0.0
      %v1154 = vmax.f32 %v1048, 0.0
      %v1155 = vmax.f32 %v1053, 0.0
      %v1156 = vmax.f32 %v1056, 0.0
      %v1157 = vmax.f32 %v1061, 0.0
      %v1158 = vmax.f32 %v1064, 0.0
      %v1159 = vmax.f32 %v1069, 0.0
      %v1160 = vmax.f32 %v1072, 0.0
      %v1161 = vmax.f32 %v1077, 0.0
      %v1162 = vmax.f32 %v1080, 0.0
      %v1163 = vmax.f32 %v1085, 0.0
      %v1164 = vmax.f32 %v1088, 0.0
      %v1165 = vmax.f32 %v1093, 0.0
      %v1166 = vmax.f32 %v1096, 0.0
      %v1167 = vmax.f32 %v1101, 0.0
      %v1168 = vmax.f32 %v1104, 0.0
      %v1169 = vmax.f32 %v1109, 0.0
      %v1170 = vmax.f32 %v1112, 0.0
      %v1171 = vmax.f32 %v1117, 0.0
      %v1172 = vmax.f32 %v1120, 0.0
      %v1173 = vmax.f32 %v1125, 0.0
      %v1174 = vmax.f32 %v1128, 0.0
      %v1175 = vmax.f32 %v1133, 0.0
      %v1176 = vmax.f32 %v1136, 0.0
      %v1177 = vmax.f32 %v1141, 0.0
      %v1178 = vmax.f32 %v1144, 0.0
      %v1179 = vpack.c.bf16 %v1148, %v1147
      %v1180 = vpack.c.bf16 %v1150, %v1149
      %v1181 = vpack.c.bf16 %v1152, %v1151
      %v1182 = vpack.c.bf16 %v1154, %v1153
      %v1183 = vpack.c.bf16 %v1156, %v1155
      %v1184 = vpack.c.bf16 %v1158, %v1157
      %v1185 = vpack.c.bf16 %v1160, %v1159
      %v1186 = vpack.c.bf16 %v1162, %v1161
      %v1187 = vpack.c.bf16 %v1164, %v1163
      %v1188 = vpack.c.bf16 %v1166, %v1165
      %v1189 = vpack.c.bf16 %v1168, %v1167
      %v1190 = vpack.c.bf16 %v1170, %v1169
      %v1191 = vpack.c.bf16 %v1172, %v1171
      %v1192 = vpack.c.bf16 %v1174, %v1173
      %v1193 = vpack.c.bf16 %v1176, %v1175
      %v1194 = vpack.c.bf16 %v1178, %v1177
      %v1211 = vunpack.c.l.b16 %v1179
      %v1212 = vunpack.c.h.b16 %v1179
      %v1213 = vunpack.c.l.b16 %v1180
      %v1214 = vunpack.c.h.b16 %v1180
      %v1215 = vunpack.c.l.b16 %v1181
      %v1216 = vunpack.c.h.b16 %v1181
      %v1217 = vunpack.c.l.b16 %v1182
      %v1218 = vunpack.c.h.b16 %v1182
      %v1219 = vunpack.c.l.b16 %v1183
      %v1220 = vunpack.c.h.b16 %v1183
      %v1221 = vunpack.c.l.b16 %v1184
      %v1222 = vunpack.c.h.b16 %v1184
      %v1223 = vunpack.c.l.b16 %v1185
      %v1224 = vunpack.c.h.b16 %v1185
      %v1225 = vunpack.c.l.b16 %v1186
      %v1226 = vunpack.c.h.b16 %v1186
      %v1227 = vunpack.c.l.b16 %v1187
      %v1228 = vunpack.c.h.b16 %v1187
      %v1229 = vunpack.c.l.b16 %v1188
      %v1230 = vunpack.c.h.b16 %v1188
      %v1231 = vunpack.c.l.b16 %v1189
      %v1232 = vunpack.c.h.b16 %v1189
      %v1233 = vunpack.c.l.b16 %v1190
      %v1234 = vunpack.c.h.b16 %v1190
      %v1235 = vunpack.c.l.b16 %v1191
      %v1236 = vunpack.c.h.b16 %v1191
      %v1237 = vunpack.c.l.b16 %v1192
      %v1238 = vunpack.c.h.b16 %v1192
      %v1239 = vunpack.c.l.b16 %v1193
      %v1240 = vunpack.c.h.b16 %v1193
      %v1241 = vunpack.c.l.b16 %v1194
      %v1242 = vunpack.c.h.b16 %v1194
      %v1243 = vpack.c.b16 %v1211, %v1211
      %v1244 = vpack.c.b16 %v1212, %v1212
      %v1245 = vpack.c.b16 %v1213, %v1213
      %v1246 = vpack.c.b16 %v1214, %v1214
      %v1247 = vpack.c.b16 %v1215, %v1215
      %v1248 = vpack.c.b16 %v1216, %v1216
      %v1249 = vpack.c.b16 %v1217, %v1217
      %v1250 = vpack.c.b16 %v1218, %v1218
      %v1251 = vpack.c.b16 %v1219, %v1219
      %v1252 = vpack.c.b16 %v1220, %v1220
      %v1253 = vpack.c.b16 %v1221, %v1221
      %v1254 = vpack.c.b16 %v1222, %v1222
      %v1255 = vpack.c.b16 %v1223, %v1223
      %v1256 = vpack.c.b16 %v1224, %v1224
      %v1257 = vpack.c.b16 %v1225, %v1225
      %v1258 = vpack.c.b16 %v1226, %v1226
      %v1259 = vpack.c.b16 %v1227, %v1227
      %v1260 = vpack.c.b16 %v1228, %v1228
      %v1261 = vpack.c.b16 %v1229, %v1229
      %v1262 = vpack.c.b16 %v1230, %v1230
      %v1263 = vpack.c.b16 %v1231, %v1231
      %v1264 = vpack.c.b16 %v1232, %v1232
      %v1265 = vpack.c.b16 %v1233, %v1233
      %v1266 = vpack.c.b16 %v1234, %v1234
      %v1267 = vpack.c.b16 %v1235, %v1235
      %v1268 = vpack.c.b16 %v1236, %v1236
      %v1269 = vpack.c.b16 %v1237, %v1237
      %v1270 = vpack.c.b16 %v1238, %v1238
      %v1271 = vpack.c.b16 %v1239, %v1239
      %v1272 = vpack.c.b16 %v1240, %v1240
      %v1273 = vpack.c.b16 %v1241, %v1241
      %v1274 = vpack.c.b16 %v1242, %v1242
      %vm1307 = vcmask 257024
      %1308 = vst.msk [vmem:[%s175] sm:$0xf] %vm1307, %v1243
      %1309 = vst.msk [vmem:[%s175 + $0x4] sm:$0xf] %vm1307, %v1244
      %1310 = vst.msk [vmem:[%s175 + $0x8] sm:$0xf] %vm1307, %v1245
      %1311 = vst.msk [vmem:[%s175 + $0xc] sm:$0xf] %vm1307, %v1246
      %1312 = vst.msk [vmem:[%s175 + $0x10] sm:$0xf] %vm1307, %v1247
      %1313 = vst.msk [vmem:[%s175 + $0x14] sm:$0xf] %vm1307, %v1248
      %1314 = vst.msk [vmem:[%s175 + $0x18] sm:$0xf] %vm1307, %v1249
      %1315 = vst.msk [vmem:[%s175 + $0x1c] sm:$0xf] %vm1307, %v1250
      %1316 = vst.msk [vmem:[%s175 + $0x20] sm:$0xf] %vm1307, %v1251
      %1317 = vst.msk [vmem:[%s175 + $0x24] sm:$0xf] %vm1307, %v1252
      %1318 = vst.msk [vmem:[%s175 + $0x28] sm:$0xf] %vm1307, %v1253
      %1319 = vst.msk [vmem:[%s175 + $0x2c] sm:$0xf] %vm1307, %v1254
      %1320 = vst.msk [vmem:[%s175 + $0x30] sm:$0xf] %vm1307, %v1255
      %1321 = vst.msk [vmem:[%s175 + $0x34] sm:$0xf] %vm1307, %v1256
      %1322 = vst.msk [vmem:[%s175 + $0x38] sm:$0xf] %vm1307, %v1257
      %1323 = vst.msk [vmem:[%s175 + $0x3c] sm:$0xf] %vm1307, %v1258
      %1324 = vst.msk [vmem:[%s175 + $0x40] sm:$0xf] %vm1307, %v1259
      %1325 = vst.msk [vmem:[%s175 + $0x44] sm:$0xf] %vm1307, %v1260
      %1326 = vst.msk [vmem:[%s175 + $0x48] sm:$0xf] %vm1307, %v1261
      %1327 = vst.msk [vmem:[%s175 + $0x4c] sm:$0xf] %vm1307, %v1262
      %1328 = vst.msk [vmem:[%s175 + $0x50] sm:$0xf] %vm1307, %v1263
      %1329 = vst.msk [vmem:[%s175 + $0x54] sm:$0xf] %vm1307, %v1264
      %1330 = vst.msk [vmem:[%s175 + $0x58] sm:$0xf] %vm1307, %v1265
      %1331 = vst.msk [vmem:[%s175 + $0x5c] sm:$0xf] %vm1307, %v1266
      %1332 = vst.msk [vmem:[%s175 + $0x60] sm:$0xf] %vm1307, %v1267
      %1333 = vst.msk [vmem:[%s175 + $0x64] sm:$0xf] %vm1307, %v1268
      %1334 = vst.msk [vmem:[%s175 + $0x68] sm:$0xf] %vm1307, %v1269
      %1335 = vst.msk [vmem:[%s175 + $0x6c] sm:$0xf] %vm1307, %v1270
      %1336 = vst.msk [vmem:[%s175 + $0x70] sm:$0xf] %vm1307, %v1271
      %1337 = vst.msk [vmem:[%s175 + $0x74] sm:$0xf] %vm1307, %v1272
      %1338 = vst.msk [vmem:[%s175 + $0x78] sm:$0xf] %vm1307, %v1273
      %1339 = vst.msk [vmem:[%s175 + $0x7c] sm:$0xf] %vm1307, %v1274
      %s1340 = smul.u32 32, %s14
      %p1341 = scmp.lt.s32.totalorder %s1340, 63
      %s1342 = scalar_select %p1341, %s1340, 63
      %s1343 = smul.addr %s1342, 4
      %s1344 = scalar_lea.vmem %s3, %s1343
      // Predicated region
      $region33: #{_lambda_.10} parent=31 // pred_check
        %p1345 = pneg %p100
      $region34: #{_lambda_.10} parent=31 // pred_check_branch
        %1347 = sbr.rel (%p1345) target = $region36
      $region35: #{_lambda_.10} parent=31 // pred_region
        %s1348 = smul.u32 32, %s14
      $region36: #{_lambda_.10} parent=31 // pred_fallthru
        _
    $region32: #{_lambda_.10} parent=5 // pred_fallthru
      _
    %p1349 = scmp.le.s32.totalorder 2, %s9
    // Predicated region
    $region37: #{_lambda_.10} parent=5 // pred_check
      %p1350 = pneg %p1349
    $region38: #{_lambda_.10} parent=5 // pred_check_branch
      %1352 = sbr.rel (%p1350) target = $region40
    $region39: #{_lambda_.10} parent=5 // pred_region
      %s1353 = ssub.s32 %s9, 2
      // Predicated region
      $region41: #{_lambda_.10} parent=39 // pred_check
        %p1354 = pneg %p106
      $region42: #{_lambda_.10} parent=39 // pred_check_branch
        %1356 = sbr.rel (%p1354) target = $region44
      $region43: #{_lambda_.10} parent=39 // pred_region
        %s1357 = smul.u32 32, %s15
        %p1358 = scmp.lt.s32.totalorder %s1357, 63
        %s1359 = scalar_select %p1358, %s1357, 63
        %s1360 = smul.addr %s1359, 4
        %s1361 = scalar_lea.vmem %s3, %s1360
      $region44: #{_lambda_.10} parent=39 // pred_fallthru
        _
    $region40: #{_lambda_.10} parent=5 // pred_fallthru
      _
  $region6: #{_lambda_.10} parent=0 // loop_footer
    %s13 = sadd.s32 1, %s9
  $region7: #{_lambda_.10} parent=0 // loop_footer_branch
    %8 = sbr.rel target = $region3
  $region8: #{_lambda_.10} parent=0 // loop_exit
    _

// kernel: _lambda_.11
$region0: #{_lambda_.11}
  #allocation0 [shape = 'u32[]', space=smem, size = 0x4, offset = 0x4, fixed_abs, tag = 'smem constant byte address 0x4 - core index']
  #allocation1 [shape = 'u32[144,128]{1,0:T(1,128)}', space=vmem, size = 0x12000, scoped, tag = 'internal scratch']
  %s0 = inlined_call_operand.vmem [shape: bf16[128,512], index: 0, kind: input, shape index: {}]
  %s1 = inlined_call_operand.vmem [shape: bf16[512,64], index: 1, kind: input, shape index: {}]
  %s2 = inlined_call_operand.vmem [shape: f32[1,64], index: 2, kind: input, shape index: {}]
  %s3 = inlined_call_operand.vmem [shape: bf16[128,64], index: 3, kind: output, shape index: {}]
  %s4 = sld [smem:[#allocation0]]
  $region22: #{_lambda_.11} parent=0
    _
  %s6 = ssub.s32 1, %s4
  %s7 = scalar_select 0, %s6, %s4
  // Predicated region
  $region2: #{_lambda_.11} parent=0 // pred_check
    _
  $region3: #{_lambda_.11} parent=0 // pred_check_branch
    %9 = sbr.rel (0) target = $region5
  $region4: #{_lambda_.11} parent=0 // pred_region
    _
  $region5: #{_lambda_.11} parent=0 // pred_fallthru
    _
  // Predicated region
  $region6: #{_lambda_.11} parent=0 // pred_check
    _
  $region7: #{_lambda_.11} parent=0 // pred_check_branch
    %11 = sbr.rel (0) target = $region9
  $region8: #{_lambda_.11} parent=0 // pred_region
    _
  $region9: #{_lambda_.11} parent=0 // pred_fallthru
    _
  // Predicated region
  $region10: #{_lambda_.11} parent=0 // pred_check
    _
  $region11: #{_lambda_.11} parent=0 // pred_check_branch
    %13 = sbr.rel (0) target = $region13
  $region12: #{_lambda_.11} parent=0 // pred_region
    _
  $region13: #{_lambda_.11} parent=0 // pred_fallthru
    _
  %v15 = vld [vmem:[%s0] sm:$0xff]
  %v16 = vld [vmem:[%s0 + $0x8] sm:$0xff]
  %v17 = vld [vmem:[%s0 + $0x10] sm:$0xff]
  %v18 = vld [vmem:[%s0 + $0x18] sm:$0xff]
  %v19 = vld [vmem:[%s0 + $0x20] sm:$0xff]
  %v20 = vld [vmem:[%s0 + $0x28] sm:$0xff]
  %v21 = vld [vmem:[%s0 + $0x30] sm:$0xff]
  %v22 = vld [vmem:[%s0 + $0x38] sm:$0xff]
  %v23 = vld [vmem:[%s0 + $0x40] sm:$0xff]
  %v24 = vld [vmem:[%s0 + $0x48] sm:$0xff]
  %v25 = vld [vmem:[%s0 + $0x50] sm:$0xff]
  %v26 = vld [vmem:[%s0 + $0x58] sm:$0xff]
  %v27 = vld [vmem:[%s0 + $0x60] sm:$0xff]
  %v28 = vld [vmem:[%s0 + $0x68] sm:$0xff]
  %v29 = vld [vmem:[%s0 + $0x70] sm:$0xff]
  %v30 = vld [vmem:[%s0 + $0x78] sm:$0xff]
  %v31 = vld [vmem:[%s0 + $0x80] sm:$0xff]
  %v32 = vld [vmem:[%s0 + $0x88] sm:$0xff]
  %v33 = vld [vmem:[%s0 + $0x90] sm:$0xff]
  %v34 = vld [vmem:[%s0 + $0x98] sm:$0xff]
  %v35 = vld [vmem:[%s0 + $0xa0] sm:$0xff]
  %v36 = vld [vmem:[%s0 + $0xa8] sm:$0xff]
  %v37 = vld [vmem:[%s0 + $0xb0] sm:$0xff]
  %v38 = vld [vmem:[%s0 + $0xb8] sm:$0xff]
  %v39 = vld [vmem:[%s0 + $0xc0] sm:$0xff]
  %v40 = vld [vmem:[%s0 + $0xc8] sm:$0xff]
  %v41 = vld [vmem:[%s0 + $0xd0] sm:$0xff]
  %v42 = vld [vmem:[%s0 + $0xd8] sm:$0xff]
  %v43 = vld [vmem:[%s0 + $0xe0] sm:$0xff]
  %v44 = vld [vmem:[%s0 + $0xe8] sm:$0xff]
  %v45 = vld [vmem:[%s0 + $0xf0] sm:$0xff]
  %v46 = vld [vmem:[%s0 + $0xf8] sm:$0xff]
  %v47 = vld [vmem:[%s1] sm:$0xf]
  %v48 = vld [vmem:[%s1 + $0x4] sm:$0xf]
  %v49 = vld [vmem:[%s1 + $0x8] sm:$0xf]
  %v50 = vld [vmem:[%s1 + $0xc] sm:$0xf]
  %v51 = vld [vmem:[%s1 + $0x10] sm:$0xf]
  %v52 = vld [vmem:[%s1 + $0x14] sm:$0xf]
  %v53 = vld [vmem:[%s1 + $0x18] sm:$0xf]
  %v54 = vld [vmem:[%s1 + $0x1c] sm:$0xf]
  %v55 = vld [vmem:[%s1 + $0x20] sm:$0xf]
  %v56 = vld [vmem:[%s1 + $0x24] sm:$0xf]
  %v57 = vld [vmem:[%s1 + $0x28] sm:$0xf]
  %v58 = vld [vmem:[%s1 + $0x2c] sm:$0xf]
  %v59 = vld [vmem:[%s1 + $0x30] sm:$0xf]
  %v60 = vld [vmem:[%s1 + $0x34] sm:$0xf]
  %v61 = vld [vmem:[%s1 + $0x38] sm:$0xf]
  %v62 = vld [vmem:[%s1 + $0x3c] sm:$0xf]
  %v63 = vld [vmem:[%s1 + $0x40] sm:$0xf]
  %v64 = vld [vmem:[%s1 + $0x44] sm:$0xf]
  %v65 = vld [vmem:[%s1 + $0x48] sm:$0xf]
  %v66 = vld [vmem:[%s1 + $0x4c] sm:$0xf]
  %v67 = vld [vmem:[%s1 + $0x50] sm:$0xf]
  %v68 = vld [vmem:[%s1 + $0x54] sm:$0xf]
  %v69 = vld [vmem:[%s1 + $0x58] sm:$0xf]
  %v70 = vld [vmem:[%s1 + $0x5c] sm:$0xf]
  %v71 = vld [vmem:[%s1 + $0x60] sm:$0xf]
  %v72 = vld [vmem:[%s1 + $0x64] sm:$0xf]
  %v73 = vld [vmem:[%s1 + $0x68] sm:$0xf]
  %v74 = vld [vmem:[%s1 + $0x6c] sm:$0xf]
  %v75 = vld [vmem:[%s1 + $0x70] sm:$0xf]
  %v76 = vld [vmem:[%s1 + $0x74] sm:$0xf]
  %v77 = vld [vmem:[%s1 + $0x78] sm:$0xf]
  %v78 = vld [vmem:[%s1 + $0x7c] sm:$0xf]
  %v79 = vld [vmem:[%s1 + $0x80] sm:$0xf]
  %v80 = vld [vmem:[%s1 + $0x84] sm:$0xf]
  %v81 = vld [vmem:[%s1 + $0x88] sm:$0xf]
  %v82 = vld [vmem:[%s1 + $0x8c] sm:$0xf]
  %v83 = vld [vmem:[%s1 + $0x90] sm:$0xf]
  %v84 = vld [vmem:[%s1 + $0x94] sm:$0xf]
  %v85 = vld [vmem:[%s1 + $0x98] sm:$0xf]
  %v86 = vld [vmem:[%s1 + $0x9c] sm:$0xf]
  %v87 = vld [vmem:[%s1 + $0xa0] sm:$0xf]
  %v88 = vld [vmem:[%s1 + $0xa4] sm:$0xf]
  %v89 = vld [vmem:[%s1 + $0xa8] sm:$0xf]
  %v90 = vld [vmem:[%s1 + $0xac] sm:$0xf]
  %v91 = vld [vmem:[%s1 + $0xb0] sm:$0xf]
  %v92 = vld [vmem:[%s1 + $0xb4] sm:$0xf]
  %v93 = vld [vmem:[%s1 + $0xb8] sm:$0xf]
  %v94 = vld [vmem:[%s1 + $0xbc] sm:$0xf]
  %v95 = vld [vmem:[%s1 + $0xc0] sm:$0xf]
  %v96 = vld [vmem:[%s1 + $0xc4] sm:$0xf]
  %v97 = vld [vmem:[%s1 + $0xc8] sm:$0xf]
  %v98 = vld [vmem:[%s1 + $0xcc] sm:$0xf]
  %v99 = vld [vmem:[%s1 + $0xd0] sm:$0xf]
  %v100 = vld [vmem:[%s1 + $0xd4] sm:$0xf]
  %v101 = vld [vmem:[%s1 + $0xd8] sm:$0xf]
  %v102 = vld [vmem:[%s1 + $0xdc] sm:$0xf]
  %v103 = vld [vmem:[%s1 + $0xe0] sm:$0xf]
  %v104 = vld [vmem:[%s1 + $0xe4] sm:$0xf]
  %v105 = vld [vmem:[%s1 + $0xe8] sm:$0xf]
  %v106 = vld [vmem:[%s1 + $0xec] sm:$0xf]
  %v107 = vld [vmem:[%s1 + $0xf0] sm:$0xf]
  %v108 = vld [vmem:[%s1 + $0xf4] sm:$0xf]
  %v109 = vld [vmem:[%s1 + $0xf8] sm:$0xf]
  %v110 = vld [vmem:[%s1 + $0xfc] sm:$0xf]
  %v111 = vld [vmem:[%s2] sm:$0x1]
  %v113 = vlaneseq
  %v114 = vshrl.u32 %v113, 7
  %v115 = vsub.s32 0, %v114
  %v116 = vrot.slane %v111, %v115
  %v150 = vunpack.c.l.b16 %v15
  %v151 = vunpack.c.h.b16 %v15
  %v152 = vunpack.c.l.b16 %v16
  %v153 = vunpack.c.h.b16 %v16
  %v154 = vunpack.c.l.b16 %v17
  %v155 = vunpack.c.h.b16 %v17
  %v156 = vunpack.c.l.b16 %v18
  %v157 = vunpack.c.h.b16 %v18
  %v158 = vunpack.c.l.b16 %v19
  %v159 = vunpack.c.h.b16 %v19
  %v160 = vunpack.c.l.b16 %v20
  %v161 = vunpack.c.h.b16 %v20
  %v162 = vunpack.c.l.b16 %v21
  %v163 = vunpack.c.h.b16 %v21
  %v164 = vunpack.c.l.b16 %v22
  %v165 = vunpack.c.h.b16 %v22
  %v166 = vunpack.c.l.b16 %v23
  %v167 = vunpack.c.h.b16 %v23
  %v168 = vunpack.c.l.b16 %v24
  %v169 = vunpack.c.h.b16 %v24
  %v170 = vunpack.c.l.b16 %v25
  %v171 = vunpack.c.h.b16 %v25
  %v172 = vunpack.c.l.b16 %v26
  %v173 = vunpack.c.h.b16 %v26
  %v174 = vunpack.c.l.b16 %v27
  %v175 = vunpack.c.h.b16 %v27
  %v176 = vunpack.c.l.b16 %v28
  %v177 = vunpack.c.h.b16 %v28
  %v178 = vunpack.c.l.b16 %v29
  %v179 = vunpack.c.h.b16 %v29
  %v180 = vunpack.c.l.b16 %v30
  %v181 = vunpack.c.h.b16 %v30
  %v182 = vunpack.c.l.b16 %v31
  %v183 = vunpack.c.h.b16 %v31
  %v184 = vunpack.c.l.b16 %v32
  %v185 = vunpack.c.h.b16 %v32
  %v186 = vunpack.c.l.b16 %v33
  %v187 = vunpack.c.h.b16 %v33
  %v188 = vunpack.c.l.b16 %v34
  %v189 = vunpack.c.h.b16 %v34
  %v190 = vunpack.c.l.b16 %v35
  %v191 = vunpack.c.h.b16 %v35
  %v192 = vunpack.c.l.b16 %v36
  %v193 = vunpack.c.h.b16 %v36
  %v194 = vunpack.c.l.b16 %v37
  %v195 = vunpack.c.h.b16 %v37
  %v196 = vunpack.c.l.b16 %v38
  %v197 = vunpack.c.h.b16 %v38
  %v198 = vunpack.c.l.b16 %v39
  %v199 = vunpack.c.h.b16 %v39
  %v200 = vunpack.c.l.b16 %v40
  %v201 = vunpack.c.h.b16 %v40
  %v202 = vunpack.c.l.b16 %v41
  %v203 = vunpack.c.h.b16 %v41
  %v204 = vunpack.c.l.b16 %v42
  %v205 = vunpack.c.h.b16 %v42
  %v206 = vunpack.c.l.b16 %v43
  %v207 = vunpack.c.h.b16 %v43
  %v208 = vunpack.c.l.b16 %v44
  %v209 = vunpack.c.h.b16 %v44
  %v210 = vunpack.c.l.b16 %v45
  %v211 = vunpack.c.h.b16 %v45
  %v212 = vunpack.c.l.b16 %v46
  %v213 = vunpack.c.h.b16 %v46
  %v214 = vpack.c.b16 %v154, %v150
  %v215 = vpack.c.b16 %v155, %v151
  %v216 = vpack.c.b16 %v156, %v152
  %v217 = vpack.c.b16 %v157, %v153
  %v218 = vpack.c.b16 %v162, %v158
  %v219 = vpack.c.b16 %v163, %v159
  %v220 = vpack.c.b16 %v164, %v160
  %v221 = vpack.c.b16 %v165, %v161
  %v222 = vpack.c.b16 %v170, %v166
  %v223 = vpack.c.b16 %v171, %v167
  %v224 = vpack.c.b16 %v172, %v168
  %v225 = vpack.c.b16 %v173, %v169
  %v226 = vpack.c.b16 %v178, %v174
  %v227 = vpack.c.b16 %v179, %v175
  %v228 = vpack.c.b16 %v180, %v176
  %v229 = vpack.c.b16 %v181, %v177
  %v230 = vpack.c.b16 %v186, %v182
  %v231 = vpack.c.b16 %v187, %v183
  %v232 = vpack.c.b16 %v188, %v184
  %v233 = vpack.c.b16 %v189, %v185
  %v234 = vpack.c.b16 %v194, %v190
  %v235 = vpack.c.b16 %v195, %v191
  %v236 = vpack.c.b16 %v196, %v192
  %v237 = vpack.c.b16 %v197, %v193
  %v238 = vpack.c.b16 %v202, %v198
  %v239 = vpack.c.b16 %v203, %v199
  %v240 = vpack.c.b16 %v204, %v200
  %v241 = vpack.c.b16 %v205, %v201
  %v242 = vpack.c.b16 %v210, %v206
  %v243 = vpack.c.b16 %v211, %v207
  %v244 = vpack.c.b16 %v212, %v208
  %v245 = vpack.c.b16 %v213, %v209
  %v342 = vunpack.c.l.b16 %v47
  %v343 = vunpack.c.l.b16 %v48
  %v344 = vunpack.c.l.b16 %v49
  %v345 = vunpack.c.l.b16 %v50
  %v346 = vunpack.c.l.b16 %v51
  %v347 = vunpack.c.l.b16 %v52
  %v348 = vunpack.c.l.b16 %v53
  %v349 = vunpack.c.l.b16 %v54
  %v350 = vunpack.c.l.b16 %v55
  %v351 = vunpack.c.l.b16 %v56
  %v352 = vunpack.c.l.b16 %v57
  %v353 = vunpack.c.l.b16 %v58
  %v354 = vunpack.c.l.b16 %v59
  %v355 = vunpack.c.l.b16 %v60
  %v356 = vunpack.c.l.b16 %v61
  %v357 = vunpack.c.l.b16 %v62
  %v358 = vunpack.c.l.b16 %v63
  %v359 = vunpack.c.l.b16 %v64
  %v360 = vunpack.c.l.b16 %v65
  %v361 = vunpack.c.l.b16 %v66
  %v362 = vunpack.c.l.b16 %v67
  %v363 = vunpack.c.l.b16 %v68
  %v364 = vunpack.c.l.b16 %v69
  %v365 = vunpack.c.l.b16 %v70
  %v366 = vunpack.c.l.b16 %v71
  %v367 = vunpack.c.l.b16 %v72
  %v368 = vunpack.c.l.b16 %v73
  %v369 = vunpack.c.l.b16 %v74
  %v370 = vunpack.c.l.b16 %v75
  %v371 = vunpack.c.l.b16 %v76
  %v372 = vunpack.c.l.b16 %v77
  %v373 = vunpack.c.l.b16 %v78
  %v374 = vunpack.c.l.b16 %v79
  %v375 = vunpack.c.l.b16 %v80
  %v376 = vunpack.c.l.b16 %v81
  %v377 = vunpack.c.l.b16 %v82
  %v378 = vunpack.c.l.b16 %v83
  %v379 = vunpack.c.l.b16 %v84
  %v380 = vunpack.c.l.b16 %v85
  %v381 = vunpack.c.l.b16 %v86
  %v382 = vunpack.c.l.b16 %v87
  %v383 = vunpack.c.l.b16 %v88
  %v384 = vunpack.c.l.b16 %v89
  %v385 = vunpack.c.l.b16 %v90
  %v386 = vunpack.c.l.b16 %v91
  %v387 = vunpack.c.l.b16 %v92
  %v388 = vunpack.c.l.b16 %v93
  %v389 = vunpack.c.l.b16 %v94
  %v390 = vunpack.c.l.b16 %v95
  %v391 = vunpack.c.l.b16 %v96
  %v392 = vunpack.c.l.b16 %v97
  %v393 = vunpack.c.l.b16 %v98
  %v394 = vunpack.c.l.b16 %v99
  %v395 = vunpack.c.l.b16 %v100
  %v396 = vunpack.c.l.b16 %v101
  %v397 = vunpack.c.l.b16 %v102
  %v398 = vunpack.c.l.b16 %v103
  %v399 = vunpack.c.l.b16 %v104
  %v400 = vunpack.c.l.b16 %v105
  %v401 = vunpack.c.l.b16 %v106
  %v402 = vunpack.c.l.b16 %v107
  %v403 = vunpack.c.l.b16 %v108
  %v404 = vunpack.c.l.b16 %v109
  %v405 = vunpack.c.l.b16 %v110
  %v406 = vpack.c.b16 %v343, %v342
  %v407 = vpack.c.b16 %v345, %v344
  %v408 = vpack.c.b16 %v347, %v346
  %v409 = vpack.c.b16 %v349, %v348
  %v410 = vpack.c.b16 %v351, %v350
  %v411 = vpack.c.b16 %v353, %v352
  %v412 = vpack.c.b16 %v355, %v354
  %v413 = vpack.c.b16 %v357, %v356
  %v414 = vpack.c.b16 %v359, %v358
  %v415 = vpack.c.b16 %v361, %v360
  %v416 = vpack.c.b16 %v363, %v362
  %v417 = vpack.c.b16 %v365, %v364
  %v418 = vpack.c.b16 %v367, %v366
  %v419 = vpack.c.b16 %v369, %v368
  %v420 = vpack.c.b16 %v371, %v370
  %v421 = vpack.c.b16 %v373, %v372
  %v422 = vpack.c.b16 %v375, %v374
  %v423 = vpack.c.b16 %v377, %v376
  %v424 = vpack.c.b16 %v379, %v378
  %v425 = vpack.c.b16 %v381, %v380
  %v426 = vpack.c.b16 %v383, %v382
  %v427 = vpack.c.b16 %v385, %v384
  %v428 = vpack.c.b16 %v387, %v386
  %v429 = vpack.c.b16 %v389, %v388
  %v430 = vpack.c.b16 %v391, %v390
  %v431 = vpack.c.b16 %v393, %v392
  %v432 = vpack.c.b16 %v395, %v394
  %v433 = vpack.c.b16 %v397, %v396
  %v434 = vpack.c.b16 %v399, %v398
  %v435 = vpack.c.b16 %v401, %v400
  %v436 = vpack.c.b16 %v403, %v402
  %v437 = vpack.c.b16 %v405, %v404
  %470 = vmatprep.subr.bf16.mxu0 0
  %471 = vmatpush1.bf16.msra.mxu0 %v406
  %472 = vmatprep.subr.bf16.mxu0 0
  %473 = vmatpush1.bf16.msra.mxu0 %v407
  %474 = vmatprep.subr.bf16.mxu0 0
  %475 = vmatpush1.bf16.msra.mxu0 %v408
  %476 = vmatprep.subr.bf16.mxu0 0
  %477 = vmatpush1.bf16.msra.mxu0 %v409
  %478 = vmatprep.subr.bf16.mxu0 0
  %479 = vmatpush1.bf16.msra.mxu0 %v410
  %480 = vmatprep.subr.bf16.mxu0 0
  %481 = vmatpush1.bf16.msra.mxu0 %v411
  %482 = vmatprep.subr.bf16.mxu0 0
  %483 = vmatpush1.bf16.msra.mxu0 %v412
  %484 = vmatprep.subr.bf16.mxu0 0
  %485 = vmatpush1.bf16.msra.mxu0 %v413
  %486 = vmatprep.subr.bf16.mxu0 0
  %487 = vmatpush1.bf16.msra.mxu0 %v414
  %488 = vmatprep.subr.bf16.mxu0 0
  %489 = vmatpush1.bf16.msra.mxu0 %v415
  %490 = vmatprep.subr.bf16.mxu0 0
  %491 = vmatpush1.bf16.msra.mxu0 %v416
  %492 = vmatprep.subr.bf16.mxu0 0
  %493 = vmatpush1.bf16.msra.mxu0 %v417
  %494 = vmatprep.subr.bf16.mxu0 0
  %495 = vmatpush1.bf16.msra.mxu0 %v418
  %496 = vmatprep.subr.bf16.mxu0 0
  %497 = vmatpush1.bf16.msra.mxu0 %v419
  %498 = vmatprep.subr.bf16.mxu0 0
  %499 = vmatpush1.bf16.msra.mxu0 %v420
  %500 = vmatprep.subr.bf16.mxu0 0
  %501 = vmatpush1.bf16.msra.mxu0 %v421
  %502 = vmatprep.mubr.bf16.mxu0 %v215
  %503 = vmatmul.mubr.bf16.gmra.mrb[0].mxu0 %v214
  %v504 = vpop.f32.mrb[0].mxu0
  %v505 = vadd.f32 %v116, %v504
  %v506 = vpop.f32.mrb[0].mxu0
  %v507 = vpop.f32.mrb[0].mxu0
  %v508 = vadd.f32 %v116, %v507
  %v509 = vpop.f32.mrb[0].mxu0
  %510 = vmatprep.mubr.bf16.mxu0 %v219
  %511 = vmatmul.mubr.bf16.gmra.mrb[0].mxu0 %v218
  %v512 = vpop.f32.mrb[0].mxu0
  %v513 = vadd.f32 %v116, %v512
  %v514 = vpop.f32.mrb[0].mxu0
  %v515 = vpop.f32.mrb[0].mxu0
  %v516 = vadd.f32 %v116, %v515
  %v517 = vpop.f32.mrb[0].mxu0
  %518 = vmatprep.mubr.bf16.mxu0 %v223
  %519 = vmatmul.mubr.bf16.gmra.mrb[0].mxu0 %v222
  %v520 = vpop.f32.mrb[0].mxu0
  %v521 = vadd.f32 %v116, %v520
  %v522 = vpop.f32.mrb[0].mxu0
  %v523 = vpop.f32.mrb[0].mxu0
  %v524 = vadd.f32 %v116, %v523
  %v525 = vpop.f32.mrb[0].mxu0
  %526 = vmatprep.mubr.bf16.mxu0 %v227
  %527 = vmatmul.mubr.bf16.gmra.mrb[0].mxu0 %v226
  %v528 = vpop.f32.mrb[0].mxu0
  %v529 = vadd.f32 %v116, %v528
  %v530 = vpop.f32.mrb[0].mxu0
  %v531 = vpop.f32.mrb[0].mxu0
  %v532 = vadd.f32 %v116, %v531
  %v533 = vpop.f32.mrb[0].mxu0
  %534 = vmatprep.mubr.bf16.mxu0 %v231
  %535 = vmatmul.mubr.bf16.gmra.mrb[0].mxu0 %v230
  %v536 = vpop.f32.mrb[0].mxu0
  %v537 = vadd.f32 %v116, %v536
  %v538 = vpop.f32.mrb[0].mxu0
  %v539 = vpop.f32.mrb[0].mxu0
  %v540 = vadd.f32 %v116, %v539
  %v541 = vpop.f32.mrb[0].mxu0
  %542 = vmatprep.mubr.bf16.mxu0 %v235
  %543 = vmatmul.mubr.bf16.gmra.mrb[0].mxu0 %v234
  %v544 = vpop.f32.mrb[0].mxu0
  %v545 = vadd.f32 %v116, %v544
  %v546 = vpop.f32.mrb[0].mxu0
  %v547 = vpop.f32.mrb[0].mxu0
  %v548 = vadd.f32 %v116, %v547
  %v549 = vpop.f32.mrb[0].mxu0
  %550 = vmatprep.mubr.bf16.mxu0 %v239
  %551 = vmatmul.mubr.bf16.gmra.mrb[0].mxu0 %v238
  %v552 = vpop.f32.mrb[0].mxu0
  %v553 = vadd.f32 %v116, %v552
  %v554 = vpop.f32.mrb[0].mxu0
  %v555 = vpop.f32.mrb[0].mxu0
  %v556 = vadd.f32 %v116, %v555
  %v557 = vpop.f32.mrb[0].mxu0
  %558 = vmatprep.mubr.bf16.mxu0 %v243
  %559 = vmatmul.mubr.bf16.gmra.mrb[0].mxu0 %v242
  %v560 = vpop.f32.mrb[0].mxu0
  %v561 = vadd.f32 %v116, %v560
  %v562 = vpop.f32.mrb[0].mxu0
  %v563 = vpop.f32.mrb[0].mxu0
  %v564 = vadd.f32 %v116, %v563
  %v565 = vpop.f32.mrb[0].mxu0
  %566 = vdwg.mxu0
  %567 = vmatprep.subr.bf16.mxu0 0
  %568 = vmatpush1.bf16.msra.mxu0 %v422
  %569 = vmatprep.subr.bf16.mxu0 0
  %570 = vmatpush1.bf16.msra.mxu0 %v423
  %571 = vmatprep.subr.bf16.mxu0 0
  %572 = vmatpush1.bf16.msra.mxu0 %v424
  %573 = vmatprep.subr.bf16.mxu0 0
  %574 = vmatpush1.bf16.msra.mxu0 %v425
  %575 = vmatprep.subr.bf16.mxu0 0
  %576 = vmatpush1.bf16.msra.mxu0 %v426
  %577 = vmatprep.subr.bf16.mxu0 0
  %578 = vmatpush1.bf16.msra.mxu0 %v427
  %579 = vmatprep.subr.bf16.mxu0 0
  %580 = vmatpush1.bf16.msra.mxu0 %v428
  %581 = vmatprep.subr.bf16.mxu0 0
  %582 = vmatpush1.bf16.msra.mxu0 %v429
  %583 = vmatprep.subr.bf16.mxu0 0
  %584 = vmatpush1.bf16.msra.mxu0 %v430
  %585 = vmatprep.subr.bf16.mxu0 0
  %586 = vmatpush1.bf16.msra.mxu0 %v431
  %587 = vmatprep.subr.bf16.mxu0 0
  %588 = vmatpush1.bf16.msra.mxu0 %v432
  %589 = vmatprep.subr.bf16.mxu0 0
  %590 = vmatpush1.bf16.msra.mxu0 %v433
  %591 = vmatprep.subr.bf16.mxu0 0
  %592 = vmatpush1.bf16.msra.mxu0 %v434
  %593 = vmatprep.subr.bf16.mxu0 0
  %594 = vmatpush1.bf16.msra.mxu0 %v435
  %595 = vmatprep.subr.bf16.mxu0 0
  %596 = vmatpush1.bf16.msra.mxu0 %v436
  %597 = vmatprep.subr.bf16.mxu0 0
  %598 = vmatpush1.bf16.msra.mxu0 %v437
  %599 = vmatprep.mubr.bf16.mxu0 %v217
  %600 = vmatmul.mubr.bf16.gmra.mrb[0].mxu0 %v216
  %v601 = vpop.f32.mrb[0].mxu0
  %v602 = vadd.f32 %v505, %v601
  %v603 = vpop.f32.mrb[0].mxu0
  %v604 = vpop.f32.mrb[0].mxu0
  %v605 = vadd.f32 %v508, %v604
  %v606 = vpop.f32.mrb[0].mxu0
  %607 = vmatprep.mubr.bf16.mxu0 %v221
  %608 = vmatmul.mubr.bf16.gmra.mrb[0].mxu0 %v220
  %v609 = vpop.f32.mrb[0].mxu0
  %v610 = vadd.f32 %v513, %v609
  %v611 = vpop.f32.mrb[0].mxu0
  %v612 = vpop.f32.mrb[0].mxu0
  %v613 = vadd.f32 %v516, %v612
  %v614 = vpop.f32.mrb[0].mxu0
  %615 = vmatprep.mubr.bf16.mxu0 %v225
  %616 = vmatmul.mubr.bf16.gmra.mrb[0].mxu0 %v224
  %v617 = vpop.f32.mrb[0].mxu0
  %v618 = vadd.f32 %v521, %v617
  %v619 = vpop.f32.mrb[0].mxu0
  %v620 = vpop.f32.mrb[0].mxu0
  %v621 = vadd.f32 %v524, %v620
  %v622 = vpop.f32.mrb[0].mxu0
  %623 = vmatprep.mubr.bf16.mxu0 %v229
  %624 = vmatmul.mubr.bf16.gmra.mrb[0].mxu0 %v228
  %v625 = vpop.f32.mrb[0].mxu0
  %v626 = vadd.f32 %v529, %v625
  %v627 = vpop.f32.mrb[0].mxu0
  %v628 = vpop.f32.mrb[0].mxu0
  %v629 = vadd.f32 %v532, %v628
  %v630 = vpop.f32.mrb[0].mxu0
  %631 = vmatprep.mubr.bf16.mxu0 %v233
  %632 = vmatmul.mubr.bf16.gmra.mrb[0].mxu0 %v232
  %v633 = vpop.f32.mrb[0].mxu0
  %v634 = vadd.f32 %v537, %v633
  %v635 = vpop.f32.mrb[0].mxu0
  %v636 = vpop.f32.mrb[0].mxu0
  %v637 = vadd.f32 %v540, %v636
  %v638 = vpop.f32.mrb[0].mxu0
  %639 = vmatprep.mubr.bf16.mxu0 %v237
  %640 = vmatmul.mubr.bf16.gmra.mrb[0].mxu0 %v236
  %v641 = vpop.f32.mrb[0].mxu0
  %v642 = vadd.f32 %v545, %v641
  %v643 = vpop.f32.mrb[0].mxu0
  %v644 = vpop.f32.mrb[0].mxu0
  %v645 = vadd.f32 %v548, %v644
  %v646 = vpop.f32.mrb[0].mxu0
  %647 = vmatprep.mubr.bf16.mxu0 %v241
  %648 = vmatmul.mubr.bf16.gmra.mrb[0].mxu0 %v240
  %v649 = vpop.f32.mrb[0].mxu0
  %v650 = vadd.f32 %v553, %v649
  %v651 = vpop.f32.mrb[0].mxu0
  %v652 = vpop.f32.mrb[0].mxu0
  %v653 = vadd.f32 %v556, %v652
  %v654 = vpop.f32.mrb[0].mxu0
  %655 = vmatprep.mubr.bf16.mxu0 %v245
  %656 = vmatmul.mubr.bf16.gmra.mrb[0].mxu0 %v244
  %v657 = vpop.f32.mrb[0].mxu0
  %v658 = vadd.f32 %v561, %v657
  %v659 = vpop.f32.mrb[0].mxu0
  %v660 = vpop.f32.mrb[0].mxu0
  %v661 = vadd.f32 %v564, %v660
  %v662 = vpop.f32.mrb[0].mxu0
  %663 = vdwg.mxu0
  %v664 = vmax.f32 %v602, 0.0
  %v665 = vmax.f32 %v605, 0.0
  %v666 = vmax.f32 %v610, 0.0
  %v667 = vmax.f32 %v613, 0.0
  %v668 = vmax.f32 %v618, 0.0
  %v669 = vmax.f32 %v621, 0.0
  %v670 = vmax.f32 %v626, 0.0
  %v671 = vmax.f32 %v629, 0.0
  %v672 = vmax.f32 %v634, 0.0
  %v673 = vmax.f32 %v637, 0.0
  %v674 = vmax.f32 %v642, 0.0
  %v675 = vmax.f32 %v645, 0.0
  %v676 = vmax.f32 %v650, 0.0
  %v677 = vmax.f32 %v653, 0.0
  %v678 = vmax.f32 %v658, 0.0
  %v679 = vmax.f32 %v661, 0.0
  %v680 = vpack.c.bf16 %v665, %v664
  %v681 = vpack.c.bf16 %v667, %v666
  %v682 = vpack.c.bf16 %v669, %v668
  %v683 = vpack.c.bf16 %v671, %v670
  %v684 = vpack.c.bf16 %v673, %v672
  %v685 = vpack.c.bf16 %v675, %v674
  %v686 = vpack.c.bf16 %v677, %v676
  %v687 = vpack.c.bf16 %v679, %v678
  %v696 = vunpack.c.l.b16 %v680
  %v697 = vunpack.c.h.b16 %v680
  %v698 = vunpack.c.l.b16 %v681
  %v699 = vunpack.c.h.b16 %v681
  %v700 = vunpack.c.l.b16 %v682
  %v701 = vunpack.c.h.b16 %v682
  %v702 = vunpack.c.l.b16 %v683
  %v703 = vunpack.c.h.b16 %v683
  %v704 = vunpack.c.l.b16 %v684
  %v705 = vunpack.c.h.b16 %v684
  %v706 = vunpack.c.l.b16 %v685
  %v707 = vunpack.c.h.b16 %v685
  %v708 = vunpack.c.l.b16 %v686
  %v709 = vunpack.c.h.b16 %v686
  %v710 = vunpack.c.l.b16 %v687
  %v711 = vunpack.c.h.b16 %v687
  %v712 = vpack.c.b16 %v696, %v696
  %v713 = vpack.c.b16 %v697, %v697
  %v714 = vpack.c.b16 %v698, %v698
  %v715 = vpack.c.b16 %v699, %v699
  %v716 = vpack.c.b16 %v700, %v700
  %v717 = vpack.c.b16 %v701, %v701
  %v718 = vpack.c.b16 %v702, %v702
  %v719 = vpack.c.b16 %v703, %v703
  %v720 = vpack.c.b16 %v704, %v704
  %v721 = vpack.c.b16 %v705, %v705
  %v722 = vpack.c.b16 %v706, %v706
  %v723 = vpack.c.b16 %v707, %v707
  %v724 = vpack.c.b16 %v708, %v708
  %v725 = vpack.c.b16 %v709, %v709
  %v726 = vpack.c.b16 %v710, %v710
  %v727 = vpack.c.b16 %v711, %v711
  %vm744 = vcmask 519168
  %745 = vst.msk [vmem:[%s3] sm:$0xf] %vm744, %v712
  %746 = vst.msk [vmem:[%s3 + $0x4] sm:$0xf] %vm744, %v713
  %747 = vst.msk [vmem:[%s3 + $0x8] sm:$0xf] %vm744, %v714
  %748 = vst.msk [vmem:[%s3 + $0xc] sm:$0xf] %vm744, %v715
  %749 = vst.msk [vmem:[%s3 + $0x10] sm:$0xf] %vm744, %v716
  %750 = vst.msk [vmem:[%s3 + $0x14] sm:$0xf] %vm744, %v717
  %751 = vst.msk [vmem:[%s3 + $0x18] sm:$0xf] %vm744, %v718
  %752 = vst.msk [vmem:[%s3 + $0x1c] sm:$0xf] %vm744, %v719
  %753 = vst.msk [vmem:[%s3 + $0x20] sm:$0xf] %vm744, %v720
  %754 = vst.msk [vmem:[%s3 + $0x24] sm:$0xf] %vm744, %v721
  %755 = vst.msk [vmem:[%s3 + $0x28] sm:$0xf] %vm744, %v722
  %756 = vst.msk [vmem:[%s3 + $0x2c] sm:$0xf] %vm744, %v723
  %757 = vst.msk [vmem:[%s3 + $0x30] sm:$0xf] %vm744, %v724
  %758 = vst.msk [vmem:[%s3 + $0x34] sm:$0xf] %vm744, %v725
  %759 = vst.msk [vmem:[%s3 + $0x38] sm:$0xf] %vm744, %v726
  %760 = vst.msk [vmem:[%s3 + $0x3c] sm:$0xf] %vm744, %v727
  // Predicated region
  $region14: #{_lambda_.11} parent=0 // pred_check
    _
  $region15: #{_lambda_.11} parent=0 // pred_check_branch
    %762 = sbr.rel (0) target = $region17
  $region16: #{_lambda_.11} parent=0 // pred_region
    _
  $region17: #{_lambda_.11} parent=0 // pred_fallthru
    _
  // Predicated region
  $region18: #{_lambda_.11} parent=0 // pred_check
    _
  $region19: #{_lambda_.11} parent=0 // pred_check_branch
    %764 = sbr.rel (0) target = $region21
  $region20: #{_lambda_.11} parent=0 // pred_region
    _
  $region21: #{_lambda_.11} parent=0 // pred_fallthru
    _

// kernel: _lambda_.12
$region0: #{_lambda_.12}
  #allocation0 [shape = 'u32[]', space=smem, size = 0x4, offset = 0x4, fixed_abs, tag = 'smem constant byte address 0x4 - core index']
  #allocation1 [shape = 'u32[144,128]{1,0:T(1,128)}', space=vmem, size = 0x12000, scoped, tag = 'internal scratch']
  %s0 = inlined_call_operand.vmem [shape: bf16[32,1024], index: 0, kind: input, shape index: {}]
  %s1 = inlined_call_operand.vmem [shape: bf16[1024,64], index: 1, kind: input, shape index: {}]
  %s2 = inlined_call_operand.vmem [shape: f32[1,64], index: 2, kind: input, shape index: {}]
  %s3 = inlined_call_operand.vmem [shape: bf16[32,64], index: 3, kind: output, shape index: {}]
  %s4 = sld [smem:[#allocation0]]
  $region22: #{_lambda_.12} parent=0
    _
  %s6 = ssub.s32 1, %s4
  %s7 = scalar_select 0, %s6, %s4
  // Predicated region
  $region2: #{_lambda_.12} parent=0 // pred_check
    _
  $region3: #{_lambda_.12} parent=0 // pred_check_branch
    %9 = sbr.rel (0) target = $region5
  $region4: #{_lambda_.12} parent=0 // pred_region
    _
  $region5: #{_lambda_.12} parent=0 // pred_fallthru
    _
  // Predicated region
  $region6: #{_lambda_.12} parent=0 // pred_check
    _
  $region7: #{_lambda_.12} parent=0 // pred_check_branch
    %11 = sbr.rel (0) target = $region9
  $region8: #{_lambda_.12} parent=0 // pred_region
    _
  $region9: #{_lambda_.12} parent=0 // pred_fallthru
    _
  // Predicated region
  $region10: #{_lambda_.12} parent=0 // pred_check
    _
  $region11: #{_lambda_.12} parent=0 // pred_check_branch
    %13 = sbr.rel (0) target = $region13
  $region12: #{_lambda_.12} parent=0 // pred_region
    _
  $region13: #{_lambda_.12} parent=0 // pred_fallthru
    _
  %v15 = vld [vmem:[%s0] sm:$0xff]
  %v16 = vld [vmem:[%s0 + $0x8] sm:$0xff]
  %v17 = vld [vmem:[%s0 + $0x10] sm:$0xff]
  %v18 = vld [vmem:[%s0 + $0x18] sm:$0xff]
  %v19 = vld [vmem:[%s0 + $0x20] sm:$0xff]
  %v20 = vld [vmem:[%s0 + $0x28] sm:$0xff]
  %v21 = vld [vmem:[%s0 + $0x30] sm:$0xff]
  %v22 = vld [vmem:[%s0 + $0x38] sm:$0xff]
  %v23 = vld [vmem:[%s0 + $0x40] sm:$0xff]
  %v24 = vld [vmem:[%s0 + $0x48] sm:$0xff]
  %v25 = vld [vmem:[%s0 + $0x50] sm:$0xff]
  %v26 = vld [vmem:[%s0 + $0x58] sm:$0xff]
  %v27 = vld [vmem:[%s0 + $0x60] sm:$0xff]
  %v28 = vld [vmem:[%s0 + $0x68] sm:$0xff]
  %v29 = vld [vmem:[%s0 + $0x70] sm:$0xff]
  %v30 = vld [vmem:[%s0 + $0x78] sm:$0xff]
  %v31 = vld [vmem:[%s1] sm:$0xf]
  %v32 = vld [vmem:[%s1 + $0x4] sm:$0xf]
  %v33 = vld [vmem:[%s1 + $0x8] sm:$0xf]
  %v34 = vld [vmem:[%s1 + $0xc] sm:$0xf]
  %v35 = vld [vmem:[%s1 + $0x10] sm:$0xf]
  %v36 = vld [vmem:[%s1 + $0x14] sm:$0xf]
  %v37 = vld [vmem:[%s1 + $0x18] sm:$0xf]
  %v38 = vld [vmem:[%s1 + $0x1c] sm:$0xf]
  %v39 = vld [vmem:[%s1 + $0x20] sm:$0xf]
  %v40 = vld [vmem:[%s1 + $0x24] sm:$0xf]
  %v41 = vld [vmem:[%s1 + $0x28] sm:$0xf]
  %v42 = vld [vmem:[%s1 + $0x2c] sm:$0xf]
  %v43 = vld [vmem:[%s1 + $0x30] sm:$0xf]
  %v44 = vld [vmem:[%s1 + $0x34] sm:$0xf]
  %v45 = vld [vmem:[%s1 + $0x38] sm:$0xf]
  %v46 = vld [vmem:[%s1 + $0x3c] sm:$0xf]
  %v47 = vld [vmem:[%s1 + $0x40] sm:$0xf]
  %v48 = vld [vmem:[%s1 + $0x44] sm:$0xf]
  %v49 = vld [vmem:[%s1 + $0x48] sm:$0xf]
  %v50 = vld [vmem:[%s1 + $0x4c] sm:$0xf]
  %v51 = vld [vmem:[%s1 + $0x50] sm:$0xf]
  %v52 = vld [vmem:[%s1 + $0x54] sm:$0xf]
  %v53 = vld [vmem:[%s1 + $0x58] sm:$0xf]
  %v54 = vld [vmem:[%s1 + $0x5c] sm:$0xf]
  %v55 = vld [vmem:[%s1 + $0x60] sm:$0xf]
  %v56 = vld [vmem:[%s1 + $0x64] sm:$0xf]
  %v57 = vld [vmem:[%s1 + $0x68] sm:$0xf]
  %v58 = vld [vmem:[%s1 + $0x6c] sm:$0xf]
  %v59 = vld [vmem:[%s1 + $0x70] sm:$0xf]
  %v60 = vld [vmem:[%s1 + $0x74] sm:$0xf]
  %v61 = vld [vmem:[%s1 + $0x78] sm:$0xf]
  %v62 = vld [vmem:[%s1 + $0x7c] sm:$0xf]
  %v63 = vld [vmem:[%s1 + $0x80] sm:$0xf]
  %v64 = vld [vmem:[%s1 + $0x84] sm:$0xf]
  %v65 = vld [vmem:[%s1 + $0x88] sm:$0xf]
  %v66 = vld [vmem:[%s1 + $0x8c] sm:$0xf]
  %v67 = vld [vmem:[%s1 + $0x90] sm:$0xf]
  %v68 = vld [vmem:[%s1 + $0x94] sm:$0xf]
  %v69 = vld [vmem:[%s1 + $0x98] sm:$0xf]
  %v70 = vld [vmem:[%s1 + $0x9c] sm:$0xf]
  %v71 = vld [vmem:[%s1 + $0xa0] sm:$0xf]
  %v72 = vld [vmem:[%s1 + $0xa4] sm:$0xf]
  %v73 = vld [vmem:[%s1 + $0xa8] sm:$0xf]
  %v74 = vld [vmem:[%s1 + $0xac] sm:$0xf]
  %v75 = vld [vmem:[%s1 + $0xb0] sm:$0xf]
  %v76 = vld [vmem:[%s1 + $0xb4] sm:$0xf]
  %v77 = vld [vmem:[%s1 + $0xb8] sm:$0xf]
  %v78 = vld [vmem:[%s1 + $0xbc] sm:$0xf]
  %v79 = vld [vmem:[%s1 + $0xc0] sm:$0xf]
  %v80 = vld [vmem:[%s1 + $0xc4] sm:$0xf]
  %v81 = vld [vmem:[%s1 + $0xc8] sm:$0xf]
  %v82 = vld [vmem:[%s1 + $0xcc] sm:$0xf]
  %v83 = vld [vmem:[%s1 + $0xd0] sm:$0xf]
  %v84 = vld [vmem:[%s1 + $0xd4] sm:$0xf]
  %v85 = vld [vmem:[%s1 + $0xd8] sm:$0xf]
  %v86 = vld [vmem:[%s1 + $0xdc] sm:$0xf]
  %v87 = vld [vmem:[%s1 + $0xe0] sm:$0xf]
  %v88 = vld [vmem:[%s1 + $0xe4] sm:$0xf]
  %v89 = vld [vmem:[%s1 + $0xe8] sm:$0xf]
  %v90 = vld [vmem:[%s1 + $0xec] sm:$0xf]
  %v91 = vld [vmem:[%s1 + $0xf0] sm:$0xf]
  %v92 = vld [vmem:[%s1 + $0xf4] sm:$0xf]
  %v93 = vld [vmem:[%s1 + $0xf8] sm:$0xf]
  %v94 = vld [vmem:[%s1 + $0xfc] sm:$0xf]
  %v95 = vld [vmem:[%s1 + $0x100] sm:$0xf]
  %v96 = vld [vmem:[%s1 + $0x104] sm:$0xf]
  %v97 = vld [vmem:[%s1 + $0x108] sm:$0xf]
  %v98 = vld [vmem:[%s1 + $0x10c] sm:$0xf]
  %v99 = vld [vmem:[%s1 + $0x110] sm:$0xf]
  %v100 = vld [vmem:[%s1 + $0x114] sm:$0xf]
  %v101 = vld [vmem:[%s1 + $0x118] sm:$0xf]
  %v102 = vld [vmem:[%s1 + $0x11c] sm:$0xf]
  %v103 = vld [vmem:[%s1 + $0x120] sm:$0xf]
  %v104 = vld [vmem:[%s1 + $0x124] sm:$0xf]
  %v105 = vld [vmem:[%s1 + $0x128] sm:$0xf]
  %v106 = vld [vmem:[%s1 + $0x12c] sm:$0xf]
  %v107 = vld [vmem:[%s1 + $0x130] sm:$0xf]
  %v108 = vld [vmem:[%s1 + $0x134] sm:$0xf]
  %v109 = vld [vmem:[%s1 + $0x138] sm:$0xf]
  %v110 = vld [vmem:[%s1 + $0x13c] sm:$0xf]
  %v111 = vld [vmem:[%s1 + $0x140] sm:$0xf]
  %v112 = vld [vmem:[%s1 + $0x144] sm:$0xf]
  %v113 = vld [vmem:[%s1 + $0x148] sm:$0xf]
  %v114 = vld [vmem:[%s1 + $0x14c] sm:$0xf]
  %v115 = vld [vmem:[%s1 + $0x150] sm:$0xf]
  %v116 = vld [vmem:[%s1 + $0x154] sm:$0xf]
  %v117 = vld [vmem:[%s1 + $0x158] sm:$0xf]
  %v118 = vld [vmem:[%s1 + $0x15c] sm:$0xf]
  %v119 = vld [vmem:[%s1 + $0x160] sm:$0xf]
  %v120 = vld [vmem:[%s1 + $0x164] sm:$0xf]
  %v121 = vld [vmem:[%s1 + $0x168] sm:$0xf]
  %v122 = vld [vmem:[%s1 + $0x16c] sm:$0xf]
  %v123 = vld [vmem:[%s1 + $0x170] sm:$0xf]
  %v124 = vld [vmem:[%s1 + $0x174] sm:$0xf]
  %v125 = vld [vmem:[%s1 + $0x178] sm:$0xf]
  %v126 = vld [vmem:[%s1 + $0x17c] sm:$0xf]
  %v127 = vld [vmem:[%s1 + $0x180] sm:$0xf]
  %v128 = vld [vmem:[%s1 + $0x184] sm:$0xf]
  %v129 = vld [vmem:[%s1 + $0x188] sm:$0xf]
  %v130 = vld [vmem:[%s1 + $0x18c] sm:$0xf]
  %v131 = vld [vmem:[%s1 + $0x190] sm:$0xf]
  %v132 = vld [vmem:[%s1 + $0x194] sm:$0xf]
  %v133 = vld [vmem:[%s1 + $0x198] sm:$0xf]
  %v134 = vld [vmem:[%s1 + $0x19c] sm:$0xf]
  %v135 = vld [vmem:[%s1 + $0x1a0] sm:$0xf]
  %v136 = vld [vmem:[%s1 + $0x1a4] sm:$0xf]
  %v137 = vld [vmem:[%s1 + $0x1a8] sm:$0xf]
  %v138 = vld [vmem:[%s1 + $0x1ac] sm:$0xf]
  %v139 = vld [vmem:[%s1 + $0x1b0] sm:$0xf]
  %v140 = vld [vmem:[%s1 + $0x1b4] sm:$0xf]
  %v141 = vld [vmem:[%s1 + $0x1b8] sm:$0xf]
  %v142 = vld [vmem:[%s1 + $0x1bc] sm:$0xf]
  %v143 = vld [vmem:[%s1 + $0x1c0] sm:$0xf]
  %v144 = vld [vmem:[%s1 + $0x1c4] sm:$0xf]
  %v145 = vld [vmem:[%s1 + $0x1c8] sm:$0xf]
  %v146 = vld [vmem:[%s1 + $0x1cc] sm:$0xf]
  %v147 = vld [vmem:[%s1 + $0x1d0] sm:$0xf]
  %v148 = vld [vmem:[%s1 + $0x1d4] sm:$0xf]
  %v149 = vld [vmem:[%s1 + $0x1d8] sm:$0xf]
  %v150 = vld [vmem:[%s1 + $0x1dc] sm:$0xf]
  %v151 = vld [vmem:[%s1 + $0x1e0] sm:$0xf]
  %v152 = vld [vmem:[%s1 + $0x1e4] sm:$0xf]
  %v153 = vld [vmem:[%s1 + $0x1e8] sm:$0xf]
  %v154 = vld [vmem:[%s1 + $0x1ec] sm:$0xf]
  %v155 = vld [vmem:[%s1 + $0x1f0] sm:$0xf]
  %v156 = vld [vmem:[%s1 + $0x1f4] sm:$0xf]
  %v157 = vld [vmem:[%s1 + $0x1f8] sm:$0xf]
  %v158 = vld [vmem:[%s1 + $0x1fc] sm:$0xf]
  %v159 = vld [vmem:[%s2] sm:$0x1]
  %v161 = vlaneseq
  %v162 = vshrl.u32 %v161, 7
  %v163 = vsub.s32 0, %v162
  %v164 = vrot.slane %v159, %v163
  %v182 = vunpack.c.l.b16 %v15
  %v183 = vunpack.c.h.b16 %v15
  %v184 = vunpack.c.l.b16 %v16
  %v185 = vunpack.c.h.b16 %v16
  %v186 = vunpack.c.l.b16 %v17
  %v187 = vunpack.c.h.b16 %v17
  %v188 = vunpack.c.l.b16 %v18
  %v189 = vunpack.c.h.b16 %v18
  %v190 = vunpack.c.l.b16 %v19
  %v191 = vunpack.c.h.b16 %v19
  %v192 = vunpack.c.l.b16 %v20
  %v193 = vunpack.c.h.b16 %v20
  %v194 = vunpack.c.l.b16 %v21
  %v195 = vunpack.c.h.b16 %v21
  %v196 = vunpack.c.l.b16 %v22
  %v197 = vunpack.c.h.b16 %v22
  %v198 = vunpack.c.l.b16 %v23
  %v199 = vunpack.c.h.b16 %v23
  %v200 = vunpack.c.l.b16 %v24
  %v201 = vunpack.c.h.b16 %v24
  %v202 = vunpack.c.l.b16 %v25
  %v203 = vunpack.c.h.b16 %v25
  %v204 = vunpack.c.l.b16 %v26
  %v205 = vunpack.c.h.b16 %v26
  %v206 = vunpack.c.l.b16 %v27
  %v207 = vunpack.c.h.b16 %v27
  %v208 = vunpack.c.l.b16 %v28
  %v209 = vunpack.c.h.b16 %v28
  %v210 = vunpack.c.l.b16 %v29
  %v211 = vunpack.c.h.b16 %v29
  %v212 = vunpack.c.l.b16 %v30
  %v213 = vunpack.c.h.b16 %v30
  %v214 = vpack.c.b16 %v190, %v182
  %v215 = vpack.c.b16 %v191, %v183
  %v216 = vpack.c.b16 %v192, %v184
  %v217 = vpack.c.b16 %v193, %v185
  %v218 = vpack.c.b16 %v194, %v186
  %v219 = vpack.c.b16 %v195, %v187
  %v220 = vpack.c.b16 %v196, %v188
  %v221 = vpack.c.b16 %v197, %v189
  %v222 = vpack.c.b16 %v206, %v198
  %v223 = vpack.c.b16 %v207, %v199
  %v224 = vpack.c.b16 %v208, %v200
  %v225 = vpack.c.b16 %v209, %v201
  %v226 = vpack.c.b16 %v210, %v202
  %v227 = vpack.c.b16 %v211, %v203
  %v228 = vpack.c.b16 %v212, %v204
  %v229 = vpack.c.b16 %v213, %v205
  %v374 = vunpack.c.l.b16 %v31
  %v375 = vunpack.c.l.b16 %v32
  %v376 = vunpack.c.l.b16 %v33
  %v377 = vunpack.c.l.b16 %v34
  %v378 = vunpack.c.l.b16 %v35
  %v379 = vunpack.c.l.b16 %v36
  %v380 = vunpack.c.l.b16 %v37
  %v381 = vunpack.c.l.b16 %v38
  %v382 = vunpack.c.l.b16 %v39
  %v383 = vunpack.c.l.b16 %v40
  %v384 = vunpack.c.l.b16 %v41
  %v385 = vunpack.c.l.b16 %v42
  %v386 = vunpack.c.l.b16 %v43
  %v387 = vunpack.c.l.b16 %v44
  %v388 = vunpack.c.l.b16 %v45
  %v389 = vunpack.c.l.b16 %v46
  %v390 = vunpack.c.l.b16 %v47
  %v391 = vunpack.c.l.b16 %v48
  %v392 = vunpack.c.l.b16 %v49
  %v393 = vunpack.c.l.b16 %v50
  %v394 = vunpack.c.l.b16 %v51
  %v395 = vunpack.c.l.b16 %v52
  %v396 = vunpack.c.l.b16 %v53
  %v397 = vunpack.c.l.b16 %v54
  %v398 = vunpack.c.l.b16 %v55
  %v399 = vunpack.c.l.b16 %v56
  %v400 = vunpack.c.l.b16 %v57
  %v401 = vunpack.c.l.b16 %v58
  %v402 = vunpack.c.l.b16 %v59
  %v403 = vunpack.c.l.b16 %v60
  %v404 = vunpack.c.l.b16 %v61
  %v405 = vunpack.c.l.b16 %v62
  %v406 = vunpack.c.l.b16 %v63
  %v407 = vunpack.c.l.b16 %v64
  %v408 = vunpack.c.l.b16 %v65
  %v409 = vunpack.c.l.b16 %v66
  %v410 = vunpack.c.l.b16 %v67
  %v411 = vunpack.c.l.b16 %v68
  %v412 = vunpack.c.l.b16 %v69
  %v413 = vunpack.c.l.b16 %v70
  %v414 = vunpack.c.l.b16 %v71
  %v415 = vunpack.c.l.b16 %v72
  %v416 = vunpack.c.l.b16 %v73
  %v417 = vunpack.c.l.b16 %v74
  %v418 = vunpack.c.l.b16 %v75
  %v419 = vunpack.c.l.b16 %v76
  %v420 = vunpack.c.l.b16 %v77
  %v421 = vunpack.c.l.b16 %v78
  %v422 = vunpack.c.l.b16 %v79
  %v423 = vunpack.c.l.b16 %v80
  %v424 = vunpack.c.l.b16 %v81
  %v425 = vunpack.c.l.b16 %v82
  %v426 = vunpack.c.l.b16 %v83
  %v427 = vunpack.c.l.b16 %v84
  %v428 = vunpack.c.l.b16 %v85
  %v429 = vunpack.c.l.b16 %v86
  %v430 = vunpack.c.l.b16 %v87
  %v431 = vunpack.c.l.b16 %v88
  %v432 = vunpack.c.l.b16 %v89
  %v433 = vunpack.c.l.b16 %v90
  %v434 = vunpack.c.l.b16 %v91
  %v435 = vunpack.c.l.b16 %v92
  %v436 = vunpack.c.l.b16 %v93
  %v437 = vunpack.c.l.b16 %v94
  %v438 = vunpack.c.l.b16 %v95
  %v439 = vunpack.c.l.b16 %v96
  %v440 = vunpack.c.l.b16 %v97
  %v441 = vunpack.c.l.b16 %v98
  %v442 = vunpack.c.l.b16 %v99
  %v443 = vunpack.c.l.b16 %v100
  %v444 = vunpack.c.l.b16 %v101
  %v445 = vunpack.c.l.b16 %v102
  %v446 = vunpack.c.l.b16 %v103
  %v447 = vunpack.c.l.b16 %v104
  %v448 = vunpack.c.l.b16 %v105
  %v449 = vunpack.c.l.b16 %v106
  %v450 = vunpack.c.l.b16 %v107
  %v451 = vunpack.c.l.b16 %v108
  %v452 = vunpack.c.l.b16 %v109
  %v453 = vunpack.c.l.b16 %v110
  %v454 = vunpack.c.l.b16 %v111
  %v455 = vunpack.c.l.b16 %v112
  %v456 = vunpack.c.l.b16 %v113
  %v457 = vunpack.c.l.b16 %v114
  %v458 = vunpack.c.l.b16 %v115
  %v459 = vunpack.c.l.b16 %v116
  %v460 = vunpack.c.l.b16 %v117
  %v461 = vunpack.c.l.b16 %v118
  %v462 = vunpack.c.l.b16 %v119
  %v463 = vunpack.c.l.b16 %v120
  %v464 = vunpack.c.l.b16 %v121
  %v465 = vunpack.c.l.b16 %v122
  %v466 = vunpack.c.l.b16 %v123
  %v467 = vunpack.c.l.b16 %v124
  %v468 = vunpack.c.l.b16 %v125
  %v469 = vunpack.c.l.b16 %v126
  %v470 = vunpack.c.l.b16 %v127
  %v471 = vunpack.c.l.b16 %v128
  %v472 = vunpack.c.l.b16 %v129
  %v473 = vunpack.c.l.b16 %v130
  %v474 = vunpack.c.l.b16 %v131
  %v475 = vunpack.c.l.b16 %v132
  %v476 = vunpack.c.l.b16 %v133
  %v477 = vunpack.c.l.b16 %v134
  %v478 = vunpack.c.l.b16 %v135
  %v479 = vunpack.c.l.b16 %v136
  %v480 = vunpack.c.l.b16 %v137
  %v481 = vunpack.c.l.b16 %v138
  %v482 = vunpack.c.l.b16 %v139
  %v483 = vunpack.c.l.b16 %v140
  %v484 = vunpack.c.l.b16 %v141
  %v485 = vunpack.c.l.b16 %v142
  %v486 = vunpack.c.l.b16 %v143
  %v487 = vunpack.c.l.b16 %v144
  %v488 = vunpack.c.l.b16 %v145
  %v489 = vunpack.c.l.b16 %v146
  %v490 = vunpack.c.l.b16 %v147
  %v491 = vunpack.c.l.b16 %v148
  %v492 = vunpack.c.l.b16 %v149
  %v493 = vunpack.c.l.b16 %v150
  %v494 = vunpack.c.l.b16 %v151
  %v495 = vunpack.c.l.b16 %v152
  %v496 = vunpack.c.l.b16 %v153
  %v497 = vunpack.c.l.b16 %v154
  %v498 = vunpack.c.l.b16 %v155
  %v499 = vunpack.c.l.b16 %v156
  %v500 = vunpack.c.l.b16 %v157
  %v501 = vunpack.c.l.b16 %v158
  %v502 = vpack.c.b16 %v375, %v374
  %v503 = vpack.c.b16 %v377, %v376
  %v504 = vpack.c.b16 %v379, %v378
  %v505 = vpack.c.b16 %v381, %v380
  %v506 = vpack.c.b16 %v383, %v382
  %v507 = vpack.c.b16 %v385, %v384
  %v508 = vpack.c.b16 %v387, %v386
  %v509 = vpack.c.b16 %v389, %v388
  %v510 = vpack.c.b16 %v391, %v390
  %v511 = vpack.c.b16 %v393, %v392
  %v512 = vpack.c.b16 %v395, %v394
  %v513 = vpack.c.b16 %v397, %v396
  %v514 = vpack.c.b16 %v399, %v398
  %v515 = vpack.c.b16 %v401, %v400
  %v516 = vpack.c.b16 %v403, %v402
  %v517 = vpack.c.b16 %v405, %v404
  %v518 = vpack.c.b16 %v407, %v406
  %v519 = vpack.c.b16 %v409, %v408
  %v520 = vpack.c.b16 %v411, %v410
  %v521 = vpack.c.b16 %v413, %v412
  %v522 = vpack.c.b16 %v415, %v414
  %v523 = vpack.c.b16 %v417, %v416
  %v524 = vpack.c.b16 %v419, %v418
  %v525 = vpack.c.b16 %v421, %v420
  %v526 = vpack.c.b16 %v423, %v422
  %v527 = vpack.c.b16 %v425, %v424
  %v528 = vpack.c.b16 %v427, %v426
  %v529 = vpack.c.b16 %v429, %v428
  %v530 = vpack.c.b16 %v431, %v430
  %v531 = vpack.c.b16 %v433, %v432
  %v532 = vpack.c.b16 %v435, %v434
  %v533 = vpack.c.b16 %v437, %v436
  %v534 = vpack.c.b16 %v439, %v438
  %v535 = vpack.c.b16 %v441, %v440
  %v536 = vpack.c.b16 %v443, %v442
  %v537 = vpack.c.b16 %v445, %v444
  %v538 = vpack.c.b16 %v447, %v446
  %v539 = vpack.c.b16 %v449, %v448
  %v540 = vpack.c.b16 %v451, %v450
  %v541 = vpack.c.b16 %v453, %v452
  %v542 = vpack.c.b16 %v455, %v454
  %v543 = vpack.c.b16 %v457, %v456
  %v544 = vpack.c.b16 %v459, %v458
  %v545 = vpack.c.b16 %v461, %v460
  %v546 = vpack.c.b16 %v463, %v462
  %v547 = vpack.c.b16 %v465, %v464
  %v548 = vpack.c.b16 %v467, %v466
  %v549 = vpack.c.b16 %v469, %v468
  %v550 = vpack.c.b16 %v471, %v470
  %v551 = vpack.c.b16 %v473, %v472
  %v552 = vpack.c.b16 %v475, %v474
  %v553 = vpack.c.b16 %v477, %v476
  %v554 = vpack.c.b16 %v479, %v478
  %v555 = vpack.c.b16 %v481, %v480
  %v556 = vpack.c.b16 %v483, %v482
  %v557 = vpack.c.b16 %v485, %v484
  %v558 = vpack.c.b16 %v487, %v486
  %v559 = vpack.c.b16 %v489, %v488
  %v560 = vpack.c.b16 %v491, %v490
  %v561 = vpack.c.b16 %v493, %v492
  %v562 = vpack.c.b16 %v495, %v494
  %v563 = vpack.c.b16 %v497, %v496
  %v564 = vpack.c.b16 %v499, %v498
  %v565 = vpack.c.b16 %v501, %v500
  %630 = vmatprep.subr.bf16.mxu0 0
  %631 = vmatpush1.bf16.msra.mxu0 %v502
  %632 = vmatprep.subr.bf16.mxu0 0
  %633 = vmatpush1.bf16.msra.mxu0 %v503
  %634 = vmatprep.subr.bf16.mxu0 0
  %635 = vmatpush1.bf16.msra.mxu0 %v504
  %636 = vmatprep.subr.bf16.mxu0 0
  %637 = vmatpush1.bf16.msra.mxu0 %v505
  %638 = vmatprep.subr.bf16.mxu0 0
  %639 = vmatpush1.bf16.msra.mxu0 %v506
  %640 = vmatprep.subr.bf16.mxu0 0
  %641 = vmatpush1.bf16.msra.mxu0 %v507
  %642 = vmatprep.subr.bf16.mxu0 0
  %643 = vmatpush1.bf16.msra.mxu0 %v508
  %644 = vmatprep.subr.bf16.mxu0 0
  %645 = vmatpush1.bf16.msra.mxu0 %v509
  %646 = vmatprep.subr.bf16.mxu0 0
  %647 = vmatpush1.bf16.msra.mxu0 %v510
  %648 = vmatprep.subr.bf16.mxu0 0
  %649 = vmatpush1.bf16.msra.mxu0 %v511
  %650 = vmatprep.subr.bf16.mxu0 0
  %651 = vmatpush1.bf16.msra.mxu0 %v512
  %652 = vmatprep.subr.bf16.mxu0 0
  %653 = vmatpush1.bf16.msra.mxu0 %v513
  %654 = vmatprep.subr.bf16.mxu0 0
  %655 = vmatpush1.bf16.msra.mxu0 %v514
  %656 = vmatprep.subr.bf16.mxu0 0
  %657 = vmatpush1.bf16.msra.mxu0 %v515
  %658 = vmatprep.subr.bf16.mxu0 0
  %659 = vmatpush1.bf16.msra.mxu0 %v516
  %660 = vmatprep.subr.bf16.mxu0 0
  %661 = vmatpush1.bf16.msra.mxu0 %v517
  %662 = vmatprep.mubr.bf16.mxu0 %v215
  %663 = vmatmul.mubr.bf16.gmra.mrb[0].mxu0 %v214
  %v664 = vpop.f32.mrb[0].mxu0
  %v665 = vadd.f32 %v164, %v664
  %v666 = vpop.f32.mrb[0].mxu0
  %v667 = vpop.f32.mrb[0].mxu0
  %v668 = vadd.f32 %v164, %v667
  %v669 = vpop.f32.mrb[0].mxu0
  %670 = vmatprep.mubr.bf16.mxu0 %v223
  %671 = vmatmul.mubr.bf16.gmra.mrb[0].mxu0 %v222
  %v672 = vpop.f32.mrb[0].mxu0
  %v673 = vadd.f32 %v164, %v672
  %v674 = vpop.f32.mrb[0].mxu0
  %v675 = vpop.f32.mrb[0].mxu0
  %v676 = vadd.f32 %v164, %v675
  %v677 = vpop.f32.mrb[0].mxu0
  %678 = vdwg.mxu0
  %679 = vmatprep.subr.bf16.mxu0 0
  %680 = vmatpush1.bf16.msra.mxu0 %v518
  %681 = vmatprep.subr.bf16.mxu0 0
  %682 = vmatpush1.bf16.msra.mxu0 %v519
  %683 = vmatprep.subr.bf16.mxu0 0
  %684 = vmatpush1.bf16.msra.mxu0 %v520
  %685 = vmatprep.subr.bf16.mxu0 0
  %686 = vmatpush1.bf16.msra.mxu0 %v521
  %687 = vmatprep.subr.bf16.mxu0 0
  %688 = vmatpush1.bf16.msra.mxu0 %v522
  %689 = vmatprep.subr.bf16.mxu0 0
  %690 = vmatpush1.bf16.msra.mxu0 %v523
  %691 = vmatprep.subr.bf16.mxu0 0
  %692 = vmatpush1.bf16.msra.mxu0 %v524
  %693 = vmatprep.subr.bf16.mxu0 0
  %694 = vmatpush1.bf16.msra.mxu0 %v525
  %695 = vmatprep.subr.bf16.mxu0 0
  %696 = vmatpush1.bf16.msra.mxu0 %v526
  %697 = vmatprep.subr.bf16.mxu0 0
  %698 = vmatpush1.bf16.msra.mxu0 %v527
  %699 = vmatprep.subr.bf16.mxu0 0
  %700 = vmatpush1.bf16.msra.mxu0 %v528
  %701 = vmatprep.subr.bf16.mxu0 0
  %702 = vmatpush1.bf16.msra.mxu0 %v529
  %703 = vmatprep.subr.bf16.mxu0 0
  %704 = vmatpush1.bf16.msra.mxu0 %v530
  %705 = vmatprep.subr.bf16.mxu0 0
  %706 = vmatpush1.bf16.msra.mxu0 %v531
  %707 = vmatprep.subr.bf16.mxu0 0
  %708 = vmatpush1.bf16.msra.mxu0 %v532
  %709 = vmatprep.subr.bf16.mxu0 0
  %710 = vmatpush1.bf16.msra.mxu0 %v533
  %711 = vmatprep.mubr.bf16.mxu0 %v217
  %712 = vmatmul.mubr.bf16.gmra.mrb[0].mxu0 %v216
  %v713 = vpop.f32.mrb[0].mxu0
  %v714 = vadd.f32 %v665, %v713
  %v715 = vpop.f32.mrb[0].mxu0
  %v716 = vpop.f32.mrb[0].mxu0
  %v717 = vadd.f32 %v668, %v716
  %v718 = vpop.f32.mrb[0].mxu0
  %719 = vmatprep.mubr.bf16.mxu0 %v225
  %720 = vmatmul.mubr.bf16.gmra.mrb[0].mxu0 %v224
  %v721 = vpop.f32.mrb[0].mxu0
  %v722 = vadd.f32 %v673, %v721
  %v723 = vpop.f32.mrb[0].mxu0
  %v724 = vpop.f32.mrb[0].mxu0
  %v725 = vadd.f32 %v676, %v724
  %v726 = vpop.f32.mrb[0].mxu0
  %727 = vdwg.mxu0
  %728 = vmatprep.subr.bf16.mxu0 0
  %729 = vmatpush1.bf16.msra.mxu0 %v534
  %730 = vmatprep.subr.bf16.mxu0 0
  %731 = vmatpush1.bf16.msra.mxu0 %v535
  %732 = vmatprep.subr.bf16.mxu0 0
  %733 = vmatpush1.bf16.msra.mxu0 %v536
  %734 = vmatprep.subr.bf16.mxu0 0
  %735 = vmatpush1.bf16.msra.mxu0 %v537
  %736 = vmatprep.subr.bf16.mxu0 0
  %737 = vmatpush1.bf16.msra.mxu0 %v538
  %738 = vmatprep.subr.bf16.mxu0 0
  %739 = vmatpush1.bf16.msra.mxu0 %v539
  %740 = vmatprep.subr.bf16.mxu0 0
  %741 = vmatpush1.bf16.msra.mxu0 %v540
  %742 = vmatprep.subr.bf16.mxu0 0
  %743 = vmatpush1.bf16.msra.mxu0 %v541
  %744 = vmatprep.subr.bf16.mxu0 0
  %745 = vmatpush1.bf16.msra.mxu0 %v542
  %746 = vmatprep.subr.bf16.mxu0 0
  %747 = vmatpush1.bf16.msra.mxu0 %v543
  %748 = vmatprep.subr.bf16.mxu0 0
  %749 = vmatpush1.bf16.msra.mxu0 %v544
  %750 = vmatprep.subr.bf16.mxu0 0
  %751 = vmatpush1.bf16.msra.mxu0 %v545
  %752 = vmatprep.subr.bf16.mxu0 0
  %753 = vmatpush1.bf16.msra.mxu0 %v546
  %754 = vmatprep.subr.bf16.mxu0 0
  %755 = vmatpush1.bf16.msra.mxu0 %v547
  %756 = vmatprep.subr.bf16.mxu0 0
  %757 = vmatpush1.bf16.msra.mxu0 %v548
  %758 = vmatprep.subr.bf16.mxu0 0
  %759 = vmatpush1.bf16.msra.mxu0 %v549
  %760 = vmatprep.mubr.bf16.mxu0 %v219
  %761 = vmatmul.mubr.bf16.gmra.mrb[0].mxu0 %v218
  %v762 = vpop.f32.mrb[0].mxu0
  %v763 = vadd.f32 %v714, %v762
  %v764 = vpop.f32.mrb[0].mxu0
  %v765 = vpop.f32.mrb[0].mxu0
  %v766 = vadd.f32 %v717, %v765
  %v767 = vpop.f32.mrb[0].mxu0
  %768 = vmatprep.mubr.bf16.mxu0 %v227
  %769 = vmatmul.mubr.bf16.gmra.mrb[0].mxu0 %v226
  %v770 = vpop.f32.mrb[0].mxu0
  %v771 = vadd.f32 %v722, %v770
  %v772 = vpop.f32.mrb[0].mxu0
  %v773 = vpop.f32.mrb[0].mxu0
  %v774 = vadd.f32 %v725, %v773
  %v775 = vpop.f32.mrb[0].mxu0
  %776 = vdwg.mxu0
  %777 = vmatprep.subr.bf16.mxu0 0
  %778 = vmatpush1.bf16.msra.mxu0 %v550
  %779 = vmatprep.subr.bf16.mxu0 0
  %780 = vmatpush1.bf16.msra.mxu0 %v551
  %781 = vmatprep.subr.bf16.mxu0 0
  %782 = vmatpush1.bf16.msra.mxu0 %v552
  %783 = vmatprep.subr.bf16.mxu0 0
  %784 = vmatpush1.bf16.msra.mxu0 %v553
  %785 = vmatprep.subr.bf16.mxu0 0
  %786 = vmatpush1.bf16.msra.mxu0 %v554
  %787 = vmatprep.subr.bf16.mxu0 0
  %788 = vmatpush1.bf16.msra.mxu0 %v555
  %789 = vmatprep.subr.bf16.mxu0 0
  %790 = vmatpush1.bf16.msra.mxu0 %v556
  %791 = vmatprep.subr.bf16.mxu0 0
  %792 = vmatpush1.bf16.msra.mxu0 %v557
  %793 = vmatprep.subr.bf16.mxu0 0
  %794 = vmatpush1.bf16.msra.mxu0 %v558
  %795 = vmatprep.subr.bf16.mxu0 0
  %796 = vmatpush1.bf16.msra.mxu0 %v559
  %797 = vmatprep.subr.bf16.mxu0 0
  %798 = vmatpush1.bf16.msra.mxu0 %v560
  %799 = vmatprep.subr.bf16.mxu0 0
  %800 = vmatpush1.bf16.msra.mxu0 %v561
  %801 = vmatprep.subr.bf16.mxu0 0
  %802 = vmatpush1.bf16.msra.mxu0 %v562
  %803 = vmatprep.subr.bf16.mxu0 0
  %804 = vmatpush1.bf16.msra.mxu0 %v563
  %805 = vmatprep.subr.bf16.mxu0 0
  %806 = vmatpush1.bf16.msra.mxu0 %v564
  %807 = vmatprep.subr.bf16.mxu0 0
  %808 = vmatpush1.bf16.msra.mxu0 %v565
  %809 = vmatprep.mubr.bf16.mxu0 %v221
  %810 = vmatmul.mubr.bf16.gmra.mrb[0].mxu0 %v220
  %v811 = vpop.f32.mrb[0].mxu0
  %v812 = vadd.f32 %v763, %v811
  %v813 = vpop.f32.mrb[0].mxu0
  %v814 = vpop.f32.mrb[0].mxu0
  %v815 = vadd.f32 %v766, %v814
  %v816 = vpop.f32.mrb[0].mxu0
  %817 = vmatprep.mubr.bf16.mxu0 %v229
  %818 = vmatmul.mubr.bf16.gmra.mrb[0].mxu0 %v228
  %v819 = vpop.f32.mrb[0].mxu0
  %v820 = vadd.f32 %v771, %v819
  %v821 = vpop.f32.mrb[0].mxu0
  %v822 = vpop.f32.mrb[0].mxu0
  %v823 = vadd.f32 %v774, %v822
  %v824 = vpop.f32.mrb[0].mxu0
  %825 = vdwg.mxu0
  %v826 = vmax.f32 %v812, 0.0
  %v827 = vmax.f32 %v815, 0.0
  %v828 = vmax.f32 %v820, 0.0
  %v829 = vmax.f32 %v823, 0.0
  %v830 = vpack.c.bf16 %v827, %v826
  %v831 = vpack.c.bf16 %v829, %v828
  %v834 = vunpack.c.l.b16 %v830
  %v835 = vunpack.c.h.b16 %v830
  %v836 = vunpack.c.l.b16 %v831
  %v837 = vunpack.c.h.b16 %v831
  %v838 = vpack.c.b16 %v834, %v834
  %v839 = vpack.c.b16 %v835, %v835
  %v840 = vpack.c.b16 %v836, %v836
  %v841 = vpack.c.b16 %v837, %v837
  %vm846 = vcmask 519168
  %847 = vst.msk [vmem:[%s3] sm:$0xf] %vm846, %v838
  %848 = vst.msk [vmem:[%s3 + $0x4] sm:$0xf] %vm846, %v839
  %849 = vst.msk [vmem:[%s3 + $0x8] sm:$0xf] %vm846, %v840
  %850 = vst.msk [vmem:[%s3 + $0xc] sm:$0xf] %vm846, %v841
  // Predicated region
  $region14: #{_lambda_.12} parent=0 // pred_check
    _
  $region15: #{_lambda_.12} parent=0 // pred_check_branch
    %852 = sbr.rel (0) target = $region17
  $region16: #{_lambda_.12} parent=0 // pred_region
    _
  $region17: #{_lambda_.12} parent=0 // pred_fallthru
    _
  // Predicated region
  $region18: #{_lambda_.12} parent=0 // pred_check
    _
  $region19: #{_lambda_.12} parent=0 // pred_check_branch
    %854 = sbr.rel (0) target = $region21
  $region20: #{_lambda_.12} parent=0 // pred_region
    _
  $region21: #{_lambda_.12} parent=0 // pred_fallthru
    _

// kernel: _lambda_.13
$region0: #{_lambda_.13}
  #allocation0 [shape = 'u32[]', space=smem, size = 0x4, offset = 0x4, fixed_abs, tag = 'smem constant byte address 0x4 - core index']
  #allocation1 [shape = 'u32[144,128]{1,0:T(1,128)}', space=vmem, size = 0x12000, scoped, tag = 'internal scratch']
  %s0 = inlined_call_operand.vmem [shape: bf16[2,1024], index: 0, kind: input, shape index: {}]
  %s1 = inlined_call_operand.vmem [shape: bf16[1024,128], index: 1, kind: input, shape index: {}]
  %s2 = inlined_call_operand.vmem [shape: f32[1,128], index: 2, kind: input, shape index: {}, may-alias: {2,10}]
  %s3 = inlined_call_operand.vmem [shape: bf16[128,10], index: 3, kind: input, shape index: {}]
  %s4 = inlined_call_operand.vmem [shape: bf16[128,10], index: 4, kind: input, shape index: {}]
  %s5 = inlined_call_operand.vmem [shape: f32[1,10], index: 5, kind: input, shape index: {}, may-alias: {5,6}]
  %s6 = inlined_call_operand.vmem [shape: f32[1,10], index: 6, kind: input, shape index: {}, may-alias: {5,6}]
  %s7 = inlined_call_operand.vmem [shape: f32[2,10], index: 7, kind: input, shape index: {}]
  %s8 = inlined_call_operand.vmem [shape: bf16[10,128], index: 8, kind: input, shape index: {}]
  %s9 = inlined_call_operand.vmem [shape: bf16[10,128], index: 9, kind: input, shape index: {}]
  %s10 = inlined_call_operand.vmem [shape: f32[1,128], index: 10, kind: input, shape index: {}, may-alias: {2,10}]
  %s11 = inlined_call_operand.vmem [shape: bf16[128,1024], index: 11, kind: input, shape index: {}]
  %s12 = inlined_call_operand.vmem [shape: f32[1,1024], index: 12, kind: input, shape index: {}]
  %s13 = inlined_call_operand.hbm [shape: f32[2,10], index: 13, kind: output, shape index: {0}]
  %s14 = inlined_call_operand.hbm [shape: f32[2,10], index: 14, kind: output, shape index: {1}]
  %s15 = inlined_call_operand.hbm [shape: f32[2,10], index: 15, kind: output, shape index: {2}]
  %s16 = inlined_call_operand.vmem [shape: bf16[2,1024], index: 16, kind: output, shape index: {3}]
  %17 = xla_tuple %s13, %s14, %s15, %s16
  %s18 = sld [smem:[#allocation0]]
  $region86: #{_lambda_.13} parent=0
    _
  %s20 = ssub.s32 1, %s18
  %s21 = scalar_select 0, %s20, %s18
  $region1: #{_lambda_.13} parent=0
    #allocation2 [shape = 'u8[1024]{0}', space=vmem, size = 0x400, scoped, tag = 'output window, operand 0, single buffered']
    #allocation3 [shape = 's32[1]{0}', space=sflag, size = 0x4, scoped, tag = 'scoped memory for _lambda_.13']
    #allocation4 [shape = 'u8[1024]{0}', space=vmem, size = 0x400, scoped, tag = 'output window, operand 1, single buffered']
    #allocation5 [shape = 's32[1]{0}', space=sflag, size = 0x4, scoped, tag = 'scoped memory for _lambda_.13']
    #allocation6 [shape = 'u8[1024]{0}', space=vmem, size = 0x400, scoped, tag = 'output window, operand 2, single buffered']
    %22 = vsyncpa [#allocation3], 0
    %23 = vsyncpa [#allocation5], 0
    // Predicated region
    $region2: #{_lambda_.13} parent=1 // pred_check
      _
    $region3: #{_lambda_.13} parent=1 // pred_check_branch
      %25 = sbr.rel (0) target = $region5
    $region4: #{_lambda_.13} parent=1 // pred_region
      _
    $region5: #{_lambda_.13} parent=1 // pred_fallthru
      _
    // Predicated region
    $region6: #{_lambda_.13} parent=1 // pred_check
      _
    $region7: #{_lambda_.13} parent=1 // pred_check_branch
      %27 = sbr.rel (0) target = $region9
    $region8: #{_lambda_.13} parent=1 // pred_region
      _
    $region9: #{_lambda_.13} parent=1 // pred_fallthru
      _
    // Predicated region
    $region10: #{_lambda_.13} parent=1 // pred_check
      _
    $region11: #{_lambda_.13} parent=1 // pred_check_branch
      %29 = sbr.rel (0) target = $region13
    $region12: #{_lambda_.13} parent=1 // pred_region
      _
    $region13: #{_lambda_.13} parent=1 // pred_fallthru
      _
    // Predicated region
    $region14: #{_lambda_.13} parent=1 // pred_check
      _
    $region15: #{_lambda_.13} parent=1 // pred_check_branch
      %31 = sbr.rel (0) target = $region17
    $region16: #{_lambda_.13} parent=1 // pred_region
      _
    $region17: #{_lambda_.13} parent=1 // pred_fallthru
      _
    // Predicated region
    $region18: #{_lambda_.13} parent=1 // pred_check
      _
    $region19: #{_lambda_.13} parent=1 // pred_check_branch
      %33 = sbr.rel (0) target = $region21
    $region20: #{_lambda_.13} parent=1 // pred_region
      _
    $region21: #{_lambda_.13} parent=1 // pred_fallthru
      _
    // Predicated region
    $region22: #{_lambda_.13} parent=1 // pred_check
      _
    $region23: #{_lambda_.13} parent=1 // pred_check_branch
      %35 = sbr.rel (0) target = $region25
    $region24: #{_lambda_.13} parent=1 // pred_region
      _
    $region25: #{_lambda_.13} parent=1 // pred_fallthru
      _
    // Predicated region
    $region26: #{_lambda_.13} parent=1 // pred_check
      _
    $region27: #{_lambda_.13} parent=1 // pred_check_branch
      %37 = sbr.rel (0) target = $region29
    $region28: #{_lambda_.13} parent=1 // pred_region
      _
    $region29: #{_lambda_.13} parent=1 // pred_fallthru
      _
    // Predicated region
    $region30: #{_lambda_.13} parent=1 // pred_check
      _
    $region31: #{_lambda_.13} parent=1 // pred_check_branch
      %39 = sbr.rel (0) target = $region33
    $region32: #{_lambda_.13} parent=1 // pred_region
      _
    $region33: #{_lambda_.13} parent=1 // pred_fallthru
      _
    // Predicated region
    $region34: #{_lambda_.13} parent=1 // pred_check
      _
    $region35: #{_lambda_.13} parent=1 // pred_check_branch
      %41 = sbr.rel (0) target = $region37
    $region36: #{_lambda_.13} parent=1 // pred_region
      _
    $region37: #{_lambda_.13} parent=1 // pred_fallthru
      _
    // Predicated region
    $region38: #{_lambda_.13} parent=1 // pred_check
      _
    $region39: #{_lambda_.13} parent=1 // pred_check_branch
      %43 = sbr.rel (0) target = $region41
    $region40: #{_lambda_.13} parent=1 // pred_region
      _
    $region41: #{_lambda_.13} parent=1 // pred_fallthru
      _
    // Predicated region
    $region42: #{_lambda_.13} parent=1 // pred_check
      _
    $region43: #{_lambda_.13} parent=1 // pred_check_branch
      %45 = sbr.rel (0) target = $region45
    $region44: #{_lambda_.13} parent=1 // pred_region
      _
    $region45: #{_lambda_.13} parent=1 // pred_fallthru
      _
    // Predicated region
    $region46: #{_lambda_.13} parent=1 // pred_check
      _
    $region47: #{_lambda_.13} parent=1 // pred_check_branch
      %47 = sbr.rel (0) target = $region49
    $region48: #{_lambda_.13} parent=1 // pred_region
      _
    $region49: #{_lambda_.13} parent=1 // pred_fallthru
      _
    // Predicated region
    $region50: #{_lambda_.13} parent=1 // pred_check
      _
    $region51: #{_lambda_.13} parent=1 // pred_check_branch
      %49 = sbr.rel (0) target = $region53
    $region52: #{_lambda_.13} parent=1 // pred_region
      _
    $region53: #{_lambda_.13} parent=1 // pred_fallthru
      _
    %v51 = vld [vmem:[%s0] sm:$0xff]
    %v52 = vld [vmem:[%s1] sm:$0xf]
    %v53 = vld [vmem:[%s1 + $0x4] sm:$0xf]
    %v54 = vld [vmem:[%s1 + $0x8] sm:$0xf]
    %v55 = vld [vmem:[%s1 + $0xc] sm:$0xf]
    %v56 = vld [vmem:[%s1 + $0x10] sm:$0xf]
    %v57 = vld [vmem:[%s1 + $0x14] sm:$0xf]
    %v58 = vld [vmem:[%s1 + $0x18] sm:$0xf]
    %v59 = vld [vmem:[%s1 + $0x1c] sm:$0xf]
    %v60 = vld [vmem:[%s1 + $0x20] sm:$0xf]
    %v61 = vld [vmem:[%s1 + $0x24] sm:$0xf]
    %v62 = vld [vmem:[%s1 + $0x28] sm:$0xf]
    %v63 = vld [vmem:[%s1 + $0x2c] sm:$0xf]
    %v64 = vld [vmem:[%s1 + $0x30] sm:$0xf]
    %v65 = vld [vmem:[%s1 + $0x34] sm:$0xf]
    %v66 = vld [vmem:[%s1 + $0x38] sm:$0xf]
    %v67 = vld [vmem:[%s1 + $0x3c] sm:$0xf]
    %v68 = vld [vmem:[%s1 + $0x40] sm:$0xf]
    %v69 = vld [vmem:[%s1 + $0x44] sm:$0xf]
    %v70 = vld [vmem:[%s1 + $0x48] sm:$0xf]
    %v71 = vld [vmem:[%s1 + $0x4c] sm:$0xf]
    %v72 = vld [vmem:[%s1 + $0x50] sm:$0xf]
    %v73 = vld [vmem:[%s1 + $0x54] sm:$0xf]
    %v74 = vld [vmem:[%s1 + $0x58] sm:$0xf]
    %v75 = vld [vmem:[%s1 + $0x5c] sm:$0xf]
    %v76 = vld [vmem:[%s1 + $0x60] sm:$0xf]
    %v77 = vld [vmem:[%s1 + $0x64] sm:$0xf]
    %v78 = vld [vmem:[%s1 + $0x68] sm:$0xf]
    %v79 = vld [vmem:[%s1 + $0x6c] sm:$0xf]
    %v80 = vld [vmem:[%s1 + $0x70] sm:$0xf]
    %v81 = vld [vmem:[%s1 + $0x74] sm:$0xf]
    %v82 = vld [vmem:[%s1 + $0x78] sm:$0xf]
    %v83 = vld [vmem:[%s1 + $0x7c] sm:$0xf]
    %v84 = vld [vmem:[%s1 + $0x80] sm:$0xf]
    %v85 = vld [vmem:[%s1 + $0x84] sm:$0xf]
    %v86 = vld [vmem:[%s1 + $0x88] sm:$0xf]
    %v87 = vld [vmem:[%s1 + $0x8c] sm:$0xf]
    %v88 = vld [vmem:[%s1 + $0x90] sm:$0xf]
    %v89 = vld [vmem:[%s1 + $0x94] sm:$0xf]
    %v90 = vld [vmem:[%s1 + $0x98] sm:$0xf]
    %v91 = vld [vmem:[%s1 + $0x9c] sm:$0xf]
    %v92 = vld [vmem:[%s1 + $0xa0] sm:$0xf]
    %v93 = vld [vmem:[%s1 + $0xa4] sm:$0xf]
    %v94 = vld [vmem:[%s1 + $0xa8] sm:$0xf]
    %v95 = vld [vmem:[%s1 + $0xac] sm:$0xf]
    %v96 = vld [vmem:[%s1 + $0xb0] sm:$0xf]
    %v97 = vld [vmem:[%s1 + $0xb4] sm:$0xf]
    %v98 = vld [vmem:[%s1 + $0xb8] sm:$0xf]
    %v99 = vld [vmem:[%s1 + $0xbc] sm:$0xf]
    %v100 = vld [vmem:[%s1 + $0xc0] sm:$0xf]
    %v101 = vld [vmem:[%s1 + $0xc4] sm:$0xf]
    %v102 = vld [vmem:[%s1 + $0xc8] sm:$0xf]
    %v103 = vld [vmem:[%s1 + $0xcc] sm:$0xf]
    %v104 = vld [vmem:[%s1 + $0xd0] sm:$0xf]
    %v105 = vld [vmem:[%s1 + $0xd4] sm:$0xf]
    %v106 = vld [vmem:[%s1 + $0xd8] sm:$0xf]
    %v107 = vld [vmem:[%s1 + $0xdc] sm:$0xf]
    %v108 = vld [vmem:[%s1 + $0xe0] sm:$0xf]
    %v109 = vld [vmem:[%s1 + $0xe4] sm:$0xf]
    %v110 = vld [vmem:[%s1 + $0xe8] sm:$0xf]
    %v111 = vld [vmem:[%s1 + $0xec] sm:$0xf]
    %v112 = vld [vmem:[%s1 + $0xf0] sm:$0xf]
    %v113 = vld [vmem:[%s1 + $0xf4] sm:$0xf]
    %v114 = vld [vmem:[%s1 + $0xf8] sm:$0xf]
    %v115 = vld [vmem:[%s1 + $0xfc] sm:$0xf]
    %v116 = vld [vmem:[%s1 + $0x100] sm:$0xf]
    %v117 = vld [vmem:[%s1 + $0x104] sm:$0xf]
    %v118 = vld [vmem:[%s1 + $0x108] sm:$0xf]
    %v119 = vld [vmem:[%s1 + $0x10c] sm:$0xf]
    %v120 = vld [vmem:[%s1 + $0x110] sm:$0xf]
    %v121 = vld [vmem:[%s1 + $0x114] sm:$0xf]
    %v122 = vld [vmem:[%s1 + $0x118] sm:$0xf]
    %v123 = vld [vmem:[%s1 + $0x11c] sm:$0xf]
    %v124 = vld [vmem:[%s1 + $0x120] sm:$0xf]
    %v125 = vld [vmem:[%s1 + $0x124] sm:$0xf]
    %v126 = vld [vmem:[%s1 + $0x128] sm:$0xf]
    %v127 = vld [vmem:[%s1 + $0x12c] sm:$0xf]
    %v128 = vld [vmem:[%s1 + $0x130] sm:$0xf]
    %v129 = vld [vmem:[%s1 + $0x134] sm:$0xf]
    %v130 = vld [vmem:[%s1 + $0x138] sm:$0xf]
    %v131 = vld [vmem:[%s1 + $0x13c] sm:$0xf]
    %v132 = vld [vmem:[%s1 + $0x140] sm:$0xf]
    %v133 = vld [vmem:[%s1 + $0x144] sm:$0xf]
    %v134 = vld [vmem:[%s1 + $0x148] sm:$0xf]
    %v135 = vld [vmem:[%s1 + $0x14c] sm:$0xf]
    %v136 = vld [vmem:[%s1 + $0x150] sm:$0xf]
    %v137 = vld [vmem:[%s1 + $0x154] sm:$0xf]
    %v138 = vld [vmem:[%s1 + $0x158] sm:$0xf]
    %v139 = vld [vmem:[%s1 + $0x15c] sm:$0xf]
    %v140 = vld [vmem:[%s1 + $0x160] sm:$0xf]
    %v141 = vld [vmem:[%s1 + $0x164] sm:$0xf]
    %v142 = vld [vmem:[%s1 + $0x168] sm:$0xf]
    %v143 = vld [vmem:[%s1 + $0x16c] sm:$0xf]
    %v144 = vld [vmem:[%s1 + $0x170] sm:$0xf]
    %v145 = vld [vmem:[%s1 + $0x174] sm:$0xf]
    %v146 = vld [vmem:[%s1 + $0x178] sm:$0xf]
    %v147 = vld [vmem:[%s1 + $0x17c] sm:$0xf]
    %v148 = vld [vmem:[%s1 + $0x180] sm:$0xf]
    %v149 = vld [vmem:[%s1 + $0x184] sm:$0xf]
    %v150 = vld [vmem:[%s1 + $0x188] sm:$0xf]
    %v151 = vld [vmem:[%s1 + $0x18c] sm:$0xf]
    %v152 = vld [vmem:[%s1 + $0x190] sm:$0xf]
    %v153 = vld [vmem:[%s1 + $0x194] sm:$0xf]
    %v154 = vld [vmem:[%s1 + $0x198] sm:$0xf]
    %v155 = vld [vmem:[%s1 + $0x19c] sm:$0xf]
    %v156 = vld [vmem:[%s1 + $0x1a0] sm:$0xf]
    %v157 = vld [vmem:[%s1 + $0x1a4] sm:$0xf]
    %v158 = vld [vmem:[%s1 + $0x1a8] sm:$0xf]
    %v159 = vld [vmem:[%s1 + $0x1ac] sm:$0xf]
    %v160 = vld [vmem:[%s1 + $0x1b0] sm:$0xf]
    %v161 = vld [vmem:[%s1 + $0x1b4] sm:$0xf]
    %v162 = vld [vmem:[%s1 + $0x1b8] sm:$0xf]
    %v163 = vld [vmem:[%s1 + $0x1bc] sm:$0xf]
    %v164 = vld [vmem:[%s1 + $0x1c0] sm:$0xf]
    %v165 = vld [vmem:[%s1 + $0x1c4] sm:$0xf]
    %v166 = vld [vmem:[%s1 + $0x1c8] sm:$0xf]
    %v167 = vld [vmem:[%s1 + $0x1cc] sm:$0xf]
    %v168 = vld [vmem:[%s1 + $0x1d0] sm:$0xf]
    %v169 = vld [vmem:[%s1 + $0x1d4] sm:$0xf]
    %v170 = vld [vmem:[%s1 + $0x1d8] sm:$0xf]
    %v171 = vld [vmem:[%s1 + $0x1dc] sm:$0xf]
    %v172 = vld [vmem:[%s1 + $0x1e0] sm:$0xf]
    %v173 = vld [vmem:[%s1 + $0x1e4] sm:$0xf]
    %v174 = vld [vmem:[%s1 + $0x1e8] sm:$0xf]
    %v175 = vld [vmem:[%s1 + $0x1ec] sm:$0xf]
    %v176 = vld [vmem:[%s1 + $0x1f0] sm:$0xf]
    %v177 = vld [vmem:[%s1 + $0x1f4] sm:$0xf]
    %v178 = vld [vmem:[%s1 + $0x1f8] sm:$0xf]
    %v179 = vld [vmem:[%s1 + $0x1fc] sm:$0xf]
    %v180 = vld [vmem:[%s2] sm:$0x1]
    %v182 = vlaneseq
    %v183 = vshrl.u32 %v182, 7
    %v184 = vsub.s32 0, %v183
    %v185 = vrot.slane %v180, %v184
    %v188 = vcombine.high %v51, %v51
    %v190 = vunpack.c.l.s4 1966171168
    %v191 = vunpack.c.0.s8 %v190
    %v192 = vlaneseq
    %v193 = vshrl.u32 %v192, 7
    %v194 = vsub.s32 %v191, %v193
    %v195 = vrot.slane %v51, %v194
    %v197 = vunpack.c.l.s4 1966171168
    %v198 = vunpack.c.0.s8 %v197
    %v199 = vlaneseq
    %v200 = vshrl.u32 %v199, 7
    %v201 = vsub.s32 %v198, %v200
    %v202 = vrot.slane %v188, %v201
    %v203 = vcombine.high %v195, %v195
    %v204 = vcombine.high %v202, %v202
    %v206 = vunpack.c.l.s4 1966171168
    %v207 = vunpack.c.0.s8 %v206
    %v208 = vlaneseq
    %v209 = vshrl.u32 %v208, 7
    %v210 = vsub.s32 %v207, %v209
    %v211 = vrot.slane %v195, %v210
    %v213 = vunpack.c.l.s4 1966171168
    %v214 = vunpack.c.0.s8 %v213
    %v215 = vlaneseq
    %v216 = vshrl.u32 %v215, 7
    %v217 = vsub.s32 %v214, %v216
    %v218 = vrot.slane %v202, %v217
    %v220 = vunpack.c.l.s4 1966171168
    %v221 = vunpack.c.0.s8 %v220
    %v222 = vlaneseq
    %v223 = vshrl.u32 %v222, 7
    %v224 = vsub.s32 %v221, %v223
    %v225 = vrot.slane %v203, %v224
    %v227 = vunpack.c.l.s4 1966171168
    %v228 = vunpack.c.0.s8 %v227
    %v229 = vlaneseq
    %v230 = vshrl.u32 %v229, 7
    %v231 = vsub.s32 %v228, %v230
    %v232 = vrot.slane %v204, %v231
    %v233 = vcombine.high %v211, %v211
    %v234 = vcombine.high %v218, %v218
    %v235 = vcombine.high %v225, %v225
    %v236 = vcombine.high %v232, %v232
    %v373 = vunpack.c.l.b16 %v52
    %v374 = vunpack.c.l.b16 %v53
    %v375 = vunpack.c.l.b16 %v54
    %v376 = vunpack.c.l.b16 %v55
    %v377 = vunpack.c.l.b16 %v56
    %v378 = vunpack.c.l.b16 %v57
    %v379 = vunpack.c.l.b16 %v58
    %v380 = vunpack.c.l.b16 %v59
    %v381 = vunpack.c.l.b16 %v60
    %v382 = vunpack.c.l.b16 %v61
    %v383 = vunpack.c.l.b16 %v62
    %v384 = vunpack.c.l.b16 %v63
    %v385 = vunpack.c.l.b16 %v64
    %v386 = vunpack.c.l.b16 %v65
    %v387 = vunpack.c.l.b16 %v66
    %v388 = vunpack.c.l.b16 %v67
    %v389 = vunpack.c.l.b16 %v68
    %v390 = vunpack.c.l.b16 %v69
    %v391 = vunpack.c.l.b16 %v70
    %v392 = vunpack.c.l.b16 %v71
    %v393 = vunpack.c.l.b16 %v72
    %v394 = vunpack.c.l.b16 %v73
    %v395 = vunpack.c.l.b16 %v74
    %v396 = vunpack.c.l.b16 %v75
    %v397 = vunpack.c.l.b16 %v76
    %v398 = vunpack.c.l.b16 %v77
    %v399 = vunpack.c.l.b16 %v78
    %v400 = vunpack.c.l.b16 %v79
    %v401 = vunpack.c.l.b16 %v80
    %v402 = vunpack.c.l.b16 %v81
    %v403 = vunpack.c.l.b16 %v82
    %v404 = vunpack.c.l.b16 %v83
    %v405 = vunpack.c.l.b16 %v84
    %v406 = vunpack.c.l.b16 %v85
    %v407 = vunpack.c.l.b16 %v86
    %v408 = vunpack.c.l.b16 %v87
    %v409 = vunpack.c.l.b16 %v88
    %v410 = vunpack.c.l.b16 %v89
    %v411 = vunpack.c.l.b16 %v90
    %v412 = vunpack.c.l.b16 %v91
    %v413 = vunpack.c.l.b16 %v92
    %v414 = vunpack.c.l.b16 %v93
    %v415 = vunpack.c.l.b16 %v94
    %v416 = vunpack.c.l.b16 %v95
    %v417 = vunpack.c.l.b16 %v96
    %v418 = vunpack.c.l.b16 %v97
    %v419 = vunpack.c.l.b16 %v98
    %v420 = vunpack.c.l.b16 %v99
    %v421 = vunpack.c.l.b16 %v100
    %v422 = vunpack.c.l.b16 %v101
    %v423 = vunpack.c.l.b16 %v102
    %v424 = vunpack.c.l.b16 %v103
    %v425 = vunpack.c.l.b16 %v104
    %v426 = vunpack.c.l.b16 %v105
    %v427 = vunpack.c.l.b16 %v106
    %v428 = vunpack.c.l.b16 %v107
    %v429 = vunpack.c.l.b16 %v108
    %v430 = vunpack.c.l.b16 %v109
    %v431 = vunpack.c.l.b16 %v110
    %v432 = vunpack.c.l.b16 %v111
    %v433 = vunpack.c.l.b16 %v112
    %v434 = vunpack.c.l.b16 %v113
    %v435 = vunpack.c.l.b16 %v114
    %v436 = vunpack.c.l.b16 %v115
    %v437 = vunpack.c.l.b16 %v116
    %v438 = vunpack.c.l.b16 %v117
    %v439 = vunpack.c.l.b16 %v118
    %v440 = vunpack.c.l.b16 %v119
    %v441 = vunpack.c.l.b16 %v120
    %v442 = vunpack.c.l.b16 %v121
    %v443 = vunpack.c.l.b16 %v122
    %v444 = vunpack.c.l.b16 %v123
    %v445 = vunpack.c.l.b16 %v124
    %v446 = vunpack.c.l.b16 %v125
    %v447 = vunpack.c.l.b16 %v126
    %v448 = vunpack.c.l.b16 %v127
    %v449 = vunpack.c.l.b16 %v128
    %v450 = vunpack.c.l.b16 %v129
    %v451 = vunpack.c.l.b16 %v130
    %v452 = vunpack.c.l.b16 %v131
    %v453 = vunpack.c.l.b16 %v132
    %v454 = vunpack.c.l.b16 %v133
    %v455 = vunpack.c.l.b16 %v134
    %v456 = vunpack.c.l.b16 %v135
    %v457 = vunpack.c.l.b16 %v136
    %v458 = vunpack.c.l.b16 %v137
    %v459 = vunpack.c.l.b16 %v138
    %v460 = vunpack.c.l.b16 %v139
    %v461 = vunpack.c.l.b16 %v140
    %v462 = vunpack.c.l.b16 %v141
    %v463 = vunpack.c.l.b16 %v142
    %v464 = vunpack.c.l.b16 %v143
    %v465 = vunpack.c.l.b16 %v144
    %v466 = vunpack.c.l.b16 %v145
    %v467 = vunpack.c.l.b16 %v146
    %v468 = vunpack.c.l.b16 %v147
    %v469 = vunpack.c.l.b16 %v148
    %v470 = vunpack.c.l.b16 %v149
    %v471 = vunpack.c.l.b16 %v150
    %v472 = vunpack.c.l.b16 %v151
    %v473 = vunpack.c.l.b16 %v152
    %v474 = vunpack.c.l.b16 %v153
    %v475 = vunpack.c.l.b16 %v154
    %v476 = vunpack.c.l.b16 %v155
    %v477 = vunpack.c.l.b16 %v156
    %v478 = vunpack.c.l.b16 %v157
    %v479 = vunpack.c.l.b16 %v158
    %v480 = vunpack.c.l.b16 %v159
    %v481 = vunpack.c.l.b16 %v160
    %v482 = vunpack.c.l.b16 %v161
    %v483 = vunpack.c.l.b16 %v162
    %v484 = vunpack.c.l.b16 %v163
    %v485 = vunpack.c.l.b16 %v164
    %v486 = vunpack.c.l.b16 %v165
    %v487 = vunpack.c.l.b16 %v166
    %v488 = vunpack.c.l.b16 %v167
    %v489 = vunpack.c.l.b16 %v168
    %v490 = vunpack.c.l.b16 %v169
    %v491 = vunpack.c.l.b16 %v170
    %v492 = vunpack.c.l.b16 %v171
    %v493 = vunpack.c.l.b16 %v172
    %v494 = vunpack.c.l.b16 %v173
    %v495 = vunpack.c.l.b16 %v174
    %v496 = vunpack.c.l.b16 %v175
    %v497 = vunpack.c.l.b16 %v176
    %v498 = vunpack.c.l.b16 %v177
    %v499 = vunpack.c.l.b16 %v178
    %v500 = vunpack.c.l.b16 %v179
    %v501 = vpack.c.b16 %v374, %v373
    %v502 = vpack.c.b16 %v376, %v375
    %v503 = vpack.c.b16 %v378, %v377
    %v504 = vpack.c.b16 %v380, %v379
    %v505 = vpack.c.b16 %v382, %v381
    %v506 = vpack.c.b16 %v384, %v383
    %v507 = vpack.c.b16 %v386, %v385
    %v508 = vpack.c.b16 %v388, %v387
    %v509 = vpack.c.b16 %v390, %v389
    %v510 = vpack.c.b16 %v392, %v391
    %v511 = vpack.c.b16 %v394, %v393
    %v512 = vpack.c.b16 %v396, %v395
    %v513 = vpack.c.b16 %v398, %v397
    %v514 = vpack.c.b16 %v400, %v399
    %v515 = vpack.c.b16 %v402, %v401
    %v516 = vpack.c.b16 %v404, %v403
    %v517 = vpack.c.b16 %v406, %v405
    %v518 = vpack.c.b16 %v408, %v407
    %v519 = vpack.c.b16 %v410, %v409
    %v520 = vpack.c.b16 %v412, %v411
    %v521 = vpack.c.b16 %v414, %v413
    %v522 = vpack.c.b16 %v416, %v415
    %v523 = vpack.c.b16 %v418, %v417
    %v524 = vpack.c.b16 %v420, %v419
    %v525 = vpack.c.b16 %v422, %v421
    %v526 = vpack.c.b16 %v424, %v423
    %v527 = vpack.c.b16 %v426, %v425
    %v528 = vpack.c.b16 %v428, %v427
    %v529 = vpack.c.b16 %v430, %v429
    %v530 = vpack.c.b16 %v432, %v431
    %v531 = vpack.c.b16 %v434, %v433
    %v532 = vpack.c.b16 %v436, %v435
    %v533 = vpack.c.b16 %v438, %v437
    %v534 = vpack.c.b16 %v440, %v439
    %v535 = vpack.c.b16 %v442, %v441
    %v536 = vpack.c.b16 %v444, %v443
    %v537 = vpack.c.b16 %v446, %v445
    %v538 = vpack.c.b16 %v448, %v447
    %v539 = vpack.c.b16 %v450, %v449
    %v540 = vpack.c.b16 %v452, %v451
    %v541 = vpack.c.b16 %v454, %v453
    %v542 = vpack.c.b16 %v456, %v455
    %v543 = vpack.c.b16 %v458, %v457
    %v544 = vpack.c.b16 %v460, %v459
    %v545 = vpack.c.b16 %v462, %v461
    %v546 = vpack.c.b16 %v464, %v463
    %v547 = vpack.c.b16 %v466, %v465
    %v548 = vpack.c.b16 %v468, %v467
    %v549 = vpack.c.b16 %v470, %v469
    %v550 = vpack.c.b16 %v472, %v471
    %v551 = vpack.c.b16 %v474, %v473
    %v552 = vpack.c.b16 %v476, %v475
    %v553 = vpack.c.b16 %v478, %v477
    %v554 = vpack.c.b16 %v480, %v479
    %v555 = vpack.c.b16 %v482, %v481
    %v556 = vpack.c.b16 %v484, %v483
    %v557 = vpack.c.b16 %v486, %v485
    %v558 = vpack.c.b16 %v488, %v487
    %v559 = vpack.c.b16 %v490, %v489
    %v560 = vpack.c.b16 %v492, %v491
    %v561 = vpack.c.b16 %v494, %v493
    %v562 = vpack.c.b16 %v496, %v495
    %v563 = vpack.c.b16 %v498, %v497
    %v564 = vpack.c.b16 %v500, %v499
    %629 = vmatprep.subr.bf16.mxu0 0
    %630 = vmatpush1.bf16.msra.mxu0 %v501
    %631 = vmatprep.subr.bf16.mxu0 0
    %632 = vmatpush1.bf16.msra.mxu0 %v502
    %633 = vmatprep.subr.bf16.mxu0 0
    %634 = vmatpush1.bf16.msra.mxu0 %v503
    %635 = vmatprep.subr.bf16.mxu0 0
    %636 = vmatpush1.bf16.msra.mxu0 %v504
    %637 = vmatprep.subr.bf16.mxu0 0
    %638 = vmatpush1.bf16.msra.mxu0 %v505
    %639 = vmatprep.subr.bf16.mxu0 0
    %640 = vmatpush1.bf16.msra.mxu0 %v506
    %641 = vmatprep.subr.bf16.mxu0 0
    %642 = vmatpush1.bf16.msra.mxu0 %v507
    %643 = vmatprep.subr.bf16.mxu0 0
    %644 = vmatpush1.bf16.msra.mxu0 %v508
    %645 = vmatprep.subr.bf16.mxu0 0
    %646 = vmatpush1.bf16.msra.mxu0 %v509
    %647 = vmatprep.subr.bf16.mxu0 0
    %648 = vmatpush1.bf16.msra.mxu0 %v510
    %649 = vmatprep.subr.bf16.mxu0 0
    %650 = vmatpush1.bf16.msra.mxu0 %v511
    %651 = vmatprep.subr.bf16.mxu0 0
    %652 = vmatpush1.bf16.msra.mxu0 %v512
    %653 = vmatprep.subr.bf16.mxu0 0
    %654 = vmatpush1.bf16.msra.mxu0 %v513
    %655 = vmatprep.subr.bf16.mxu0 0
    %656 = vmatpush1.bf16.msra.mxu0 %v514
    %657 = vmatprep.subr.bf16.mxu0 0
    %658 = vmatpush1.bf16.msra.mxu0 %v515
    %659 = vmatprep.subr.bf16.mxu0 0
    %660 = vmatpush1.bf16.msra.mxu0 %v516
    %661 = vmatprep.mubr.bf16.mxu0 %v225
    %662 = vmatmul.mubr.bf16.gmra.mrb[0].mxu0 %v211
    %v663 = vpop.f32.mrb[0].mxu0
    %v664 = vadd.f32 %v185, %v663
    %v665 = vpop.f32.mrb[0].mxu0
    %v666 = vpop.f32.mrb[0].mxu0
    %v667 = vpop.f32.mrb[0].mxu0
    %668 = vdwg.mxu0
    %669 = vmatprep.subr.bf16.mxu0 0
    %670 = vmatpush1.bf16.msra.mxu0 %v517
    %671 = vmatprep.subr.bf16.mxu0 0
    %672 = vmatpush1.bf16.msra.mxu0 %v518
    %673 = vmatprep.subr.bf16.mxu0 0
    %674 = vmatpush1.bf16.msra.mxu0 %v519
    %675 = vmatprep.subr.bf16.mxu0 0
    %676 = vmatpush1.bf16.msra.mxu0 %v520
    %677 = vmatprep.subr.bf16.mxu0 0
    %678 = vmatpush1.bf16.msra.mxu0 %v521
    %679 = vmatprep.subr.bf16.mxu0 0
    %680 = vmatpush1.bf16.msra.mxu0 %v522
    %681 = vmatprep.subr.bf16.mxu0 0
    %682 = vmatpush1.bf16.msra.mxu0 %v523
    %683 = vmatprep.subr.bf16.mxu0 0
    %684 = vmatpush1.bf16.msra.mxu0 %v524
    %685 = vmatprep.subr.bf16.mxu0 0
    %686 = vmatpush1.bf16.msra.mxu0 %v525
    %687 = vmatprep.subr.bf16.mxu0 0
    %688 = vmatpush1.bf16.msra.mxu0 %v526
    %689 = vmatprep.subr.bf16.mxu0 0
    %690 = vmatpush1.bf16.msra.mxu0 %v527
    %691 = vmatprep.subr.bf16.mxu0 0
    %692 = vmatpush1.bf16.msra.mxu0 %v528
    %693 = vmatprep.subr.bf16.mxu0 0
    %694 = vmatpush1.bf16.msra.mxu0 %v529
    %695 = vmatprep.subr.bf16.mxu0 0
    %696 = vmatpush1.bf16.msra.mxu0 %v530
    %697 = vmatprep.subr.bf16.mxu0 0
    %698 = vmatpush1.bf16.msra.mxu0 %v531
    %699 = vmatprep.subr.bf16.mxu0 0
    %700 = vmatpush1.bf16.msra.mxu0 %v532
    %701 = vmatprep.mubr.bf16.mxu0 %v235
    %702 = vmatmul.mubr.bf16.gmra.mrb[0].mxu0 %v233
    %v703 = vpop.f32.mrb[0].mxu0
    %v704 = vadd.f32 %v664, %v703
    %v705 = vpop.f32.mrb[0].mxu0
    %v706 = vpop.f32.mrb[0].mxu0
    %v707 = vpop.f32.mrb[0].mxu0
    %708 = vdwg.mxu0
    %709 = vmatprep.subr.bf16.mxu0 0
    %710 = vmatpush1.bf16.msra.mxu0 %v533
    %711 = vmatprep.subr.bf16.mxu0 0
    %712 = vmatpush1.bf16.msra.mxu0 %v534
    %713 = vmatprep.subr.bf16.mxu0 0
    %714 = vmatpush1.bf16.msra.mxu0 %v535
    %715 = vmatprep.subr.bf16.mxu0 0
    %716 = vmatpush1.bf16.msra.mxu0 %v536
    %717 = vmatprep.subr.bf16.mxu0 0
    %718 = vmatpush1.bf16.msra.mxu0 %v537
    %719 = vmatprep.subr.bf16.mxu0 0
    %720 = vmatpush1.bf16.msra.mxu0 %v538
    %721 = vmatprep.subr.bf16.mxu0 0
    %722 = vmatpush1.bf16.msra.mxu0 %v539
    %723 = vmatprep.subr.bf16.mxu0 0
    %724 = vmatpush1.bf16.msra.mxu0 %v540
    %725 = vmatprep.subr.bf16.mxu0 0
    %726 = vmatpush1.bf16.msra.mxu0 %v541
    %727 = vmatprep.subr.bf16.mxu0 0
    %728 = vmatpush1.bf16.msra.mxu0 %v542
    %729 = vmatprep.subr.bf16.mxu0 0
    %730 = vmatpush1.bf16.msra.mxu0 %v543
    %731 = vmatprep.subr.bf16.mxu0 0
    %732 = vmatpush1.bf16.msra.mxu0 %v544
    %733 = vmatprep.subr.bf16.mxu0 0
    %734 = vmatpush1.bf16.msra.mxu0 %v545
    %735 = vmatprep.subr.bf16.mxu0 0
    %736 = vmatpush1.bf16.msra.mxu0 %v546
    %737 = vmatprep.subr.bf16.mxu0 0
    %738 = vmatpush1.bf16.msra.mxu0 %v547
    %739 = vmatprep.subr.bf16.mxu0 0
    %740 = vmatpush1.bf16.msra.mxu0 %v548
    %741 = vmatprep.mubr.bf16.mxu0 %v232
    %742 = vmatmul.mubr.bf16.gmra.mrb[0].mxu0 %v218
    %v743 = vpop.f32.mrb[0].mxu0
    %v744 = vadd.f32 %v704, %v743
    %v745 = vpop.f32.mrb[0].mxu0
    %v746 = vpop.f32.mrb[0].mxu0
    %v747 = vpop.f32.mrb[0].mxu0
    %748 = vdwg.mxu0
    %749 = vmatprep.subr.bf16.mxu0 0
    %750 = vmatpush1.bf16.msra.mxu0 %v549
    %751 = vmatprep.subr.bf16.mxu0 0
    %752 = vmatpush1.bf16.msra.mxu0 %v550
    %753 = vmatprep.subr.bf16.mxu0 0
    %754 = vmatpush1.bf16.msra.mxu0 %v551
    %755 = vmatprep.subr.bf16.mxu0 0
    %756 = vmatpush1.bf16.msra.mxu0 %v552
    %757 = vmatprep.subr.bf16.mxu0 0
    %758 = vmatpush1.bf16.msra.mxu0 %v553
    %759 = vmatprep.subr.bf16.mxu0 0
    %760 = vmatpush1.bf16.msra.mxu0 %v554
    %761 = vmatprep.subr.bf16.mxu0 0
    %762 = vmatpush1.bf16.msra.mxu0 %v555
    %763 = vmatprep.subr.bf16.mxu0 0
    %764 = vmatpush1.bf16.msra.mxu0 %v556
    %765 = vmatprep.subr.bf16.mxu0 0
    %766 = vmatpush1.bf16.msra.mxu0 %v557
    %767 = vmatprep.subr.bf16.mxu0 0
    %768 = vmatpush1.bf16.msra.mxu0 %v558
    %769 = vmatprep.subr.bf16.mxu0 0
    %770 = vmatpush1.bf16.msra.mxu0 %v559
    %771 = vmatprep.subr.bf16.mxu0 0
    %772 = vmatpush1.bf16.msra.mxu0 %v560
    %773 = vmatprep.subr.bf16.mxu0 0
    %774 = vmatpush1.bf16.msra.mxu0 %v561
    %775 = vmatprep.subr.bf16.mxu0 0
    %776 = vmatpush1.bf16.msra.mxu0 %v562
    %777 = vmatprep.subr.bf16.mxu0 0
    %778 = vmatpush1.bf16.msra.mxu0 %v563
    %779 = vmatprep.subr.bf16.mxu0 0
    %780 = vmatpush1.bf16.msra.mxu0 %v564
    %781 = vmatprep.mubr.bf16.mxu0 %v236
    %782 = vmatmul.mubr.bf16.gmra.mrb[0].mxu0 %v234
    %v783 = vpop.f32.mrb[0].mxu0
    %v784 = vadd.f32 %v744, %v783
    %v785 = vpop.f32.mrb[0].mxu0
    %v786 = vpop.f32.mrb[0].mxu0
    %v787 = vpop.f32.mrb[0].mxu0
    %788 = vdwg.mxu0
    %v789 = vmax.f32 %v784, 0.0
    %v790 = vpack.c.bf16 %v789, %v789
    %v791 = vld [vmem:[%s3] sm:$0xf]
    %v792 = vld [vmem:[%s3 + $0x4] sm:$0xf]
    %v793 = vld [vmem:[%s3 + $0x8] sm:$0xf]
    %v794 = vld [vmem:[%s3 + $0xc] sm:$0xf]
    %v795 = vld [vmem:[%s3 + $0x10] sm:$0xf]
    %v796 = vld [vmem:[%s3 + $0x14] sm:$0xf]
    %v797 = vld [vmem:[%s3 + $0x18] sm:$0xf]
    %v798 = vld [vmem:[%s3 + $0x1c] sm:$0xf]
    %v799 = vld [vmem:[%s3 + $0x20] sm:$0xf]
    %v800 = vld [vmem:[%s3 + $0x24] sm:$0xf]
    %v801 = vld [vmem:[%s3 + $0x28] sm:$0xf]
    %v802 = vld [vmem:[%s3 + $0x2c] sm:$0xf]
    %v803 = vld [vmem:[%s3 + $0x30] sm:$0xf]
    %v804 = vld [vmem:[%s3 + $0x34] sm:$0xf]
    %v805 = vld [vmem:[%s3 + $0x38] sm:$0xf]
    %v806 = vld [vmem:[%s3 + $0x3c] sm:$0xf]
    %v807 = vld [vmem:[%s5] sm:$0x1]
    %v809 = vlaneseq
    %v810 = vshrl.u32 %v809, 7
    %v811 = vsub.s32 0, %v810
    %v812 = vrot.slane %v807, %v811
    %v830 = vunpack.c.l.b16 %v791
    %v831 = vunpack.c.l.b16 %v792
    %v832 = vunpack.c.l.b16 %v793
    %v833 = vunpack.c.l.b16 %v794
    %v834 = vunpack.c.l.b16 %v795
    %v835 = vunpack.c.l.b16 %v796
    %v836 = vunpack.c.l.b16 %v797
    %v837 = vunpack.c.l.b16 %v798
    %v838 = vunpack.c.l.b16 %v799
    %v839 = vunpack.c.l.b16 %v800
    %v840 = vunpack.c.l.b16 %v801
    %v841 = vunpack.c.l.b16 %v802
    %v842 = vunpack.c.l.b16 %v803
    %v843 = vunpack.c.l.b16 %v804
    %v844 = vunpack.c.l.b16 %v805
    %v845 = vunpack.c.l.b16 %v806
    %v846 = vpack.c.b16 %v831, %v830
    %v847 = vpack.c.b16 %v833, %v832
    %v848 = vpack.c.b16 %v835, %v834
    %v849 = vpack.c.b16 %v837, %v836
    %v850 = vpack.c.b16 %v839, %v838
    %v851 = vpack.c.b16 %v841, %v840
    %v852 = vpack.c.b16 %v843, %v842
    %v853 = vpack.c.b16 %v845, %v844
    %862 = vmatprep.subr.bf16.mxu0 0
    %863 = vmatpush1.bf16.msra.mxu0 %v846
    %864 = vmatprep.subr.bf16.mxu0 0
    %865 = vmatpush1.bf16.msra.mxu0 %v847
    %866 = vmatprep.subr.bf16.mxu0 0
    %867 = vmatpush1.bf16.msra.mxu0 %v848
    %868 = vmatprep.subr.bf16.mxu0 0
    %869 = vmatpush1.bf16.msra.mxu0 %v849
    %870 = vmatprep.subr.bf16.mxu0 0
    %871 = vmatpush1.bf16.msra.mxu0 %v850
    %872 = vmatprep.subr.bf16.mxu0 0
    %873 = vmatpush1.bf16.msra.mxu0 %v851
    %874 = vmatprep.subr.bf16.mxu0 0
    %875 = vmatpush1.bf16.msra.mxu0 %v852
    %876 = vmatprep.subr.bf16.mxu0 0
    %877 = vmatpush1.bf16.msra.mxu0 %v853
    %878 = vmatprep.subr.bf16.mxu0 0
    %879 = vmatpush1.bf16.msra.mxu0 0
    %880 = vmatprep.subr.bf16.mxu0 0
    %881 = vmatpush1.bf16.msra.mxu0 0
    %882 = vmatprep.subr.bf16.mxu0 0
    %883 = vmatpush1.bf16.msra.mxu0 0
    %884 = vmatprep.subr.bf16.mxu0 0
    %885 = vmatpush1.bf16.msra.mxu0 0
    %886 = vmatprep.subr.bf16.mxu0 0
    %887 = vmatpush1.bf16.msra.mxu0 0
    %888 = vmatprep.subr.bf16.mxu0 0
    %889 = vmatpush1.bf16.msra.mxu0 0
    %890 = vmatprep.subr.bf16.mxu0 0
    %891 = vmatpush1.bf16.msra.mxu0 0
    %892 = vmatprep.subr.bf16.mxu0 0
    %893 = vmatpush1.bf16.msra.mxu0 0
    %894 = vmatprep.mubr.bf16.mxu0 0
    %895 = vmatmul.mubr.bf16.gmra.mrb[0].mxu0 %v790
    %v896 = vpop.f32.mrb[0].mxu0
    %v897 = vadd.f32 %v812, %v896
    %v898 = vpop.f32.mrb[0].mxu0
    %v899 = vpop.f32.mrb[0].mxu0
    %v900 = vpop.f32.mrb[0].mxu0
    %901 = vdwg.mxu0
    %v902 = vld [vmem:[%s4] sm:$0xf]
    %v903 = vld [vmem:[%s4 + $0x4] sm:$0xf]
    %v904 = vld [vmem:[%s4 + $0x8] sm:$0xf]
    %v905 = vld [vmem:[%s4 + $0xc] sm:$0xf]
    %v906 = vld [vmem:[%s4 + $0x10] sm:$0xf]
    %v907 = vld [vmem:[%s4 + $0x14] sm:$0xf]
    %v908 = vld [vmem:[%s4 + $0x18] sm:$0xf]
    %v909 = vld [vmem:[%s4 + $0x1c] sm:$0xf]
    %v910 = vld [vmem:[%s4 + $0x20] sm:$0xf]
    %v911 = vld [vmem:[%s4 + $0x24] sm:$0xf]
    %v912 = vld [vmem:[%s4 + $0x28] sm:$0xf]
    %v913 = vld [vmem:[%s4 + $0x2c] sm:$0xf]
    %v914 = vld [vmem:[%s4 + $0x30] sm:$0xf]
    %v915 = vld [vmem:[%s4 + $0x34] sm:$0xf]
    %v916 = vld [vmem:[%s4 + $0x38] sm:$0xf]
    %v917 = vld [vmem:[%s4 + $0x3c] sm:$0xf]
    %v918 = vld [vmem:[%s6] sm:$0x1]
    %v920 = vlaneseq
    %v921 = vshrl.u32 %v920, 7
    %v922 = vsub.s32 0, %v921
    %v923 = vrot.slane %v918, %v922
    %v941 = vunpack.c.l.b16 %v902
    %v942 = vunpack.c.l.b16 %v903
    %v943 = vunpack.c.l.b16 %v904
    %v944 = vunpack.c.l.b16 %v905
    %v945 = vunpack.c.l.b16 %v906
    %v946 = vunpack.c.l.b16 %v907
    %v947 = vunpack.c.l.b16 %v908
    %v948 = vunpack.c.l.b16 %v909
    %v949 = vunpack.c.l.b16 %v910
    %v950 = vunpack.c.l.b16 %v911
    %v951 = vunpack.c.l.b16 %v912
    %v952 = vunpack.c.l.b16 %v913
    %v953 = vunpack.c.l.b16 %v914
    %v954 = vunpack.c.l.b16 %v915
    %v955 = vunpack.c.l.b16 %v916
    %v956 = vunpack.c.l.b16 %v917
    %v957 = vpack.c.b16 %v942, %v941
    %v958 = vpack.c.b16 %v944, %v943
    %v959 = vpack.c.b16 %v946, %v945
    %v960 = vpack.c.b16 %v948, %v947
    %v961 = vpack.c.b16 %v950, %v949
    %v962 = vpack.c.b16 %v952, %v951
    %v963 = vpack.c.b16 %v954, %v953
    %v964 = vpack.c.b16 %v956, %v955
    %973 = vmatprep.subr.bf16.mxu0 0
    %974 = vmatpush1.bf16.msra.mxu0 %v957
    %975 = vmatprep.subr.bf16.mxu0 0
    %976 = vmatpush1.bf16.msra.mxu0 %v958
    %977 = vmatprep.subr.bf16.mxu0 0
    %978 = vmatpush1.bf16.msra.mxu0 %v959
    %979 = vmatprep.subr.bf16.mxu0 0
    %980 = vmatpush1.bf16.msra.mxu0 %v960
    %981 = vmatprep.subr.bf16.mxu0 0
    %982 = vmatpush1.bf16.msra.mxu0 %v961
    %983 = vmatprep.subr.bf16.mxu0 0
    %984 = vmatpush1.bf16.msra.mxu0 %v962
    %985 = vmatprep.subr.bf16.mxu0 0
    %986 = vmatpush1.bf16.msra.mxu0 %v963
    %987 = vmatprep.subr.bf16.mxu0 0
    %988 = vmatpush1.bf16.msra.mxu0 %v964
    %989 = vmatprep.subr.bf16.mxu0 0
    %990 = vmatpush1.bf16.msra.mxu0 0
    %991 = vmatprep.subr.bf16.mxu0 0
    %992 = vmatpush1.bf16.msra.mxu0 0
    %993 = vmatprep.subr.bf16.mxu0 0
    %994 = vmatpush1.bf16.msra.mxu0 0
    %995 = vmatprep.subr.bf16.mxu0 0
    %996 = vmatpush1.bf16.msra.mxu0 0
    %997 = vmatprep.subr.bf16.mxu0 0
    %998 = vmatpush1.bf16.msra.mxu0 0
    %999 = vmatprep.subr.bf16.mxu0 0
    %1000 = vmatpush1.bf16.msra.mxu0 0
    %1001 = vmatprep.subr.bf16.mxu0 0
    %1002 = vmatpush1.bf16.msra.mxu0 0
    %1003 = vmatprep.subr.bf16.mxu0 0
    %1004 = vmatpush1.bf16.msra.mxu0 0
    %1005 = vmatprep.mubr.bf16.mxu0 0
    %1006 = vmatmul.mubr.bf16.gmra.mrb[0].mxu0 %v790
    %v1007 = vpop.f32.mrb[0].mxu0
    %v1008 = vadd.f32 %v923, %v1007
    %v1009 = vpop.f32.mrb[0].mxu0
    %v1010 = vpop.f32.mrb[0].mxu0
    %v1011 = vpop.f32.mrb[0].mxu0
    %1012 = vdwg.mxu0
    %v1013 = vld [vmem:[%s7] sm:$0x3]
    %v1014 = vmul.f32 %v1008, 0.5
    %v1015 = vmul.f32 %v1014, 1.442695
    %v1016 = vpow.pop %v1015
    %v1017 = vmul.f32 %v1013, %v1016
    %v1018 = vadd.f32 %v1017, %v897
    %v1019 = vmul.f32 %v1018, 0.62831855
    %v1020 = vand.u32 2147483647, %v1019
    %vm1021 = vcmp.le.f32.partialorder %v1020, 0.7853982
    %vm1022 = vcmp.lt.s32.totalorder %v1019, 0
    %v1023 = vand.u32 %v1019, 2139095040
    %v1024 = vshrl.u32 %v1023, 23
    %v1025 = vsub.s32 %v1024, 127
    %v1026 = vand.u32 2147483647, %v1019
    %v1027 = vand.u32 %v1026, 8388607
    %v1028 = vor.u32 %v1027, 8388608
    %v1029 = vsub.s32 0, %v1028
    %v1030 = vadd.s32 %v1025, 1
    %vm1031 = vcmp.gt.s32.totalorder %v1030, 0
    %v1032 = vsel %vm1031, %v1030, 0
    %v1033 = vshrl.u32 %v1032, 5
    %v1034 = vand.u32 %v1032, 31
    %v1035 = vsub.s32 32, %v1034
    %v1036 = vshrl.u32 683565275, %v1035
    %v1037 = vshll.u32 683565275, %v1034
    %v1038 = vshrl.u32 2475754826, %v1035
    %v1039 = vor.u32 %v1037, %v1038
    %v1040 = vshll.u32 2475754826, %v1034
    %v1041 = vshrl.u32 2131351028, %v1035
    %v1042 = vor.u32 %v1040, %v1041
    %v1043 = vshll.u32 2131351028, %v1034
    %v1044 = vshrl.u32 2102212464, %v1035
    %v1045 = vor.u32 %v1043, %v1044
    %v1046 = vshll.u32 2102212464, %v1034
    %v1047 = vshrl.u32 920167782, %v1035
    %v1048 = vor.u32 %v1046, %v1047
    %v1049 = vshll.u32 920167782, %v1034
    %v1050 = vshrl.u32 1326507024, %v1035
    %v1051 = vor.u32 %v1049, %v1050
    %vm1052 = vcmp.lt.s32.totalorder %v1033, 1
    %vm1053 = vcmp.lt.s32.totalorder %v1033, 2
    %vm1054 = vcmp.lt.s32.totalorder %v1033, 3
    %vm1055 = vcmp.lt.s32.totalorder %v1033, 4
    %v1056 = vsel %vm1052, %v1036, %v1039
    %v1057 = vsel %vm1055, %v1045, 2102212464
    %v1058 = vsel %vm1054, %v1042, %v1057
    %v1059 = vsel %vm1053, %v1056, %v1058
    %v1060 = vsel %vm1052, %v1039, %v1042
    %v1061 = vsel %vm1055, %v1048, 920167782
    %v1062 = vsel %vm1054, %v1045, %v1061
    %v1063 = vsel %vm1053, %v1060, %v1062
    %v1064 = vsel %vm1052, %v1042, %v1045
    %v1065 = vsel %vm1055, %v1051, 1326507024
    %v1066 = vsel %vm1054, %v1048, %v1065
    %v1067 = vsel %vm1053, %v1064, %v1066
    %v1068 = vshll.u32 %v1028, 8
    %v1069 = vmul.u32.u64.compose %v1068, %v1067
    %v1070 = vextract.low.u32 %v1069
    %v1071 = vextract.high.u32 %v1069
    %v1072 = vmul.u32.u64.compose %v1068, %v1063
    %v1073 = vextract.low.u32 %v1072
    %v1074 = vextract.high.u32 %v1072
    %v1075 = vmul.u32 %v1068, %v1059
    %v1076 = vadd.s32 %v1071, %v1073
    %vm1077 = vc.u32 %v1071, %v1073
    %v1078 = vadd.s32 %v1074, 1
    %v1079 = vsel %vm1077, %v1078, %v1074
    %v1080 = vadd.s32 %v1075, %v1079
    %v1081 = vadd.s32 %v1080, 536870912
    %v1082 = vshrl.u32 %v1081, 30
    %v1083 = vshll.u32 %v1082, 30
    %v1084 = vsub.s32 %v1080, %v1083
    %vm1085 = vcmp.lt.s32.totalorder %v1084, 0
    %v1086 = vsub.s32 0, %v1084
    %v1087 = vsel %vm1085, %v1086, %v1084
    %v1088 = vclz %v1087
    %v1089 = vsub.s32 %v1088, 2
    %vm1090 = vcmp.gt.s32.totalorder 0, %v1089
    %v1091 = vsel %vm1090, 0, %v1089
    %v1092 = vsub.s32 32, %v1091
    %v1093 = vshll.u32 %v1084, %v1091
    %v1094 = vshrl.u32 %v1076, %v1092
    %v1095 = vor.u32 %v1093, %v1094
    %v1096 = vsub.s32 4294967266, %v1091
    %v1097 = vadd.s32 %v1096, 127
    %v1098 = vshll.u32 %v1097, 23
    %v1099 = vor.u32 4788187, %v1098
    %v1100 = vand.u32 2147483647, %v1099
    %v1102 = vcvt.s32.f32 %v1095
    %v1103 = vmul.f32 %v1102, %v1100
    %v1104 = vxor.u32 %v1103, 2147483648
    %v1105 = vsel %vm1022, %v1104, %v1103
    %v1106 = vsub.s32 4, %v1082
    %v1107 = vsel %vm1022, %v1106, %v1082
    %v1108 = vsel %vm1021, %v1019, %v1105
    %v1109 = vsel %vm1021, 0, %v1107
    %v1110 = vcosq.f32.pop %v1108
    %v1111 = vsinq.f32.pop %v1108
    %vm1112 = vweird.f32 %v1019
    %v1113 = vadd.s32 %v1109, 3
    %v1114 = vand.u32 %v1113, 3
    %vm1115 = vcmp.lt.s32.totalorder %v1114, 2
    %vm1116 = vcmp.eq.s32.totalorder %v1114, 0
    %v1117 = vxor.u32 %v1111, 2147483648
    %v1118 = vsel %vm1116, %v1110, %v1117
    %vm1119 = vcmp.eq.s32.totalorder %v1114, 2
    %v1120 = vxor.u32 %v1110, 2147483648
    %v1121 = vsel %vm1119, %v1120, %v1111
    %v1122 = vsel %vm1115, %v1118, %v1121
    %v1123 = vsel %vm1112, nan, %v1122
    %v1124 = vpack.c.bf16 %v1123, %v1123
    %v1125 = vand.u32 2147483647, %v1019
    %vm1126 = vcmp.le.f32.partialorder %v1125, 0.7853982
    %vm1127 = vcmp.lt.s32.totalorder %v1019, 0
    %v1128 = vand.u32 %v1019, 2139095040
    %v1129 = vshrl.u32 %v1128, 23
    %v1130 = vsub.s32 %v1129, 127
    %v1131 = vand.u32 2147483647, %v1019
    %v1132 = vand.u32 %v1131, 8388607
    %v1133 = vor.u32 %v1132, 8388608
    %v1134 = vsub.s32 0, %v1133
    %v1135 = vadd.s32 %v1130, 1
    %vm1136 = vcmp.gt.s32.totalorder %v1135, 0
    %v1137 = vsel %vm1136, %v1135, 0
    %v1138 = vshrl.u32 %v1137, 5
    %v1139 = vand.u32 %v1137, 31
    %v1140 = vsub.s32 32, %v1139
    %v1141 = vshrl.u32 683565275, %v1140
    %v1142 = vshll.u32 683565275, %v1139
    %v1143 = vshrl.u32 2475754826, %v1140
    %v1144 = vor.u32 %v1142, %v1143
    %v1145 = vshll.u32 2475754826, %v1139
    %v1146 = vshrl.u32 2131351028, %v1140
    %v1147 = vor.u32 %v1145, %v1146
    %v1148 = vshll.u32 2131351028, %v1139
    %v1149 = vshrl.u32 2102212464, %v1140
    %v1150 = vor.u32 %v1148, %v1149
    %v1151 = vshll.u32 2102212464, %v1139
    %v1152 = vshrl.u32 920167782, %v1140
    %v1153 = vor.u32 %v1151, %v1152
    %v1154 = vshll.u32 920167782, %v1139
    %v1155 = vshrl.u32 1326507024, %v1140
    %v1156 = vor.u32 %v1154, %v1155
    %vm1157 = vcmp.lt.s32.totalorder %v1138, 1
    %vm1158 = vcmp.lt.s32.totalorder %v1138, 2
    %vm1159 = vcmp.lt.s32.totalorder %v1138, 3
    %vm1160 = vcmp.lt.s32.totalorder %v1138, 4
    %v1161 = vsel %vm1157, %v1141, %v1144
    %v1162 = vsel %vm1160, %v1150, 2102212464
    %v1163 = vsel %vm1159, %v1147, %v1162
    %v1164 = vsel %vm1158, %v1161, %v1163
    %v1165 = vsel %vm1157, %v1144, %v1147
    %v1166 = vsel %vm1160, %v1153, 920167782
    %v1167 = vsel %vm1159, %v1150, %v1166
    %v1168 = vsel %vm1158, %v1165, %v1167
    %v1169 = vsel %vm1157, %v1147, %v1150
    %v1170 = vsel %vm1160, %v1156, 1326507024
    %v1171 = vsel %vm1159, %v1153, %v1170
    %v1172 = vsel %vm1158, %v1169, %v1171
    %v1173 = vshll.u32 %v1133, 8
    %v1174 = vmul.u32.u64.compose %v1173, %v1172
    %v1175 = vextract.low.u32 %v1174
    %v1176 = vextract.high.u32 %v1174
    %v1177 = vmul.u32.u64.compose %v1173, %v1168
    %v1178 = vextract.low.u32 %v1177
    %v1179 = vextract.high.u32 %v1177
    %v1180 = vmul.u32 %v1173, %v1164
    %v1181 = vadd.s32 %v1176, %v1178
    %vm1182 = vc.u32 %v1176, %v1178
    %v1183 = vadd.s32 %v1179, 1
    %v1184 = vsel %vm1182, %v1183, %v1179
    %v1185 = vadd.s32 %v1180, %v1184
    %v1186 = vadd.s32 %v1185, 536870912
    %v1187 = vshrl.u32 %v1186, 30
    %v1188 = vshll.u32 %v1187, 30
    %v1189 = vsub.s32 %v1185, %v1188
    %vm1190 = vcmp.lt.s32.totalorder %v1189, 0
    %v1191 = vsub.s32 0, %v1189
    %v1192 = vsel %vm1190, %v1191, %v1189
    %v1193 = vclz %v1192
    %v1194 = vsub.s32 %v1193, 2
    %vm1195 = vcmp.gt.s32.totalorder 0, %v1194
    %v1196 = vsel %vm1195, 0, %v1194
    %v1197 = vsub.s32 32, %v1196
    %v1198 = vshll.u32 %v1189, %v1196
    %v1199 = vshrl.u32 %v1181, %v1197
    %v1200 = vor.u32 %v1198, %v1199
    %v1201 = vsub.s32 4294967266, %v1196
    %v1202 = vadd.s32 %v1201, 127
    %v1203 = vshll.u32 %v1202, 23
    %v1204 = vor.u32 4788187, %v1203
    %v1205 = vand.u32 2147483647, %v1204
    %v1207 = vcvt.s32.f32 %v1200
    %v1208 = vmul.f32 %v1207, %v1205
    %v1209 = vxor.u32 %v1208, 2147483648
    %v1210 = vsel %vm1127, %v1209, %v1208
    %v1211 = vsub.s32 4, %v1187
    %v1212 = vsel %vm1127, %v1211, %v1187
    %v1213 = vsel %vm1126, %v1019, %v1210
    %v1214 = vsel %vm1126, 0, %v1212
    %v1215 = vcosq.f32.pop %v1213
    %v1216 = vsinq.f32.pop %v1213
    %vm1217 = vweird.f32 %v1019
    %v1218 = vand.u32 %v1214, 3
    %vm1219 = vcmp.lt.s32.totalorder %v1218, 2
    %vm1220 = vcmp.eq.s32.totalorder %v1218, 0
    %v1221 = vxor.u32 %v1216, 2147483648
    %v1222 = vsel %vm1220, %v1215, %v1221
    %vm1223 = vcmp.eq.s32.totalorder %v1218, 2
    %v1224 = vxor.u32 %v1215, 2147483648
    %v1225 = vsel %vm1223, %v1224, %v1216
    %v1226 = vsel %vm1219, %v1222, %v1225
    %v1227 = vsel %vm1217, nan, %v1226
    %v1228 = vpack.c.bf16 %v1227, %v1227
    %v1229 = vld [vmem:[%s8] sm:$0xf]
    %v1230 = vld [vmem:[%s8 + $0x4] sm:$0x1]
    %v1231 = vld [vmem:[%s9] sm:$0xf]
    %v1232 = vld [vmem:[%s9 + $0x4] sm:$0x1]
    %v1235 = vunpack.c.l.b16 %v1231
    %v1236 = vunpack.c.l.b16 %v1232
    %v1237 = vpack.c.b16 %v1236, %v1235
    %vm1238 = vcmask 80896
    %v1240 = vsel %vm1238, %v1228, 0
    %vm1242 = vcmask 1044480
    %v1244 = vsel %vm1242, %v1237, 0
    %1246 = vmatprep.subr.bf16.mxu0 0
    %1247 = vmatpush1.bf16.msra.mxu0 %v1244
    %1248 = vmatprep.subr.bf16.mxu0 0
    %1249 = vmatpush1.bf16.msra.mxu0 0
    %1250 = vmatprep.subr.bf16.mxu0 0
    %1251 = vmatpush1.bf16.msra.mxu0 0
    %1252 = vmatprep.subr.bf16.mxu0 0
    %1253 = vmatpush1.bf16.msra.mxu0 0
    %1254 = vmatprep.subr.bf16.mxu0 0
    %1255 = vmatpush1.bf16.msra.mxu0 0
    %1256 = vmatprep.subr.bf16.mxu0 0
    %1257 = vmatpush1.bf16.msra.mxu0 0
    %1258 = vmatprep.subr.bf16.mxu0 0
    %1259 = vmatpush1.bf16.msra.mxu0 0
    %1260 = vmatprep.subr.bf16.mxu0 0
    %1261 = vmatpush1.bf16.msra.mxu0 0
    %1262 = vmatprep.subr.bf16.mxu0 0
    %1263 = vmatpush1.bf16.msra.mxu0 0
    %1264 = vmatprep.subr.bf16.mxu0 0
    %1265 = vmatpush1.bf16.msra.mxu0 0
    %1266 = vmatprep.subr.bf16.mxu0 0
    %1267 = vmatpush1.bf16.msra.mxu0 0
    %1268 = vmatprep.subr.bf16.mxu0 0
    %1269 = vmatpush1.bf16.msra.mxu0 0
    %1270 = vmatprep.subr.bf16.mxu0 0
    %1271 = vmatpush1.bf16.msra.mxu0 0
    %1272 = vmatprep.subr.bf16.mxu0 0
    %1273 = vmatpush1.bf16.msra.mxu0 0
    %1274 = vmatprep.subr.bf16.mxu0 0
    %1275 = vmatpush1.bf16.msra.mxu0 0
    %1276 = vmatprep.subr.bf16.mxu0 0
    %1277 = vmatpush1.bf16.msra.mxu0 0
    %1278 = vmatprep.mubr.bf16.mxu0 0
    %1279 = vmatmul.mubr.bf16.gmra.mrb[0].mxu0 %v1240
    %v1280 = vpop.f32.mrb[0].mxu0
    %v1281 = vadd.f32 0.0, %v1280
    %v1282 = vpop.f32.mrb[0].mxu0
    %v1283 = vpop.f32.mrb[0].mxu0
    %v1284 = vpop.f32.mrb[0].mxu0
    %1285 = vdwg.mxu0
    %v1288 = vunpack.c.l.b16 %v1229
    %v1289 = vunpack.c.l.b16 %v1230
    %v1290 = vpack.c.b16 %v1289, %v1288
    %v1292 = vsel %vm1238, %v1124, 0
    %v1295 = vsel %vm1242, %v1290, 0
    %1297 = vmatprep.subr.bf16.mxu0 0
    %1298 = vmatpush1.bf16.msra.mxu0 %v1295
    %1299 = vmatprep.subr.bf16.mxu0 0
    %1300 = vmatpush1.bf16.msra.mxu0 0
    %1301 = vmatprep.subr.bf16.mxu0 0
    %1302 = vmatpush1.bf16.msra.mxu0 0
    %1303 = vmatprep.subr.bf16.mxu0 0
    %1304 = vmatpush1.bf16.msra.mxu0 0
    %1305 = vmatprep.subr.bf16.mxu0 0
    %1306 = vmatpush1.bf16.msra.mxu0 0
    %1307 = vmatprep.subr.bf16.mxu0 0
    %1308 = vmatpush1.bf16.msra.mxu0 0
    %1309 = vmatprep.subr.bf16.mxu0 0
    %1310 = vmatpush1.bf16.msra.mxu0 0
    %1311 = vmatprep.subr.bf16.mxu0 0
    %1312 = vmatpush1.bf16.msra.mxu0 0
    %1313 = vmatprep.subr.bf16.mxu0 0
    %1314 = vmatpush1.bf16.msra.mxu0 0
    %1315 = vmatprep.subr.bf16.mxu0 0
    %1316 = vmatpush1.bf16.msra.mxu0 0
    %1317 = vmatprep.subr.bf16.mxu0 0
    %1318 = vmatpush1.bf16.msra.mxu0 0
    %1319 = vmatprep.subr.bf16.mxu0 0
    %1320 = vmatpush1.bf16.msra.mxu0 0
    %1321 = vmatprep.subr.bf16.mxu0 0
    %1322 = vmatpush1.bf16.msra.mxu0 0
    %1323 = vmatprep.subr.bf16.mxu0 0
    %1324 = vmatpush1.bf16.msra.mxu0 0
    %1325 = vmatprep.subr.bf16.mxu0 0
    %1326 = vmatpush1.bf16.msra.mxu0 0
    %1327 = vmatprep.subr.bf16.mxu0 0
    %1328 = vmatpush1.bf16.msra.mxu0 0
    %1329 = vmatprep.mubr.bf16.mxu0 0
    %1330 = vmatmul.mubr.bf16.gmra.mrb[0].mxu0 %v1292
    %v1331 = vpop.f32.mrb[0].mxu0
    %v1332 = vadd.f32 %v1281, %v1331
    %v1333 = vpop.f32.mrb[0].mxu0
    %v1334 = vpop.f32.mrb[0].mxu0
    %v1335 = vpop.f32.mrb[0].mxu0
    %1336 = vdwg.mxu0
    %v1337 = vld [vmem:[%s10] sm:$0x1]
    %v1339 = vlaneseq
    %v1340 = vshrl.u32 %v1339, 7
    %v1341 = vsub.s32 0, %v1340
    %v1342 = vrot.slane %v1337, %v1341
    %v1344 = vadd.f32 %v1332, %v1342
    %v1345 = vmax.f32 %v1344, 0.0
    %v1346 = vpack.c.bf16 %v1345, %v1345
    %v1347 = vld [vmem:[%s11] sm:$0xff]
    %v1348 = vld [vmem:[%s11 + $0x8] sm:$0xff]
    %v1349 = vld [vmem:[%s11 + $0x10] sm:$0xff]
    %v1350 = vld [vmem:[%s11 + $0x18] sm:$0xff]
    %v1351 = vld [vmem:[%s11 + $0x20] sm:$0xff]
    %v1352 = vld [vmem:[%s11 + $0x28] sm:$0xff]
    %v1353 = vld [vmem:[%s11 + $0x30] sm:$0xff]
    %v1354 = vld [vmem:[%s11 + $0x38] sm:$0xff]
    %v1355 = vld [vmem:[%s11 + $0x40] sm:$0xff]
    %v1356 = vld [vmem:[%s11 + $0x48] sm:$0xff]
    %v1357 = vld [vmem:[%s11 + $0x50] sm:$0xff]
    %v1358 = vld [vmem:[%s11 + $0x58] sm:$0xff]
    %v1359 = vld [vmem:[%s11 + $0x60] sm:$0xff]
    %v1360 = vld [vmem:[%s11 + $0x68] sm:$0xff]
    %v1361 = vld [vmem:[%s11 + $0x70] sm:$0xff]
    %v1362 = vld [vmem:[%s11 + $0x78] sm:$0xff]
    %v1363 = vld [vmem:[%s11 + $0x80] sm:$0xff]
    %v1364 = vld [vmem:[%s11 + $0x88] sm:$0xff]
    %v1365 = vld [vmem:[%s11 + $0x90] sm:$0xff]
    %v1366 = vld [vmem:[%s11 + $0x98] sm:$0xff]
    %v1367 = vld [vmem:[%s11 + $0xa0] sm:$0xff]
    %v1368 = vld [vmem:[%s11 + $0xa8] sm:$0xff]
    %v1369 = vld [vmem:[%s11 + $0xb0] sm:$0xff]
    %v1370 = vld [vmem:[%s11 + $0xb8] sm:$0xff]
    %v1371 = vld [vmem:[%s11 + $0xc0] sm:$0xff]
    %v1372 = vld [vmem:[%s11 + $0xc8] sm:$0xff]
    %v1373 = vld [vmem:[%s11 + $0xd0] sm:$0xff]
    %v1374 = vld [vmem:[%s11 + $0xd8] sm:$0xff]
    %v1375 = vld [vmem:[%s11 + $0xe0] sm:$0xff]
    %v1376 = vld [vmem:[%s11 + $0xe8] sm:$0xff]
    %v1377 = vld [vmem:[%s11 + $0xf0] sm:$0xff]
    %v1378 = vld [vmem:[%s11 + $0xf8] sm:$0xff]
    %v1379 = vld [vmem:[%s11 + $0x100] sm:$0xff]
    %v1380 = vld [vmem:[%s11 + $0x108] sm:$0xff]
    %v1381 = vld [vmem:[%s11 + $0x110] sm:$0xff]
    %v1382 = vld [vmem:[%s11 + $0x118] sm:$0xff]
    %v1383 = vld [vmem:[%s11 + $0x120] sm:$0xff]
    %v1384 = vld [vmem:[%s11 + $0x128] sm:$0xff]
    %v1385 = vld [vmem:[%s11 + $0x130] sm:$0xff]
    %v1386 = vld [vmem:[%s11 + $0x138] sm:$0xff]
    %v1387 = vld [vmem:[%s11 + $0x140] sm:$0xff]
    %v1388 = vld [vmem:[%s11 + $0x148] sm:$0xff]
    %v1389 = vld [vmem:[%s11 + $0x150] sm:$0xff]
    %v1390 = vld [vmem:[%s11 + $0x158] sm:$0xff]
    %v1391 = vld [vmem:[%s11 + $0x160] sm:$0xff]
    %v1392 = vld [vmem:[%s11 + $0x168] sm:$0xff]
    %v1393 = vld [vmem:[%s11 + $0x170] sm:$0xff]
    %v1394 = vld [vmem:[%s11 + $0x178] sm:$0xff]
    %v1395 = vld [vmem:[%s11 + $0x180] sm:$0xff]
    %v1396 = vld [vmem:[%s11 + $0x188] sm:$0xff]
    %v1397 = vld [vmem:[%s11 + $0x190] sm:$0xff]
    %v1398 = vld [vmem:[%s11 + $0x198] sm:$0xff]
    %v1399 = vld [vmem:[%s11 + $0x1a0] sm:$0xff]
    %v1400 = vld [vmem:[%s11 + $0x1a8] sm:$0xff]
    %v1401 = vld [vmem:[%s11 + $0x1b0] sm:$0xff]
    %v1402 = vld [vmem:[%s11 + $0x1b8] sm:$0xff]
    %v1403 = vld [vmem:[%s11 + $0x1c0] sm:$0xff]
    %v1404 = vld [vmem:[%s11 + $0x1c8] sm:$0xff]
    %v1405 = vld [vmem:[%s11 + $0x1d0] sm:$0xff]
    %v1406 = vld [vmem:[%s11 + $0x1d8] sm:$0xff]
    %v1407 = vld [vmem:[%s11 + $0x1e0] sm:$0xff]
    %v1408 = vld [vmem:[%s11 + $0x1e8] sm:$0xff]
    %v1409 = vld [vmem:[%s11 + $0x1f0] sm:$0xff]
    %v1410 = vld [vmem:[%s11 + $0x1f8] sm:$0xff]
    %v1411 = vld [vmem:[%s12] sm:$0xff]
    %v1413 = vlaneseq
    %v1414 = vshrl.u32 %v1413, 7
    %v1415 = vsub.s32 0, %v1414
    %v1416 = vrot.slane %v1411, %v1415
    %v1417 = vlaneseq
    %v1418 = vshrl.u32 %v1417, 7
    %v1419 = vsub.s32 1, %v1418
    %v1420 = vrot.slane %v1411, %v1419
    %v1421 = vlaneseq
    %v1422 = vshrl.u32 %v1421, 7
    %v1423 = vsub.s32 2, %v1422
    %v1424 = vrot.slane %v1411, %v1423
    %v1425 = vlaneseq
    %v1426 = vshrl.u32 %v1425, 7
    %v1427 = vsub.s32 3, %v1426
    %v1428 = vrot.slane %v1411, %v1427
    %v1429 = vlaneseq
    %v1430 = vshrl.u32 %v1429, 7
    %v1431 = vsub.s32 4, %v1430
    %v1432 = vrot.slane %v1411, %v1431
    %v1433 = vlaneseq
    %v1434 = vshrl.u32 %v1433, 7
    %v1435 = vsub.s32 5, %v1434
    %v1436 = vrot.slane %v1411, %v1435
    %v1437 = vlaneseq
    %v1438 = vshrl.u32 %v1437, 7
    %v1439 = vsub.s32 6, %v1438
    %v1440 = vrot.slane %v1411, %v1439
    %v1441 = vlaneseq
    %v1442 = vshrl.u32 %v1441, 7
    %v1443 = vsub.s32 7, %v1442
    %v1444 = vrot.slane %v1411, %v1443
    %v1517 = vunpack.c.l.b16 %v1347
    %v1518 = vunpack.c.h.b16 %v1347
    %v1519 = vunpack.c.l.b16 %v1348
    %v1520 = vunpack.c.h.b16 %v1348
    %v1521 = vunpack.c.l.b16 %v1349
    %v1522 = vunpack.c.h.b16 %v1349
    %v1523 = vunpack.c.l.b16 %v1350
    %v1524 = vunpack.c.h.b16 %v1350
    %v1525 = vunpack.c.l.b16 %v1351
    %v1526 = vunpack.c.h.b16 %v1351
    %v1527 = vunpack.c.l.b16 %v1352
    %v1528 = vunpack.c.h.b16 %v1352
    %v1529 = vunpack.c.l.b16 %v1353
    %v1530 = vunpack.c.h.b16 %v1353
    %v1531 = vunpack.c.l.b16 %v1354
    %v1532 = vunpack.c.h.b16 %v1354
    %v1533 = vunpack.c.l.b16 %v1355
    %v1534 = vunpack.c.h.b16 %v1355
    %v1535 = vunpack.c.l.b16 %v1356
    %v1536 = vunpack.c.h.b16 %v1356
    %v1537 = vunpack.c.l.b16 %v1357
    %v1538 = vunpack.c.h.b16 %v1357
    %v1539 = vunpack.c.l.b16 %v1358
    %v1540 = vunpack.c.h.b16 %v1358
    %v1541 = vunpack.c.l.b16 %v1359
    %v1542 = vunpack.c.h.b16 %v1359
    %v1543 = vunpack.c.l.b16 %v1360
    %v1544 = vunpack.c.h.b16 %v1360
    %v1545 = vunpack.c.l.b16 %v1361
    %v1546 = vunpack.c.h.b16 %v1361
    %v1547 = vunpack.c.l.b16 %v1362
    %v1548 = vunpack.c.h.b16 %v1362
    %v1549 = vunpack.c.l.b16 %v1363
    %v1550 = vunpack.c.h.b16 %v1363
    %v1551 = vunpack.c.l.b16 %v1364
    %v1552 = vunpack.c.h.b16 %v1364
    %v1553 = vunpack.c.l.b16 %v1365
    %v1554 = vunpack.c.h.b16 %v1365
    %v1555 = vunpack.c.l.b16 %v1366
    %v1556 = vunpack.c.h.b16 %v1366
    %v1557 = vunpack.c.l.b16 %v1367
    %v1558 = vunpack.c.h.b16 %v1367
    %v1559 = vunpack.c.l.b16 %v1368
    %v1560 = vunpack.c.h.b16 %v1368
    %v1561 = vunpack.c.l.b16 %v1369
    %v1562 = vunpack.c.h.b16 %v1369
    %v1563 = vunpack.c.l.b16 %v1370
    %v1564 = vunpack.c.h.b16 %v1370
    %v1565 = vunpack.c.l.b16 %v1371
    %v1566 = vunpack.c.h.b16 %v1371
    %v1567 = vunpack.c.l.b16 %v1372
    %v1568 = vunpack.c.h.b16 %v1372
    %v1569 = vunpack.c.l.b16 %v1373
    %v1570 = vunpack.c.h.b16 %v1373
    %v1571 = vunpack.c.l.b16 %v1374
    %v1572 = vunpack.c.h.b16 %v1374
    %v1573 = vunpack.c.l.b16 %v1375
    %v1574 = vunpack.c.h.b16 %v1375
    %v1575 = vunpack.c.l.b16 %v1376
    %v1576 = vunpack.c.h.b16 %v1376
    %v1577 = vunpack.c.l.b16 %v1377
    %v1578 = vunpack.c.h.b16 %v1377
    %v1579 = vunpack.c.l.b16 %v1378
    %v1580 = vunpack.c.h.b16 %v1378
    %v1581 = vunpack.c.l.b16 %v1379
    %v1582 = vunpack.c.h.b16 %v1379
    %v1583 = vunpack.c.l.b16 %v1380
    %v1584 = vunpack.c.h.b16 %v1380
    %v1585 = vunpack.c.l.b16 %v1381
    %v1586 = vunpack.c.h.b16 %v1381
    %v1587 = vunpack.c.l.b16 %v1382
    %v1588 = vunpack.c.h.b16 %v1382
    %v1589 = vunpack.c.l.b16 %v1383
    %v1590 = vunpack.c.h.b16 %v1383
    %v1591 = vunpack.c.l.b16 %v1384
    %v1592 = vunpack.c.h.b16 %v1384
    %v1593 = vunpack.c.l.b16 %v1385
    %v1594 = vunpack.c.h.b16 %v1385
    %v1595 = vunpack.c.l.b16 %v1386
    %v1596 = vunpack.c.h.b16 %v1386
    %v1597 = vunpack.c.l.b16 %v1387
    %v1598 = vunpack.c.h.b16 %v1387
    %v1599 = vunpack.c.l.b16 %v1388
    %v1600 = vunpack.c.h.b16 %v1388
    %v1601 = vunpack.c.l.b16 %v1389
    %v1602 = vunpack.c.h.b16 %v1389
    %v1603 = vunpack.c.l.b16 %v1390
    %v1604 = vunpack.c.h.b16 %v1390
    %v1605 = vunpack.c.l.b16 %v1391
    %v1606 = vunpack.c.h.b16 %v1391
    %v1607 = vunpack.c.l.b16 %v1392
    %v1608 = vunpack.c.h.b16 %v1392
    %v1609 = vunpack.c.l.b16 %v1393
    %v1610 = vunpack.c.h.b16 %v1393
    %v1611 = vunpack.c.l.b16 %v1394
    %v1612 = vunpack.c.h.b16 %v1394
    %v1613 = vunpack.c.l.b16 %v1395
    %v1614 = vunpack.c.h.b16 %v1395
    %v1615 = vunpack.c.l.b16 %v1396
    %v1616 = vunpack.c.h.b16 %v1396
    %v1617 = vunpack.c.l.b16 %v1397
    %v1618 = vunpack.c.h.b16 %v1397
    %v1619 = vunpack.c.l.b16 %v1398
    %v1620 = vunpack.c.h.b16 %v1398
    %v1621 = vunpack.c.l.b16 %v1399
    %v1622 = vunpack.c.h.b16 %v1399
    %v1623 = vunpack.c.l.b16 %v1400
    %v1624 = vunpack.c.h.b16 %v1400
    %v1625 = vunpack.c.l.b16 %v1401
    %v1626 = vunpack.c.h.b16 %v1401
    %v1627 = vunpack.c.l.b16 %v1402
    %v1628 = vunpack.c.h.b16 %v1402
    %v1629 = vunpack.c.l.b16 %v1403
    %v1630 = vunpack.c.h.b16 %v1403
    %v1631 = vunpack.c.l.b16 %v1404
    %v1632 = vunpack.c.h.b16 %v1404
    %v1633 = vunpack.c.l.b16 %v1405
    %v1634 = vunpack.c.h.b16 %v1405
    %v1635 = vunpack.c.l.b16 %v1406
    %v1636 = vunpack.c.h.b16 %v1406
    %v1637 = vunpack.c.l.b16 %v1407
    %v1638 = vunpack.c.h.b16 %v1407
    %v1639 = vunpack.c.l.b16 %v1408
    %v1640 = vunpack.c.h.b16 %v1408
    %v1641 = vunpack.c.l.b16 %v1409
    %v1642 = vunpack.c.h.b16 %v1409
    %v1643 = vunpack.c.l.b16 %v1410
    %v1644 = vunpack.c.h.b16 %v1410
    %v1645 = vpack.c.b16 %v1525, %v1517
    %v1646 = vpack.c.b16 %v1526, %v1518
    %v1647 = vpack.c.b16 %v1527, %v1519
    %v1648 = vpack.c.b16 %v1528, %v1520
    %v1649 = vpack.c.b16 %v1529, %v1521
    %v1650 = vpack.c.b16 %v1530, %v1522
    %v1651 = vpack.c.b16 %v1531, %v1523
    %v1652 = vpack.c.b16 %v1532, %v1524
    %v1653 = vpack.c.b16 %v1541, %v1533
    %v1654 = vpack.c.b16 %v1542, %v1534
    %v1655 = vpack.c.b16 %v1543, %v1535
    %v1656 = vpack.c.b16 %v1544, %v1536
    %v1657 = vpack.c.b16 %v1545, %v1537
    %v1658 = vpack.c.b16 %v1546, %v1538
    %v1659 = vpack.c.b16 %v1547, %v1539
    %v1660 = vpack.c.b16 %v1548, %v1540
    %v1661 = vpack.c.b16 %v1557, %v1549
    %v1662 = vpack.c.b16 %v1558, %v1550
    %v1663 = vpack.c.b16 %v1559, %v1551
    %v1664 = vpack.c.b16 %v1560, %v1552
    %v1665 = vpack.c.b16 %v1561, %v1553
    %v1666 = vpack.c.b16 %v1562, %v1554
    %v1667 = vpack.c.b16 %v1563, %v1555
    %v1668 = vpack.c.b16 %v1564, %v1556
    %v1669 = vpack.c.b16 %v1573, %v1565
    %v1670 = vpack.c.b16 %v1574, %v1566
    %v1671 = vpack.c.b16 %v1575, %v1567
    %v1672 = vpack.c.b16 %v1576, %v1568
    %v1673 = vpack.c.b16 %v1577, %v1569
    %v1674 = vpack.c.b16 %v1578, %v1570
    %v1675 = vpack.c.b16 %v1579, %v1571
    %v1676 = vpack.c.b16 %v1580, %v1572
    %v1677 = vpack.c.b16 %v1589, %v1581
    %v1678 = vpack.c.b16 %v1590, %v1582
    %v1679 = vpack.c.b16 %v1591, %v1583
    %v1680 = vpack.c.b16 %v1592, %v1584
    %v1681 = vpack.c.b16 %v1593, %v1585
    %v1682 = vpack.c.b16 %v1594, %v1586
    %v1683 = vpack.c.b16 %v1595, %v1587
    %v1684 = vpack.c.b16 %v1596, %v1588
    %v1685 = vpack.c.b16 %v1605, %v1597
    %v1686 = vpack.c.b16 %v1606, %v1598
    %v1687 = vpack.c.b16 %v1607, %v1599
    %v1688 = vpack.c.b16 %v1608, %v1600
    %v1689 = vpack.c.b16 %v1609, %v1601
    %v1690 = vpack.c.b16 %v1610, %v1602
    %v1691 = vpack.c.b16 %v1611, %v1603
    %v1692 = vpack.c.b16 %v1612, %v1604
    %v1693 = vpack.c.b16 %v1621, %v1613
    %v1694 = vpack.c.b16 %v1622, %v1614
    %v1695 = vpack.c.b16 %v1623, %v1615
    %v1696 = vpack.c.b16 %v1624, %v1616
    %v1697 = vpack.c.b16 %v1625, %v1617
    %v1698 = vpack.c.b16 %v1626, %v1618
    %v1699 = vpack.c.b16 %v1627, %v1619
    %v1700 = vpack.c.b16 %v1628, %v1620
    %v1701 = vpack.c.b16 %v1637, %v1629
    %v1702 = vpack.c.b16 %v1638, %v1630
    %v1703 = vpack.c.b16 %v1639, %v1631
    %v1704 = vpack.c.b16 %v1640, %v1632
    %v1705 = vpack.c.b16 %v1641, %v1633
    %v1706 = vpack.c.b16 %v1642, %v1634
    %v1707 = vpack.c.b16 %v1643, %v1635
    %v1708 = vpack.c.b16 %v1644, %v1636
    %1773 = vmatprep.subr.bf16.mxu0 %v1646
    %1774 = vmatpush1.bf16.msra.mxu0 %v1645
    %1775 = vmatprep.subr.bf16.mxu0 %v1654
    %1776 = vmatpush1.bf16.msra.mxu0 %v1653
    %1777 = vmatprep.subr.bf16.mxu0 %v1662
    %1778 = vmatpush1.bf16.msra.mxu0 %v1661
    %1779 = vmatprep.subr.bf16.mxu0 %v1670
    %1780 = vmatpush1.bf16.msra.mxu0 %v1669
    %1781 = vmatprep.subr.bf16.mxu0 %v1678
    %1782 = vmatpush1.bf16.msra.mxu0 %v1677
    %1783 = vmatprep.subr.bf16.mxu0 %v1686
    %1784 = vmatpush1.bf16.msra.mxu0 %v1685
    %1785 = vmatprep.subr.bf16.mxu0 %v1694
    %1786 = vmatpush1.bf16.msra.mxu0 %v1693
    %1787 = vmatprep.subr.bf16.mxu0 %v1702
    %1788 = vmatpush1.bf16.msra.mxu0 %v1701
    %1789 = vmatprep.subr.bf16.mxu0 0
    %1790 = vmatpush1.bf16.msra.mxu0 0
    %1791 = vmatprep.subr.bf16.mxu0 0
    %1792 = vmatpush1.bf16.msra.mxu0 0
    %1793 = vmatprep.subr.bf16.mxu0 0
    %1794 = vmatpush1.bf16.msra.mxu0 0
    %1795 = vmatprep.subr.bf16.mxu0 0
    %1796 = vmatpush1.bf16.msra.mxu0 0
    %1797 = vmatprep.subr.bf16.mxu0 0
    %1798 = vmatpush1.bf16.msra.mxu0 0
    %1799 = vmatprep.subr.bf16.mxu0 0
    %1800 = vmatpush1.bf16.msra.mxu0 0
    %1801 = vmatprep.subr.bf16.mxu0 0
    %1802 = vmatpush1.bf16.msra.mxu0 0
    %1803 = vmatprep.subr.bf16.mxu0 0
    %1804 = vmatpush1.bf16.msra.mxu0 0
    %1805 = vmatprep.mubr.bf16.mxu0 0
    %1806 = vmatmul.mubr.bf16.gmra.mrb[0].mxu0 %v1346
    %v1807 = vpop.f32.mrb[0].mxu0
    %v1808 = vadd.f32 %v1416, %v1807
    %v1809 = vpop.f32.mrb[0].mxu0
    %v1810 = vadd.f32 %v1420, %v1809
    %v1811 = vpop.f32.mrb[0].mxu0
    %v1812 = vpop.f32.mrb[0].mxu0
    %1813 = vdwg.mxu0
    %1814 = vmatprep.subr.bf16.mxu0 %v1648
    %1815 = vmatpush1.bf16.msra.mxu0 %v1647
    %1816 = vmatprep.subr.bf16.mxu0 %v1656
    %1817 = vmatpush1.bf16.msra.mxu0 %v1655
    %1818 = vmatprep.subr.bf16.mxu0 %v1664
    %1819 = vmatpush1.bf16.msra.mxu0 %v1663
    %1820 = vmatprep.subr.bf16.mxu0 %v1672
    %1821 = vmatpush1.bf16.msra.mxu0 %v1671
    %1822 = vmatprep.subr.bf16.mxu0 %v1680
    %1823 = vmatpush1.bf16.msra.mxu0 %v1679
    %1824 = vmatprep.subr.bf16.mxu0 %v1688
    %1825 = vmatpush1.bf16.msra.mxu0 %v1687
    %1826 = vmatprep.subr.bf16.mxu0 %v1696
    %1827 = vmatpush1.bf16.msra.mxu0 %v1695
    %1828 = vmatprep.subr.bf16.mxu0 %v1704
    %1829 = vmatpush1.bf16.msra.mxu0 %v1703
    %1830 = vmatprep.subr.bf16.mxu0 0
    %1831 = vmatpush1.bf16.msra.mxu0 0
    %1832 = vmatprep.subr.bf16.mxu0 0
    %1833 = vmatpush1.bf16.msra.mxu0 0
    %1834 = vmatprep.subr.bf16.mxu0 0
    %1835 = vmatpush1.bf16.msra.mxu0 0
    %1836 = vmatprep.subr.bf16.mxu0 0
    %1837 = vmatpush1.bf16.msra.mxu0 0
    %1838 = vmatprep.subr.bf16.mxu0 0
    %1839 = vmatpush1.bf16.msra.mxu0 0
    %1840 = vmatprep.subr.bf16.mxu0 0
    %1841 = vmatpush1.bf16.msra.mxu0 0
    %1842 = vmatprep.subr.bf16.mxu0 0
    %1843 = vmatpush1.bf16.msra.mxu0 0
    %1844 = vmatprep.subr.bf16.mxu0 0
    %1845 = vmatpush1.bf16.msra.mxu0 0
    %1846 = vmatprep.mubr.bf16.mxu0 0
    %1847 = vmatmul.mubr.bf16.gmra.mrb[0].mxu0 %v1346
    %v1848 = vpop.f32.mrb[0].mxu0
    %v1849 = vadd.f32 %v1424, %v1848
    %v1850 = vpop.f32.mrb[0].mxu0
    %v1851 = vadd.f32 %v1428, %v1850
    %v1852 = vpop.f32.mrb[0].mxu0
    %v1853 = vpop.f32.mrb[0].mxu0
    %1854 = vdwg.mxu0
    %1855 = vmatprep.subr.bf16.mxu0 %v1650
    %1856 = vmatpush1.bf16.msra.mxu0 %v1649
    %1857 = vmatprep.subr.bf16.mxu0 %v1658
    %1858 = vmatpush1.bf16.msra.mxu0 %v1657
    %1859 = vmatprep.subr.bf16.mxu0 %v1666
    %1860 = vmatpush1.bf16.msra.mxu0 %v1665
    %1861 = vmatprep.subr.bf16.mxu0 %v1674
    %1862 = vmatpush1.bf16.msra.mxu0 %v1673
    %1863 = vmatprep.subr.bf16.mxu0 %v1682
    %1864 = vmatpush1.bf16.msra.mxu0 %v1681
    %1865 = vmatprep.subr.bf16.mxu0 %v1690
    %1866 = vmatpush1.bf16.msra.mxu0 %v1689
    %1867 = vmatprep.subr.bf16.mxu0 %v1698
    %1868 = vmatpush1.bf16.msra.mxu0 %v1697
    %1869 = vmatprep.subr.bf16.mxu0 %v1706
    %1870 = vmatpush1.bf16.msra.mxu0 %v1705
    %1871 = vmatprep.subr.bf16.mxu0 0
    %1872 = vmatpush1.bf16.msra.mxu0 0
    %1873 = vmatprep.subr.bf16.mxu0 0
    %1874 = vmatpush1.bf16.msra.mxu0 0
    %1875 = vmatprep.subr.bf16.mxu0 0
    %1876 = vmatpush1.bf16.msra.mxu0 0
    %1877 = vmatprep.subr.bf16.mxu0 0
    %1878 = vmatpush1.bf16.msra.mxu0 0
    %1879 = vmatprep.subr.bf16.mxu0 0
    %1880 = vmatpush1.bf16.msra.mxu0 0
    %1881 = vmatprep.subr.bf16.mxu0 0
    %1882 = vmatpush1.bf16.msra.mxu0 0
    %1883 = vmatprep.subr.bf16.mxu0 0
    %1884 = vmatpush1.bf16.msra.mxu0 0
    %1885 = vmatprep.subr.bf16.mxu0 0
    %1886 = vmatpush1.bf16.msra.mxu0 0
    %1887 = vmatprep.mubr.bf16.mxu0 0
    %1888 = vmatmul.mubr.bf16.gmra.mrb[0].mxu0 %v1346
    %v1889 = vpop.f32.mrb[0].mxu0
    %v1890 = vadd.f32 %v1432, %v1889
    %v1891 = vpop.f32.mrb[0].mxu0
    %v1892 = vadd.f32 %v1436, %v1891
    %v1893 = vpop.f32.mrb[0].mxu0
    %v1894 = vpop.f32.mrb[0].mxu0
    %1895 = vdwg.mxu0
    %1896 = vmatprep.subr.bf16.mxu0 %v1652
    %1897 = vmatpush1.bf16.msra.mxu0 %v1651
    %1898 = vmatprep.subr.bf16.mxu0 %v1660
    %1899 = vmatpush1.bf16.msra.mxu0 %v1659
    %1900 = vmatprep.subr.bf16.mxu0 %v1668
    %1901 = vmatpush1.bf16.msra.mxu0 %v1667
    %1902 = vmatprep.subr.bf16.mxu0 %v1676
    %1903 = vmatpush1.bf16.msra.mxu0 %v1675
    %1904 = vmatprep.subr.bf16.mxu0 %v1684
    %1905 = vmatpush1.bf16.msra.mxu0 %v1683
    %1906 = vmatprep.subr.bf16.mxu0 %v1692
    %1907 = vmatpush1.bf16.msra.mxu0 %v1691
    %1908 = vmatprep.subr.bf16.mxu0 %v1700
    %1909 = vmatpush1.bf16.msra.mxu0 %v1699
    %1910 = vmatprep.subr.bf16.mxu0 %v1708
    %1911 = vmatpush1.bf16.msra.mxu0 %v1707
    %1912 = vmatprep.subr.bf16.mxu0 0
    %1913 = vmatpush1.bf16.msra.mxu0 0
    %1914 = vmatprep.subr.bf16.mxu0 0
    %1915 = vmatpush1.bf16.msra.mxu0 0
    %1916 = vmatprep.subr.bf16.mxu0 0
    %1917 = vmatpush1.bf16.msra.mxu0 0
    %1918 = vmatprep.subr.bf16.mxu0 0
    %1919 = vmatpush1.bf16.msra.mxu0 0
    %1920 = vmatprep.subr.bf16.mxu0 0
    %1921 = vmatpush1.bf16.msra.mxu0 0
    %1922 = vmatprep.subr.bf16.mxu0 0
    %1923 = vmatpush1.bf16.msra.mxu0 0
    %1924 = vmatprep.subr.bf16.mxu0 0
    %1925 = vmatpush1.bf16.msra.mxu0 0
    %1926 = vmatprep.subr.bf16.mxu0 0
    %1927 = vmatpush1.bf16.msra.mxu0 0
    %1928 = vmatprep.mubr.bf16.mxu0 0
    %1929 = vmatmul.mubr.bf16.gmra.mrb[0].mxu0 %v1346
    %v1930 = vpop.f32.mrb[0].mxu0
    %v1931 = vadd.f32 %v1440, %v1930
    %v1932 = vpop.f32.mrb[0].mxu0
    %v1933 = vadd.f32 %v1444, %v1932
    %v1934 = vpop.f32.mrb[0].mxu0
    %v1935 = vpop.f32.mrb[0].mxu0
    %1936 = vdwg.mxu0
    %v1937 = vmax.f32 %v1808, 0.0
    %v1938 = vmax.f32 %v1810, 0.0
    %v1939 = vmax.f32 %v1849, 0.0
    %v1940 = vmax.f32 %v1851, 0.0
    %v1941 = vmax.f32 %v1890, 0.0
    %v1942 = vmax.f32 %v1892, 0.0
    %v1943 = vmax.f32 %v1931, 0.0
    %v1944 = vmax.f32 %v1933, 0.0
    %v1945 = vpack.c.bf16 %v1937, %v1937
    %v1946 = vpack.c.bf16 %v1938, %v1938
    %v1947 = vpack.c.bf16 %v1939, %v1939
    %v1948 = vpack.c.bf16 %v1940, %v1940
    %v1949 = vpack.c.bf16 %v1941, %v1941
    %v1950 = vpack.c.bf16 %v1942, %v1942
    %v1951 = vpack.c.bf16 %v1943, %v1943
    %v1952 = vpack.c.bf16 %v1944, %v1944
    %v1961 = vcombine.low %v1945, %v1946
    %v1962 = vcombine.low %v1947, %v1948
    %v1963 = vcombine.low %v1949, %v1950
    %v1964 = vcombine.low %v1951, %v1952
    %v1966 = vunpack.c.l.s4 1966171168
    %v1967 = vunpack.c.0.s8 %v1966
    %v1968 = vlaneseq
    %v1969 = vshrl.u32 %v1968, 7
    %v1970 = vsub.s32 %v1967, %v1969
    %v1971 = vrot.slane %v1961, %v1970
    %v1973 = vunpack.c.l.s4 1966171168
    %v1974 = vunpack.c.0.s8 %v1973
    %v1975 = vlaneseq
    %v1976 = vshrl.u32 %v1975, 7
    %v1977 = vsub.s32 %v1974, %v1976
    %v1978 = vrot.slane %v1962, %v1977
    %v1980 = vunpack.c.l.s4 1966171168
    %v1981 = vunpack.c.0.s8 %v1980
    %v1982 = vlaneseq
    %v1983 = vshrl.u32 %v1982, 7
    %v1984 = vsub.s32 %v1981, %v1983
    %v1985 = vrot.slane %v1963, %v1984
    %v1987 = vunpack.c.l.s4 1966171168
    %v1988 = vunpack.c.0.s8 %v1987
    %v1989 = vlaneseq
    %v1990 = vshrl.u32 %v1989, 7
    %v1991 = vsub.s32 %v1988, %v1990
    %v1992 = vrot.slane %v1964, %v1991
    %v1993 = vcombine.low %v1971, %v1978
    %v1994 = vcombine.low %v1985, %v1992
    %v1996 = vunpack.c.l.s4 1966171168
    %v1997 = vunpack.c.0.s8 %v1996
    %v1998 = vlaneseq
    %v1999 = vshrl.u32 %v1998, 7
    %v2000 = vsub.s32 %v1997, %v1999
    %v2001 = vrot.slane %v1993, %v2000
    %v2003 = vunpack.c.l.s4 1966171168
    %v2004 = vunpack.c.0.s8 %v2003
    %v2005 = vlaneseq
    %v2006 = vshrl.u32 %v2005, 7
    %v2007 = vsub.s32 %v2004, %v2006
    %v2008 = vrot.slane %v1994, %v2007
    %v2009 = vcombine.low %v2001, %v2008
    %2011 = vst [vmem:[%s16] sm:$0xff] %v2009
    %vm2012 = vcmask 74752
    %2013 = vst.msk [vmem:[#allocation2] sm:$0x3] %vm2012, %v897
    %2014 = vst.msk [vmem:[#allocation4] sm:$0x3] %vm2012, %v1008
    %2015 = vst.msk [vmem:[#allocation6] sm:$0x3] %vm2012, %v1018
    // Predicated region
    $region54: #{_lambda_.13} parent=1 // pred_check
      _
    $region55: #{_lambda_.13} parent=1 // pred_check_branch
      %2017 = sbr.rel (0) target = $region57
    $region56: #{_lambda_.13} parent=1 // pred_region
      %s2019 = ssub.s32 32, 32
      %2020 = vsyncadd [#allocation3], %s2019
      %s2022 = sshll.u32 [#allocation2], 4
      %s2023 = int_to_ptr.vmem [resolvable:$true] %s2022
      %2025 = dma.vmem_to_hbm [thread:$0]  %s2023, 32, %s13, [#allocation3]
    $region57: #{_lambda_.13} parent=1 // pred_fallthru
      _
    // Predicated region
    $region58: #{_lambda_.13} parent=1 // pred_check
      _
    $region59: #{_lambda_.13} parent=1 // pred_check_branch
      %2027 = sbr.rel (0) target = $region61
    $region60: #{_lambda_.13} parent=1 // pred_region
      %s2029 = ssub.s32 32, 32
      %2030 = vsyncadd [#allocation5], %s2029
      %s2032 = sshll.u32 [#allocation4], 4
      %s2033 = int_to_ptr.vmem [resolvable:$true] %s2032
      %2035 = dma.vmem_to_hbm [thread:$0]  %s2033, 32, %s14, [#allocation5]
    $region61: #{_lambda_.13} parent=1 // pred_fallthru
      _
    // Predicated region
    $region62: #{_lambda_.13} parent=1 // pred_check
      _
    $region63: #{_lambda_.13} parent=1 // pred_check_branch
      %2037 = sbr.rel (0) target = $region65
    $region64: #{_lambda_.13} parent=1 // pred_region
      %s2039 = ssub.s32 32, 32
      %2040 = vsyncadd [#allocation5], %s2039
      %s2042 = sshll.u32 [#allocation6], 4
      %s2043 = int_to_ptr.vmem [resolvable:$true] %s2042
      %2045 = dma.vmem_to_hbm [thread:$0]  %s2043, 32, %s15, [#allocation5]
    $region65: #{_lambda_.13} parent=1 // pred_fallthru
      _
    // Predicated region
    $region66: #{_lambda_.13} parent=1 // pred_check
      _
    $region67: #{_lambda_.13} parent=1 // pred_check_branch
      %2047 = sbr.rel (0) target = $region69
    $region68: #{_lambda_.13} parent=1 // pred_region
      _
    $region69: #{_lambda_.13} parent=1 // pred_fallthru
      _
    // Predicated region
    $region70: #{_lambda_.13} parent=1 // pred_check
      _
    $region71: #{_lambda_.13} parent=1 // pred_check_branch
      %2049 = sbr.rel (0) target = $region73
    $region72: #{_lambda_.13} parent=1 // pred_region
      %2050 = dma.done [#allocation3], 32
    $region73: #{_lambda_.13} parent=1 // pred_fallthru
      _
    // Predicated region
    $region74: #{_lambda_.13} parent=1 // pred_check
      _
    $region75: #{_lambda_.13} parent=1 // pred_check_branch
      %2052 = sbr.rel (0) target = $region77
    $region76: #{_lambda_.13} parent=1 // pred_region
      %2053 = dma.done [#allocation5], 32
    $region77: #{_lambda_.13} parent=1 // pred_fallthru
      _
    // Predicated region
    $region78: #{_lambda_.13} parent=1 // pred_check
      _
    $region79: #{_lambda_.13} parent=1 // pred_check_branch
      %2055 = sbr.rel (0) target = $region81
    $region80: #{_lambda_.13} parent=1 // pred_region
      %2056 = dma.done [#allocation5], 32
    $region81: #{_lambda_.13} parent=1 // pred_fallthru
      _
    // Predicated region
    $region82: #{_lambda_.13} parent=1 // pred_check
      _
    $region83: #{_lambda_.13} parent=1 // pred_check_branch
      %2058 = sbr.rel (0) target = $region85
    $region84: #{_lambda_.13} parent=1 // pred_region
      _
    $region85: #{_lambda_.13} parent=1 // pred_fallthru
      _
    %2059 = vsyncpa [#allocation3], 1
    %2060 = vsyncpa [#allocation5], 1

// kernel: _lambda_.14
$region0: #{_lambda_.14}
  #allocation0 [shape = 'u32[]', space=smem, size = 0x4, offset = 0x4, fixed_abs, tag = 'smem constant byte address 0x4 - core index']
  #allocation1 [shape = 'u32[144,128]{1,0:T(1,128)}', space=vmem, size = 0x12000, scoped, tag = 'internal scratch']
  %s0 = inlined_call_operand.vmem [shape: bf16[32,576], index: 0, kind: input, shape index: {}]
  %s1 = inlined_call_operand.vmem [shape: bf16[576,256], index: 1, kind: input, shape index: {}]
  %s2 = inlined_call_operand.vmem [shape: f32[1,256], index: 2, kind: input, shape index: {}]
  %s3 = inlined_call_operand.vmem [shape: bf16[32,256], index: 3, kind: output, shape index: {}]
  %s4 = sld [smem:[#allocation0]]
  $region22: #{_lambda_.14} parent=0
    _
  %s6 = ssub.s32 1, %s4
  %s7 = scalar_select 0, %s6, %s4
  // Predicated region
  $region2: #{_lambda_.14} parent=0 // pred_check
    _
  $region3: #{_lambda_.14} parent=0 // pred_check_branch
    %9 = sbr.rel (0) target = $region5
  $region4: #{_lambda_.14} parent=0 // pred_region
    _
  $region5: #{_lambda_.14} parent=0 // pred_fallthru
    _
  // Predicated region
  $region6: #{_lambda_.14} parent=0 // pred_check
    _
  $region7: #{_lambda_.14} parent=0 // pred_check_branch
    %11 = sbr.rel (0) target = $region9
  $region8: #{_lambda_.14} parent=0 // pred_region
    _
  $region9: #{_lambda_.14} parent=0 // pred_fallthru
    _
  // Predicated region
  $region10: #{_lambda_.14} parent=0 // pred_check
    _
  $region11: #{_lambda_.14} parent=0 // pred_check_branch
    %13 = sbr.rel (0) target = $region13
  $region12: #{_lambda_.14} parent=0 // pred_region
    _
  $region13: #{_lambda_.14} parent=0 // pred_fallthru
    _
  %v15 = vld [vmem:[%s0] sm:$0xff]
  %v16 = vld [vmem:[%s0 + $0x8] sm:$0xff]
  %v17 = vld [vmem:[%s0 + $0x10] sm:$0xf]
  %v18 = vld [vmem:[%s0 + $0x14] sm:$0xff]
  %v19 = vld [vmem:[%s0 + $0x1c] sm:$0xff]
  %v20 = vld [vmem:[%s0 + $0x24] sm:$0xf]
  %v21 = vld [vmem:[%s0 + $0x28] sm:$0xff]
  %v22 = vld [vmem:[%s0 + $0x30] sm:$0xff]
  %v23 = vld [vmem:[%s0 + $0x38] sm:$0xf]
  %v24 = vld [vmem:[%s0 + $0x3c] sm:$0xff]
  %v25 = vld [vmem:[%s0 + $0x44] sm:$0xff]
  %v26 = vld [vmem:[%s0 + $0x4c] sm:$0xf]
  %v27 = vld [vmem:[%s1] sm:$0xff]
  %v28 = vld [vmem:[%s1 + $0x8] sm:$0xff]
  %v29 = vld [vmem:[%s1 + $0x10] sm:$0xff]
  %v30 = vld [vmem:[%s1 + $0x18] sm:$0xff]
  %v31 = vld [vmem:[%s1 + $0x20] sm:$0xff]
  %v32 = vld [vmem:[%s1 + $0x28] sm:$0xff]
  %v33 = vld [vmem:[%s1 + $0x30] sm:$0xff]
  %v34 = vld [vmem:[%s1 + $0x38] sm:$0xff]
  %v35 = vld [vmem:[%s1 + $0x40] sm:$0xff]
  %v36 = vld [vmem:[%s1 + $0x48] sm:$0xff]
  %v37 = vld [vmem:[%s1 + $0x50] sm:$0xff]
  %v38 = vld [vmem:[%s1 + $0x58] sm:$0xff]
  %v39 = vld [vmem:[%s1 + $0x60] sm:$0xff]
  %v40 = vld [vmem:[%s1 + $0x68] sm:$0xff]
  %v41 = vld [vmem:[%s1 + $0x70] sm:$0xff]
  %v42 = vld [vmem:[%s1 + $0x78] sm:$0xff]
  %v43 = vld [vmem:[%s1 + $0x80] sm:$0xff]
  %v44 = vld [vmem:[%s1 + $0x88] sm:$0xff]
  %v45 = vld [vmem:[%s1 + $0x90] sm:$0xff]
  %v46 = vld [vmem:[%s1 + $0x98] sm:$0xff]
  %v47 = vld [vmem:[%s1 + $0xa0] sm:$0xff]
  %v48 = vld [vmem:[%s1 + $0xa8] sm:$0xff]
  %v49 = vld [vmem:[%s1 + $0xb0] sm:$0xff]
  %v50 = vld [vmem:[%s1 + $0xb8] sm:$0xff]
  %v51 = vld [vmem:[%s1 + $0xc0] sm:$0xff]
  %v52 = vld [vmem:[%s1 + $0xc8] sm:$0xff]
  %v53 = vld [vmem:[%s1 + $0xd0] sm:$0xff]
  %v54 = vld [vmem:[%s1 + $0xd8] sm:$0xff]
  %v55 = vld [vmem:[%s1 + $0xe0] sm:$0xff]
  %v56 = vld [vmem:[%s1 + $0xe8] sm:$0xff]
  %v57 = vld [vmem:[%s1 + $0xf0] sm:$0xff]
  %v58 = vld [vmem:[%s1 + $0xf8] sm:$0xff]
  %v59 = vld [vmem:[%s1 + $0x100] sm:$0xff]
  %v60 = vld [vmem:[%s1 + $0x108] sm:$0xff]
  %v61 = vld [vmem:[%s1 + $0x110] sm:$0xff]
  %v62 = vld [vmem:[%s1 + $0x118] sm:$0xff]
  %v63 = vld [vmem:[%s1 + $0x120] sm:$0xff]
  %v64 = vld [vmem:[%s1 + $0x128] sm:$0xff]
  %v65 = vld [vmem:[%s1 + $0x130] sm:$0xff]
  %v66 = vld [vmem:[%s1 + $0x138] sm:$0xff]
  %v67 = vld [vmem:[%s1 + $0x140] sm:$0xff]
  %v68 = vld [vmem:[%s1 + $0x148] sm:$0xff]
  %v69 = vld [vmem:[%s1 + $0x150] sm:$0xff]
  %v70 = vld [vmem:[%s1 + $0x158] sm:$0xff]
  %v71 = vld [vmem:[%s1 + $0x160] sm:$0xff]
  %v72 = vld [vmem:[%s1 + $0x168] sm:$0xff]
  %v73 = vld [vmem:[%s1 + $0x170] sm:$0xff]
  %v74 = vld [vmem:[%s1 + $0x178] sm:$0xff]
  %v75 = vld [vmem:[%s1 + $0x180] sm:$0xff]
  %v76 = vld [vmem:[%s1 + $0x188] sm:$0xff]
  %v77 = vld [vmem:[%s1 + $0x190] sm:$0xff]
  %v78 = vld [vmem:[%s1 + $0x198] sm:$0xff]
  %v79 = vld [vmem:[%s1 + $0x1a0] sm:$0xff]
  %v80 = vld [vmem:[%s1 + $0x1a8] sm:$0xff]
  %v81 = vld [vmem:[%s1 + $0x1b0] sm:$0xff]
  %v82 = vld [vmem:[%s1 + $0x1b8] sm:$0xff]
  %v83 = vld [vmem:[%s1 + $0x1c0] sm:$0xff]
  %v84 = vld [vmem:[%s1 + $0x1c8] sm:$0xff]
  %v85 = vld [vmem:[%s1 + $0x1d0] sm:$0xff]
  %v86 = vld [vmem:[%s1 + $0x1d8] sm:$0xff]
  %v87 = vld [vmem:[%s1 + $0x1e0] sm:$0xff]
  %v88 = vld [vmem:[%s1 + $0x1e8] sm:$0xff]
  %v89 = vld [vmem:[%s1 + $0x1f0] sm:$0xff]
  %v90 = vld [vmem:[%s1 + $0x1f8] sm:$0xff]
  %v91 = vld [vmem:[%s1 + $0x200] sm:$0xff]
  %v92 = vld [vmem:[%s1 + $0x208] sm:$0xff]
  %v93 = vld [vmem:[%s1 + $0x210] sm:$0xff]
  %v94 = vld [vmem:[%s1 + $0x218] sm:$0xff]
  %v95 = vld [vmem:[%s1 + $0x220] sm:$0xff]
  %v96 = vld [vmem:[%s1 + $0x228] sm:$0xff]
  %v97 = vld [vmem:[%s1 + $0x230] sm:$0xff]
  %v98 = vld [vmem:[%s1 + $0x238] sm:$0xff]
  %v99 = vld [vmem:[%s2] sm:$0x3]
  %v101 = vlaneseq
  %v102 = vshrl.u32 %v101, 7
  %v103 = vsub.s32 0, %v102
  %v104 = vrot.slane %v99, %v103
  %v105 = vlaneseq
  %v106 = vshrl.u32 %v105, 7
  %v107 = vsub.s32 1, %v106
  %v108 = vrot.slane %v99, %v107
  %v123 = vunpack.c.l.b16 %v15
  %v124 = vunpack.c.h.b16 %v15
  %v125 = vunpack.c.l.b16 %v16
  %v126 = vunpack.c.h.b16 %v16
  %v127 = vunpack.c.l.b16 %v17
  %v128 = vunpack.c.l.b16 %v18
  %v129 = vunpack.c.h.b16 %v18
  %v130 = vunpack.c.l.b16 %v19
  %v131 = vunpack.c.h.b16 %v19
  %v132 = vunpack.c.l.b16 %v20
  %v133 = vunpack.c.l.b16 %v21
  %v134 = vunpack.c.h.b16 %v21
  %v135 = vunpack.c.l.b16 %v22
  %v136 = vunpack.c.h.b16 %v22
  %v137 = vunpack.c.l.b16 %v23
  %v138 = vunpack.c.l.b16 %v24
  %v139 = vunpack.c.h.b16 %v24
  %v140 = vunpack.c.l.b16 %v25
  %v141 = vunpack.c.h.b16 %v25
  %v142 = vunpack.c.l.b16 %v26
  %v143 = vpack.c.b16 %v128, %v123
  %v144 = vpack.c.b16 %v129, %v124
  %v145 = vpack.c.b16 %v130, %v125
  %v146 = vpack.c.b16 %v131, %v126
  %v147 = vpack.c.b16 %v132, %v127
  %v148 = vpack.c.b16 %v138, %v133
  %v149 = vpack.c.b16 %v139, %v134
  %v150 = vpack.c.b16 %v140, %v135
  %v151 = vpack.c.b16 %v141, %v136
  %v152 = vpack.c.b16 %v142, %v137
  %v233 = vunpack.c.l.b16 %v27
  %v234 = vunpack.c.h.b16 %v27
  %v235 = vunpack.c.l.b16 %v28
  %v236 = vunpack.c.h.b16 %v28
  %v237 = vunpack.c.l.b16 %v29
  %v238 = vunpack.c.h.b16 %v29
  %v239 = vunpack.c.l.b16 %v30
  %v240 = vunpack.c.h.b16 %v30
  %v241 = vunpack.c.l.b16 %v31
  %v242 = vunpack.c.h.b16 %v31
  %v243 = vunpack.c.l.b16 %v32
  %v244 = vunpack.c.h.b16 %v32
  %v245 = vunpack.c.l.b16 %v33
  %v246 = vunpack.c.h.b16 %v33
  %v247 = vunpack.c.l.b16 %v34
  %v248 = vunpack.c.h.b16 %v34
  %v249 = vunpack.c.l.b16 %v35
  %v250 = vunpack.c.h.b16 %v35
  %v251 = vunpack.c.l.b16 %v36
  %v252 = vunpack.c.h.b16 %v36
  %v253 = vunpack.c.l.b16 %v37
  %v254 = vunpack.c.h.b16 %v37
  %v255 = vunpack.c.l.b16 %v38
  %v256 = vunpack.c.h.b16 %v38
  %v257 = vunpack.c.l.b16 %v39
  %v258 = vunpack.c.h.b16 %v39
  %v259 = vunpack.c.l.b16 %v40
  %v260 = vunpack.c.h.b16 %v40
  %v261 = vunpack.c.l.b16 %v41
  %v262 = vunpack.c.h.b16 %v41
  %v263 = vunpack.c.l.b16 %v42
  %v264 = vunpack.c.h.b16 %v42
  %v265 = vunpack.c.l.b16 %v43
  %v266 = vunpack.c.h.b16 %v43
  %v267 = vunpack.c.l.b16 %v44
  %v268 = vunpack.c.h.b16 %v44
  %v269 = vunpack.c.l.b16 %v45
  %v270 = vunpack.c.h.b16 %v45
  %v271 = vunpack.c.l.b16 %v46
  %v272 = vunpack.c.h.b16 %v46
  %v273 = vunpack.c.l.b16 %v47
  %v274 = vunpack.c.h.b16 %v47
  %v275 = vunpack.c.l.b16 %v48
  %v276 = vunpack.c.h.b16 %v48
  %v277 = vunpack.c.l.b16 %v49
  %v278 = vunpack.c.h.b16 %v49
  %v279 = vunpack.c.l.b16 %v50
  %v280 = vunpack.c.h.b16 %v50
  %v281 = vunpack.c.l.b16 %v51
  %v282 = vunpack.c.h.b16 %v51
  %v283 = vunpack.c.l.b16 %v52
  %v284 = vunpack.c.h.b16 %v52
  %v285 = vunpack.c.l.b16 %v53
  %v286 = vunpack.c.h.b16 %v53
  %v287 = vunpack.c.l.b16 %v54
  %v288 = vunpack.c.h.b16 %v54
  %v289 = vunpack.c.l.b16 %v55
  %v290 = vunpack.c.h.b16 %v55
  %v291 = vunpack.c.l.b16 %v56
  %v292 = vunpack.c.h.b16 %v56
  %v293 = vunpack.c.l.b16 %v57
  %v294 = vunpack.c.h.b16 %v57
  %v295 = vunpack.c.l.b16 %v58
  %v296 = vunpack.c.h.b16 %v58
  %v297 = vunpack.c.l.b16 %v59
  %v298 = vunpack.c.h.b16 %v59
  %v299 = vunpack.c.l.b16 %v60
  %v300 = vunpack.c.h.b16 %v60
  %v301 = vunpack.c.l.b16 %v61
  %v302 = vunpack.c.h.b16 %v61
  %v303 = vunpack.c.l.b16 %v62
  %v304 = vunpack.c.h.b16 %v62
  %v305 = vunpack.c.l.b16 %v63
  %v306 = vunpack.c.h.b16 %v63
  %v307 = vunpack.c.l.b16 %v64
  %v308 = vunpack.c.h.b16 %v64
  %v309 = vunpack.c.l.b16 %v65
  %v310 = vunpack.c.h.b16 %v65
  %v311 = vunpack.c.l.b16 %v66
  %v312 = vunpack.c.h.b16 %v66
  %v313 = vunpack.c.l.b16 %v67
  %v314 = vunpack.c.h.b16 %v67
  %v315 = vunpack.c.l.b16 %v68
  %v316 = vunpack.c.h.b16 %v68
  %v317 = vunpack.c.l.b16 %v69
  %v318 = vunpack.c.h.b16 %v69
  %v319 = vunpack.c.l.b16 %v70
  %v320 = vunpack.c.h.b16 %v70
  %v321 = vunpack.c.l.b16 %v71
  %v322 = vunpack.c.h.b16 %v71
  %v323 = vunpack.c.l.b16 %v72
  %v324 = vunpack.c.h.b16 %v72
  %v325 = vunpack.c.l.b16 %v73
  %v326 = vunpack.c.h.b16 %v73
  %v327 = vunpack.c.l.b16 %v74
  %v328 = vunpack.c.h.b16 %v74
  %v329 = vunpack.c.l.b16 %v75
  %v330 = vunpack.c.h.b16 %v75
  %v331 = vunpack.c.l.b16 %v76
  %v332 = vunpack.c.h.b16 %v76
  %v333 = vunpack.c.l.b16 %v77
  %v334 = vunpack.c.h.b16 %v77
  %v335 = vunpack.c.l.b16 %v78
  %v336 = vunpack.c.h.b16 %v78
  %v337 = vunpack.c.l.b16 %v79
  %v338 = vunpack.c.h.b16 %v79
  %v339 = vunpack.c.l.b16 %v80
  %v340 = vunpack.c.h.b16 %v80
  %v341 = vunpack.c.l.b16 %v81
  %v342 = vunpack.c.h.b16 %v81
  %v343 = vunpack.c.l.b16 %v82
  %v344 = vunpack.c.h.b16 %v82
  %v345 = vunpack.c.l.b16 %v83
  %v346 = vunpack.c.h.b16 %v83
  %v347 = vunpack.c.l.b16 %v84
  %v348 = vunpack.c.h.b16 %v84
  %v349 = vunpack.c.l.b16 %v85
  %v350 = vunpack.c.h.b16 %v85
  %v351 = vunpack.c.l.b16 %v86
  %v352 = vunpack.c.h.b16 %v86
  %v353 = vunpack.c.l.b16 %v87
  %v354 = vunpack.c.h.b16 %v87
  %v355 = vunpack.c.l.b16 %v88
  %v356 = vunpack.c.h.b16 %v88
  %v357 = vunpack.c.l.b16 %v89
  %v358 = vunpack.c.h.b16 %v89
  %v359 = vunpack.c.l.b16 %v90
  %v360 = vunpack.c.h.b16 %v90
  %v361 = vunpack.c.l.b16 %v91
  %v362 = vunpack.c.h.b16 %v91
  %v363 = vunpack.c.l.b16 %v92
  %v364 = vunpack.c.h.b16 %v92
  %v365 = vunpack.c.l.b16 %v93
  %v366 = vunpack.c.h.b16 %v93
  %v367 = vunpack.c.l.b16 %v94
  %v368 = vunpack.c.h.b16 %v94
  %v369 = vunpack.c.l.b16 %v95
  %v370 = vunpack.c.h.b16 %v95
  %v371 = vunpack.c.l.b16 %v96
  %v372 = vunpack.c.h.b16 %v96
  %v373 = vunpack.c.l.b16 %v97
  %v374 = vunpack.c.h.b16 %v97
  %v375 = vunpack.c.l.b16 %v98
  %v376 = vunpack.c.h.b16 %v98
  %v377 = vpack.c.b16 %v235, %v233
  %v378 = vpack.c.b16 %v236, %v234
  %v379 = vpack.c.b16 %v239, %v237
  %v380 = vpack.c.b16 %v240, %v238
  %v381 = vpack.c.b16 %v243, %v241
  %v382 = vpack.c.b16 %v244, %v242
  %v383 = vpack.c.b16 %v247, %v245
  %v384 = vpack.c.b16 %v248, %v246
  %v385 = vpack.c.b16 %v251, %v249
  %v386 = vpack.c.b16 %v252, %v250
  %v387 = vpack.c.b16 %v255, %v253
  %v388 = vpack.c.b16 %v256, %v254
  %v389 = vpack.c.b16 %v259, %v257
  %v390 = vpack.c.b16 %v260, %v258
  %v391 = vpack.c.b16 %v263, %v261
  %v392 = vpack.c.b16 %v264, %v262
  %v393 = vpack.c.b16 %v267, %v265
  %v394 = vpack.c.b16 %v268, %v266
  %v395 = vpack.c.b16 %v271, %v269
  %v396 = vpack.c.b16 %v272, %v270
  %v397 = vpack.c.b16 %v275, %v273
  %v398 = vpack.c.b16 %v276, %v274
  %v399 = vpack.c.b16 %v279, %v277
  %v400 = vpack.c.b16 %v280, %v278
  %v401 = vpack.c.b16 %v283, %v281
  %v402 = vpack.c.b16 %v284, %v282
  %v403 = vpack.c.b16 %v287, %v285
  %v404 = vpack.c.b16 %v288, %v286
  %v405 = vpack.c.b16 %v291, %v289
  %v406 = vpack.c.b16 %v292, %v290
  %v407 = vpack.c.b16 %v295, %v293
  %v408 = vpack.c.b16 %v296, %v294
  %v409 = vpack.c.b16 %v299, %v297
  %v410 = vpack.c.b16 %v300, %v298
  %v411 = vpack.c.b16 %v303, %v301
  %v412 = vpack.c.b16 %v304, %v302
  %v413 = vpack.c.b16 %v307, %v305
  %v414 = vpack.c.b16 %v308, %v306
  %v415 = vpack.c.b16 %v311, %v309
  %v416 = vpack.c.b16 %v312, %v310
  %v417 = vpack.c.b16 %v315, %v313
  %v418 = vpack.c.b16 %v316, %v314
  %v419 = vpack.c.b16 %v319, %v317
  %v420 = vpack.c.b16 %v320, %v318
  %v421 = vpack.c.b16 %v323, %v321
  %v422 = vpack.c.b16 %v324, %v322
  %v423 = vpack.c.b16 %v327, %v325
  %v424 = vpack.c.b16 %v328, %v326
  %v425 = vpack.c.b16 %v331, %v329
  %v426 = vpack.c.b16 %v332, %v330
  %v427 = vpack.c.b16 %v335, %v333
  %v428 = vpack.c.b16 %v336, %v334
  %v429 = vpack.c.b16 %v339, %v337
  %v430 = vpack.c.b16 %v340, %v338
  %v431 = vpack.c.b16 %v343, %v341
  %v432 = vpack.c.b16 %v344, %v342
  %v433 = vpack.c.b16 %v347, %v345
  %v434 = vpack.c.b16 %v348, %v346
  %v435 = vpack.c.b16 %v351, %v349
  %v436 = vpack.c.b16 %v352, %v350
  %v437 = vpack.c.b16 %v355, %v353
  %v438 = vpack.c.b16 %v356, %v354
  %v439 = vpack.c.b16 %v359, %v357
  %v440 = vpack.c.b16 %v360, %v358
  %v441 = vpack.c.b16 %v363, %v361
  %v442 = vpack.c.b16 %v364, %v362
  %v443 = vpack.c.b16 %v367, %v365
  %v444 = vpack.c.b16 %v368, %v366
  %v445 = vpack.c.b16 %v371, %v369
  %v446 = vpack.c.b16 %v372, %v370
  %v447 = vpack.c.b16 %v375, %v373
  %v448 = vpack.c.b16 %v376, %v374
  %vm521 = vcmask 523264
  %v523 = vsel %vm521, %v147, 0
  %v526 = vsel %vm521, %v152, 0
  %528 = vmatprep.subr.bf16.mxu0 %v378
  %529 = vmatpush1.bf16.msra.mxu0 %v377
  %530 = vmatprep.subr.bf16.mxu0 %v380
  %531 = vmatpush1.bf16.msra.mxu0 %v379
  %532 = vmatprep.subr.bf16.mxu0 %v382
  %533 = vmatpush1.bf16.msra.mxu0 %v381
  %534 = vmatprep.subr.bf16.mxu0 %v384
  %535 = vmatpush1.bf16.msra.mxu0 %v383
  %536 = vmatprep.subr.bf16.mxu0 %v386
  %537 = vmatpush1.bf16.msra.mxu0 %v385
  %538 = vmatprep.subr.bf16.mxu0 %v388
  %539 = vmatpush1.bf16.msra.mxu0 %v387
  %540 = vmatprep.subr.bf16.mxu0 %v390
  %541 = vmatpush1.bf16.msra.mxu0 %v389
  %542 = vmatprep.subr.bf16.mxu0 %v392
  %543 = vmatpush1.bf16.msra.mxu0 %v391
  %544 = vmatprep.subr.bf16.mxu0 %v394
  %545 = vmatpush1.bf16.msra.mxu0 %v393
  %546 = vmatprep.subr.bf16.mxu0 %v396
  %547 = vmatpush1.bf16.msra.mxu0 %v395
  %548 = vmatprep.subr.bf16.mxu0 %v398
  %549 = vmatpush1.bf16.msra.mxu0 %v397
  %550 = vmatprep.subr.bf16.mxu0 %v400
  %551 = vmatpush1.bf16.msra.mxu0 %v399
  %552 = vmatprep.subr.bf16.mxu0 %v402
  %553 = vmatpush1.bf16.msra.mxu0 %v401
  %554 = vmatprep.subr.bf16.mxu0 %v404
  %555 = vmatpush1.bf16.msra.mxu0 %v403
  %556 = vmatprep.subr.bf16.mxu0 %v406
  %557 = vmatpush1.bf16.msra.mxu0 %v405
  %558 = vmatprep.subr.bf16.mxu0 %v408
  %559 = vmatpush1.bf16.msra.mxu0 %v407
  %560 = vmatprep.mubr.bf16.mxu0 %v144
  %561 = vmatmul.mubr.bf16.gmra.mrb[0].mxu0 %v143
  %v562 = vpop.f32.mrb[0].mxu0
  %v563 = vadd.f32 %v104, %v562
  %v564 = vpop.f32.mrb[0].mxu0
  %v565 = vadd.f32 %v108, %v564
  %v566 = vpop.f32.mrb[0].mxu0
  %v567 = vadd.f32 %v104, %v566
  %v568 = vpop.f32.mrb[0].mxu0
  %v569 = vadd.f32 %v108, %v568
  %570 = vmatprep.mubr.bf16.mxu0 %v149
  %571 = vmatmul.mubr.bf16.gmra.mrb[0].mxu0 %v148
  %v572 = vpop.f32.mrb[0].mxu0
  %v573 = vadd.f32 %v104, %v572
  %v574 = vpop.f32.mrb[0].mxu0
  %v575 = vadd.f32 %v108, %v574
  %v576 = vpop.f32.mrb[0].mxu0
  %v577 = vadd.f32 %v104, %v576
  %v578 = vpop.f32.mrb[0].mxu0
  %v579 = vadd.f32 %v108, %v578
  %580 = vdwg.mxu0
  %581 = vmatprep.subr.bf16.mxu0 %v410
  %582 = vmatpush1.bf16.msra.mxu0 %v409
  %583 = vmatprep.subr.bf16.mxu0 %v412
  %584 = vmatpush1.bf16.msra.mxu0 %v411
  %585 = vmatprep.subr.bf16.mxu0 %v414
  %586 = vmatpush1.bf16.msra.mxu0 %v413
  %587 = vmatprep.subr.bf16.mxu0 %v416
  %588 = vmatpush1.bf16.msra.mxu0 %v415
  %589 = vmatprep.subr.bf16.mxu0 %v418
  %590 = vmatpush1.bf16.msra.mxu0 %v417
  %591 = vmatprep.subr.bf16.mxu0 %v420
  %592 = vmatpush1.bf16.msra.mxu0 %v419
  %593 = vmatprep.subr.bf16.mxu0 %v422
  %594 = vmatpush1.bf16.msra.mxu0 %v421
  %595 = vmatprep.subr.bf16.mxu0 %v424
  %596 = vmatpush1.bf16.msra.mxu0 %v423
  %597 = vmatprep.subr.bf16.mxu0 %v426
  %598 = vmatpush1.bf16.msra.mxu0 %v425
  %599 = vmatprep.subr.bf16.mxu0 %v428
  %600 = vmatpush1.bf16.msra.mxu0 %v427
  %601 = vmatprep.subr.bf16.mxu0 %v430
  %602 = vmatpush1.bf16.msra.mxu0 %v429
  %603 = vmatprep.subr.bf16.mxu0 %v432
  %604 = vmatpush1.bf16.msra.mxu0 %v431
  %605 = vmatprep.subr.bf16.mxu0 %v434
  %606 = vmatpush1.bf16.msra.mxu0 %v433
  %607 = vmatprep.subr.bf16.mxu0 %v436
  %608 = vmatpush1.bf16.msra.mxu0 %v435
  %609 = vmatprep.subr.bf16.mxu0 %v438
  %610 = vmatpush1.bf16.msra.mxu0 %v437
  %611 = vmatprep.subr.bf16.mxu0 %v440
  %612 = vmatpush1.bf16.msra.mxu0 %v439
  %613 = vmatprep.mubr.bf16.mxu0 %v146
  %614 = vmatmul.mubr.bf16.gmra.mrb[0].mxu0 %v145
  %v615 = vpop.f32.mrb[0].mxu0
  %v616 = vadd.f32 %v563, %v615
  %v617 = vpop.f32.mrb[0].mxu0
  %v618 = vadd.f32 %v565, %v617
  %v619 = vpop.f32.mrb[0].mxu0
  %v620 = vadd.f32 %v567, %v619
  %v621 = vpop.f32.mrb[0].mxu0
  %v622 = vadd.f32 %v569, %v621
  %623 = vmatprep.mubr.bf16.mxu0 %v151
  %624 = vmatmul.mubr.bf16.gmra.mrb[0].mxu0 %v150
  %v625 = vpop.f32.mrb[0].mxu0
  %v626 = vadd.f32 %v573, %v625
  %v627 = vpop.f32.mrb[0].mxu0
  %v628 = vadd.f32 %v575, %v627
  %v629 = vpop.f32.mrb[0].mxu0
  %v630 = vadd.f32 %v577, %v629
  %v631 = vpop.f32.mrb[0].mxu0
  %v632 = vadd.f32 %v579, %v631
  %633 = vdwg.mxu0
  %634 = vmatprep.subr.bf16.mxu0 %v442
  %635 = vmatpush1.bf16.msra.mxu0 %v441
  %636 = vmatprep.subr.bf16.mxu0 %v444
  %637 = vmatpush1.bf16.msra.mxu0 %v443
  %638 = vmatprep.subr.bf16.mxu0 %v446
  %639 = vmatpush1.bf16.msra.mxu0 %v445
  %640 = vmatprep.subr.bf16.mxu0 %v448
  %641 = vmatpush1.bf16.msra.mxu0 %v447
  %642 = vmatprep.subr.bf16.mxu0 0
  %643 = vmatpush1.bf16.msra.mxu0 0
  %644 = vmatprep.subr.bf16.mxu0 0
  %645 = vmatpush1.bf16.msra.mxu0 0
  %646 = vmatprep.subr.bf16.mxu0 0
  %647 = vmatpush1.bf16.msra.mxu0 0
  %648 = vmatprep.subr.bf16.mxu0 0
  %649 = vmatpush1.bf16.msra.mxu0 0
  %650 = vmatprep.subr.bf16.mxu0 0
  %651 = vmatpush1.bf16.msra.mxu0 0
  %652 = vmatprep.subr.bf16.mxu0 0
  %653 = vmatpush1.bf16.msra.mxu0 0
  %654 = vmatprep.subr.bf16.mxu0 0
  %655 = vmatpush1.bf16.msra.mxu0 0
  %656 = vmatprep.subr.bf16.mxu0 0
  %657 = vmatpush1.bf16.msra.mxu0 0
  %658 = vmatprep.subr.bf16.mxu0 0
  %659 = vmatpush1.bf16.msra.mxu0 0
  %660 = vmatprep.subr.bf16.mxu0 0
  %661 = vmatpush1.bf16.msra.mxu0 0
  %662 = vmatprep.subr.bf16.mxu0 0
  %663 = vmatpush1.bf16.msra.mxu0 0
  %664 = vmatprep.subr.bf16.mxu0 0
  %665 = vmatpush1.bf16.msra.mxu0 0
  %666 = vmatprep.mubr.bf16.mxu0 0
  %667 = vmatmul.mubr.bf16.gmra.mrb[0].mxu0 %v523
  %v668 = vpop.f32.mrb[0].mxu0
  %v669 = vadd.f32 %v616, %v668
  %v670 = vpop.f32.mrb[0].mxu0
  %v671 = vadd.f32 %v618, %v670
  %v672 = vpop.f32.mrb[0].mxu0
  %v673 = vadd.f32 %v620, %v672
  %v674 = vpop.f32.mrb[0].mxu0
  %v675 = vadd.f32 %v622, %v674
  %676 = vmatprep.mubr.bf16.mxu0 0
  %677 = vmatmul.mubr.bf16.gmra.mrb[0].mxu0 %v526
  %v678 = vpop.f32.mrb[0].mxu0
  %v679 = vadd.f32 %v626, %v678
  %v680 = vpop.f32.mrb[0].mxu0
  %v681 = vadd.f32 %v628, %v680
  %v682 = vpop.f32.mrb[0].mxu0
  %v683 = vadd.f32 %v630, %v682
  %v684 = vpop.f32.mrb[0].mxu0
  %v685 = vadd.f32 %v632, %v684
  %686 = vdwg.mxu0
  %v687 = vmax.f32 %v669, 0.0
  %v688 = vmax.f32 %v671, 0.0
  %v689 = vmax.f32 %v673, 0.0
  %v690 = vmax.f32 %v675, 0.0
  %v691 = vmax.f32 %v679, 0.0
  %v692 = vmax.f32 %v681, 0.0
  %v693 = vmax.f32 %v683, 0.0
  %v694 = vmax.f32 %v685, 0.0
  %v695 = vpack.c.bf16 %v689, %v687
  %v696 = vpack.c.bf16 %v690, %v688
  %v697 = vpack.c.bf16 %v693, %v691
  %v698 = vpack.c.bf16 %v694, %v692
  %v703 = vunpack.c.l.b16 %v695
  %v704 = vunpack.c.l.b16 %v696
  %v705 = vunpack.c.h.b16 %v695
  %v706 = vunpack.c.h.b16 %v696
  %v707 = vunpack.c.l.b16 %v697
  %v708 = vunpack.c.l.b16 %v698
  %v709 = vunpack.c.h.b16 %v697
  %v710 = vunpack.c.h.b16 %v698
  %v711 = vpack.c.b16 %v704, %v703
  %v712 = vpack.c.b16 %v706, %v705
  %v713 = vpack.c.b16 %v708, %v707
  %v714 = vpack.c.b16 %v710, %v709
  %719 = vst [vmem:[%s3] sm:$0xff] %v711
  %720 = vst [vmem:[%s3 + $0x8] sm:$0xff] %v712
  %721 = vst [vmem:[%s3 + $0x10] sm:$0xff] %v713
  %722 = vst [vmem:[%s3 + $0x18] sm:$0xff] %v714
  // Predicated region
  $region14: #{_lambda_.14} parent=0 // pred_check
    _
  $region15: #{_lambda_.14} parent=0 // pred_check_branch
    %724 = sbr.rel (0) target = $region17
  $region16: #{_lambda_.14} parent=0 // pred_region
    _
  $region17: #{_lambda_.14} parent=0 // pred_fallthru
    _
  // Predicated region
  $region18: #{_lambda_.14} parent=0 // pred_check
    _
  $region19: #{_lambda_.14} parent=0 // pred_check_branch
    %726 = sbr.rel (0) target = $region21
  $region20: #{_lambda_.14} parent=0 // pred_region
    _
  $region21: #{_lambda_.14} parent=0 // pred_fallthru
    _

// kernel: _lambda_.15
$region0: #{_lambda_.15}
  #allocation0 [shape = 'u32[]', space=smem, size = 0x4, offset = 0x4, fixed_abs, tag = 'smem constant byte address 0x4 - core index']
  #allocation1 [shape = 'u32[144,128]{1,0:T(1,128)}', space=vmem, size = 0x12000, scoped, tag = 'internal scratch']
  %s0 = inlined_call_operand.vmem [shape: bf16[128,576], index: 0, kind: input, shape index: {}]
  %s1 = inlined_call_operand.vmem [shape: bf16[576,128], index: 1, kind: input, shape index: {}]
  %s2 = inlined_call_operand.vmem [shape: f32[1,128], index: 2, kind: input, shape index: {}]
  %s3 = inlined_call_operand.vmem [shape: bf16[128,128], index: 3, kind: output, shape index: {}]
  %s4 = sld [smem:[#allocation0]]
  $region22: #{_lambda_.15} parent=0
    _
  %s6 = ssub.s32 1, %s4
  %s7 = scalar_select 0, %s6, %s4
  // Predicated region
  $region2: #{_lambda_.15} parent=0 // pred_check
    _
  $region3: #{_lambda_.15} parent=0 // pred_check_branch
    %9 = sbr.rel (0) target = $region5
  $region4: #{_lambda_.15} parent=0 // pred_region
    _
  $region5: #{_lambda_.15} parent=0 // pred_fallthru
    _
  // Predicated region
  $region6: #{_lambda_.15} parent=0 // pred_check
    _
  $region7: #{_lambda_.15} parent=0 // pred_check_branch
    %11 = sbr.rel (0) target = $region9
  $region8: #{_lambda_.15} parent=0 // pred_region
    _
  $region9: #{_lambda_.15} parent=0 // pred_fallthru
    _
  // Predicated region
  $region10: #{_lambda_.15} parent=0 // pred_check
    _
  $region11: #{_lambda_.15} parent=0 // pred_check_branch
    %13 = sbr.rel (0) target = $region13
  $region12: #{_lambda_.15} parent=0 // pred_region
    _
  $region13: #{_lambda_.15} parent=0 // pred_fallthru
    _
  %v15 = vld [vmem:[%s0] sm:$0xff]
  %v16 = vld [vmem:[%s0 + $0x8] sm:$0xff]
  %v17 = vld [vmem:[%s0 + $0x10] sm:$0xf]
  %v18 = vld [vmem:[%s0 + $0x14] sm:$0xff]
  %v19 = vld [vmem:[%s0 + $0x1c] sm:$0xff]
  %v20 = vld [vmem:[%s0 + $0x24] sm:$0xf]
  %v21 = vld [vmem:[%s0 + $0x28] sm:$0xff]
  %v22 = vld [vmem:[%s0 + $0x30] sm:$0xff]
  %v23 = vld [vmem:[%s0 + $0x38] sm:$0xf]
  %v24 = vld [vmem:[%s0 + $0x3c] sm:$0xff]
  %v25 = vld [vmem:[%s0 + $0x44] sm:$0xff]
  %v26 = vld [vmem:[%s0 + $0x4c] sm:$0xf]
  %v27 = vld [vmem:[%s0 + $0x50] sm:$0xff]
  %v28 = vld [vmem:[%s0 + $0x58] sm:$0xff]
  %v29 = vld [vmem:[%s0 + $0x60] sm:$0xf]
  %v30 = vld [vmem:[%s0 + $0x64] sm:$0xff]
  %v31 = vld [vmem:[%s0 + $0x6c] sm:$0xff]
  %v32 = vld [vmem:[%s0 + $0x74] sm:$0xf]
  %v33 = vld [vmem:[%s0 + $0x78] sm:$0xff]
  %v34 = vld [vmem:[%s0 + $0x80] sm:$0xff]
  %v35 = vld [vmem:[%s0 + $0x88] sm:$0xf]
  %v36 = vld [vmem:[%s0 + $0x8c] sm:$0xff]
  %v37 = vld [vmem:[%s0 + $0x94] sm:$0xff]
  %v38 = vld [vmem:[%s0 + $0x9c] sm:$0xf]
  %v39 = vld [vmem:[%s0 + $0xa0] sm:$0xff]
  %v40 = vld [vmem:[%s0 + $0xa8] sm:$0xff]
  %v41 = vld [vmem:[%s0 + $0xb0] sm:$0xf]
  %v42 = vld [vmem:[%s0 + $0xb4] sm:$0xff]
  %v43 = vld [vmem:[%s0 + $0xbc] sm:$0xff]
  %v44 = vld [vmem:[%s0 + $0xc4] sm:$0xf]
  %v45 = vld [vmem:[%s0 + $0xc8] sm:$0xff]
  %v46 = vld [vmem:[%s0 + $0xd0] sm:$0xff]
  %v47 = vld [vmem:[%s0 + $0xd8] sm:$0xf]
  %v48 = vld [vmem:[%s0 + $0xdc] sm:$0xff]
  %v49 = vld [vmem:[%s0 + $0xe4] sm:$0xff]
  %v50 = vld [vmem:[%s0 + $0xec] sm:$0xf]
  %v51 = vld [vmem:[%s0 + $0xf0] sm:$0xff]
  %v52 = vld [vmem:[%s0 + $0xf8] sm:$0xff]
  %v53 = vld [vmem:[%s0 + $0x100] sm:$0xf]
  %v54 = vld [vmem:[%s0 + $0x104] sm:$0xff]
  %v55 = vld [vmem:[%s0 + $0x10c] sm:$0xff]
  %v56 = vld [vmem:[%s0 + $0x114] sm:$0xf]
  %v57 = vld [vmem:[%s0 + $0x118] sm:$0xff]
  %v58 = vld [vmem:[%s0 + $0x120] sm:$0xff]
  %v59 = vld [vmem:[%s0 + $0x128] sm:$0xf]
  %v60 = vld [vmem:[%s0 + $0x12c] sm:$0xff]
  %v61 = vld [vmem:[%s0 + $0x134] sm:$0xff]
  %v62 = vld [vmem:[%s0 + $0x13c] sm:$0xf]
  %v63 = vld [vmem:[%s1] sm:$0xf]
  %v64 = vld [vmem:[%s1 + $0x4] sm:$0xf]
  %v65 = vld [vmem:[%s1 + $0x8] sm:$0xf]
  %v66 = vld [vmem:[%s1 + $0xc] sm:$0xf]
  %v67 = vld [vmem:[%s1 + $0x10] sm:$0xf]
  %v68 = vld [vmem:[%s1 + $0x14] sm:$0xf]
  %v69 = vld [vmem:[%s1 + $0x18] sm:$0xf]
  %v70 = vld [vmem:[%s1 + $0x1c] sm:$0xf]
  %v71 = vld [vmem:[%s1 + $0x20] sm:$0xf]
  %v72 = vld [vmem:[%s1 + $0x24] sm:$0xf]
  %v73 = vld [vmem:[%s1 + $0x28] sm:$0xf]
  %v74 = vld [vmem:[%s1 + $0x2c] sm:$0xf]
  %v75 = vld [vmem:[%s1 + $0x30] sm:$0xf]
  %v76 = vld [vmem:[%s1 + $0x34] sm:$0xf]
  %v77 = vld [vmem:[%s1 + $0x38] sm:$0xf]
  %v78 = vld [vmem:[%s1 + $0x3c] sm:$0xf]
  %v79 = vld [vmem:[%s1 + $0x40] sm:$0xf]
  %v80 = vld [vmem:[%s1 + $0x44] sm:$0xf]
  %v81 = vld [vmem:[%s1 + $0x48] sm:$0xf]
  %v82 = vld [vmem:[%s1 + $0x4c] sm:$0xf]
  %v83 = vld [vmem:[%s1 + $0x50] sm:$0xf]
  %v84 = vld [vmem:[%s1 + $0x54] sm:$0xf]
  %v85 = vld [vmem:[%s1 + $0x58] sm:$0xf]
  %v86 = vld [vmem:[%s1 + $0x5c] sm:$0xf]
  %v87 = vld [vmem:[%s1 + $0x60] sm:$0xf]
  %v88 = vld [vmem:[%s1 + $0x64] sm:$0xf]
  %v89 = vld [vmem:[%s1 + $0x68] sm:$0xf]
  %v90 = vld [vmem:[%s1 + $0x6c] sm:$0xf]
  %v91 = vld [vmem:[%s1 + $0x70] sm:$0xf]
  %v92 = vld [vmem:[%s1 + $0x74] sm:$0xf]
  %v93 = vld [vmem:[%s1 + $0x78] sm:$0xf]
  %v94 = vld [vmem:[%s1 + $0x7c] sm:$0xf]
  %v95 = vld [vmem:[%s1 + $0x80] sm:$0xf]
  %v96 = vld [vmem:[%s1 + $0x84] sm:$0xf]
  %v97 = vld [vmem:[%s1 + $0x88] sm:$0xf]
  %v98 = vld [vmem:[%s1 + $0x8c] sm:$0xf]
  %v99 = vld [vmem:[%s1 + $0x90] sm:$0xf]
  %v100 = vld [vmem:[%s1 + $0x94] sm:$0xf]
  %v101 = vld [vmem:[%s1 + $0x98] sm:$0xf]
  %v102 = vld [vmem:[%s1 + $0x9c] sm:$0xf]
  %v103 = vld [vmem:[%s1 + $0xa0] sm:$0xf]
  %v104 = vld [vmem:[%s1 + $0xa4] sm:$0xf]
  %v105 = vld [vmem:[%s1 + $0xa8] sm:$0xf]
  %v106 = vld [vmem:[%s1 + $0xac] sm:$0xf]
  %v107 = vld [vmem:[%s1 + $0xb0] sm:$0xf]
  %v108 = vld [vmem:[%s1 + $0xb4] sm:$0xf]
  %v109 = vld [vmem:[%s1 + $0xb8] sm:$0xf]
  %v110 = vld [vmem:[%s1 + $0xbc] sm:$0xf]
  %v111 = vld [vmem:[%s1 + $0xc0] sm:$0xf]
  %v112 = vld [vmem:[%s1 + $0xc4] sm:$0xf]
  %v113 = vld [vmem:[%s1 + $0xc8] sm:$0xf]
  %v114 = vld [vmem:[%s1 + $0xcc] sm:$0xf]
  %v115 = vld [vmem:[%s1 + $0xd0] sm:$0xf]
  %v116 = vld [vmem:[%s1 + $0xd4] sm:$0xf]
  %v117 = vld [vmem:[%s1 + $0xd8] sm:$0xf]
  %v118 = vld [vmem:[%s1 + $0xdc] sm:$0xf]
  %v119 = vld [vmem:[%s1 + $0xe0] sm:$0xf]
  %v120 = vld [vmem:[%s1 + $0xe4] sm:$0xf]
  %v121 = vld [vmem:[%s1 + $0xe8] sm:$0xf]
  %v122 = vld [vmem:[%s1 + $0xec] sm:$0xf]
  %v123 = vld [vmem:[%s1 + $0xf0] sm:$0xf]
  %v124 = vld [vmem:[%s1 + $0xf4] sm:$0xf]
  %v125 = vld [vmem:[%s1 + $0xf8] sm:$0xf]
  %v126 = vld [vmem:[%s1 + $0xfc] sm:$0xf]
  %v127 = vld [vmem:[%s1 + $0x100] sm:$0xf]
  %v128 = vld [vmem:[%s1 + $0x104] sm:$0xf]
  %v129 = vld [vmem:[%s1 + $0x108] sm:$0xf]
  %v130 = vld [vmem:[%s1 + $0x10c] sm:$0xf]
  %v131 = vld [vmem:[%s1 + $0x110] sm:$0xf]
  %v132 = vld [vmem:[%s1 + $0x114] sm:$0xf]
  %v133 = vld [vmem:[%s1 + $0x118] sm:$0xf]
  %v134 = vld [vmem:[%s1 + $0x11c] sm:$0xf]
  %v135 = vld [vmem:[%s2] sm:$0x1]
  %v137 = vlaneseq
  %v138 = vshrl.u32 %v137, 7
  %v139 = vsub.s32 0, %v138
  %v140 = vrot.slane %v135, %v139
  %v190 = vunpack.c.l.b16 %v15
  %v191 = vunpack.c.h.b16 %v15
  %v192 = vunpack.c.l.b16 %v16
  %v193 = vunpack.c.h.b16 %v16
  %v194 = vunpack.c.l.b16 %v17
  %v195 = vunpack.c.l.b16 %v18
  %v196 = vunpack.c.h.b16 %v18
  %v197 = vunpack.c.l.b16 %v19
  %v198 = vunpack.c.h.b16 %v19
  %v199 = vunpack.c.l.b16 %v20
  %v200 = vunpack.c.l.b16 %v21
  %v201 = vunpack.c.h.b16 %v21
  %v202 = vunpack.c.l.b16 %v22
  %v203 = vunpack.c.h.b16 %v22
  %v204 = vunpack.c.l.b16 %v23
  %v205 = vunpack.c.l.b16 %v24
  %v206 = vunpack.c.h.b16 %v24
  %v207 = vunpack.c.l.b16 %v25
  %v208 = vunpack.c.h.b16 %v25
  %v209 = vunpack.c.l.b16 %v26
  %v210 = vunpack.c.l.b16 %v27
  %v211 = vunpack.c.h.b16 %v27
  %v212 = vunpack.c.l.b16 %v28
  %v213 = vunpack.c.h.b16 %v28
  %v214 = vunpack.c.l.b16 %v29
  %v215 = vunpack.c.l.b16 %v30
  %v216 = vunpack.c.h.b16 %v30
  %v217 = vunpack.c.l.b16 %v31
  %v218 = vunpack.c.h.b16 %v31
  %v219 = vunpack.c.l.b16 %v32
  %v220 = vunpack.c.l.b16 %v33
  %v221 = vunpack.c.h.b16 %v33
  %v222 = vunpack.c.l.b16 %v34
  %v223 = vunpack.c.h.b16 %v34
  %v224 = vunpack.c.l.b16 %v35
  %v225 = vunpack.c.l.b16 %v36
  %v226 = vunpack.c.h.b16 %v36
  %v227 = vunpack.c.l.b16 %v37
  %v228 = vunpack.c.h.b16 %v37
  %v229 = vunpack.c.l.b16 %v38
  %v230 = vunpack.c.l.b16 %v39
  %v231 = vunpack.c.h.b16 %v39
  %v232 = vunpack.c.l.b16 %v40
  %v233 = vunpack.c.h.b16 %v40
  %v234 = vunpack.c.l.b16 %v41
  %v235 = vunpack.c.l.b16 %v42
  %v236 = vunpack.c.h.b16 %v42
  %v237 = vunpack.c.l.b16 %v43
  %v238 = vunpack.c.h.b16 %v43
  %v239 = vunpack.c.l.b16 %v44
  %v240 = vunpack.c.l.b16 %v45
  %v241 = vunpack.c.h.b16 %v45
  %v242 = vunpack.c.l.b16 %v46
  %v243 = vunpack.c.h.b16 %v46
  %v244 = vunpack.c.l.b16 %v47
  %v245 = vunpack.c.l.b16 %v48
  %v246 = vunpack.c.h.b16 %v48
  %v247 = vunpack.c.l.b16 %v49
  %v248 = vunpack.c.h.b16 %v49
  %v249 = vunpack.c.l.b16 %v50
  %v250 = vunpack.c.l.b16 %v51
  %v251 = vunpack.c.h.b16 %v51
  %v252 = vunpack.c.l.b16 %v52
  %v253 = vunpack.c.h.b16 %v52
  %v254 = vunpack.c.l.b16 %v53
  %v255 = vunpack.c.l.b16 %v54
  %v256 = vunpack.c.h.b16 %v54
  %v257 = vunpack.c.l.b16 %v55
  %v258 = vunpack.c.h.b16 %v55
  %v259 = vunpack.c.l.b16 %v56
  %v260 = vunpack.c.l.b16 %v57
  %v261 = vunpack.c.h.b16 %v57
  %v262 = vunpack.c.l.b16 %v58
  %v263 = vunpack.c.h.b16 %v58
  %v264 = vunpack.c.l.b16 %v59
  %v265 = vunpack.c.l.b16 %v60
  %v266 = vunpack.c.h.b16 %v60
  %v267 = vunpack.c.l.b16 %v61
  %v268 = vunpack.c.h.b16 %v61
  %v269 = vunpack.c.l.b16 %v62
  %v270 = vpack.c.b16 %v195, %v190
  %v271 = vpack.c.b16 %v196, %v191
  %v272 = vpack.c.b16 %v197, %v192
  %v273 = vpack.c.b16 %v198, %v193
  %v274 = vpack.c.b16 %v199, %v194
  %v275 = vpack.c.b16 %v205, %v200
  %v276 = vpack.c.b16 %v206, %v201
  %v277 = vpack.c.b16 %v207, %v202
  %v278 = vpack.c.b16 %v208, %v203
  %v279 = vpack.c.b16 %v209, %v204
  %v280 = vpack.c.b16 %v215, %v210
  %v281 = vpack.c.b16 %v216, %v211
  %v282 = vpack.c.b16 %v217, %v212
  %v283 = vpack.c.b16 %v218, %v213
  %v284 = vpack.c.b16 %v219, %v214
  %v285 = vpack.c.b16 %v225, %v220
  %v286 = vpack.c.b16 %v226, %v221
  %v287 = vpack.c.b16 %v227, %v222
  %v288 = vpack.c.b16 %v228, %v223
  %v289 = vpack.c.b16 %v229, %v224
  %v290 = vpack.c.b16 %v235, %v230
  %v291 = vpack.c.b16 %v236, %v231
  %v292 = vpack.c.b16 %v237, %v232
  %v293 = vpack.c.b16 %v238, %v233
  %v294 = vpack.c.b16 %v239, %v234
  %v295 = vpack.c.b16 %v245, %v240
  %v296 = vpack.c.b16 %v246, %v241
  %v297 = vpack.c.b16 %v247, %v242
  %v298 = vpack.c.b16 %v248, %v243
  %v299 = vpack.c.b16 %v249, %v244
  %v300 = vpack.c.b16 %v255, %v250
  %v301 = vpack.c.b16 %v256, %v251
  %v302 = vpack.c.b16 %v257, %v252
  %v303 = vpack.c.b16 %v258, %v253
  %v304 = vpack.c.b16 %v259, %v254
  %v305 = vpack.c.b16 %v265, %v260
  %v306 = vpack.c.b16 %v266, %v261
  %v307 = vpack.c.b16 %v267, %v262
  %v308 = vpack.c.b16 %v268, %v263
  %v309 = vpack.c.b16 %v269, %v264
  %v414 = vunpack.c.l.b16 %v63
  %v415 = vunpack.c.l.b16 %v64
  %v416 = vunpack.c.l.b16 %v65
  %v417 = vunpack.c.l.b16 %v66
  %v418 = vunpack.c.l.b16 %v67
  %v419 = vunpack.c.l.b16 %v68
  %v420 = vunpack.c.l.b16 %v69
  %v421 = vunpack.c.l.b16 %v70
  %v422 = vunpack.c.l.b16 %v71
  %v423 = vunpack.c.l.b16 %v72
  %v424 = vunpack.c.l.b16 %v73
  %v425 = vunpack.c.l.b16 %v74
  %v426 = vunpack.c.l.b16 %v75
  %v427 = vunpack.c.l.b16 %v76
  %v428 = vunpack.c.l.b16 %v77
  %v429 = vunpack.c.l.b16 %v78
  %v430 = vunpack.c.l.b16 %v79
  %v431 = vunpack.c.l.b16 %v80
  %v432 = vunpack.c.l.b16 %v81
  %v433 = vunpack.c.l.b16 %v82
  %v434 = vunpack.c.l.b16 %v83
  %v435 = vunpack.c.l.b16 %v84
  %v436 = vunpack.c.l.b16 %v85
  %v437 = vunpack.c.l.b16 %v86
  %v438 = vunpack.c.l.b16 %v87
  %v439 = vunpack.c.l.b16 %v88
  %v440 = vunpack.c.l.b16 %v89
  %v441 = vunpack.c.l.b16 %v90
  %v442 = vunpack.c.l.b16 %v91
  %v443 = vunpack.c.l.b16 %v92
  %v444 = vunpack.c.l.b16 %v93
  %v445 = vunpack.c.l.b16 %v94
  %v446 = vunpack.c.l.b16 %v95
  %v447 = vunpack.c.l.b16 %v96
  %v448 = vunpack.c.l.b16 %v97
  %v449 = vunpack.c.l.b16 %v98
  %v450 = vunpack.c.l.b16 %v99
  %v451 = vunpack.c.l.b16 %v100
  %v452 = vunpack.c.l.b16 %v101
  %v453 = vunpack.c.l.b16 %v102
  %v454 = vunpack.c.l.b16 %v103
  %v455 = vunpack.c.l.b16 %v104
  %v456 = vunpack.c.l.b16 %v105
  %v457 = vunpack.c.l.b16 %v106
  %v458 = vunpack.c.l.b16 %v107
  %v459 = vunpack.c.l.b16 %v108
  %v460 = vunpack.c.l.b16 %v109
  %v461 = vunpack.c.l.b16 %v110
  %v462 = vunpack.c.l.b16 %v111
  %v463 = vunpack.c.l.b16 %v112
  %v464 = vunpack.c.l.b16 %v113
  %v465 = vunpack.c.l.b16 %v114
  %v466 = vunpack.c.l.b16 %v115
  %v467 = vunpack.c.l.b16 %v116
  %v468 = vunpack.c.l.b16 %v117
  %v469 = vunpack.c.l.b16 %v118
  %v470 = vunpack.c.l.b16 %v119
  %v471 = vunpack.c.l.b16 %v120
  %v472 = vunpack.c.l.b16 %v121
  %v473 = vunpack.c.l.b16 %v122
  %v474 = vunpack.c.l.b16 %v123
  %v475 = vunpack.c.l.b16 %v124
  %v476 = vunpack.c.l.b16 %v125
  %v477 = vunpack.c.l.b16 %v126
  %v478 = vunpack.c.l.b16 %v127
  %v479 = vunpack.c.l.b16 %v128
  %v480 = vunpack.c.l.b16 %v129
  %v481 = vunpack.c.l.b16 %v130
  %v482 = vunpack.c.l.b16 %v131
  %v483 = vunpack.c.l.b16 %v132
  %v484 = vunpack.c.l.b16 %v133
  %v485 = vunpack.c.l.b16 %v134
  %v486 = vpack.c.b16 %v415, %v414
  %v487 = vpack.c.b16 %v417, %v416
  %v488 = vpack.c.b16 %v419, %v418
  %v489 = vpack.c.b16 %v421, %v420
  %v490 = vpack.c.b16 %v423, %v422
  %v491 = vpack.c.b16 %v425, %v424
  %v492 = vpack.c.b16 %v427, %v426
  %v493 = vpack.c.b16 %v429, %v428
  %v494 = vpack.c.b16 %v431, %v430
  %v495 = vpack.c.b16 %v433, %v432
  %v496 = vpack.c.b16 %v435, %v434
  %v497 = vpack.c.b16 %v437, %v436
  %v498 = vpack.c.b16 %v439, %v438
  %v499 = vpack.c.b16 %v441, %v440
  %v500 = vpack.c.b16 %v443, %v442
  %v501 = vpack.c.b16 %v445, %v444
  %v502 = vpack.c.b16 %v447, %v446
  %v503 = vpack.c.b16 %v449, %v448
  %v504 = vpack.c.b16 %v451, %v450
  %v505 = vpack.c.b16 %v453, %v452
  %v506 = vpack.c.b16 %v455, %v454
  %v507 = vpack.c.b16 %v457, %v456
  %v508 = vpack.c.b16 %v459, %v458
  %v509 = vpack.c.b16 %v461, %v460
  %v510 = vpack.c.b16 %v463, %v462
  %v511 = vpack.c.b16 %v465, %v464
  %v512 = vpack.c.b16 %v467, %v466
  %v513 = vpack.c.b16 %v469, %v468
  %v514 = vpack.c.b16 %v471, %v470
  %v515 = vpack.c.b16 %v473, %v472
  %v516 = vpack.c.b16 %v475, %v474
  %v517 = vpack.c.b16 %v477, %v476
  %v518 = vpack.c.b16 %v479, %v478
  %v519 = vpack.c.b16 %v481, %v480
  %v520 = vpack.c.b16 %v483, %v482
  %v521 = vpack.c.b16 %v485, %v484
  %vm558 = vcmask 523264
  %v560 = vsel %vm558, %v274, 0
  %v563 = vsel %vm558, %v279, 0
  %v566 = vsel %vm558, %v284, 0
  %v569 = vsel %vm558, %v289, 0
  %v572 = vsel %vm558, %v294, 0
  %v575 = vsel %vm558, %v299, 0
  %v578 = vsel %vm558, %v304, 0
  %v581 = vsel %vm558, %v309, 0
  %583 = vmatprep.subr.bf16.mxu0 0
  %584 = vmatpush1.bf16.msra.mxu0 %v486
  %585 = vmatprep.subr.bf16.mxu0 0
  %586 = vmatpush1.bf16.msra.mxu0 %v487
  %587 = vmatprep.subr.bf16.mxu0 0
  %588 = vmatpush1.bf16.msra.mxu0 %v488
  %589 = vmatprep.subr.bf16.mxu0 0
  %590 = vmatpush1.bf16.msra.mxu0 %v489
  %591 = vmatprep.subr.bf16.mxu0 0
  %592 = vmatpush1.bf16.msra.mxu0 %v490
  %593 = vmatprep.subr.bf16.mxu0 0
  %594 = vmatpush1.bf16.msra.mxu0 %v491
  %595 = vmatprep.subr.bf16.mxu0 0
  %596 = vmatpush1.bf16.msra.mxu0 %v492
  %597 = vmatprep.subr.bf16.mxu0 0
  %598 = vmatpush1.bf16.msra.mxu0 %v493
  %599 = vmatprep.subr.bf16.mxu0 0
  %600 = vmatpush1.bf16.msra.mxu0 %v494
  %601 = vmatprep.subr.bf16.mxu0 0
  %602 = vmatpush1.bf16.msra.mxu0 %v495
  %603 = vmatprep.subr.bf16.mxu0 0
  %604 = vmatpush1.bf16.msra.mxu0 %v496
  %605 = vmatprep.subr.bf16.mxu0 0
  %606 = vmatpush1.bf16.msra.mxu0 %v497
  %607 = vmatprep.subr.bf16.mxu0 0
  %608 = vmatpush1.bf16.msra.mxu0 %v498
  %609 = vmatprep.subr.bf16.mxu0 0
  %610 = vmatpush1.bf16.msra.mxu0 %v499
  %611 = vmatprep.subr.bf16.mxu0 0
  %612 = vmatpush1.bf16.msra.mxu0 %v500
  %613 = vmatprep.subr.bf16.mxu0 0
  %614 = vmatpush1.bf16.msra.mxu0 %v501
  %615 = vmatprep.mubr.bf16.mxu0 %v271
  %616 = vmatmul.mubr.bf16.gmra.mrb[0].mxu0 %v270
  %v617 = vpop.f32.mrb[0].mxu0
  %v618 = vadd.f32 %v140, %v617
  %v619 = vpop.f32.mrb[0].mxu0
  %v620 = vpop.f32.mrb[0].mxu0
  %v621 = vadd.f32 %v140, %v620
  %v622 = vpop.f32.mrb[0].mxu0
  %623 = vmatprep.mubr.bf16.mxu0 %v276
  %624 = vmatmul.mubr.bf16.gmra.mrb[0].mxu0 %v275
  %v625 = vpop.f32.mrb[0].mxu0
  %v626 = vadd.f32 %v140, %v625
  %v627 = vpop.f32.mrb[0].mxu0
  %v628 = vpop.f32.mrb[0].mxu0
  %v629 = vadd.f32 %v140, %v628
  %v630 = vpop.f32.mrb[0].mxu0
  %631 = vmatprep.mubr.bf16.mxu0 %v281
  %632 = vmatmul.mubr.bf16.gmra.mrb[0].mxu0 %v280
  %v633 = vpop.f32.mrb[0].mxu0
  %v634 = vadd.f32 %v140, %v633
  %v635 = vpop.f32.mrb[0].mxu0
  %v636 = vpop.f32.mrb[0].mxu0
  %v637 = vadd.f32 %v140, %v636
  %v638 = vpop.f32.mrb[0].mxu0
  %639 = vmatprep.mubr.bf16.mxu0 %v286
  %640 = vmatmul.mubr.bf16.gmra.mrb[0].mxu0 %v285
  %v641 = vpop.f32.mrb[0].mxu0
  %v642 = vadd.f32 %v140, %v641
  %v643 = vpop.f32.mrb[0].mxu0
  %v644 = vpop.f32.mrb[0].mxu0
  %v645 = vadd.f32 %v140, %v644
  %v646 = vpop.f32.mrb[0].mxu0
  %647 = vmatprep.mubr.bf16.mxu0 %v291
  %648 = vmatmul.mubr.bf16.gmra.mrb[0].mxu0 %v290
  %v649 = vpop.f32.mrb[0].mxu0
  %v650 = vadd.f32 %v140, %v649
  %v651 = vpop.f32.mrb[0].mxu0
  %v652 = vpop.f32.mrb[0].mxu0
  %v653 = vadd.f32 %v140, %v652
  %v654 = vpop.f32.mrb[0].mxu0
  %655 = vmatprep.mubr.bf16.mxu0 %v296
  %656 = vmatmul.mubr.bf16.gmra.mrb[0].mxu0 %v295
  %v657 = vpop.f32.mrb[0].mxu0
  %v658 = vadd.f32 %v140, %v657
  %v659 = vpop.f32.mrb[0].mxu0
  %v660 = vpop.f32.mrb[0].mxu0
  %v661 = vadd.f32 %v140, %v660
  %v662 = vpop.f32.mrb[0].mxu0
  %663 = vmatprep.mubr.bf16.mxu0 %v301
  %664 = vmatmul.mubr.bf16.gmra.mrb[0].mxu0 %v300
  %v665 = vpop.f32.mrb[0].mxu0
  %v666 = vadd.f32 %v140, %v665
  %v667 = vpop.f32.mrb[0].mxu0
  %v668 = vpop.f32.mrb[0].mxu0
  %v669 = vadd.f32 %v140, %v668
  %v670 = vpop.f32.mrb[0].mxu0
  %671 = vmatprep.mubr.bf16.mxu0 %v306
  %672 = vmatmul.mubr.bf16.gmra.mrb[0].mxu0 %v305
  %v673 = vpop.f32.mrb[0].mxu0
  %v674 = vadd.f32 %v140, %v673
  %v675 = vpop.f32.mrb[0].mxu0
  %v676 = vpop.f32.mrb[0].mxu0
  %v677 = vadd.f32 %v140, %v676
  %v678 = vpop.f32.mrb[0].mxu0
  %679 = vdwg.mxu0
  %680 = vmatprep.subr.bf16.mxu0 0
  %681 = vmatpush1.bf16.msra.mxu0 %v502
  %682 = vmatprep.subr.bf16.mxu0 0
  %683 = vmatpush1.bf16.msra.mxu0 %v503
  %684 = vmatprep.subr.bf16.mxu0 0
  %685 = vmatpush1.bf16.msra.mxu0 %v504
  %686 = vmatprep.subr.bf16.mxu0 0
  %687 = vmatpush1.bf16.msra.mxu0 %v505
  %688 = vmatprep.subr.bf16.mxu0 0
  %689 = vmatpush1.bf16.msra.mxu0 %v506
  %690 = vmatprep.subr.bf16.mxu0 0
  %691 = vmatpush1.bf16.msra.mxu0 %v507
  %692 = vmatprep.subr.bf16.mxu0 0
  %693 = vmatpush1.bf16.msra.mxu0 %v508
  %694 = vmatprep.subr.bf16.mxu0 0
  %695 = vmatpush1.bf16.msra.mxu0 %v509
  %696 = vmatprep.subr.bf16.mxu0 0
  %697 = vmatpush1.bf16.msra.mxu0 %v510
  %698 = vmatprep.subr.bf16.mxu0 0
  %699 = vmatpush1.bf16.msra.mxu0 %v511
  %700 = vmatprep.subr.bf16.mxu0 0
  %701 = vmatpush1.bf16.msra.mxu0 %v512
  %702 = vmatprep.subr.bf16.mxu0 0
  %703 = vmatpush1.bf16.msra.mxu0 %v513
  %704 = vmatprep.subr.bf16.mxu0 0
  %705 = vmatpush1.bf16.msra.mxu0 %v514
  %706 = vmatprep.subr.bf16.mxu0 0
  %707 = vmatpush1.bf16.msra.mxu0 %v515
  %708 = vmatprep.subr.bf16.mxu0 0
  %709 = vmatpush1.bf16.msra.mxu0 %v516
  %710 = vmatprep.subr.bf16.mxu0 0
  %711 = vmatpush1.bf16.msra.mxu0 %v517
  %712 = vmatprep.mubr.bf16.mxu0 %v273
  %713 = vmatmul.mubr.bf16.gmra.mrb[0].mxu0 %v272
  %v714 = vpop.f32.mrb[0].mxu0
  %v715 = vadd.f32 %v618, %v714
  %v716 = vpop.f32.mrb[0].mxu0
  %v717 = vpop.f32.mrb[0].mxu0
  %v718 = vadd.f32 %v621, %v717
  %v719 = vpop.f32.mrb[0].mxu0
  %720 = vmatprep.mubr.bf16.mxu0 %v278
  %721 = vmatmul.mubr.bf16.gmra.mrb[0].mxu0 %v277
  %v722 = vpop.f32.mrb[0].mxu0
  %v723 = vadd.f32 %v626, %v722
  %v724 = vpop.f32.mrb[0].mxu0
  %v725 = vpop.f32.mrb[0].mxu0
  %v726 = vadd.f32 %v629, %v725
  %v727 = vpop.f32.mrb[0].mxu0
  %728 = vmatprep.mubr.bf16.mxu0 %v283
  %729 = vmatmul.mubr.bf16.gmra.mrb[0].mxu0 %v282
  %v730 = vpop.f32.mrb[0].mxu0
  %v731 = vadd.f32 %v634, %v730
  %v732 = vpop.f32.mrb[0].mxu0
  %v733 = vpop.f32.mrb[0].mxu0
  %v734 = vadd.f32 %v637, %v733
  %v735 = vpop.f32.mrb[0].mxu0
  %736 = vmatprep.mubr.bf16.mxu0 %v288
  %737 = vmatmul.mubr.bf16.gmra.mrb[0].mxu0 %v287
  %v738 = vpop.f32.mrb[0].mxu0
  %v739 = vadd.f32 %v642, %v738
  %v740 = vpop.f32.mrb[0].mxu0
  %v741 = vpop.f32.mrb[0].mxu0
  %v742 = vadd.f32 %v645, %v741
  %v743 = vpop.f32.mrb[0].mxu0
  %744 = vmatprep.mubr.bf16.mxu0 %v293
  %745 = vmatmul.mubr.bf16.gmra.mrb[0].mxu0 %v292
  %v746 = vpop.f32.mrb[0].mxu0
  %v747 = vadd.f32 %v650, %v746
  %v748 = vpop.f32.mrb[0].mxu0
  %v749 = vpop.f32.mrb[0].mxu0
  %v750 = vadd.f32 %v653, %v749
  %v751 = vpop.f32.mrb[0].mxu0
  %752 = vmatprep.mubr.bf16.mxu0 %v298
  %753 = vmatmul.mubr.bf16.gmra.mrb[0].mxu0 %v297
  %v754 = vpop.f32.mrb[0].mxu0
  %v755 = vadd.f32 %v658, %v754
  %v756 = vpop.f32.mrb[0].mxu0
  %v757 = vpop.f32.mrb[0].mxu0
  %v758 = vadd.f32 %v661, %v757
  %v759 = vpop.f32.mrb[0].mxu0
  %760 = vmatprep.mubr.bf16.mxu0 %v303
  %761 = vmatmul.mubr.bf16.gmra.mrb[0].mxu0 %v302
  %v762 = vpop.f32.mrb[0].mxu0
  %v763 = vadd.f32 %v666, %v762
  %v764 = vpop.f32.mrb[0].mxu0
  %v765 = vpop.f32.mrb[0].mxu0
  %v766 = vadd.f32 %v669, %v765
  %v767 = vpop.f32.mrb[0].mxu0
  %768 = vmatprep.mubr.bf16.mxu0 %v308
  %769 = vmatmul.mubr.bf16.gmra.mrb[0].mxu0 %v307
  %v770 = vpop.f32.mrb[0].mxu0
  %v771 = vadd.f32 %v674, %v770
  %v772 = vpop.f32.mrb[0].mxu0
  %v773 = vpop.f32.mrb[0].mxu0
  %v774 = vadd.f32 %v677, %v773
  %v775 = vpop.f32.mrb[0].mxu0
  %776 = vdwg.mxu0
  %777 = vmatprep.subr.bf16.mxu0 0
  %778 = vmatpush1.bf16.msra.mxu0 %v518
  %779 = vmatprep.subr.bf16.mxu0 0
  %780 = vmatpush1.bf16.msra.mxu0 %v519
  %781 = vmatprep.subr.bf16.mxu0 0
  %782 = vmatpush1.bf16.msra.mxu0 %v520
  %783 = vmatprep.subr.bf16.mxu0 0
  %784 = vmatpush1.bf16.msra.mxu0 %v521
  %785 = vmatprep.subr.bf16.mxu0 0
  %786 = vmatpush1.bf16.msra.mxu0 0
  %787 = vmatprep.subr.bf16.mxu0 0
  %788 = vmatpush1.bf16.msra.mxu0 0
  %789 = vmatprep.subr.bf16.mxu0 0
  %790 = vmatpush1.bf16.msra.mxu0 0
  %791 = vmatprep.subr.bf16.mxu0 0
  %792 = vmatpush1.bf16.msra.mxu0 0
  %793 = vmatprep.subr.bf16.mxu0 0
  %794 = vmatpush1.bf16.msra.mxu0 0
  %795 = vmatprep.subr.bf16.mxu0 0
  %796 = vmatpush1.bf16.msra.mxu0 0
  %797 = vmatprep.subr.bf16.mxu0 0
  %798 = vmatpush1.bf16.msra.mxu0 0
  %799 = vmatprep.subr.bf16.mxu0 0
  %800 = vmatpush1.bf16.msra.mxu0 0
  %801 = vmatprep.subr.bf16.mxu0 0
  %802 = vmatpush1.bf16.msra.mxu0 0
  %803 = vmatprep.subr.bf16.mxu0 0
  %804 = vmatpush1.bf16.msra.mxu0 0
  %805 = vmatprep.subr.bf16.mxu0 0
  %806 = vmatpush1.bf16.msra.mxu0 0
  %807 = vmatprep.subr.bf16.mxu0 0
  %808 = vmatpush1.bf16.msra.mxu0 0
  %809 = vmatprep.mubr.bf16.mxu0 0
  %810 = vmatmul.mubr.bf16.gmra.mrb[0].mxu0 %v560
  %v811 = vpop.f32.mrb[0].mxu0
  %v812 = vadd.f32 %v715, %v811
  %v813 = vpop.f32.mrb[0].mxu0
  %v814 = vpop.f32.mrb[0].mxu0
  %v815 = vadd.f32 %v718, %v814
  %v816 = vpop.f32.mrb[0].mxu0
  %817 = vmatprep.mubr.bf16.mxu0 0
  %818 = vmatmul.mubr.bf16.gmra.mrb[0].mxu0 %v563
  %v819 = vpop.f32.mrb[0].mxu0
  %v820 = vadd.f32 %v723, %v819
  %v821 = vpop.f32.mrb[0].mxu0
  %v822 = vpop.f32.mrb[0].mxu0
  %v823 = vadd.f32 %v726, %v822
  %v824 = vpop.f32.mrb[0].mxu0
  %825 = vmatprep.mubr.bf16.mxu0 0
  %826 = vmatmul.mubr.bf16.gmra.mrb[0].mxu0 %v566
  %v827 = vpop.f32.mrb[0].mxu0
  %v828 = vadd.f32 %v731, %v827
  %v829 = vpop.f32.mrb[0].mxu0
  %v830 = vpop.f32.mrb[0].mxu0
  %v831 = vadd.f32 %v734, %v830
  %v832 = vpop.f32.mrb[0].mxu0
  %833 = vmatprep.mubr.bf16.mxu0 0
  %834 = vmatmul.mubr.bf16.gmra.mrb[0].mxu0 %v569
  %v835 = vpop.f32.mrb[0].mxu0
  %v836 = vadd.f32 %v739, %v835
  %v837 = vpop.f32.mrb[0].mxu0
  %v838 = vpop.f32.mrb[0].mxu0
  %v839 = vadd.f32 %v742, %v838
  %v840 = vpop.f32.mrb[0].mxu0
  %841 = vmatprep.mubr.bf16.mxu0 0
  %842 = vmatmul.mubr.bf16.gmra.mrb[0].mxu0 %v572
  %v843 = vpop.f32.mrb[0].mxu0
  %v844 = vadd.f32 %v747, %v843
  %v845 = vpop.f32.mrb[0].mxu0
  %v846 = vpop.f32.mrb[0].mxu0
  %v847 = vadd.f32 %v750, %v846
  %v848 = vpop.f32.mrb[0].mxu0
  %849 = vmatprep.mubr.bf16.mxu0 0
  %850 = vmatmul.mubr.bf16.gmra.mrb[0].mxu0 %v575
  %v851 = vpop.f32.mrb[0].mxu0
  %v852 = vadd.f32 %v755, %v851
  %v853 = vpop.f32.mrb[0].mxu0
  %v854 = vpop.f32.mrb[0].mxu0
  %v855 = vadd.f32 %v758, %v854
  %v856 = vpop.f32.mrb[0].mxu0
  %857 = vmatprep.mubr.bf16.mxu0 0
  %858 = vmatmul.mubr.bf16.gmra.mrb[0].mxu0 %v578
  %v859 = vpop.f32.mrb[0].mxu0
  %v860 = vadd.f32 %v763, %v859
  %v861 = vpop.f32.mrb[0].mxu0
  %v862 = vpop.f32.mrb[0].mxu0
  %v863 = vadd.f32 %v766, %v862
  %v864 = vpop.f32.mrb[0].mxu0
  %865 = vmatprep.mubr.bf16.mxu0 0
  %866 = vmatmul.mubr.bf16.gmra.mrb[0].mxu0 %v581
  %v867 = vpop.f32.mrb[0].mxu0
  %v868 = vadd.f32 %v771, %v867
  %v869 = vpop.f32.mrb[0].mxu0
  %v870 = vpop.f32.mrb[0].mxu0
  %v871 = vadd.f32 %v774, %v870
  %v872 = vpop.f32.mrb[0].mxu0
  %873 = vdwg.mxu0
  %v874 = vmax.f32 %v812, 0.0
  %v875 = vmax.f32 %v815, 0.0
  %v876 = vmax.f32 %v820, 0.0
  %v877 = vmax.f32 %v823, 0.0
  %v878 = vmax.f32 %v828, 0.0
  %v879 = vmax.f32 %v831, 0.0
  %v880 = vmax.f32 %v836, 0.0
  %v881 = vmax.f32 %v839, 0.0
  %v882 = vmax.f32 %v844, 0.0
  %v883 = vmax.f32 %v847, 0.0
  %v884 = vmax.f32 %v852, 0.0
  %v885 = vmax.f32 %v855, 0.0
  %v886 = vmax.f32 %v860, 0.0
  %v887 = vmax.f32 %v863, 0.0
  %v888 = vmax.f32 %v868, 0.0
  %v889 = vmax.f32 %v871, 0.0
  %v890 = vpack.c.bf16 %v875, %v874
  %v891 = vpack.c.bf16 %v877, %v876
  %v892 = vpack.c.bf16 %v879, %v878
  %v893 = vpack.c.bf16 %v881, %v880
  %v894 = vpack.c.bf16 %v883, %v882
  %v895 = vpack.c.bf16 %v885, %v884
  %v896 = vpack.c.bf16 %v887, %v886
  %v897 = vpack.c.bf16 %v889, %v888
  %v906 = vunpack.c.l.b16 %v890
  %v907 = vunpack.c.h.b16 %v890
  %v908 = vunpack.c.l.b16 %v891
  %v909 = vunpack.c.h.b16 %v891
  %v910 = vunpack.c.l.b16 %v892
  %v911 = vunpack.c.h.b16 %v892
  %v912 = vunpack.c.l.b16 %v893
  %v913 = vunpack.c.h.b16 %v893
  %v914 = vunpack.c.l.b16 %v894
  %v915 = vunpack.c.h.b16 %v894
  %v916 = vunpack.c.l.b16 %v895
  %v917 = vunpack.c.h.b16 %v895
  %v918 = vunpack.c.l.b16 %v896
  %v919 = vunpack.c.h.b16 %v896
  %v920 = vunpack.c.l.b16 %v897
  %v921 = vunpack.c.h.b16 %v897
  %v922 = vpack.c.b16 %v906, %v906
  %v923 = vpack.c.b16 %v907, %v907
  %v924 = vpack.c.b16 %v908, %v908
  %v925 = vpack.c.b16 %v909, %v909
  %v926 = vpack.c.b16 %v910, %v910
  %v927 = vpack.c.b16 %v911, %v911
  %v928 = vpack.c.b16 %v912, %v912
  %v929 = vpack.c.b16 %v913, %v913
  %v930 = vpack.c.b16 %v914, %v914
  %v931 = vpack.c.b16 %v915, %v915
  %v932 = vpack.c.b16 %v916, %v916
  %v933 = vpack.c.b16 %v917, %v917
  %v934 = vpack.c.b16 %v918, %v918
  %v935 = vpack.c.b16 %v919, %v919
  %v936 = vpack.c.b16 %v920, %v920
  %v937 = vpack.c.b16 %v921, %v921
  %954 = vst [vmem:[%s3] sm:$0xf] %v922
  %955 = vst [vmem:[%s3 + $0x4] sm:$0xf] %v923
  %956 = vst [vmem:[%s3 + $0x8] sm:$0xf] %v924
  %957 = vst [vmem:[%s3 + $0xc] sm:$0xf] %v925
  %958 = vst [vmem:[%s3 + $0x10] sm:$0xf] %v926
  %959 = vst [vmem:[%s3 + $0x14] sm:$0xf] %v927
  %960 = vst [vmem:[%s3 + $0x18] sm:$0xf] %v928
  %961 = vst [vmem:[%s3 + $0x1c] sm:$0xf] %v929
  %962 = vst [vmem:[%s3 + $0x20] sm:$0xf] %v930
  %963 = vst [vmem:[%s3 + $0x24] sm:$0xf] %v931
  %964 = vst [vmem:[%s3 + $0x28] sm:$0xf] %v932
  %965 = vst [vmem:[%s3 + $0x2c] sm:$0xf] %v933
  %966 = vst [vmem:[%s3 + $0x30] sm:$0xf] %v934
  %967 = vst [vmem:[%s3 + $0x34] sm:$0xf] %v935
  %968 = vst [vmem:[%s3 + $0x38] sm:$0xf] %v936
  %969 = vst [vmem:[%s3 + $0x3c] sm:$0xf] %v937
  // Predicated region
  $region14: #{_lambda_.15} parent=0 // pred_check
    _
  $region15: #{_lambda_.15} parent=0 // pred_check_branch
    %971 = sbr.rel (0) target = $region17
  $region16: #{_lambda_.15} parent=0 // pred_region
    _
  $region17: #{_lambda_.15} parent=0 // pred_fallthru
    _
  // Predicated region
  $region18: #{_lambda_.15} parent=0 // pred_check
    _
  $region19: #{_lambda_.15} parent=0 // pred_check_branch
    %973 = sbr.rel (0) target = $region21
  $region20: #{_lambda_.15} parent=0 // pred_region
    _
  $region21: #{_lambda_.15} parent=0 // pred_fallthru
    _

// kernel: _lambda_.16
$region0: #{_lambda_.16}
  #allocation0 [shape = 'u32[]', space=smem, size = 0x4, offset = 0x4, fixed_abs, tag = 'smem constant byte address 0x4 - core index']
  #allocation1 [shape = 'u32[144,128]{1,0:T(1,128)}', space=vmem, size = 0x12000, scoped, tag = 'internal scratch']
  %s0 = inlined_call_operand.vmem [shape: bf16[512,288], index: 0, kind: input, shape index: {}]
  %s1 = inlined_call_operand.vmem [shape: bf16[288,128], index: 1, kind: input, shape index: {}]
  %s2 = inlined_call_operand.vmem [shape: f32[1,128], index: 2, kind: input, shape index: {}]
  %s3 = inlined_call_operand.vmem [shape: bf16[512,128], index: 3, kind: output, shape index: {}]
  %s4 = sld [smem:[#allocation0]]
  $region45: #{_lambda_.16} parent=0
    _
  %s6 = ssub.s32 1, %s4
  %s7 = scalar_select 0, %s6, %s4
  loop: start=0, step=1, limit=4
  $region2: #{_lambda_.16} parent=0 // loop_pre_header
    _
  $region3: #{_lambda_.16} parent=0 // loop_header
    %s9 = sphi 0, %s13
    %p10 = scmp.ge.s32.totalorder %s9, 4
    %s19 = sphi 0, %s21
    %s22 = sphi 0, %s19
    %s23 = sphi 0, %s22
    %s39 = sphi 0, %s23
    %s43 = sphi 0, %s43
    %s45 = sphi 0, %s43
    %s46 = sphi 0, %s45
    %s60 = sphi 0, %s46
    %s64 = sphi 0, %s64
    %s66 = sphi 0, %s64
    %s67 = sphi 0, %s66
    %s81 = sphi 0, %s67
    %s87 = sphi 0, %s89
    %s90 = sphi 0, %s87
    %s91 = sphi 0, %s90
    %s107 = sphi 0, %s91
  $region4: #{_lambda_.16} parent=0 // loop_header_branch
    %12 = sbr.rel (%p10) target = $region8
  $region5: #{_lambda_.16} parent=0 // loop_body
    %s14 = ssub.s32 %s9, 1
    %s15 = ssub.s32 %s9, 2
    %s16 = sadd.s32 %s9, 1
    %s17 = ssub.s32 %s9, %s16
    %p18 = scmp.eq.s32.totalorder %s17, 0
    %s20 = sadd.s32 %s19, 1
    %s21 = scalar_select %p18, %s19, %s20
    %p24 = pneg %p18
    %p25 = scmp.eq.s32.totalorder %s9, 1
    %p26 = por %p24, %p25
    %p27 = scmp.ne.s32.totalorder %s19, %s22
    %p28 = scmp.eq.s32.totalorder %s9, 0
    %p29 = por %p27, %p28
    %p30 = scmp.ne.s32.totalorder %s19, %s22
    %p31 = scmp.eq.s32.totalorder %s14, 1
    %p32 = por %p30, %p31
    %p33 = scmp.ne.s32.totalorder %s22, %s23
    %p34 = scmp.eq.s32.totalorder %s14, 0
    %p35 = por %p33, %p34
    %p36 = scmp.ne.s32.totalorder %s22, %s23
    %p37 = scmp.eq.s32.totalorder %s15, 1
    %p38 = por %p36, %p37
    %p40 = scmp.ne.s32.totalorder %s23, %s39
    %p41 = scmp.eq.s32.totalorder %s15, 0
    %p42 = por %p40, %p41
    %s44 = sadd.s32 %s43, 1
    %p47 = scmp.eq.s32.totalorder %s9, 1
    %p48 = scmp.ne.s32.totalorder %s43, %s45
    %p49 = scmp.eq.s32.totalorder %s9, 0
    %p50 = por %p48, %p49
    %p51 = scmp.ne.s32.totalorder %s43, %s45
    %p52 = scmp.eq.s32.totalorder %s14, 1
    %p53 = por %p51, %p52
    %p54 = scmp.ne.s32.totalorder %s45, %s46
    %p55 = scmp.eq.s32.totalorder %s14, 0
    %p56 = por %p54, %p55
    %p57 = scmp.ne.s32.totalorder %s45, %s46
    %p58 = scmp.eq.s32.totalorder %s15, 1
    %p59 = por %p57, %p58
    %p61 = scmp.ne.s32.totalorder %s46, %s60
    %p62 = scmp.eq.s32.totalorder %s15, 0
    %p63 = por %p61, %p62
    %s65 = sadd.s32 %s64, 1
    %p68 = scmp.eq.s32.totalorder %s9, 1
    %p69 = scmp.ne.s32.totalorder %s64, %s66
    %p70 = scmp.eq.s32.totalorder %s9, 0
    %p71 = por %p69, %p70
    %p72 = scmp.ne.s32.totalorder %s64, %s66
    %p73 = scmp.eq.s32.totalorder %s14, 1
    %p74 = por %p72, %p73
    %p75 = scmp.ne.s32.totalorder %s66, %s67
    %p76 = scmp.eq.s32.totalorder %s14, 0
    %p77 = por %p75, %p76
    %p78 = scmp.ne.s32.totalorder %s66, %s67
    %p79 = scmp.eq.s32.totalorder %s15, 1
    %p80 = por %p78, %p79
    %p82 = scmp.ne.s32.totalorder %s67, %s81
    %p83 = scmp.eq.s32.totalorder %s15, 0
    %p84 = por %p82, %p83
    %s85 = ssub.s32 %s9, %s16
    %p86 = scmp.eq.s32.totalorder %s85, 0
    %s88 = sadd.s32 %s87, 1
    %s89 = scalar_select %p86, %s87, %s88
    %p92 = pneg %p86
    %p93 = scmp.eq.s32.totalorder %s9, 1
    %p94 = por %p92, %p93
    %p95 = scmp.ne.s32.totalorder %s87, %s90
    %p96 = scmp.eq.s32.totalorder %s9, 0
    %p97 = por %p95, %p96
    %p98 = scmp.ne.s32.totalorder %s87, %s90
    %p99 = scmp.eq.s32.totalorder %s14, 1
    %p100 = por %p98, %p99
    %p101 = scmp.ne.s32.totalorder %s90, %s91
    %p102 = scmp.eq.s32.totalorder %s14, 0
    %p103 = por %p101, %p102
    %p104 = scmp.ne.s32.totalorder %s90, %s91
    %p105 = scmp.eq.s32.totalorder %s15, 1
    %p106 = por %p104, %p105
    %p108 = scmp.ne.s32.totalorder %s91, %s107
    %p109 = scmp.eq.s32.totalorder %s15, 0
    %p110 = por %p108, %p109
    %p111 = scmp.le.s32.totalorder 1, %s9
    %p112 = scmp.lt.s32.totalorder %s9, 3
    %p113 = pnand %p111, %p112
    %p114 = pneg %p113
    // Predicated region
    $region9: #{_lambda_.16} parent=5 // pred_check
      _
    $region10: #{_lambda_.16} parent=5 // pred_check_branch
      %116 = sbr.rel (%p113) target = $region12
    $region11: #{_lambda_.16} parent=5 // pred_region
      %s117 = ssub.s32 %s9, 1
      // Predicated region
      $region13: #{_lambda_.16} parent=11 // pred_check
        %p118 = pneg %p56
      $region14: #{_lambda_.16} parent=11 // pred_check_branch
        %120 = sbr.rel (%p118) target = $region16
      $region15: #{_lambda_.16} parent=11 // pred_region
        _
      $region16: #{_lambda_.16} parent=11 // pred_fallthru
        _
      // Predicated region
      $region17: #{_lambda_.16} parent=11 // pred_check
        %p121 = pneg %p77
      $region18: #{_lambda_.16} parent=11 // pred_check_branch
        %123 = sbr.rel (%p121) target = $region20
      $region19: #{_lambda_.16} parent=11 // pred_region
        _
      $region20: #{_lambda_.16} parent=11 // pred_fallthru
        _
    $region12: #{_lambda_.16} parent=5 // pred_fallthru
      _
    %p124 = scmp.lt.s32.totalorder %s9, 2
    // Predicated region
    $region21: #{_lambda_.16} parent=5 // pred_check
      %p125 = pneg %p124
    $region22: #{_lambda_.16} parent=5 // pred_check_branch
      %127 = sbr.rel (%p125) target = $region24
    $region23: #{_lambda_.16} parent=5 // pred_region
      // Predicated region
      $region25: #{_lambda_.16} parent=23 // pred_check
        %p128 = pneg %p29
      $region26: #{_lambda_.16} parent=23 // pred_check_branch
        %130 = sbr.rel (%p128) target = $region28
      $region27: #{_lambda_.16} parent=23 // pred_region
        %s131 = smul.u32 32, %s9
        %p132 = scmp.lt.s32.totalorder %s131, 63
        %s133 = scalar_select %p132, %s131, 63
        %s134 = smul.addr %s133, 3
        %s135 = smul.addr %s134, 4
        %s136 = scalar_lea.vmem %s0, %s135
        %s137 = smul.u32 32, %s9
      $region28: #{_lambda_.16} parent=23 // pred_fallthru
        _
    $region24: #{_lambda_.16} parent=5 // pred_fallthru
      _
    %p138 = scmp.le.s32.totalorder 1, %s9
    %p139 = scmp.lt.s32.totalorder %s9, 3
    %p140 = pnand %p138, %p139
    %p141 = pneg %p140
    // Predicated region
    $region29: #{_lambda_.16} parent=5 // pred_check
      _
    $region30: #{_lambda_.16} parent=5 // pred_check_branch
      %143 = sbr.rel (%p140) target = $region32
    $region31: #{_lambda_.16} parent=5 // pred_region
      %s144 = ssub.s32 %s9, 1
      %s145 = smul.u32 32, %s14
      %p146 = scmp.lt.s32.totalorder %s145, 63
      %s147 = scalar_select %p146, %s145, 63
      %s148 = smul.addr %s147, 3
      %s149 = smul.addr %s148, 4
      %s150 = scalar_lea.vmem %s0, %s149
      %p151 = pneg %p35
      %p152 = pneg %p32
      %p153 = pneg %p56
      %p154 = pneg %p53
      %p155 = pneg %p77
      %p156 = pneg %p74
      %p157 = pneg %p103
      %p158 = pneg %p100
      %s159 = smul.u32 32, %s14
      %p160 = scmp.lt.s32.totalorder %s159, 63
      %s161 = scalar_select %p160, %s159, 63
      %s162 = smul.addr %s161, 4
      %s163 = scalar_lea.vmem %s3, %s162
      %s164 = smul.u32 32, %s14
      %p165 = scmp.lt.s32.totalorder %s164, 63
      %s166 = scalar_select %p165, %s164, 63
      %s167 = smul.addr %s166, 3
      %s168 = smul.addr %s167, 4
      %s169 = scalar_lea.vmem %s0, %s168
      %s170 = smul.u32 32, %s14
      %s171 = smul.u32 32, %s14
      %p172 = scmp.lt.s32.totalorder %s171, 63
      %s173 = scalar_select %p172, %s171, 63
      %s174 = smul.addr %s173, 4
      %s175 = scalar_lea.vmem %s3, %s174
      %s176 = smul.u32 32, %s14
      %v178 = vld [vmem:[%s169] sm:$0xff]
      %v179 = vld [vmem:[%s169 + $0x8] sm:$0xf]
      %v180 = vld [vmem:[%s169 + $0xc] sm:$0xff]
      %v181 = vld [vmem:[%s169 + $0x14] sm:$0xf]
      %v182 = vld [vmem:[%s169 + $0x18] sm:$0xff]
      %v183 = vld [vmem:[%s169 + $0x20] sm:$0xf]
      %v184 = vld [vmem:[%s169 + $0x24] sm:$0xff]
      %v185 = vld [vmem:[%s169 + $0x2c] sm:$0xf]
      %v186 = vld [vmem:[%s169 + $0x30] sm:$0xff]
      %v187 = vld [vmem:[%s169 + $0x38] sm:$0xf]
      %v188 = vld [vmem:[%s169 + $0x3c] sm:$0xff]
      %v189 = vld [vmem:[%s169 + $0x44] sm:$0xf]
      %v190 = vld [vmem:[%s169 + $0x48] sm:$0xff]
      %v191 = vld [vmem:[%s169 + $0x50] sm:$0xf]
      %v192 = vld [vmem:[%s169 + $0x54] sm:$0xff]
      %v193 = vld [vmem:[%s169 + $0x5c] sm:$0xf]
      %v194 = vld [vmem:[%s169 + $0x60] sm:$0xff]
      %v195 = vld [vmem:[%s169 + $0x68] sm:$0xf]
      %v196 = vld [vmem:[%s169 + $0x6c] sm:$0xff]
      %v197 = vld [vmem:[%s169 + $0x74] sm:$0xf]
      %v198 = vld [vmem:[%s169 + $0x78] sm:$0xff]
      %v199 = vld [vmem:[%s169 + $0x80] sm:$0xf]
      %v200 = vld [vmem:[%s169 + $0x84] sm:$0xff]
      %v201 = vld [vmem:[%s169 + $0x8c] sm:$0xf]
      %v202 = vld [vmem:[%s169 + $0x90] sm:$0xff]
      %v203 = vld [vmem:[%s169 + $0x98] sm:$0xf]
      %v204 = vld [vmem:[%s169 + $0x9c] sm:$0xff]
      %v205 = vld [vmem:[%s169 + $0xa4] sm:$0xf]
      %v206 = vld [vmem:[%s169 + $0xa8] sm:$0xff]
      %v207 = vld [vmem:[%s169 + $0xb0] sm:$0xf]
      %v208 = vld [vmem:[%s169 + $0xb4] sm:$0xff]
      %v209 = vld [vmem:[%s169 + $0xbc] sm:$0xf]
      %v210 = vld [vmem:[%s169 + $0xc0] sm:$0xff]
      %v211 = vld [vmem:[%s169 + $0xc8] sm:$0xf]
      %v212 = vld [vmem:[%s169 + $0xcc] sm:$0xff]
      %v213 = vld [vmem:[%s169 + $0xd4] sm:$0xf]
      %v214 = vld [vmem:[%s169 + $0xd8] sm:$0xff]
      %v215 = vld [vmem:[%s169 + $0xe0] sm:$0xf]
      %v216 = vld [vmem:[%s169 + $0xe4] sm:$0xff]
      %v217 = vld [vmem:[%s169 + $0xec] sm:$0xf]
      %v218 = vld [vmem:[%s169 + $0xf0] sm:$0xff]
      %v219 = vld [vmem:[%s169 + $0xf8] sm:$0xf]
      %v220 = vld [vmem:[%s169 + $0xfc] sm:$0xff]
      %v221 = vld [vmem:[%s169 + $0x104] sm:$0xf]
      %v222 = vld [vmem:[%s169 + $0x108] sm:$0xff]
      %v223 = vld [vmem:[%s169 + $0x110] sm:$0xf]
      %v224 = vld [vmem:[%s169 + $0x114] sm:$0xff]
      %v225 = vld [vmem:[%s169 + $0x11c] sm:$0xf]
      %v226 = vld [vmem:[%s169 + $0x120] sm:$0xff]
      %v227 = vld [vmem:[%s169 + $0x128] sm:$0xf]
      %v228 = vld [vmem:[%s169 + $0x12c] sm:$0xff]
      %v229 = vld [vmem:[%s169 + $0x134] sm:$0xf]
      %v230 = vld [vmem:[%s169 + $0x138] sm:$0xff]
      %v231 = vld [vmem:[%s169 + $0x140] sm:$0xf]
      %v232 = vld [vmem:[%s169 + $0x144] sm:$0xff]
      %v233 = vld [vmem:[%s169 + $0x14c] sm:$0xf]
      %v234 = vld [vmem:[%s169 + $0x150] sm:$0xff]
      %v235 = vld [vmem:[%s169 + $0x158] sm:$0xf]
      %v236 = vld [vmem:[%s169 + $0x15c] sm:$0xff]
      %v237 = vld [vmem:[%s169 + $0x164] sm:$0xf]
      %v238 = vld [vmem:[%s169 + $0x168] sm:$0xff]
      %v239 = vld [vmem:[%s169 + $0x170] sm:$0xf]
      %v240 = vld [vmem:[%s169 + $0x174] sm:$0xff]
      %v241 = vld [vmem:[%s169 + $0x17c] sm:$0xf]
      %v242 = vld [vmem:[%s1] sm:$0xf]
      %v243 = vld [vmem:[%s1 + $0x4] sm:$0xf]
      %v244 = vld [vmem:[%s1 + $0x8] sm:$0xf]
      %v245 = vld [vmem:[%s1 + $0xc] sm:$0xf]
      %v246 = vld [vmem:[%s1 + $0x10] sm:$0xf]
      %v247 = vld [vmem:[%s1 + $0x14] sm:$0xf]
      %v248 = vld [vmem:[%s1 + $0x18] sm:$0xf]
      %v249 = vld [vmem:[%s1 + $0x1c] sm:$0xf]
      %v250 = vld [vmem:[%s1 + $0x20] sm:$0xf]
      %v251 = vld [vmem:[%s1 + $0x24] sm:$0xf]
      %v252 = vld [vmem:[%s1 + $0x28] sm:$0xf]
      %v253 = vld [vmem:[%s1 + $0x2c] sm:$0xf]
      %v254 = vld [vmem:[%s1 + $0x30] sm:$0xf]
      %v255 = vld [vmem:[%s1 + $0x34] sm:$0xf]
      %v256 = vld [vmem:[%s1 + $0x38] sm:$0xf]
      %v257 = vld [vmem:[%s1 + $0x3c] sm:$0xf]
      %v258 = vld [vmem:[%s1 + $0x40] sm:$0xf]
      %v259 = vld [vmem:[%s1 + $0x44] sm:$0xf]
      %v260 = vld [vmem:[%s1 + $0x48] sm:$0xf]
      %v261 = vld [vmem:[%s1 + $0x4c] sm:$0xf]
      %v262 = vld [vmem:[%s1 + $0x50] sm:$0xf]
      %v263 = vld [vmem:[%s1 + $0x54] sm:$0xf]
      %v264 = vld [vmem:[%s1 + $0x58] sm:$0xf]
      %v265 = vld [vmem:[%s1 + $0x5c] sm:$0xf]
      %v266 = vld [vmem:[%s1 + $0x60] sm:$0xf]
      %v267 = vld [vmem:[%s1 + $0x64] sm:$0xf]
      %v268 = vld [vmem:[%s1 + $0x68] sm:$0xf]
      %v269 = vld [vmem:[%s1 + $0x6c] sm:$0xf]
      %v270 = vld [vmem:[%s1 + $0x70] sm:$0xf]
      %v271 = vld [vmem:[%s1 + $0x74] sm:$0xf]
      %v272 = vld [vmem:[%s1 + $0x78] sm:$0xf]
      %v273 = vld [vmem:[%s1 + $0x7c] sm:$0xf]
      %v274 = vld [vmem:[%s1 + $0x80] sm:$0xf]
      %v275 = vld [vmem:[%s1 + $0x84] sm:$0xf]
      %v276 = vld [vmem:[%s1 + $0x88] sm:$0xf]
      %v277 = vld [vmem:[%s1 + $0x8c] sm:$0xf]
      %v278 = vld [vmem:[%s2] sm:$0x1]
      %v280 = vlaneseq
      %v281 = vshrl.u32 %v280, 7
      %v282 = vsub.s32 0, %v281
      %v283 = vrot.slane %v278, %v282
      %v349 = vunpack.c.l.b16 %v178
      %v350 = vunpack.c.h.b16 %v178
      %v351 = vunpack.c.l.b16 %v179
      %v352 = vunpack.c.l.b16 %v180
      %v353 = vunpack.c.h.b16 %v180
      %v354 = vunpack.c.l.b16 %v181
      %v355 = vunpack.c.l.b16 %v182
      %v356 = vunpack.c.h.b16 %v182
      %v357 = vunpack.c.l.b16 %v183
      %v358 = vunpack.c.l.b16 %v184
      %v359 = vunpack.c.h.b16 %v184
      %v360 = vunpack.c.l.b16 %v185
      %v361 = vunpack.c.l.b16 %v186
      %v362 = vunpack.c.h.b16 %v186
      %v363 = vunpack.c.l.b16 %v187
      %v364 = vunpack.c.l.b16 %v188
      %v365 = vunpack.c.h.b16 %v188
      %v366 = vunpack.c.l.b16 %v189
      %v367 = vunpack.c.l.b16 %v190
      %v368 = vunpack.c.h.b16 %v190
      %v369 = vunpack.c.l.b16 %v191
      %v370 = vunpack.c.l.b16 %v192
      %v371 = vunpack.c.h.b16 %v192
      %v372 = vunpack.c.l.b16 %v193
      %v373 = vunpack.c.l.b16 %v194
      %v374 = vunpack.c.h.b16 %v194
      %v375 = vunpack.c.l.b16 %v195
      %v376 = vunpack.c.l.b16 %v196
      %v377 = vunpack.c.h.b16 %v196
      %v378 = vunpack.c.l.b16 %v197
      %v379 = vunpack.c.l.b16 %v198
      %v380 = vunpack.c.h.b16 %v198
      %v381 = vunpack.c.l.b16 %v199
      %v382 = vunpack.c.l.b16 %v200
      %v383 = vunpack.c.h.b16 %v200
      %v384 = vunpack.c.l.b16 %v201
      %v385 = vunpack.c.l.b16 %v202
      %v386 = vunpack.c.h.b16 %v202
      %v387 = vunpack.c.l.b16 %v203
      %v388 = vunpack.c.l.b16 %v204
      %v389 = vunpack.c.h.b16 %v204
      %v390 = vunpack.c.l.b16 %v205
      %v391 = vunpack.c.l.b16 %v206
      %v392 = vunpack.c.h.b16 %v206
      %v393 = vunpack.c.l.b16 %v207
      %v394 = vunpack.c.l.b16 %v208
      %v395 = vunpack.c.h.b16 %v208
      %v396 = vunpack.c.l.b16 %v209
      %v397 = vunpack.c.l.b16 %v210
      %v398 = vunpack.c.h.b16 %v210
      %v399 = vunpack.c.l.b16 %v211
      %v400 = vunpack.c.l.b16 %v212
      %v401 = vunpack.c.h.b16 %v212
      %v402 = vunpack.c.l.b16 %v213
      %v403 = vunpack.c.l.b16 %v214
      %v404 = vunpack.c.h.b16 %v214
      %v405 = vunpack.c.l.b16 %v215
      %v406 = vunpack.c.l.b16 %v216
      %v407 = vunpack.c.h.b16 %v216
      %v408 = vunpack.c.l.b16 %v217
      %v409 = vunpack.c.l.b16 %v218
      %v410 = vunpack.c.h.b16 %v218
      %v411 = vunpack.c.l.b16 %v219
      %v412 = vunpack.c.l.b16 %v220
      %v413 = vunpack.c.h.b16 %v220
      %v414 = vunpack.c.l.b16 %v221
      %v415 = vunpack.c.l.b16 %v222
      %v416 = vunpack.c.h.b16 %v222
      %v417 = vunpack.c.l.b16 %v223
      %v418 = vunpack.c.l.b16 %v224
      %v419 = vunpack.c.h.b16 %v224
      %v420 = vunpack.c.l.b16 %v225
      %v421 = vunpack.c.l.b16 %v226
      %v422 = vunpack.c.h.b16 %v226
      %v423 = vunpack.c.l.b16 %v227
      %v424 = vunpack.c.l.b16 %v228
      %v425 = vunpack.c.h.b16 %v228
      %v426 = vunpack.c.l.b16 %v229
      %v427 = vunpack.c.l.b16 %v230
      %v428 = vunpack.c.h.b16 %v230
      %v429 = vunpack.c.l.b16 %v231
      %v430 = vunpack.c.l.b16 %v232
      %v431 = vunpack.c.h.b16 %v232
      %v432 = vunpack.c.l.b16 %v233
      %v433 = vunpack.c.l.b16 %v234
      %v434 = vunpack.c.h.b16 %v234
      %v435 = vunpack.c.l.b16 %v235
      %v436 = vunpack.c.l.b16 %v236
      %v437 = vunpack.c.h.b16 %v236
      %v438 = vunpack.c.l.b16 %v237
      %v439 = vunpack.c.l.b16 %v238
      %v440 = vunpack.c.h.b16 %v238
      %v441 = vunpack.c.l.b16 %v239
      %v442 = vunpack.c.l.b16 %v240
      %v443 = vunpack.c.h.b16 %v240
      %v444 = vunpack.c.l.b16 %v241
      %v445 = vpack.c.b16 %v352, %v349
      %v446 = vpack.c.b16 %v353, %v350
      %v447 = vpack.c.b16 %v354, %v351
      %v448 = vpack.c.b16 %v358, %v355
      %v449 = vpack.c.b16 %v359, %v356
      %v450 = vpack.c.b16 %v360, %v357
      %v451 = vpack.c.b16 %v364, %v361
      %v452 = vpack.c.b16 %v365, %v362
      %v453 = vpack.c.b16 %v366, %v363
      %v454 = vpack.c.b16 %v370, %v367
      %v455 = vpack.c.b16 %v371, %v368
      %v456 = vpack.c.b16 %v372, %v369
      %v457 = vpack.c.b16 %v376, %v373
      %v458 = vpack.c.b16 %v377, %v374
      %v459 = vpack.c.b16 %v378, %v375
      %v460 = vpack.c.b16 %v382, %v379
      %v461 = vpack.c.b16 %v383, %v380
      %v462 = vpack.c.b16 %v384, %v381
      %v463 = vpack.c.b16 %v388, %v385
      %v464 = vpack.c.b16 %v389, %v386
      %v465 = vpack.c.b16 %v390, %v387
      %v466 = vpack.c.b16 %v394, %v391
      %v467 = vpack.c.b16 %v395, %v392
      %v468 = vpack.c.b16 %v396, %v393
      %v469 = vpack.c.b16 %v400, %v397
      %v470 = vpack.c.b16 %v401, %v398
      %v471 = vpack.c.b16 %v402, %v399
      %v472 = vpack.c.b16 %v406, %v403
      %v473 = vpack.c.b16 %v407, %v404
      %v474 = vpack.c.b16 %v408, %v405
      %v475 = vpack.c.b16 %v412, %v409
      %v476 = vpack.c.b16 %v413, %v410
      %v477 = vpack.c.b16 %v414, %v411
      %v478 = vpack.c.b16 %v418, %v415
      %v479 = vpack.c.b16 %v419, %v416
      %v480 = vpack.c.b16 %v420, %v417
      %v481 = vpack.c.b16 %v424, %v421
      %v482 = vpack.c.b16 %v425, %v422
      %v483 = vpack.c.b16 %v426, %v423
      %v484 = vpack.c.b16 %v430, %v427
      %v485 = vpack.c.b16 %v431, %v428
      %v486 = vpack.c.b16 %v432, %v429
      %v487 = vpack.c.b16 %v436, %v433
      %v488 = vpack.c.b16 %v437, %v434
      %v489 = vpack.c.b16 %v438, %v435
      %v490 = vpack.c.b16 %v442, %v439
      %v491 = vpack.c.b16 %v443, %v440
      %v492 = vpack.c.b16 %v444, %v441
      %v561 = vunpack.c.l.b16 %v242
      %v562 = vunpack.c.l.b16 %v243
      %v563 = vunpack.c.l.b16 %v244
      %v564 = vunpack.c.l.b16 %v245
      %v565 = vunpack.c.l.b16 %v246
      %v566 = vunpack.c.l.b16 %v247
      %v567 = vunpack.c.l.b16 %v248
      %v568 = vunpack.c.l.b16 %v249
      %v569 = vunpack.c.l.b16 %v250
      %v570 = vunpack.c.l.b16 %v251
      %v571 = vunpack.c.l.b16 %v252
      %v572 = vunpack.c.l.b16 %v253
      %v573 = vunpack.c.l.b16 %v254
      %v574 = vunpack.c.l.b16 %v255
      %v575 = vunpack.c.l.b16 %v256
      %v576 = vunpack.c.l.b16 %v257
      %v577 = vunpack.c.l.b16 %v258
      %v578 = vunpack.c.l.b16 %v259
      %v579 = vunpack.c.l.b16 %v260
      %v580 = vunpack.c.l.b16 %v261
      %v581 = vunpack.c.l.b16 %v262
      %v582 = vunpack.c.l.b16 %v263
      %v583 = vunpack.c.l.b16 %v264
      %v584 = vunpack.c.l.b16 %v265
      %v585 = vunpack.c.l.b16 %v266
      %v586 = vunpack.c.l.b16 %v267
      %v587 = vunpack.c.l.b16 %v268
      %v588 = vunpack.c.l.b16 %v269
      %v589 = vunpack.c.l.b16 %v270
      %v590 = vunpack.c.l.b16 %v271
      %v591 = vunpack.c.l.b16 %v272
      %v592 = vunpack.c.l.b16 %v273
      %v593 = vunpack.c.l.b16 %v274
      %v594 = vunpack.c.l.b16 %v275
      %v595 = vunpack.c.l.b16 %v276
      %v596 = vunpack.c.l.b16 %v277
      %v597 = vpack.c.b16 %v562, %v561
      %v598 = vpack.c.b16 %v564, %v563
      %v599 = vpack.c.b16 %v566, %v565
      %v600 = vpack.c.b16 %v568, %v567
      %v601 = vpack.c.b16 %v570, %v569
      %v602 = vpack.c.b16 %v572, %v571
      %v603 = vpack.c.b16 %v574, %v573
      %v604 = vpack.c.b16 %v576, %v575
      %v605 = vpack.c.b16 %v578, %v577
      %v606 = vpack.c.b16 %v580, %v579
      %v607 = vpack.c.b16 %v582, %v581
      %v608 = vpack.c.b16 %v584, %v583
      %v609 = vpack.c.b16 %v586, %v585
      %v610 = vpack.c.b16 %v588, %v587
      %v611 = vpack.c.b16 %v590, %v589
      %v612 = vpack.c.b16 %v592, %v591
      %v613 = vpack.c.b16 %v594, %v593
      %v614 = vpack.c.b16 %v596, %v595
      %vm633 = vcmask 261120
      %v635 = vsel %vm633, %v447, 0
      %v638 = vsel %vm633, %v450, 0
      %v641 = vsel %vm633, %v453, 0
      %v644 = vsel %vm633, %v456, 0
      %v647 = vsel %vm633, %v459, 0
      %v650 = vsel %vm633, %v462, 0
      %v653 = vsel %vm633, %v465, 0
      %v656 = vsel %vm633, %v468, 0
      %v659 = vsel %vm633, %v471, 0
      %v662 = vsel %vm633, %v474, 0
      %v665 = vsel %vm633, %v477, 0
      %v668 = vsel %vm633, %v480, 0
      %v671 = vsel %vm633, %v483, 0
      %v674 = vsel %vm633, %v486, 0
      %v677 = vsel %vm633, %v489, 0
      %v680 = vsel %vm633, %v492, 0
      %682 = vmatprep.subr.bf16.mxu0 0
      %683 = vmatpush1.bf16.msra.mxu0 %v597
      %684 = vmatprep.subr.bf16.mxu0 0
      %685 = vmatpush1.bf16.msra.mxu0 %v598
      %686 = vmatprep.subr.bf16.mxu0 0
      %687 = vmatpush1.bf16.msra.mxu0 %v599
      %688 = vmatprep.subr.bf16.mxu0 0
      %689 = vmatpush1.bf16.msra.mxu0 %v600
      %690 = vmatprep.subr.bf16.mxu0 0
      %691 = vmatpush1.bf16.msra.mxu0 %v601
      %692 = vmatprep.subr.bf16.mxu0 0
      %693 = vmatpush1.bf16.msra.mxu0 %v602
      %694 = vmatprep.subr.bf16.mxu0 0
      %695 = vmatpush1.bf16.msra.mxu0 %v603
      %696 = vmatprep.subr.bf16.mxu0 0
      %697 = vmatpush1.bf16.msra.mxu0 %v604
      %698 = vmatprep.subr.bf16.mxu0 0
      %699 = vmatpush1.bf16.msra.mxu0 %v605
      %700 = vmatprep.subr.bf16.mxu0 0
      %701 = vmatpush1.bf16.msra.mxu0 %v606
      %702 = vmatprep.subr.bf16.mxu0 0
      %703 = vmatpush1.bf16.msra.mxu0 %v607
      %704 = vmatprep.subr.bf16.mxu0 0
      %705 = vmatpush1.bf16.msra.mxu0 %v608
      %706 = vmatprep.subr.bf16.mxu0 0
      %707 = vmatpush1.bf16.msra.mxu0 %v609
      %708 = vmatprep.subr.bf16.mxu0 0
      %709 = vmatpush1.bf16.msra.mxu0 %v610
      %710 = vmatprep.subr.bf16.mxu0 0
      %711 = vmatpush1.bf16.msra.mxu0 %v611
      %712 = vmatprep.subr.bf16.mxu0 0
      %713 = vmatpush1.bf16.msra.mxu0 %v612
      %714 = vmatprep.mubr.bf16.mxu0 %v446
      %715 = vmatmul.mubr.bf16.gmra.mrb[0].mxu0 %v445
      %v716 = vpop.f32.mrb[0].mxu0
      %v717 = vadd.f32 %v283, %v716
      %v718 = vpop.f32.mrb[0].mxu0
      %v719 = vpop.f32.mrb[0].mxu0
      %v720 = vadd.f32 %v283, %v719
      %v721 = vpop.f32.mrb[0].mxu0
      %722 = vmatprep.mubr.bf16.mxu0 %v449
      %723 = vmatmul.mubr.bf16.gmra.mrb[0].mxu0 %v448
      %v724 = vpop.f32.mrb[0].mxu0
      %v725 = vadd.f32 %v283, %v724
      %v726 = vpop.f32.mrb[0].mxu0
      %v727 = vpop.f32.mrb[0].mxu0
      %v728 = vadd.f32 %v283, %v727
      %v729 = vpop.f32.mrb[0].mxu0
      %730 = vmatprep.mubr.bf16.mxu0 %v452
      %731 = vmatmul.mubr.bf16.gmra.mrb[0].mxu0 %v451
      %v732 = vpop.f32.mrb[0].mxu0
      %v733 = vadd.f32 %v283, %v732
      %v734 = vpop.f32.mrb[0].mxu0
      %v735 = vpop.f32.mrb[0].mxu0
      %v736 = vadd.f32 %v283, %v735
      %v737 = vpop.f32.mrb[0].mxu0
      %738 = vmatprep.mubr.bf16.mxu0 %v455
      %739 = vmatmul.mubr.bf16.gmra.mrb[0].mxu0 %v454
      %v740 = vpop.f32.mrb[0].mxu0
      %v741 = vadd.f32 %v283, %v740
      %v742 = vpop.f32.mrb[0].mxu0
      %v743 = vpop.f32.mrb[0].mxu0
      %v744 = vadd.f32 %v283, %v743
      %v745 = vpop.f32.mrb[0].mxu0
      %746 = vmatprep.mubr.bf16.mxu0 %v458
      %747 = vmatmul.mubr.bf16.gmra.mrb[0].mxu0 %v457
      %v748 = vpop.f32.mrb[0].mxu0
      %v749 = vadd.f32 %v283, %v748
      %v750 = vpop.f32.mrb[0].mxu0
      %v751 = vpop.f32.mrb[0].mxu0
      %v752 = vadd.f32 %v283, %v751
      %v753 = vpop.f32.mrb[0].mxu0
      %754 = vmatprep.mubr.bf16.mxu0 %v461
      %755 = vmatmul.mubr.bf16.gmra.mrb[0].mxu0 %v460
      %v756 = vpop.f32.mrb[0].mxu0
      %v757 = vadd.f32 %v283, %v756
      %v758 = vpop.f32.mrb[0].mxu0
      %v759 = vpop.f32.mrb[0].mxu0
      %v760 = vadd.f32 %v283, %v759
      %v761 = vpop.f32.mrb[0].mxu0
      %762 = vmatprep.mubr.bf16.mxu0 %v464
      %763 = vmatmul.mubr.bf16.gmra.mrb[0].mxu0 %v463
      %v764 = vpop.f32.mrb[0].mxu0
      %v765 = vadd.f32 %v283, %v764
      %v766 = vpop.f32.mrb[0].mxu0
      %v767 = vpop.f32.mrb[0].mxu0
      %v768 = vadd.f32 %v283, %v767
      %v769 = vpop.f32.mrb[0].mxu0
      %770 = vmatprep.mubr.bf16.mxu0 %v467
      %771 = vmatmul.mubr.bf16.gmra.mrb[0].mxu0 %v466
      %v772 = vpop.f32.mrb[0].mxu0
      %v773 = vadd.f32 %v283, %v772
      %v774 = vpop.f32.mrb[0].mxu0
      %v775 = vpop.f32.mrb[0].mxu0
      %v776 = vadd.f32 %v283, %v775
      %v777 = vpop.f32.mrb[0].mxu0
      %778 = vmatprep.mubr.bf16.mxu0 %v470
      %779 = vmatmul.mubr.bf16.gmra.mrb[0].mxu0 %v469
      %v780 = vpop.f32.mrb[0].mxu0
      %v781 = vadd.f32 %v283, %v780
      %v782 = vpop.f32.mrb[0].mxu0
      %v783 = vpop.f32.mrb[0].mxu0
      %v784 = vadd.f32 %v283, %v783
      %v785 = vpop.f32.mrb[0].mxu0
      %786 = vmatprep.mubr.bf16.mxu0 %v473
      %787 = vmatmul.mubr.bf16.gmra.mrb[0].mxu0 %v472
      %v788 = vpop.f32.mrb[0].mxu0
      %v789 = vadd.f32 %v283, %v788
      %v790 = vpop.f32.mrb[0].mxu0
      %v791 = vpop.f32.mrb[0].mxu0
      %v792 = vadd.f32 %v283, %v791
      %v793 = vpop.f32.mrb[0].mxu0
      %794 = vmatprep.mubr.bf16.mxu0 %v476
      %795 = vmatmul.mubr.bf16.gmra.mrb[0].mxu0 %v475
      %v796 = vpop.f32.mrb[0].mxu0
      %v797 = vadd.f32 %v283, %v796
      %v798 = vpop.f32.mrb[0].mxu0
      %v799 = vpop.f32.mrb[0].mxu0
      %v800 = vadd.f32 %v283, %v799
      %v801 = vpop.f32.mrb[0].mxu0
      %802 = vmatprep.mubr.bf16.mxu0 %v479
      %803 = vmatmul.mubr.bf16.gmra.mrb[0].mxu0 %v478
      %v804 = vpop.f32.mrb[0].mxu0
      %v805 = vadd.f32 %v283, %v804
      %v806 = vpop.f32.mrb[0].mxu0
      %v807 = vpop.f32.mrb[0].mxu0
      %v808 = vadd.f32 %v283, %v807
      %v809 = vpop.f32.mrb[0].mxu0
      %810 = vmatprep.mubr.bf16.mxu0 %v482
      %811 = vmatmul.mubr.bf16.gmra.mrb[0].mxu0 %v481
      %v812 = vpop.f32.mrb[0].mxu0
      %v813 = vadd.f32 %v283, %v812
      %v814 = vpop.f32.mrb[0].mxu0
      %v815 = vpop.f32.mrb[0].mxu0
      %v816 = vadd.f32 %v283, %v815
      %v817 = vpop.f32.mrb[0].mxu0
      %818 = vmatprep.mubr.bf16.mxu0 %v485
      %819 = vmatmul.mubr.bf16.gmra.mrb[0].mxu0 %v484
      %v820 = vpop.f32.mrb[0].mxu0
      %v821 = vadd.f32 %v283, %v820
      %v822 = vpop.f32.mrb[0].mxu0
      %v823 = vpop.f32.mrb[0].mxu0
      %v824 = vadd.f32 %v283, %v823
      %v825 = vpop.f32.mrb[0].mxu0
      %826 = vmatprep.mubr.bf16.mxu0 %v488
      %827 = vmatmul.mubr.bf16.gmra.mrb[0].mxu0 %v487
      %v828 = vpop.f32.mrb[0].mxu0
      %v829 = vadd.f32 %v283, %v828
      %v830 = vpop.f32.mrb[0].mxu0
      %v831 = vpop.f32.mrb[0].mxu0
      %v832 = vadd.f32 %v283, %v831
      %v833 = vpop.f32.mrb[0].mxu0
      %834 = vmatprep.mubr.bf16.mxu0 %v491
      %835 = vmatmul.mubr.bf16.gmra.mrb[0].mxu0 %v490
      %v836 = vpop.f32.mrb[0].mxu0
      %v837 = vadd.f32 %v283, %v836
      %v838 = vpop.f32.mrb[0].mxu0
      %v839 = vpop.f32.mrb[0].mxu0
      %v840 = vadd.f32 %v283, %v839
      %v841 = vpop.f32.mrb[0].mxu0
      %842 = vdwg.mxu0
      %843 = vmatprep.subr.bf16.mxu0 0
      %844 = vmatpush1.bf16.msra.mxu0 %v613
      %845 = vmatprep.subr.bf16.mxu0 0
      %846 = vmatpush1.bf16.msra.mxu0 %v614
      %847 = vmatprep.subr.bf16.mxu0 0
      %848 = vmatpush1.bf16.msra.mxu0 0
      %849 = vmatprep.subr.bf16.mxu0 0
      %850 = vmatpush1.bf16.msra.mxu0 0
      %851 = vmatprep.subr.bf16.mxu0 0
      %852 = vmatpush1.bf16.msra.mxu0 0
      %853 = vmatprep.subr.bf16.mxu0 0
      %854 = vmatpush1.bf16.msra.mxu0 0
      %855 = vmatprep.subr.bf16.mxu0 0
      %856 = vmatpush1.bf16.msra.mxu0 0
      %857 = vmatprep.subr.bf16.mxu0 0
      %858 = vmatpush1.bf16.msra.mxu0 0
      %859 = vmatprep.subr.bf16.mxu0 0
      %860 = vmatpush1.bf16.msra.mxu0 0
      %861 = vmatprep.subr.bf16.mxu0 0
      %862 = vmatpush1.bf16.msra.mxu0 0
      %863 = vmatprep.subr.bf16.mxu0 0
      %864 = vmatpush1.bf16.msra.mxu0 0
      %865 = vmatprep.subr.bf16.mxu0 0
      %866 = vmatpush1.bf16.msra.mxu0 0
      %867 = vmatprep.subr.bf16.mxu0 0
      %868 = vmatpush1.bf16.msra.mxu0 0
      %869 = vmatprep.subr.bf16.mxu0 0
      %870 = vmatpush1.bf16.msra.mxu0 0
      %871 = vmatprep.subr.bf16.mxu0 0
      %872 = vmatpush1.bf16.msra.mxu0 0
      %873 = vmatprep.subr.bf16.mxu0 0
      %874 = vmatpush1.bf16.msra.mxu0 0
      %875 = vmatprep.mubr.bf16.mxu0 0
      %876 = vmatmul.mubr.bf16.gmra.mrb[0].mxu0 %v635
      %v877 = vpop.f32.mrb[0].mxu0
      %v878 = vadd.f32 %v717, %v877
      %v879 = vpop.f32.mrb[0].mxu0
      %v880 = vpop.f32.mrb[0].mxu0
      %v881 = vadd.f32 %v720, %v880
      %v882 = vpop.f32.mrb[0].mxu0
      %883 = vmatprep.mubr.bf16.mxu0 0
      %884 = vmatmul.mubr.bf16.gmra.mrb[0].mxu0 %v638
      %v885 = vpop.f32.mrb[0].mxu0
      %v886 = vadd.f32 %v725, %v885
      %v887 = vpop.f32.mrb[0].mxu0
      %v888 = vpop.f32.mrb[0].mxu0
      %v889 = vadd.f32 %v728, %v888
      %v890 = vpop.f32.mrb[0].mxu0
      %891 = vmatprep.mubr.bf16.mxu0 0
      %892 = vmatmul.mubr.bf16.gmra.mrb[0].mxu0 %v641
      %v893 = vpop.f32.mrb[0].mxu0
      %v894 = vadd.f32 %v733, %v893
      %v895 = vpop.f32.mrb[0].mxu0
      %v896 = vpop.f32.mrb[0].mxu0
      %v897 = vadd.f32 %v736, %v896
      %v898 = vpop.f32.mrb[0].mxu0
      %899 = vmatprep.mubr.bf16.mxu0 0
      %900 = vmatmul.mubr.bf16.gmra.mrb[0].mxu0 %v644
      %v901 = vpop.f32.mrb[0].mxu0
      %v902 = vadd.f32 %v741, %v901
      %v903 = vpop.f32.mrb[0].mxu0
      %v904 = vpop.f32.mrb[0].mxu0
      %v905 = vadd.f32 %v744, %v904
      %v906 = vpop.f32.mrb[0].mxu0
      %907 = vmatprep.mubr.bf16.mxu0 0
      %908 = vmatmul.mubr.bf16.gmra.mrb[0].mxu0 %v647
      %v909 = vpop.f32.mrb[0].mxu0
      %v910 = vadd.f32 %v749, %v909
      %v911 = vpop.f32.mrb[0].mxu0
      %v912 = vpop.f32.mrb[0].mxu0
      %v913 = vadd.f32 %v752, %v912
      %v914 = vpop.f32.mrb[0].mxu0
      %915 = vmatprep.mubr.bf16.mxu0 0
      %916 = vmatmul.mubr.bf16.gmra.mrb[0].mxu0 %v650
      %v917 = vpop.f32.mrb[0].mxu0
      %v918 = vadd.f32 %v757, %v917
      %v919 = vpop.f32.mrb[0].mxu0
      %v920 = vpop.f32.mrb[0].mxu0
      %v921 = vadd.f32 %v760, %v920
      %v922 = vpop.f32.mrb[0].mxu0
      %923 = vmatprep.mubr.bf16.mxu0 0
      %924 = vmatmul.mubr.bf16.gmra.mrb[0].mxu0 %v653
      %v925 = vpop.f32.mrb[0].mxu0
      %v926 = vadd.f32 %v765, %v925
      %v927 = vpop.f32.mrb[0].mxu0
      %v928 = vpop.f32.mrb[0].mxu0
      %v929 = vadd.f32 %v768, %v928
      %v930 = vpop.f32.mrb[0].mxu0
      %931 = vmatprep.mubr.bf16.mxu0 0
      %932 = vmatmul.mubr.bf16.gmra.mrb[0].mxu0 %v656
      %v933 = vpop.f32.mrb[0].mxu0
      %v934 = vadd.f32 %v773, %v933
      %v935 = vpop.f32.mrb[0].mxu0
      %v936 = vpop.f32.mrb[0].mxu0
      %v937 = vadd.f32 %v776, %v936
      %v938 = vpop.f32.mrb[0].mxu0
      %939 = vmatprep.mubr.bf16.mxu0 0
      %940 = vmatmul.mubr.bf16.gmra.mrb[0].mxu0 %v659
      %v941 = vpop.f32.mrb[0].mxu0
      %v942 = vadd.f32 %v781, %v941
      %v943 = vpop.f32.mrb[0].mxu0
      %v944 = vpop.f32.mrb[0].mxu0
      %v945 = vadd.f32 %v784, %v944
      %v946 = vpop.f32.mrb[0].mxu0
      %947 = vmatprep.mubr.bf16.mxu0 0
      %948 = vmatmul.mubr.bf16.gmra.mrb[0].mxu0 %v662
      %v949 = vpop.f32.mrb[0].mxu0
      %v950 = vadd.f32 %v789, %v949
      %v951 = vpop.f32.mrb[0].mxu0
      %v952 = vpop.f32.mrb[0].mxu0
      %v953 = vadd.f32 %v792, %v952
      %v954 = vpop.f32.mrb[0].mxu0
      %955 = vmatprep.mubr.bf16.mxu0 0
      %956 = vmatmul.mubr.bf16.gmra.mrb[0].mxu0 %v665
      %v957 = vpop.f32.mrb[0].mxu0
      %v958 = vadd.f32 %v797, %v957
      %v959 = vpop.f32.mrb[0].mxu0
      %v960 = vpop.f32.mrb[0].mxu0
      %v961 = vadd.f32 %v800, %v960
      %v962 = vpop.f32.mrb[0].mxu0
      %963 = vmatprep.mubr.bf16.mxu0 0
      %964 = vmatmul.mubr.bf16.gmra.mrb[0].mxu0 %v668
      %v965 = vpop.f32.mrb[0].mxu0
      %v966 = vadd.f32 %v805, %v965
      %v967 = vpop.f32.mrb[0].mxu0
      %v968 = vpop.f32.mrb[0].mxu0
      %v969 = vadd.f32 %v808, %v968
      %v970 = vpop.f32.mrb[0].mxu0
      %971 = vmatprep.mubr.bf16.mxu0 0
      %972 = vmatmul.mubr.bf16.gmra.mrb[0].mxu0 %v671
      %v973 = vpop.f32.mrb[0].mxu0
      %v974 = vadd.f32 %v813, %v973
      %v975 = vpop.f32.mrb[0].mxu0
      %v976 = vpop.f32.mrb[0].mxu0
      %v977 = vadd.f32 %v816, %v976
      %v978 = vpop.f32.mrb[0].mxu0
      %979 = vmatprep.mubr.bf16.mxu0 0
      %980 = vmatmul.mubr.bf16.gmra.mrb[0].mxu0 %v674
      %v981 = vpop.f32.mrb[0].mxu0
      %v982 = vadd.f32 %v821, %v981
      %v983 = vpop.f32.mrb[0].mxu0
      %v984 = vpop.f32.mrb[0].mxu0
      %v985 = vadd.f32 %v824, %v984
      %v986 = vpop.f32.mrb[0].mxu0
      %987 = vmatprep.mubr.bf16.mxu0 0
      %988 = vmatmul.mubr.bf16.gmra.mrb[0].mxu0 %v677
      %v989 = vpop.f32.mrb[0].mxu0
      %v990 = vadd.f32 %v829, %v989
      %v991 = vpop.f32.mrb[0].mxu0
      %v992 = vpop.f32.mrb[0].mxu0
      %v993 = vadd.f32 %v832, %v992
      %v994 = vpop.f32.mrb[0].mxu0
      %995 = vmatprep.mubr.bf16.mxu0 0
      %996 = vmatmul.mubr.bf16.gmra.mrb[0].mxu0 %v680
      %v997 = vpop.f32.mrb[0].mxu0
      %v998 = vadd.f32 %v837, %v997
      %v999 = vpop.f32.mrb[0].mxu0
      %v1000 = vpop.f32.mrb[0].mxu0
      %v1001 = vadd.f32 %v840, %v1000
      %v1002 = vpop.f32.mrb[0].mxu0
      %1003 = vdwg.mxu0
      %v1004 = vmax.f32 %v878, 0.0
      %v1005 = vmax.f32 %v881, 0.0
      %v1006 = vmax.f32 %v886, 0.0
      %v1007 = vmax.f32 %v889, 0.0
      %v1008 = vmax.f32 %v894, 0.0
      %v1009 = vmax.f32 %v897, 0.0
      %v1010 = vmax.f32 %v902, 0.0
      %v1011 = vmax.f32 %v905, 0.0
      %v1012 = vmax.f32 %v910, 0.0
      %v1013 = vmax.f32 %v913, 0.0
      %v1014 = vmax.f32 %v918, 0.0
      %v1015 = vmax.f32 %v921, 0.0
      %v1016 = vmax.f32 %v926, 0.0
      %v1017 = vmax.f32 %v929, 0.0
      %v1018 = vmax.f32 %v934, 0.0
      %v1019 = vmax.f32 %v937, 0.0
      %v1020 = vmax.f32 %v942, 0.0
      %v1021 = vmax.f32 %v945, 0.0
      %v1022 = vmax.f32 %v950, 0.0
      %v1023 = vmax.f32 %v953, 0.0
      %v1024 = vmax.f32 %v958, 0.0
      %v1025 = vmax.f32 %v961, 0.0
      %v1026 = vmax.f32 %v966, 0.0
      %v1027 = vmax.f32 %v969, 0.0
      %v1028 = vmax.f32 %v974, 0.0
      %v1029 = vmax.f32 %v977, 0.0
      %v1030 = vmax.f32 %v982, 0.0
      %v1031 = vmax.f32 %v985, 0.0
      %v1032 = vmax.f32 %v990, 0.0
      %v1033 = vmax.f32 %v993, 0.0
      %v1034 = vmax.f32 %v998, 0.0
      %v1035 = vmax.f32 %v1001, 0.0
      %v1036 = vpack.c.bf16 %v1005, %v1004
      %v1037 = vpack.c.bf16 %v1007, %v1006
      %v1038 = vpack.c.bf16 %v1009, %v1008
      %v1039 = vpack.c.bf16 %v1011, %v1010
      %v1040 = vpack.c.bf16 %v1013, %v1012
      %v1041 = vpack.c.bf16 %v1015, %v1014
      %v1042 = vpack.c.bf16 %v1017, %v1016
      %v1043 = vpack.c.bf16 %v1019, %v1018
      %v1044 = vpack.c.bf16 %v1021, %v1020
      %v1045 = vpack.c.bf16 %v1023, %v1022
      %v1046 = vpack.c.bf16 %v1025, %v1024
      %v1047 = vpack.c.bf16 %v1027, %v1026
      %v1048 = vpack.c.bf16 %v1029, %v1028
      %v1049 = vpack.c.bf16 %v1031, %v1030
      %v1050 = vpack.c.bf16 %v1033, %v1032
      %v1051 = vpack.c.bf16 %v1035, %v1034
      %v1068 = vunpack.c.l.b16 %v1036
      %v1069 = vunpack.c.h.b16 %v1036
      %v1070 = vunpack.c.l.b16 %v1037
      %v1071 = vunpack.c.h.b16 %v1037
      %v1072 = vunpack.c.l.b16 %v1038
      %v1073 = vunpack.c.h.b16 %v1038
      %v1074 = vunpack.c.l.b16 %v1039
      %v1075 = vunpack.c.h.b16 %v1039
      %v1076 = vunpack.c.l.b16 %v1040
      %v1077 = vunpack.c.h.b16 %v1040
      %v1078 = vunpack.c.l.b16 %v1041
      %v1079 = vunpack.c.h.b16 %v1041
      %v1080 = vunpack.c.l.b16 %v1042
      %v1081 = vunpack.c.h.b16 %v1042
      %v1082 = vunpack.c.l.b16 %v1043
      %v1083 = vunpack.c.h.b16 %v1043
      %v1084 = vunpack.c.l.b16 %v1044
      %v1085 = vunpack.c.h.b16 %v1044
      %v1086 = vunpack.c.l.b16 %v1045
      %v1087 = vunpack.c.h.b16 %v1045
      %v1088 = vunpack.c.l.b16 %v1046
      %v1089 = vunpack.c.h.b16 %v1046
      %v1090 = vunpack.c.l.b16 %v1047
      %v1091 = vunpack.c.h.b16 %v1047
      %v1092 = vunpack.c.l.b16 %v1048
      %v1093 = vunpack.c.h.b16 %v1048
      %v1094 = vunpack.c.l.b16 %v1049
      %v1095 = vunpack.c.h.b16 %v1049
      %v1096 = vunpack.c.l.b16 %v1050
      %v1097 = vunpack.c.h.b16 %v1050
      %v1098 = vunpack.c.l.b16 %v1051
      %v1099 = vunpack.c.h.b16 %v1051
      %v1100 = vpack.c.b16 %v1068, %v1068
      %v1101 = vpack.c.b16 %v1069, %v1069
      %v1102 = vpack.c.b16 %v1070, %v1070
      %v1103 = vpack.c.b16 %v1071, %v1071
      %v1104 = vpack.c.b16 %v1072, %v1072
      %v1105 = vpack.c.b16 %v1073, %v1073
      %v1106 = vpack.c.b16 %v1074, %v1074
      %v1107 = vpack.c.b16 %v1075, %v1075
      %v1108 = vpack.c.b16 %v1076, %v1076
      %v1109 = vpack.c.b16 %v1077, %v1077
      %v1110 = vpack.c.b16 %v1078, %v1078
      %v1111 = vpack.c.b16 %v1079, %v1079
      %v1112 = vpack.c.b16 %v1080, %v1080
      %v1113 = vpack.c.b16 %v1081, %v1081
      %v1114 = vpack.c.b16 %v1082, %v1082
      %v1115 = vpack.c.b16 %v1083, %v1083
      %v1116 = vpack.c.b16 %v1084, %v1084
      %v1117 = vpack.c.b16 %v1085, %v1085
      %v1118 = vpack.c.b16 %v1086, %v1086
      %v1119 = vpack.c.b16 %v1087, %v1087
      %v1120 = vpack.c.b16 %v1088, %v1088
      %v1121 = vpack.c.b16 %v1089, %v1089
      %v1122 = vpack.c.b16 %v1090, %v1090
      %v1123 = vpack.c.b16 %v1091, %v1091
      %v1124 = vpack.c.b16 %v1092, %v1092
      %v1125 = vpack.c.b16 %v1093, %v1093
      %v1126 = vpack.c.b16 %v1094, %v1094
      %v1127 = vpack.c.b16 %v1095, %v1095
      %v1128 = vpack.c.b16 %v1096, %v1096
      %v1129 = vpack.c.b16 %v1097, %v1097
      %v1130 = vpack.c.b16 %v1098, %v1098
      %v1131 = vpack.c.b16 %v1099, %v1099
      %1164 = vst [vmem:[%s175] sm:$0xf] %v1100
      %1165 = vst [vmem:[%s175 + $0x4] sm:$0xf] %v1101
      %1166 = vst [vmem:[%s175 + $0x8] sm:$0xf] %v1102
      %1167 = vst [vmem:[%s175 + $0xc] sm:$0xf] %v1103
      %1168 = vst [vmem:[%s175 + $0x10] sm:$0xf] %v1104
      %1169 = vst [vmem:[%s175 + $0x14] sm:$0xf] %v1105
      %1170 = vst [vmem:[%s175 + $0x18] sm:$0xf] %v1106
      %1171 = vst [vmem:[%s175 + $0x1c] sm:$0xf] %v1107
      %1172 = vst [vmem:[%s175 + $0x20] sm:$0xf] %v1108
      %1173 = vst [vmem:[%s175 + $0x24] sm:$0xf] %v1109
      %1174 = vst [vmem:[%s175 + $0x28] sm:$0xf] %v1110
      %1175 = vst [vmem:[%s175 + $0x2c] sm:$0xf] %v1111
      %1176 = vst [vmem:[%s175 + $0x30] sm:$0xf] %v1112
      %1177 = vst [vmem:[%s175 + $0x34] sm:$0xf] %v1113
      %1178 = vst [vmem:[%s175 + $0x38] sm:$0xf] %v1114
      %1179 = vst [vmem:[%s175 + $0x3c] sm:$0xf] %v1115
      %1180 = vst [vmem:[%s175 + $0x40] sm:$0xf] %v1116
      %1181 = vst [vmem:[%s175 + $0x44] sm:$0xf] %v1117
      %1182 = vst [vmem:[%s175 + $0x48] sm:$0xf] %v1118
      %1183 = vst [vmem:[%s175 + $0x4c] sm:$0xf] %v1119
      %1184 = vst [vmem:[%s175 + $0x50] sm:$0xf] %v1120
      %1185 = vst [vmem:[%s175 + $0x54] sm:$0xf] %v1121
      %1186 = vst [vmem:[%s175 + $0x58] sm:$0xf] %v1122
      %1187 = vst [vmem:[%s175 + $0x5c] sm:$0xf] %v1123
      %1188 = vst [vmem:[%s175 + $0x60] sm:$0xf] %v1124
      %1189 = vst [vmem:[%s175 + $0x64] sm:$0xf] %v1125
      %1190 = vst [vmem:[%s175 + $0x68] sm:$0xf] %v1126
      %1191 = vst [vmem:[%s175 + $0x6c] sm:$0xf] %v1127
      %1192 = vst [vmem:[%s175 + $0x70] sm:$0xf] %v1128
      %1193 = vst [vmem:[%s175 + $0x74] sm:$0xf] %v1129
      %1194 = vst [vmem:[%s175 + $0x78] sm:$0xf] %v1130
      %1195 = vst [vmem:[%s175 + $0x7c] sm:$0xf] %v1131
      %s1196 = smul.u32 32, %s14
      %p1197 = scmp.lt.s32.totalorder %s1196, 63
      %s1198 = scalar_select %p1197, %s1196, 63
      %s1199 = smul.addr %s1198, 4
      %s1200 = scalar_lea.vmem %s3, %s1199
      // Predicated region
      $region33: #{_lambda_.16} parent=31 // pred_check
        %p1201 = pneg %p100
      $region34: #{_lambda_.16} parent=31 // pred_check_branch
        %1203 = sbr.rel (%p1201) target = $region36
      $region35: #{_lambda_.16} parent=31 // pred_region
        %s1204 = smul.u32 32, %s14
      $region36: #{_lambda_.16} parent=31 // pred_fallthru
        _
    $region32: #{_lambda_.16} parent=5 // pred_fallthru
      _
    %p1205 = scmp.le.s32.totalorder 2, %s9
    // Predicated region
    $region37: #{_lambda_.16} parent=5 // pred_check
      %p1206 = pneg %p1205
    $region38: #{_lambda_.16} parent=5 // pred_check_branch
      %1208 = sbr.rel (%p1206) target = $region40
    $region39: #{_lambda_.16} parent=5 // pred_region
      %s1209 = ssub.s32 %s9, 2
      // Predicated region
      $region41: #{_lambda_.16} parent=39 // pred_check
        %p1210 = pneg %p106
      $region42: #{_lambda_.16} parent=39 // pred_check_branch
        %1212 = sbr.rel (%p1210) target = $region44
      $region43: #{_lambda_.16} parent=39 // pred_region
        %s1213 = smul.u32 32, %s15
        %p1214 = scmp.lt.s32.totalorder %s1213, 63
        %s1215 = scalar_select %p1214, %s1213, 63
        %s1216 = smul.addr %s1215, 4
        %s1217 = scalar_lea.vmem %s3, %s1216
      $region44: #{_lambda_.16} parent=39 // pred_fallthru
        _
    $region40: #{_lambda_.16} parent=5 // pred_fallthru
      _
  $region6: #{_lambda_.16} parent=0 // loop_footer
    %s13 = sadd.s32 1, %s9
  $region7: #{_lambda_.16} parent=0 // loop_footer_branch
    %8 = sbr.rel target = $region3
  $region8: #{_lambda_.16} parent=0 // loop_exit
    _

// kernel: _lambda_.17
$region0: #{_lambda_.17}
  #allocation0 [shape = 'u32[]', space=smem, size = 0x4, offset = 0x4, fixed_abs, tag = 'smem constant byte address 0x4 - core index']
  #allocation1 [shape = 'u32[144,128]{1,0:T(1,128)}', space=vmem, size = 0x12000, scoped, tag = 'internal scratch']
  %s0 = inlined_call_operand.vmem [shape: bf16[2048,288], index: 0, kind: input, shape index: {}]
  %s1 = inlined_call_operand.vmem [shape: bf16[288,4], index: 1, kind: input, shape index: {}]
  %s2 = inlined_call_operand.vmem [shape: f32[1,4], index: 2, kind: input, shape index: {}]
  %s3 = inlined_call_operand.vmem [shape: f32[2048,4], index: 3, kind: output, shape index: {}]
  %s4 = sld [smem:[#allocation0]]
  $region45: #{_lambda_.17} parent=0
    _
  %s6 = ssub.s32 1, %s4
  %s7 = scalar_select 0, %s6, %s4
  loop: start=0, step=1, limit=4
  $region2: #{_lambda_.17} parent=0 // loop_pre_header
    _
  $region3: #{_lambda_.17} parent=0 // loop_header
    %s9 = sphi 0, %s13
    %p10 = scmp.ge.s32.totalorder %s9, 4
    %s19 = sphi 0, %s21
    %s22 = sphi 0, %s19
    %s23 = sphi 0, %s22
    %s39 = sphi 0, %s23
    %s43 = sphi 0, %s43
    %s45 = sphi 0, %s43
    %s46 = sphi 0, %s45
    %s60 = sphi 0, %s46
    %s64 = sphi 0, %s64
    %s66 = sphi 0, %s64
    %s67 = sphi 0, %s66
    %s81 = sphi 0, %s67
    %s87 = sphi 0, %s89
    %s90 = sphi 0, %s87
    %s91 = sphi 0, %s90
    %s107 = sphi 0, %s91
  $region4: #{_lambda_.17} parent=0 // loop_header_branch
    %12 = sbr.rel (%p10) target = $region8
  $region5: #{_lambda_.17} parent=0 // loop_body
    %s14 = ssub.s32 %s9, 1
    %s15 = ssub.s32 %s9, 2
    %s16 = sadd.s32 %s9, 1
    %s17 = ssub.s32 %s9, %s16
    %p18 = scmp.eq.s32.totalorder %s17, 0
    %s20 = sadd.s32 %s19, 1
    %s21 = scalar_select %p18, %s19, %s20
    %p24 = pneg %p18
    %p25 = scmp.eq.s32.totalorder %s9, 1
    %p26 = por %p24, %p25
    %p27 = scmp.ne.s32.totalorder %s19, %s22
    %p28 = scmp.eq.s32.totalorder %s9, 0
    %p29 = por %p27, %p28
    %p30 = scmp.ne.s32.totalorder %s19, %s22
    %p31 = scmp.eq.s32.totalorder %s14, 1
    %p32 = por %p30, %p31
    %p33 = scmp.ne.s32.totalorder %s22, %s23
    %p34 = scmp.eq.s32.totalorder %s14, 0
    %p35 = por %p33, %p34
    %p36 = scmp.ne.s32.totalorder %s22, %s23
    %p37 = scmp.eq.s32.totalorder %s15, 1
    %p38 = por %p36, %p37
    %p40 = scmp.ne.s32.totalorder %s23, %s39
    %p41 = scmp.eq.s32.totalorder %s15, 0
    %p42 = por %p40, %p41
    %s44 = sadd.s32 %s43, 1
    %p47 = scmp.eq.s32.totalorder %s9, 1
    %p48 = scmp.ne.s32.totalorder %s43, %s45
    %p49 = scmp.eq.s32.totalorder %s9, 0
    %p50 = por %p48, %p49
    %p51 = scmp.ne.s32.totalorder %s43, %s45
    %p52 = scmp.eq.s32.totalorder %s14, 1
    %p53 = por %p51, %p52
    %p54 = scmp.ne.s32.totalorder %s45, %s46
    %p55 = scmp.eq.s32.totalorder %s14, 0
    %p56 = por %p54, %p55
    %p57 = scmp.ne.s32.totalorder %s45, %s46
    %p58 = scmp.eq.s32.totalorder %s15, 1
    %p59 = por %p57, %p58
    %p61 = scmp.ne.s32.totalorder %s46, %s60
    %p62 = scmp.eq.s32.totalorder %s15, 0
    %p63 = por %p61, %p62
    %s65 = sadd.s32 %s64, 1
    %p68 = scmp.eq.s32.totalorder %s9, 1
    %p69 = scmp.ne.s32.totalorder %s64, %s66
    %p70 = scmp.eq.s32.totalorder %s9, 0
    %p71 = por %p69, %p70
    %p72 = scmp.ne.s32.totalorder %s64, %s66
    %p73 = scmp.eq.s32.totalorder %s14, 1
    %p74 = por %p72, %p73
    %p75 = scmp.ne.s32.totalorder %s66, %s67
    %p76 = scmp.eq.s32.totalorder %s14, 0
    %p77 = por %p75, %p76
    %p78 = scmp.ne.s32.totalorder %s66, %s67
    %p79 = scmp.eq.s32.totalorder %s15, 1
    %p80 = por %p78, %p79
    %p82 = scmp.ne.s32.totalorder %s67, %s81
    %p83 = scmp.eq.s32.totalorder %s15, 0
    %p84 = por %p82, %p83
    %s85 = ssub.s32 %s9, %s16
    %p86 = scmp.eq.s32.totalorder %s85, 0
    %s88 = sadd.s32 %s87, 1
    %s89 = scalar_select %p86, %s87, %s88
    %p92 = pneg %p86
    %p93 = scmp.eq.s32.totalorder %s9, 1
    %p94 = por %p92, %p93
    %p95 = scmp.ne.s32.totalorder %s87, %s90
    %p96 = scmp.eq.s32.totalorder %s9, 0
    %p97 = por %p95, %p96
    %p98 = scmp.ne.s32.totalorder %s87, %s90
    %p99 = scmp.eq.s32.totalorder %s14, 1
    %p100 = por %p98, %p99
    %p101 = scmp.ne.s32.totalorder %s90, %s91
    %p102 = scmp.eq.s32.totalorder %s14, 0
    %p103 = por %p101, %p102
    %p104 = scmp.ne.s32.totalorder %s90, %s91
    %p105 = scmp.eq.s32.totalorder %s15, 1
    %p106 = por %p104, %p105
    %p108 = scmp.ne.s32.totalorder %s91, %s107
    %p109 = scmp.eq.s32.totalorder %s15, 0
    %p110 = por %p108, %p109
    %p111 = scmp.le.s32.totalorder 1, %s9
    %p112 = scmp.lt.s32.totalorder %s9, 3
    %p113 = pnand %p111, %p112
    %p114 = pneg %p113
    // Predicated region
    $region9: #{_lambda_.17} parent=5 // pred_check
      _
    $region10: #{_lambda_.17} parent=5 // pred_check_branch
      %116 = sbr.rel (%p113) target = $region12
    $region11: #{_lambda_.17} parent=5 // pred_region
      %s117 = ssub.s32 %s9, 1
      // Predicated region
      $region13: #{_lambda_.17} parent=11 // pred_check
        %p118 = pneg %p56
      $region14: #{_lambda_.17} parent=11 // pred_check_branch
        %120 = sbr.rel (%p118) target = $region16
      $region15: #{_lambda_.17} parent=11 // pred_region
        _
      $region16: #{_lambda_.17} parent=11 // pred_fallthru
        _
      // Predicated region
      $region17: #{_lambda_.17} parent=11 // pred_check
        %p121 = pneg %p77
      $region18: #{_lambda_.17} parent=11 // pred_check_branch
        %123 = sbr.rel (%p121) target = $region20
      $region19: #{_lambda_.17} parent=11 // pred_region
        _
      $region20: #{_lambda_.17} parent=11 // pred_fallthru
        _
    $region12: #{_lambda_.17} parent=5 // pred_fallthru
      _
    %p124 = scmp.lt.s32.totalorder %s9, 2
    // Predicated region
    $region21: #{_lambda_.17} parent=5 // pred_check
      %p125 = pneg %p124
    $region22: #{_lambda_.17} parent=5 // pred_check_branch
      %127 = sbr.rel (%p125) target = $region24
    $region23: #{_lambda_.17} parent=5 // pred_region
      // Predicated region
      $region25: #{_lambda_.17} parent=23 // pred_check
        %p128 = pneg %p29
      $region26: #{_lambda_.17} parent=23 // pred_check_branch
        %130 = sbr.rel (%p128) target = $region28
      $region27: #{_lambda_.17} parent=23 // pred_region
        %s131 = smul.u32 128, %s9
        %p132 = scmp.lt.s32.totalorder %s131, 255
        %s133 = scalar_select %p132, %s131, 255
        %s134 = smul.addr %s133, 3
        %s135 = smul.addr %s134, 4
        %s136 = scalar_lea.vmem %s0, %s135
        %s137 = smul.u32 128, %s9
      $region28: #{_lambda_.17} parent=23 // pred_fallthru
        _
    $region24: #{_lambda_.17} parent=5 // pred_fallthru
      _
    %p138 = scmp.le.s32.totalorder 1, %s9
    %p139 = scmp.lt.s32.totalorder %s9, 3
    %p140 = pnand %p138, %p139
    %p141 = pneg %p140
    // Predicated region
    $region29: #{_lambda_.17} parent=5 // pred_check
      _
    $region30: #{_lambda_.17} parent=5 // pred_check_branch
      %143 = sbr.rel (%p140) target = $region32
    $region31: #{_lambda_.17} parent=5 // pred_region
      %s144 = ssub.s32 %s9, 1
      %s145 = smul.u32 128, %s14
      %p146 = scmp.lt.s32.totalorder %s145, 255
      %s147 = scalar_select %p146, %s145, 255
      %s148 = smul.addr %s147, 3
      %s149 = smul.addr %s148, 4
      %s150 = scalar_lea.vmem %s0, %s149
      %p151 = pneg %p35
      %p152 = pneg %p32
      %p153 = pneg %p56
      %p154 = pneg %p53
      %p155 = pneg %p77
      %p156 = pneg %p74
      %p157 = pneg %p103
      %p158 = pneg %p100
      %s159 = smul.u32 128, %s14
      %p160 = scmp.lt.s32.totalorder %s159, 255
      %s161 = scalar_select %p160, %s159, 255
      %s162 = smul.addr %s161, 8
      %s163 = scalar_lea.vmem %s3, %s162
      %s164 = smul.u32 128, %s14
      %p165 = scmp.lt.s32.totalorder %s164, 255
      %s166 = scalar_select %p165, %s164, 255
      %s167 = smul.addr %s166, 3
      %s168 = smul.addr %s167, 4
      %s169 = scalar_lea.vmem %s0, %s168
      %s170 = smul.u32 128, %s14
      %s171 = smul.u32 128, %s14
      %p172 = scmp.lt.s32.totalorder %s171, 255
      %s173 = scalar_select %p172, %s171, 255
      %s174 = smul.addr %s173, 8
      %s175 = scalar_lea.vmem %s3, %s174
      %s176 = smul.u32 128, %s14
      %v178 = vld [vmem:[%s169] sm:$0xff]
      %v179 = vld [vmem:[%s169 + $0x8] sm:$0xf]
      %v180 = vld [vmem:[%s169 + $0xc] sm:$0xff]
      %v181 = vld [vmem:[%s169 + $0x14] sm:$0xf]
      %v182 = vld [vmem:[%s169 + $0x18] sm:$0xff]
      %v183 = vld [vmem:[%s169 + $0x20] sm:$0xf]
      %v184 = vld [vmem:[%s169 + $0x24] sm:$0xff]
      %v185 = vld [vmem:[%s169 + $0x2c] sm:$0xf]
      %v186 = vld [vmem:[%s169 + $0x30] sm:$0xff]
      %v187 = vld [vmem:[%s169 + $0x38] sm:$0xf]
      %v188 = vld [vmem:[%s169 + $0x3c] sm:$0xff]
      %v189 = vld [vmem:[%s169 + $0x44] sm:$0xf]
      %v190 = vld [vmem:[%s169 + $0x48] sm:$0xff]
      %v191 = vld [vmem:[%s169 + $0x50] sm:$0xf]
      %v192 = vld [vmem:[%s169 + $0x54] sm:$0xff]
      %v193 = vld [vmem:[%s169 + $0x5c] sm:$0xf]
      %v194 = vld [vmem:[%s169 + $0x60] sm:$0xff]
      %v195 = vld [vmem:[%s169 + $0x68] sm:$0xf]
      %v196 = vld [vmem:[%s169 + $0x6c] sm:$0xff]
      %v197 = vld [vmem:[%s169 + $0x74] sm:$0xf]
      %v198 = vld [vmem:[%s169 + $0x78] sm:$0xff]
      %v199 = vld [vmem:[%s169 + $0x80] sm:$0xf]
      %v200 = vld [vmem:[%s169 + $0x84] sm:$0xff]
      %v201 = vld [vmem:[%s169 + $0x8c] sm:$0xf]
      %v202 = vld [vmem:[%s169 + $0x90] sm:$0xff]
      %v203 = vld [vmem:[%s169 + $0x98] sm:$0xf]
      %v204 = vld [vmem:[%s169 + $0x9c] sm:$0xff]
      %v205 = vld [vmem:[%s169 + $0xa4] sm:$0xf]
      %v206 = vld [vmem:[%s169 + $0xa8] sm:$0xff]
      %v207 = vld [vmem:[%s169 + $0xb0] sm:$0xf]
      %v208 = vld [vmem:[%s169 + $0xb4] sm:$0xff]
      %v209 = vld [vmem:[%s169 + $0xbc] sm:$0xf]
      %v210 = vld [vmem:[%s169 + $0xc0] sm:$0xff]
      %v211 = vld [vmem:[%s169 + $0xc8] sm:$0xf]
      %v212 = vld [vmem:[%s169 + $0xcc] sm:$0xff]
      %v213 = vld [vmem:[%s169 + $0xd4] sm:$0xf]
      %v214 = vld [vmem:[%s169 + $0xd8] sm:$0xff]
      %v215 = vld [vmem:[%s169 + $0xe0] sm:$0xf]
      %v216 = vld [vmem:[%s169 + $0xe4] sm:$0xff]
      %v217 = vld [vmem:[%s169 + $0xec] sm:$0xf]
      %v218 = vld [vmem:[%s169 + $0xf0] sm:$0xff]
      %v219 = vld [vmem:[%s169 + $0xf8] sm:$0xf]
      %v220 = vld [vmem:[%s169 + $0xfc] sm:$0xff]
      %v221 = vld [vmem:[%s169 + $0x104] sm:$0xf]
      %v222 = vld [vmem:[%s169 + $0x108] sm:$0xff]
      %v223 = vld [vmem:[%s169 + $0x110] sm:$0xf]
      %v224 = vld [vmem:[%s169 + $0x114] sm:$0xff]
      %v225 = vld [vmem:[%s169 + $0x11c] sm:$0xf]
      %v226 = vld [vmem:[%s169 + $0x120] sm:$0xff]
      %v227 = vld [vmem:[%s169 + $0x128] sm:$0xf]
      %v228 = vld [vmem:[%s169 + $0x12c] sm:$0xff]
      %v229 = vld [vmem:[%s169 + $0x134] sm:$0xf]
      %v230 = vld [vmem:[%s169 + $0x138] sm:$0xff]
      %v231 = vld [vmem:[%s169 + $0x140] sm:$0xf]
      %v232 = vld [vmem:[%s169 + $0x144] sm:$0xff]
      %v233 = vld [vmem:[%s169 + $0x14c] sm:$0xf]
      %v234 = vld [vmem:[%s169 + $0x150] sm:$0xff]
      %v235 = vld [vmem:[%s169 + $0x158] sm:$0xf]
      %v236 = vld [vmem:[%s169 + $0x15c] sm:$0xff]
      %v237 = vld [vmem:[%s169 + $0x164] sm:$0xf]
      %v238 = vld [vmem:[%s169 + $0x168] sm:$0xff]
      %v239 = vld [vmem:[%s169 + $0x170] sm:$0xf]
      %v240 = vld [vmem:[%s169 + $0x174] sm:$0xff]
      %v241 = vld [vmem:[%s169 + $0x17c] sm:$0xf]
      %v242 = vld [vmem:[%s169 + $0x180] sm:$0xff]
      %v243 = vld [vmem:[%s169 + $0x188] sm:$0xf]
      %v244 = vld [vmem:[%s169 + $0x18c] sm:$0xff]
      %v245 = vld [vmem:[%s169 + $0x194] sm:$0xf]
      %v246 = vld [vmem:[%s169 + $0x198] sm:$0xff]
      %v247 = vld [vmem:[%s169 + $0x1a0] sm:$0xf]
      %v248 = vld [vmem:[%s169 + $0x1a4] sm:$0xff]
      %v249 = vld [vmem:[%s169 + $0x1ac] sm:$0xf]
      %v250 = vld [vmem:[%s169 + $0x1b0] sm:$0xff]
      %v251 = vld [vmem:[%s169 + $0x1b8] sm:$0xf]
      %v252 = vld [vmem:[%s169 + $0x1bc] sm:$0xff]
      %v253 = vld [vmem:[%s169 + $0x1c4] sm:$0xf]
      %v254 = vld [vmem:[%s169 + $0x1c8] sm:$0xff]
      %v255 = vld [vmem:[%s169 + $0x1d0] sm:$0xf]
      %v256 = vld [vmem:[%s169 + $0x1d4] sm:$0xff]
      %v257 = vld [vmem:[%s169 + $0x1dc] sm:$0xf]
      %v258 = vld [vmem:[%s169 + $0x1e0] sm:$0xff]
      %v259 = vld [vmem:[%s169 + $0x1e8] sm:$0xf]
      %v260 = vld [vmem:[%s169 + $0x1ec] sm:$0xff]
      %v261 = vld [vmem:[%s169 + $0x1f4] sm:$0xf]
      %v262 = vld [vmem:[%s169 + $0x1f8] sm:$0xff]
      %v263 = vld [vmem:[%s169 + $0x200] sm:$0xf]
      %v264 = vld [vmem:[%s169 + $0x204] sm:$0xff]
      %v265 = vld [vmem:[%s169 + $0x20c] sm:$0xf]
      %v266 = vld [vmem:[%s169 + $0x210] sm:$0xff]
      %v267 = vld [vmem:[%s169 + $0x218] sm:$0xf]
      %v268 = vld [vmem:[%s169 + $0x21c] sm:$0xff]
      %v269 = vld [vmem:[%s169 + $0x224] sm:$0xf]
      %v270 = vld [vmem:[%s169 + $0x228] sm:$0xff]
      %v271 = vld [vmem:[%s169 + $0x230] sm:$0xf]
      %v272 = vld [vmem:[%s169 + $0x234] sm:$0xff]
      %v273 = vld [vmem:[%s169 + $0x23c] sm:$0xf]
      %v274 = vld [vmem:[%s169 + $0x240] sm:$0xff]
      %v275 = vld [vmem:[%s169 + $0x248] sm:$0xf]
      %v276 = vld [vmem:[%s169 + $0x24c] sm:$0xff]
      %v277 = vld [vmem:[%s169 + $0x254] sm:$0xf]
      %v278 = vld [vmem:[%s169 + $0x258] sm:$0xff]
      %v279 = vld [vmem:[%s169 + $0x260] sm:$0xf]
      %v280 = vld [vmem:[%s169 + $0x264] sm:$0xff]
      %v281 = vld [vmem:[%s169 + $0x26c] sm:$0xf]
      %v282 = vld [vmem:[%s169 + $0x270] sm:$0xff]
      %v283 = vld [vmem:[%s169 + $0x278] sm:$0xf]
      %v284 = vld [vmem:[%s169 + $0x27c] sm:$0xff]
      %v285 = vld [vmem:[%s169 + $0x284] sm:$0xf]
      %v286 = vld [vmem:[%s169 + $0x288] sm:$0xff]
      %v287 = vld [vmem:[%s169 + $0x290] sm:$0xf]
      %v288 = vld [vmem:[%s169 + $0x294] sm:$0xff]
      %v289 = vld [vmem:[%s169 + $0x29c] sm:$0xf]
      %v290 = vld [vmem:[%s169 + $0x2a0] sm:$0xff]
      %v291 = vld [vmem:[%s169 + $0x2a8] sm:$0xf]
      %v292 = vld [vmem:[%s169 + $0x2ac] sm:$0xff]
      %v293 = vld [vmem:[%s169 + $0x2b4] sm:$0xf]
      %v294 = vld [vmem:[%s169 + $0x2b8] sm:$0xff]
      %v295 = vld [vmem:[%s169 + $0x2c0] sm:$0xf]
      %v296 = vld [vmem:[%s169 + $0x2c4] sm:$0xff]
      %v297 = vld [vmem:[%s169 + $0x2cc] sm:$0xf]
      %v298 = vld [vmem:[%s169 + $0x2d0] sm:$0xff]
      %v299 = vld [vmem:[%s169 + $0x2d8] sm:$0xf]
      %v300 = vld [vmem:[%s169 + $0x2dc] sm:$0xff]
      %v301 = vld [vmem:[%s169 + $0x2e4] sm:$0xf]
      %v302 = vld [vmem:[%s169 + $0x2e8] sm:$0xff]
      %v303 = vld [vmem:[%s169 + $0x2f0] sm:$0xf]
      %v304 = vld [vmem:[%s169 + $0x2f4] sm:$0xff]
      %v305 = vld [vmem:[%s169 + $0x2fc] sm:$0xf]
      %v306 = vld [vmem:[%s169 + $0x300] sm:$0xff]
      %v307 = vld [vmem:[%s169 + $0x308] sm:$0xf]
      %v308 = vld [vmem:[%s169 + $0x30c] sm:$0xff]
      %v309 = vld [vmem:[%s169 + $0x314] sm:$0xf]
      %v310 = vld [vmem:[%s169 + $0x318] sm:$0xff]
      %v311 = vld [vmem:[%s169 + $0x320] sm:$0xf]
      %v312 = vld [vmem:[%s169 + $0x324] sm:$0xff]
      %v313 = vld [vmem:[%s169 + $0x32c] sm:$0xf]
      %v314 = vld [vmem:[%s169 + $0x330] sm:$0xff]
      %v315 = vld [vmem:[%s169 + $0x338] sm:$0xf]
      %v316 = vld [vmem:[%s169 + $0x33c] sm:$0xff]
      %v317 = vld [vmem:[%s169 + $0x344] sm:$0xf]
      %v318 = vld [vmem:[%s169 + $0x348] sm:$0xff]
      %v319 = vld [vmem:[%s169 + $0x350] sm:$0xf]
      %v320 = vld [vmem:[%s169 + $0x354] sm:$0xff]
      %v321 = vld [vmem:[%s169 + $0x35c] sm:$0xf]
      %v322 = vld [vmem:[%s169 + $0x360] sm:$0xff]
      %v323 = vld [vmem:[%s169 + $0x368] sm:$0xf]
      %v324 = vld [vmem:[%s169 + $0x36c] sm:$0xff]
      %v325 = vld [vmem:[%s169 + $0x374] sm:$0xf]
      %v326 = vld [vmem:[%s169 + $0x378] sm:$0xff]
      %v327 = vld [vmem:[%s169 + $0x380] sm:$0xf]
      %v328 = vld [vmem:[%s169 + $0x384] sm:$0xff]
      %v329 = vld [vmem:[%s169 + $0x38c] sm:$0xf]
      %v330 = vld [vmem:[%s169 + $0x390] sm:$0xff]
      %v331 = vld [vmem:[%s169 + $0x398] sm:$0xf]
      %v332 = vld [vmem:[%s169 + $0x39c] sm:$0xff]
      %v333 = vld [vmem:[%s169 + $0x3a4] sm:$0xf]
      %v334 = vld [vmem:[%s169 + $0x3a8] sm:$0xff]
      %v335 = vld [vmem:[%s169 + $0x3b0] sm:$0xf]
      %v336 = vld [vmem:[%s169 + $0x3b4] sm:$0xff]
      %v337 = vld [vmem:[%s169 + $0x3bc] sm:$0xf]
      %v338 = vld [vmem:[%s169 + $0x3c0] sm:$0xff]
      %v339 = vld [vmem:[%s169 + $0x3c8] sm:$0xf]
      %v340 = vld [vmem:[%s169 + $0x3cc] sm:$0xff]
      %v341 = vld [vmem:[%s169 + $0x3d4] sm:$0xf]
      %v342 = vld [vmem:[%s169 + $0x3d8] sm:$0xff]
      %v343 = vld [vmem:[%s169 + $0x3e0] sm:$0xf]
      %v344 = vld [vmem:[%s169 + $0x3e4] sm:$0xff]
      %v345 = vld [vmem:[%s169 + $0x3ec] sm:$0xf]
      %v346 = vld [vmem:[%s169 + $0x3f0] sm:$0xff]
      %v347 = vld [vmem:[%s169 + $0x3f8] sm:$0xf]
      %v348 = vld [vmem:[%s169 + $0x3fc] sm:$0xff]
      %v349 = vld [vmem:[%s169 + $0x404] sm:$0xf]
      %v350 = vld [vmem:[%s169 + $0x408] sm:$0xff]
      %v351 = vld [vmem:[%s169 + $0x410] sm:$0xf]
      %v352 = vld [vmem:[%s169 + $0x414] sm:$0xff]
      %v353 = vld [vmem:[%s169 + $0x41c] sm:$0xf]
      %v354 = vld [vmem:[%s169 + $0x420] sm:$0xff]
      %v355 = vld [vmem:[%s169 + $0x428] sm:$0xf]
      %v356 = vld [vmem:[%s169 + $0x42c] sm:$0xff]
      %v357 = vld [vmem:[%s169 + $0x434] sm:$0xf]
      %v358 = vld [vmem:[%s169 + $0x438] sm:$0xff]
      %v359 = vld [vmem:[%s169 + $0x440] sm:$0xf]
      %v360 = vld [vmem:[%s169 + $0x444] sm:$0xff]
      %v361 = vld [vmem:[%s169 + $0x44c] sm:$0xf]
      %v362 = vld [vmem:[%s169 + $0x450] sm:$0xff]
      %v363 = vld [vmem:[%s169 + $0x458] sm:$0xf]
      %v364 = vld [vmem:[%s169 + $0x45c] sm:$0xff]
      %v365 = vld [vmem:[%s169 + $0x464] sm:$0xf]
      %v366 = vld [vmem:[%s169 + $0x468] sm:$0xff]
      %v367 = vld [vmem:[%s169 + $0x470] sm:$0xf]
      %v368 = vld [vmem:[%s169 + $0x474] sm:$0xff]
      %v369 = vld [vmem:[%s169 + $0x47c] sm:$0xf]
      %v370 = vld [vmem:[%s169 + $0x480] sm:$0xff]
      %v371 = vld [vmem:[%s169 + $0x488] sm:$0xf]
      %v372 = vld [vmem:[%s169 + $0x48c] sm:$0xff]
      %v373 = vld [vmem:[%s169 + $0x494] sm:$0xf]
      %v374 = vld [vmem:[%s169 + $0x498] sm:$0xff]
      %v375 = vld [vmem:[%s169 + $0x4a0] sm:$0xf]
      %v376 = vld [vmem:[%s169 + $0x4a4] sm:$0xff]
      %v377 = vld [vmem:[%s169 + $0x4ac] sm:$0xf]
      %v378 = vld [vmem:[%s169 + $0x4b0] sm:$0xff]
      %v379 = vld [vmem:[%s169 + $0x4b8] sm:$0xf]
      %v380 = vld [vmem:[%s169 + $0x4bc] sm:$0xff]
      %v381 = vld [vmem:[%s169 + $0x4c4] sm:$0xf]
      %v382 = vld [vmem:[%s169 + $0x4c8] sm:$0xff]
      %v383 = vld [vmem:[%s169 + $0x4d0] sm:$0xf]
      %v384 = vld [vmem:[%s169 + $0x4d4] sm:$0xff]
      %v385 = vld [vmem:[%s169 + $0x4dc] sm:$0xf]
      %v386 = vld [vmem:[%s169 + $0x4e0] sm:$0xff]
      %v387 = vld [vmem:[%s169 + $0x4e8] sm:$0xf]
      %v388 = vld [vmem:[%s169 + $0x4ec] sm:$0xff]
      %v389 = vld [vmem:[%s169 + $0x4f4] sm:$0xf]
      %v390 = vld [vmem:[%s169 + $0x4f8] sm:$0xff]
      %v391 = vld [vmem:[%s169 + $0x500] sm:$0xf]
      %v392 = vld [vmem:[%s169 + $0x504] sm:$0xff]
      %v393 = vld [vmem:[%s169 + $0x50c] sm:$0xf]
      %v394 = vld [vmem:[%s169 + $0x510] sm:$0xff]
      %v395 = vld [vmem:[%s169 + $0x518] sm:$0xf]
      %v396 = vld [vmem:[%s169 + $0x51c] sm:$0xff]
      %v397 = vld [vmem:[%s169 + $0x524] sm:$0xf]
      %v398 = vld [vmem:[%s169 + $0x528] sm:$0xff]
      %v399 = vld [vmem:[%s169 + $0x530] sm:$0xf]
      %v400 = vld [vmem:[%s169 + $0x534] sm:$0xff]
      %v401 = vld [vmem:[%s169 + $0x53c] sm:$0xf]
      %v402 = vld [vmem:[%s169 + $0x540] sm:$0xff]
      %v403 = vld [vmem:[%s169 + $0x548] sm:$0xf]
      %v404 = vld [vmem:[%s169 + $0x54c] sm:$0xff]
      %v405 = vld [vmem:[%s169 + $0x554] sm:$0xf]
      %v406 = vld [vmem:[%s169 + $0x558] sm:$0xff]
      %v407 = vld [vmem:[%s169 + $0x560] sm:$0xf]
      %v408 = vld [vmem:[%s169 + $0x564] sm:$0xff]
      %v409 = vld [vmem:[%s169 + $0x56c] sm:$0xf]
      %v410 = vld [vmem:[%s169 + $0x570] sm:$0xff]
      %v411 = vld [vmem:[%s169 + $0x578] sm:$0xf]
      %v412 = vld [vmem:[%s169 + $0x57c] sm:$0xff]
      %v413 = vld [vmem:[%s169 + $0x584] sm:$0xf]
      %v414 = vld [vmem:[%s169 + $0x588] sm:$0xff]
      %v415 = vld [vmem:[%s169 + $0x590] sm:$0xf]
      %v416 = vld [vmem:[%s169 + $0x594] sm:$0xff]
      %v417 = vld [vmem:[%s169 + $0x59c] sm:$0xf]
      %v418 = vld [vmem:[%s169 + $0x5a0] sm:$0xff]
      %v419 = vld [vmem:[%s169 + $0x5a8] sm:$0xf]
      %v420 = vld [vmem:[%s169 + $0x5ac] sm:$0xff]
      %v421 = vld [vmem:[%s169 + $0x5b4] sm:$0xf]
      %v422 = vld [vmem:[%s169 + $0x5b8] sm:$0xff]
      %v423 = vld [vmem:[%s169 + $0x5c0] sm:$0xf]
      %v424 = vld [vmem:[%s169 + $0x5c4] sm:$0xff]
      %v425 = vld [vmem:[%s169 + $0x5cc] sm:$0xf]
      %v426 = vld [vmem:[%s169 + $0x5d0] sm:$0xff]
      %v427 = vld [vmem:[%s169 + $0x5d8] sm:$0xf]
      %v428 = vld [vmem:[%s169 + $0x5dc] sm:$0xff]
      %v429 = vld [vmem:[%s169 + $0x5e4] sm:$0xf]
      %v430 = vld [vmem:[%s169 + $0x5e8] sm:$0xff]
      %v431 = vld [vmem:[%s169 + $0x5f0] sm:$0xf]
      %v432 = vld [vmem:[%s169 + $0x5f4] sm:$0xff]
      %v433 = vld [vmem:[%s169 + $0x5fc] sm:$0xf]
      %v434 = vld [vmem:[%s1] sm:$0xf]
      %v435 = vld [vmem:[%s1 + $0x4] sm:$0xf]
      %v436 = vld [vmem:[%s1 + $0x8] sm:$0xf]
      %v437 = vld [vmem:[%s1 + $0xc] sm:$0xf]
      %v438 = vld [vmem:[%s1 + $0x10] sm:$0xf]
      %v439 = vld [vmem:[%s1 + $0x14] sm:$0xf]
      %v440 = vld [vmem:[%s1 + $0x18] sm:$0xf]
      %v441 = vld [vmem:[%s1 + $0x1c] sm:$0xf]
      %v442 = vld [vmem:[%s1 + $0x20] sm:$0xf]
      %v443 = vld [vmem:[%s1 + $0x24] sm:$0xf]
      %v444 = vld [vmem:[%s1 + $0x28] sm:$0xf]
      %v445 = vld [vmem:[%s1 + $0x2c] sm:$0xf]
      %v446 = vld [vmem:[%s1 + $0x30] sm:$0xf]
      %v447 = vld [vmem:[%s1 + $0x34] sm:$0xf]
      %v448 = vld [vmem:[%s1 + $0x38] sm:$0xf]
      %v449 = vld [vmem:[%s1 + $0x3c] sm:$0xf]
      %v450 = vld [vmem:[%s1 + $0x40] sm:$0xf]
      %v451 = vld [vmem:[%s1 + $0x44] sm:$0xf]
      %v452 = vld [vmem:[%s1 + $0x48] sm:$0xf]
      %v453 = vld [vmem:[%s1 + $0x4c] sm:$0xf]
      %v454 = vld [vmem:[%s1 + $0x50] sm:$0xf]
      %v455 = vld [vmem:[%s1 + $0x54] sm:$0xf]
      %v456 = vld [vmem:[%s1 + $0x58] sm:$0xf]
      %v457 = vld [vmem:[%s1 + $0x5c] sm:$0xf]
      %v458 = vld [vmem:[%s1 + $0x60] sm:$0xf]
      %v459 = vld [vmem:[%s1 + $0x64] sm:$0xf]
      %v460 = vld [vmem:[%s1 + $0x68] sm:$0xf]
      %v461 = vld [vmem:[%s1 + $0x6c] sm:$0xf]
      %v462 = vld [vmem:[%s1 + $0x70] sm:$0xf]
      %v463 = vld [vmem:[%s1 + $0x74] sm:$0xf]
      %v464 = vld [vmem:[%s1 + $0x78] sm:$0xf]
      %v465 = vld [vmem:[%s1 + $0x7c] sm:$0xf]
      %v466 = vld [vmem:[%s1 + $0x80] sm:$0xf]
      %v467 = vld [vmem:[%s1 + $0x84] sm:$0xf]
      %v468 = vld [vmem:[%s1 + $0x88] sm:$0xf]
      %v469 = vld [vmem:[%s1 + $0x8c] sm:$0xf]
      %v470 = vld [vmem:[%s2] sm:$0x1]
      %v472 = vlaneseq
      %v473 = vshrl.u32 %v472, 7
      %v474 = vsub.s32 0, %v473
      %v475 = vrot.slane %v470, %v474
      %v733 = vunpack.c.l.b16 %v178
      %v734 = vunpack.c.h.b16 %v178
      %v735 = vunpack.c.l.b16 %v179
      %v736 = vunpack.c.l.b16 %v180
      %v737 = vunpack.c.h.b16 %v180
      %v738 = vunpack.c.l.b16 %v181
      %v739 = vunpack.c.l.b16 %v182
      %v740 = vunpack.c.h.b16 %v182
      %v741 = vunpack.c.l.b16 %v183
      %v742 = vunpack.c.l.b16 %v184
      %v743 = vunpack.c.h.b16 %v184
      %v744 = vunpack.c.l.b16 %v185
      %v745 = vunpack.c.l.b16 %v186
      %v746 = vunpack.c.h.b16 %v186
      %v747 = vunpack.c.l.b16 %v187
      %v748 = vunpack.c.l.b16 %v188
      %v749 = vunpack.c.h.b16 %v188
      %v750 = vunpack.c.l.b16 %v189
      %v751 = vunpack.c.l.b16 %v190
      %v752 = vunpack.c.h.b16 %v190
      %v753 = vunpack.c.l.b16 %v191
      %v754 = vunpack.c.l.b16 %v192
      %v755 = vunpack.c.h.b16 %v192
      %v756 = vunpack.c.l.b16 %v193
      %v757 = vunpack.c.l.b16 %v194
      %v758 = vunpack.c.h.b16 %v194
      %v759 = vunpack.c.l.b16 %v195
      %v760 = vunpack.c.l.b16 %v196
      %v761 = vunpack.c.h.b16 %v196
      %v762 = vunpack.c.l.b16 %v197
      %v763 = vunpack.c.l.b16 %v198
      %v764 = vunpack.c.h.b16 %v198
      %v765 = vunpack.c.l.b16 %v199
      %v766 = vunpack.c.l.b16 %v200
      %v767 = vunpack.c.h.b16 %v200
      %v768 = vunpack.c.l.b16 %v201
      %v769 = vunpack.c.l.b16 %v202
      %v770 = vunpack.c.h.b16 %v202
      %v771 = vunpack.c.l.b16 %v203
      %v772 = vunpack.c.l.b16 %v204
      %v773 = vunpack.c.h.b16 %v204
      %v774 = vunpack.c.l.b16 %v205
      %v775 = vunpack.c.l.b16 %v206
      %v776 = vunpack.c.h.b16 %v206
      %v777 = vunpack.c.l.b16 %v207
      %v778 = vunpack.c.l.b16 %v208
      %v779 = vunpack.c.h.b16 %v208
      %v780 = vunpack.c.l.b16 %v209
      %v781 = vunpack.c.l.b16 %v210
      %v782 = vunpack.c.h.b16 %v210
      %v783 = vunpack.c.l.b16 %v211
      %v784 = vunpack.c.l.b16 %v212
      %v785 = vunpack.c.h.b16 %v212
      %v786 = vunpack.c.l.b16 %v213
      %v787 = vunpack.c.l.b16 %v214
      %v788 = vunpack.c.h.b16 %v214
      %v789 = vunpack.c.l.b16 %v215
      %v790 = vunpack.c.l.b16 %v216
      %v791 = vunpack.c.h.b16 %v216
      %v792 = vunpack.c.l.b16 %v217
      %v793 = vunpack.c.l.b16 %v218
      %v794 = vunpack.c.h.b16 %v218
      %v795 = vunpack.c.l.b16 %v219
      %v796 = vunpack.c.l.b16 %v220
      %v797 = vunpack.c.h.b16 %v220
      %v798 = vunpack.c.l.b16 %v221
      %v799 = vunpack.c.l.b16 %v222
      %v800 = vunpack.c.h.b16 %v222
      %v801 = vunpack.c.l.b16 %v223
      %v802 = vunpack.c.l.b16 %v224
      %v803 = vunpack.c.h.b16 %v224
      %v804 = vunpack.c.l.b16 %v225
      %v805 = vunpack.c.l.b16 %v226
      %v806 = vunpack.c.h.b16 %v226
      %v807 = vunpack.c.l.b16 %v227
      %v808 = vunpack.c.l.b16 %v228
      %v809 = vunpack.c.h.b16 %v228
      %v810 = vunpack.c.l.b16 %v229
      %v811 = vunpack.c.l.b16 %v230
      %v812 = vunpack.c.h.b16 %v230
      %v813 = vunpack.c.l.b16 %v231
      %v814 = vunpack.c.l.b16 %v232
      %v815 = vunpack.c.h.b16 %v232
      %v816 = vunpack.c.l.b16 %v233
      %v817 = vunpack.c.l.b16 %v234
      %v818 = vunpack.c.h.b16 %v234
      %v819 = vunpack.c.l.b16 %v235
      %v820 = vunpack.c.l.b16 %v236
      %v821 = vunpack.c.h.b16 %v236
      %v822 = vunpack.c.l.b16 %v237
      %v823 = vunpack.c.l.b16 %v238
      %v824 = vunpack.c.h.b16 %v238
      %v825 = vunpack.c.l.b16 %v239
      %v826 = vunpack.c.l.b16 %v240
      %v827 = vunpack.c.h.b16 %v240
      %v828 = vunpack.c.l.b16 %v241
      %v829 = vunpack.c.l.b16 %v242
      %v830 = vunpack.c.h.b16 %v242
      %v831 = vunpack.c.l.b16 %v243
      %v832 = vunpack.c.l.b16 %v244
      %v833 = vunpack.c.h.b16 %v244
      %v834 = vunpack.c.l.b16 %v245
      %v835 = vunpack.c.l.b16 %v246
      %v836 = vunpack.c.h.b16 %v246
      %v837 = vunpack.c.l.b16 %v247
      %v838 = vunpack.c.l.b16 %v248
      %v839 = vunpack.c.h.b16 %v248
      %v840 = vunpack.c.l.b16 %v249
      %v841 = vunpack.c.l.b16 %v250
      %v842 = vunpack.c.h.b16 %v250
      %v843 = vunpack.c.l.b16 %v251
      %v844 = vunpack.c.l.b16 %v252
      %v845 = vunpack.c.h.b16 %v252
      %v846 = vunpack.c.l.b16 %v253
      %v847 = vunpack.c.l.b16 %v254
      %v848 = vunpack.c.h.b16 %v254
      %v849 = vunpack.c.l.b16 %v255
      %v850 = vunpack.c.l.b16 %v256
      %v851 = vunpack.c.h.b16 %v256
      %v852 = vunpack.c.l.b16 %v257
      %v853 = vunpack.c.l.b16 %v258
      %v854 = vunpack.c.h.b16 %v258
      %v855 = vunpack.c.l.b16 %v259
      %v856 = vunpack.c.l.b16 %v260
      %v857 = vunpack.c.h.b16 %v260
      %v858 = vunpack.c.l.b16 %v261
      %v859 = vunpack.c.l.b16 %v262
      %v860 = vunpack.c.h.b16 %v262
      %v861 = vunpack.c.l.b16 %v263
      %v862 = vunpack.c.l.b16 %v264
      %v863 = vunpack.c.h.b16 %v264
      %v864 = vunpack.c.l.b16 %v265
      %v865 = vunpack.c.l.b16 %v266
      %v866 = vunpack.c.h.b16 %v266
      %v867 = vunpack.c.l.b16 %v267
      %v868 = vunpack.c.l.b16 %v268
      %v869 = vunpack.c.h.b16 %v268
      %v870 = vunpack.c.l.b16 %v269
      %v871 = vunpack.c.l.b16 %v270
      %v872 = vunpack.c.h.b16 %v270
      %v873 = vunpack.c.l.b16 %v271
      %v874 = vunpack.c.l.b16 %v272
      %v875 = vunpack.c.h.b16 %v272
      %v876 = vunpack.c.l.b16 %v273
      %v877 = vunpack.c.l.b16 %v274
      %v878 = vunpack.c.h.b16 %v274
      %v879 = vunpack.c.l.b16 %v275
      %v880 = vunpack.c.l.b16 %v276
      %v881 = vunpack.c.h.b16 %v276
      %v882 = vunpack.c.l.b16 %v277
      %v883 = vunpack.c.l.b16 %v278
      %v884 = vunpack.c.h.b16 %v278
      %v885 = vunpack.c.l.b16 %v279
      %v886 = vunpack.c.l.b16 %v280
      %v887 = vunpack.c.h.b16 %v280
      %v888 = vunpack.c.l.b16 %v281
      %v889 = vunpack.c.l.b16 %v282
      %v890 = vunpack.c.h.b16 %v282
      %v891 = vunpack.c.l.b16 %v283
      %v892 = vunpack.c.l.b16 %v284
      %v893 = vunpack.c.h.b16 %v284
      %v894 = vunpack.c.l.b16 %v285
      %v895 = vunpack.c.l.b16 %v286
      %v896 = vunpack.c.h.b16 %v286
      %v897 = vunpack.c.l.b16 %v287
      %v898 = vunpack.c.l.b16 %v288
      %v899 = vunpack.c.h.b16 %v288
      %v900 = vunpack.c.l.b16 %v289
      %v901 = vunpack.c.l.b16 %v290
      %v902 = vunpack.c.h.b16 %v290
      %v903 = vunpack.c.l.b16 %v291
      %v904 = vunpack.c.l.b16 %v292
      %v905 = vunpack.c.h.b16 %v292
      %v906 = vunpack.c.l.b16 %v293
      %v907 = vunpack.c.l.b16 %v294
      %v908 = vunpack.c.h.b16 %v294
      %v909 = vunpack.c.l.b16 %v295
      %v910 = vunpack.c.l.b16 %v296
      %v911 = vunpack.c.h.b16 %v296
      %v912 = vunpack.c.l.b16 %v297
      %v913 = vunpack.c.l.b16 %v298
      %v914 = vunpack.c.h.b16 %v298
      %v915 = vunpack.c.l.b16 %v299
      %v916 = vunpack.c.l.b16 %v300
      %v917 = vunpack.c.h.b16 %v300
      %v918 = vunpack.c.l.b16 %v301
      %v919 = vunpack.c.l.b16 %v302
      %v920 = vunpack.c.h.b16 %v302
      %v921 = vunpack.c.l.b16 %v303
      %v922 = vunpack.c.l.b16 %v304
      %v923 = vunpack.c.h.b16 %v304
      %v924 = vunpack.c.l.b16 %v305
      %v925 = vunpack.c.l.b16 %v306
      %v926 = vunpack.c.h.b16 %v306
      %v927 = vunpack.c.l.b16 %v307
      %v928 = vunpack.c.l.b16 %v308
      %v929 = vunpack.c.h.b16 %v308
      %v930 = vunpack.c.l.b16 %v309
      %v931 = vunpack.c.l.b16 %v310
      %v932 = vunpack.c.h.b16 %v310
      %v933 = vunpack.c.l.b16 %v311
      %v934 = vunpack.c.l.b16 %v312
      %v935 = vunpack.c.h.b16 %v312
      %v936 = vunpack.c.l.b16 %v313
      %v937 = vunpack.c.l.b16 %v314
      %v938 = vunpack.c.h.b16 %v314
      %v939 = vunpack.c.l.b16 %v315
      %v940 = vunpack.c.l.b16 %v316
      %v941 = vunpack.c.h.b16 %v316
      %v942 = vunpack.c.l.b16 %v317
      %v943 = vunpack.c.l.b16 %v318
      %v944 = vunpack.c.h.b16 %v318
      %v945 = vunpack.c.l.b16 %v319
      %v946 = vunpack.c.l.b16 %v320
      %v947 = vunpack.c.h.b16 %v320
      %v948 = vunpack.c.l.b16 %v321
      %v949 = vunpack.c.l.b16 %v322
      %v950 = vunpack.c.h.b16 %v322
      %v951 = vunpack.c.l.b16 %v323
      %v952 = vunpack.c.l.b16 %v324
      %v953 = vunpack.c.h.b16 %v324
      %v954 = vunpack.c.l.b16 %v325
      %v955 = vunpack.c.l.b16 %v326
      %v956 = vunpack.c.h.b16 %v326
      %v957 = vunpack.c.l.b16 %v327
      %v958 = vunpack.c.l.b16 %v328
      %v959 = vunpack.c.h.b16 %v328
      %v960 = vunpack.c.l.b16 %v329
      %v961 = vunpack.c.l.b16 %v330
      %v962 = vunpack.c.h.b16 %v330
      %v963 = vunpack.c.l.b16 %v331
      %v964 = vunpack.c.l.b16 %v332
      %v965 = vunpack.c.h.b16 %v332
      %v966 = vunpack.c.l.b16 %v333
      %v967 = vunpack.c.l.b16 %v334
      %v968 = vunpack.c.h.b16 %v334
      %v969 = vunpack.c.l.b16 %v335
      %v970 = vunpack.c.l.b16 %v336
      %v971 = vunpack.c.h.b16 %v336
      %v972 = vunpack.c.l.b16 %v337
      %v973 = vunpack.c.l.b16 %v338
      %v974 = vunpack.c.h.b16 %v338
      %v975 = vunpack.c.l.b16 %v339
      %v976 = vunpack.c.l.b16 %v340
      %v977 = vunpack.c.h.b16 %v340
      %v978 = vunpack.c.l.b16 %v341
      %v979 = vunpack.c.l.b16 %v342
      %v980 = vunpack.c.h.b16 %v342
      %v981 = vunpack.c.l.b16 %v343
      %v982 = vunpack.c.l.b16 %v344
      %v983 = vunpack.c.h.b16 %v344
      %v984 = vunpack.c.l.b16 %v345
      %v985 = vunpack.c.l.b16 %v346
      %v986 = vunpack.c.h.b16 %v346
      %v987 = vunpack.c.l.b16 %v347
      %v988 = vunpack.c.l.b16 %v348
      %v989 = vunpack.c.h.b16 %v348
      %v990 = vunpack.c.l.b16 %v349
      %v991 = vunpack.c.l.b16 %v350
      %v992 = vunpack.c.h.b16 %v350
      %v993 = vunpack.c.l.b16 %v351
      %v994 = vunpack.c.l.b16 %v352
      %v995 = vunpack.c.h.b16 %v352
      %v996 = vunpack.c.l.b16 %v353
      %v997 = vunpack.c.l.b16 %v354
      %v998 = vunpack.c.h.b16 %v354
      %v999 = vunpack.c.l.b16 %v355
      %v1000 = vunpack.c.l.b16 %v356
      %v1001 = vunpack.c.h.b16 %v356
      %v1002 = vunpack.c.l.b16 %v357
      %v1003 = vunpack.c.l.b16 %v358
      %v1004 = vunpack.c.h.b16 %v358
      %v1005 = vunpack.c.l.b16 %v359
      %v1006 = vunpack.c.l.b16 %v360
      %v1007 = vunpack.c.h.b16 %v360
      %v1008 = vunpack.c.l.b16 %v361
      %v1009 = vunpack.c.l.b16 %v362
      %v1010 = vunpack.c.h.b16 %v362
      %v1011 = vunpack.c.l.b16 %v363
      %v1012 = vunpack.c.l.b16 %v364
      %v1013 = vunpack.c.h.b16 %v364
      %v1014 = vunpack.c.l.b16 %v365
      %v1015 = vunpack.c.l.b16 %v366
      %v1016 = vunpack.c.h.b16 %v366
      %v1017 = vunpack.c.l.b16 %v367
      %v1018 = vunpack.c.l.b16 %v368
      %v1019 = vunpack.c.h.b16 %v368
      %v1020 = vunpack.c.l.b16 %v369
      %v1021 = vunpack.c.l.b16 %v370
      %v1022 = vunpack.c.h.b16 %v370
      %v1023 = vunpack.c.l.b16 %v371
      %v1024 = vunpack.c.l.b16 %v372
      %v1025 = vunpack.c.h.b16 %v372
      %v1026 = vunpack.c.l.b16 %v373
      %v1027 = vunpack.c.l.b16 %v374
      %v1028 = vunpack.c.h.b16 %v374
      %v1029 = vunpack.c.l.b16 %v375
      %v1030 = vunpack.c.l.b16 %v376
      %v1031 = vunpack.c.h.b16 %v376
      %v1032 = vunpack.c.l.b16 %v377
      %v1033 = vunpack.c.l.b16 %v378
      %v1034 = vunpack.c.h.b16 %v378
      %v1035 = vunpack.c.l.b16 %v379
      %v1036 = vunpack.c.l.b16 %v380
      %v1037 = vunpack.c.h.b16 %v380
      %v1038 = vunpack.c.l.b16 %v381
      %v1039 = vunpack.c.l.b16 %v382
      %v1040 = vunpack.c.h.b16 %v382
      %v1041 = vunpack.c.l.b16 %v383
      %v1042 = vunpack.c.l.b16 %v384
      %v1043 = vunpack.c.h.b16 %v384
      %v1044 = vunpack.c.l.b16 %v385
      %v1045 = vunpack.c.l.b16 %v386
      %v1046 = vunpack.c.h.b16 %v386
      %v1047 = vunpack.c.l.b16 %v387
      %v1048 = vunpack.c.l.b16 %v388
      %v1049 = vunpack.c.h.b16 %v388
      %v1050 = vunpack.c.l.b16 %v389
      %v1051 = vunpack.c.l.b16 %v390
      %v1052 = vunpack.c.h.b16 %v390
      %v1053 = vunpack.c.l.b16 %v391
      %v1054 = vunpack.c.l.b16 %v392
      %v1055 = vunpack.c.h.b16 %v392
      %v1056 = vunpack.c.l.b16 %v393
      %v1057 = vunpack.c.l.b16 %v394
      %v1058 = vunpack.c.h.b16 %v394
      %v1059 = vunpack.c.l.b16 %v395
      %v1060 = vunpack.c.l.b16 %v396
      %v1061 = vunpack.c.h.b16 %v396
      %v1062 = vunpack.c.l.b16 %v397
      %v1063 = vunpack.c.l.b16 %v398
      %v1064 = vunpack.c.h.b16 %v398
      %v1065 = vunpack.c.l.b16 %v399
      %v1066 = vunpack.c.l.b16 %v400
      %v1067 = vunpack.c.h.b16 %v400
      %v1068 = vunpack.c.l.b16 %v401
      %v1069 = vunpack.c.l.b16 %v402
      %v1070 = vunpack.c.h.b16 %v402
      %v1071 = vunpack.c.l.b16 %v403
      %v1072 = vunpack.c.l.b16 %v404
      %v1073 = vunpack.c.h.b16 %v404
      %v1074 = vunpack.c.l.b16 %v405
      %v1075 = vunpack.c.l.b16 %v406
      %v1076 = vunpack.c.h.b16 %v406
      %v1077 = vunpack.c.l.b16 %v407
      %v1078 = vunpack.c.l.b16 %v408
      %v1079 = vunpack.c.h.b16 %v408
      %v1080 = vunpack.c.l.b16 %v409
      %v1081 = vunpack.c.l.b16 %v410
      %v1082 = vunpack.c.h.b16 %v410
      %v1083 = vunpack.c.l.b16 %v411
      %v1084 = vunpack.c.l.b16 %v412
      %v1085 = vunpack.c.h.b16 %v412
      %v1086 = vunpack.c.l.b16 %v413
      %v1087 = vunpack.c.l.b16 %v414
      %v1088 = vunpack.c.h.b16 %v414
      %v1089 = vunpack.c.l.b16 %v415
      %v1090 = vunpack.c.l.b16 %v416
      %v1091 = vunpack.c.h.b16 %v416
      %v1092 = vunpack.c.l.b16 %v417
      %v1093 = vunpack.c.l.b16 %v418
      %v1094 = vunpack.c.h.b16 %v418
      %v1095 = vunpack.c.l.b16 %v419
      %v1096 = vunpack.c.l.b16 %v420
      %v1097 = vunpack.c.h.b16 %v420
      %v1098 = vunpack.c.l.b16 %v421
      %v1099 = vunpack.c.l.b16 %v422
      %v1100 = vunpack.c.h.b16 %v422
      %v1101 = vunpack.c.l.b16 %v423
      %v1102 = vunpack.c.l.b16 %v424
      %v1103 = vunpack.c.h.b16 %v424
      %v1104 = vunpack.c.l.b16 %v425
      %v1105 = vunpack.c.l.b16 %v426
      %v1106 = vunpack.c.h.b16 %v426
      %v1107 = vunpack.c.l.b16 %v427
      %v1108 = vunpack.c.l.b16 %v428
      %v1109 = vunpack.c.h.b16 %v428
      %v1110 = vunpack.c.l.b16 %v429
      %v1111 = vunpack.c.l.b16 %v430
      %v1112 = vunpack.c.h.b16 %v430
      %v1113 = vunpack.c.l.b16 %v431
      %v1114 = vunpack.c.l.b16 %v432
      %v1115 = vunpack.c.h.b16 %v432
      %v1116 = vunpack.c.l.b16 %v433
      %v1117 = vpack.c.b16 %v736, %v733
      %v1118 = vpack.c.b16 %v737, %v734
      %v1119 = vpack.c.b16 %v738, %v735
      %v1120 = vpack.c.b16 %v742, %v739
      %v1121 = vpack.c.b16 %v743, %v740
      %v1122 = vpack.c.b16 %v744, %v741
      %v1123 = vpack.c.b16 %v748, %v745
      %v1124 = vpack.c.b16 %v749, %v746
      %v1125 = vpack.c.b16 %v750, %v747
      %v1126 = vpack.c.b16 %v754, %v751
      %v1127 = vpack.c.b16 %v755, %v752
      %v1128 = vpack.c.b16 %v756, %v753
      %v1129 = vpack.c.b16 %v760, %v757
      %v1130 = vpack.c.b16 %v761, %v758
      %v1131 = vpack.c.b16 %v762, %v759
      %v1132 = vpack.c.b16 %v766, %v763
      %v1133 = vpack.c.b16 %v767, %v764
      %v1134 = vpack.c.b16 %v768, %v765
      %v1135 = vpack.c.b16 %v772, %v769
      %v1136 = vpack.c.b16 %v773, %v770
      %v1137 = vpack.c.b16 %v774, %v771
      %v1138 = vpack.c.b16 %v778, %v775
      %v1139 = vpack.c.b16 %v779, %v776
      %v1140 = vpack.c.b16 %v780, %v777
      %v1141 = vpack.c.b16 %v784, %v781
      %v1142 = vpack.c.b16 %v785, %v782
      %v1143 = vpack.c.b16 %v786, %v783
      %v1144 = vpack.c.b16 %v790, %v787
      %v1145 = vpack.c.b16 %v791, %v788
      %v1146 = vpack.c.b16 %v792, %v789
      %v1147 = vpack.c.b16 %v796, %v793
      %v1148 = vpack.c.b16 %v797, %v794
      %v1149 = vpack.c.b16 %v798, %v795
      %v1150 = vpack.c.b16 %v802, %v799
      %v1151 = vpack.c.b16 %v803, %v800
      %v1152 = vpack.c.b16 %v804, %v801
      %v1153 = vpack.c.b16 %v808, %v805
      %v1154 = vpack.c.b16 %v809, %v806
      %v1155 = vpack.c.b16 %v810, %v807
      %v1156 = vpack.c.b16 %v814, %v811
      %v1157 = vpack.c.b16 %v815, %v812
      %v1158 = vpack.c.b16 %v816, %v813
      %v1159 = vpack.c.b16 %v820, %v817
      %v1160 = vpack.c.b16 %v821, %v818
      %v1161 = vpack.c.b16 %v822, %v819
      %v1162 = vpack.c.b16 %v826, %v823
      %v1163 = vpack.c.b16 %v827, %v824
      %v1164 = vpack.c.b16 %v828, %v825
      %v1165 = vpack.c.b16 %v832, %v829
      %v1166 = vpack.c.b16 %v833, %v830
      %v1167 = vpack.c.b16 %v834, %v831
      %v1168 = vpack.c.b16 %v838, %v835
      %v1169 = vpack.c.b16 %v839, %v836
      %v1170 = vpack.c.b16 %v840, %v837
      %v1171 = vpack.c.b16 %v844, %v841
      %v1172 = vpack.c.b16 %v845, %v842
      %v1173 = vpack.c.b16 %v846, %v843
      %v1174 = vpack.c.b16 %v850, %v847
      %v1175 = vpack.c.b16 %v851, %v848
      %v1176 = vpack.c.b16 %v852, %v849
      %v1177 = vpack.c.b16 %v856, %v853
      %v1178 = vpack.c.b16 %v857, %v854
      %v1179 = vpack.c.b16 %v858, %v855
      %v1180 = vpack.c.b16 %v862, %v859
      %v1181 = vpack.c.b16 %v863, %v860
      %v1182 = vpack.c.b16 %v864, %v861
      %v1183 = vpack.c.b16 %v868, %v865
      %v1184 = vpack.c.b16 %v869, %v866
      %v1185 = vpack.c.b16 %v870, %v867
      %v1186 = vpack.c.b16 %v874, %v871
      %v1187 = vpack.c.b16 %v875, %v872
      %v1188 = vpack.c.b16 %v876, %v873
      %v1189 = vpack.c.b16 %v880, %v877
      %v1190 = vpack.c.b16 %v881, %v878
      %v1191 = vpack.c.b16 %v882, %v879
      %v1192 = vpack.c.b16 %v886, %v883
      %v1193 = vpack.c.b16 %v887, %v884
      %v1194 = vpack.c.b16 %v888, %v885
      %v1195 = vpack.c.b16 %v892, %v889
      %v1196 = vpack.c.b16 %v893, %v890
      %v1197 = vpack.c.b16 %v894, %v891
      %v1198 = vpack.c.b16 %v898, %v895
      %v1199 = vpack.c.b16 %v899, %v896
      %v1200 = vpack.c.b16 %v900, %v897
      %v1201 = vpack.c.b16 %v904, %v901
      %v1202 = vpack.c.b16 %v905, %v902
      %v1203 = vpack.c.b16 %v906, %v903
      %v1204 = vpack.c.b16 %v910, %v907
      %v1205 = vpack.c.b16 %v911, %v908
      %v1206 = vpack.c.b16 %v912, %v909
      %v1207 = vpack.c.b16 %v916, %v913
      %v1208 = vpack.c.b16 %v917, %v914
      %v1209 = vpack.c.b16 %v918, %v915
      %v1210 = vpack.c.b16 %v922, %v919
      %v1211 = vpack.c.b16 %v923, %v920
      %v1212 = vpack.c.b16 %v924, %v921
      %v1213 = vpack.c.b16 %v928, %v925
      %v1214 = vpack.c.b16 %v929, %v926
      %v1215 = vpack.c.b16 %v930, %v927
      %v1216 = vpack.c.b16 %v934, %v931
      %v1217 = vpack.c.b16 %v935, %v932
      %v1218 = vpack.c.b16 %v936, %v933
      %v1219 = vpack.c.b16 %v940, %v937
      %v1220 = vpack.c.b16 %v941, %v938
      %v1221 = vpack.c.b16 %v942, %v939
      %v1222 = vpack.c.b16 %v946, %v943
      %v1223 = vpack.c.b16 %v947, %v944
      %v1224 = vpack.c.b16 %v948, %v945
      %v1225 = vpack.c.b16 %v952, %v949
      %v1226 = vpack.c.b16 %v953, %v950
      %v1227 = vpack.c.b16 %v954, %v951
      %v1228 = vpack.c.b16 %v958, %v955
      %v1229 = vpack.c.b16 %v959, %v956
      %v1230 = vpack.c.b16 %v960, %v957
      %v1231 = vpack.c.b16 %v964, %v961
      %v1232 = vpack.c.b16 %v965, %v962
      %v1233 = vpack.c.b16 %v966, %v963
      %v1234 = vpack.c.b16 %v970, %v967
      %v1235 = vpack.c.b16 %v971, %v968
      %v1236 = vpack.c.b16 %v972, %v969
      %v1237 = vpack.c.b16 %v976, %v973
      %v1238 = vpack.c.b16 %v977, %v974
      %v1239 = vpack.c.b16 %v978, %v975
      %v1240 = vpack.c.b16 %v982, %v979
      %v1241 = vpack.c.b16 %v983, %v980
      %v1242 = vpack.c.b16 %v984, %v981
      %v1243 = vpack.c.b16 %v988, %v985
      %v1244 = vpack.c.b16 %v989, %v986
      %v1245 = vpack.c.b16 %v990, %v987
      %v1246 = vpack.c.b16 %v994, %v991
      %v1247 = vpack.c.b16 %v995, %v992
      %v1248 = vpack.c.b16 %v996, %v993
      %v1249 = vpack.c.b16 %v1000, %v997
      %v1250 = vpack.c.b16 %v1001, %v998
      %v1251 = vpack.c.b16 %v1002, %v999
      %v1252 = vpack.c.b16 %v1006, %v1003
      %v1253 = vpack.c.b16 %v1007, %v1004
      %v1254 = vpack.c.b16 %v1008, %v1005
      %v1255 = vpack.c.b16 %v1012, %v1009
      %v1256 = vpack.c.b16 %v1013, %v1010
      %v1257 = vpack.c.b16 %v1014, %v1011
      %v1258 = vpack.c.b16 %v1018, %v1015
      %v1259 = vpack.c.b16 %v1019, %v1016
      %v1260 = vpack.c.b16 %v1020, %v1017
      %v1261 = vpack.c.b16 %v1024, %v1021
      %v1262 = vpack.c.b16 %v1025, %v1022
      %v1263 = vpack.c.b16 %v1026, %v1023
      %v1264 = vpack.c.b16 %v1030, %v1027
      %v1265 = vpack.c.b16 %v1031, %v1028
      %v1266 = vpack.c.b16 %v1032, %v1029
      %v1267 = vpack.c.b16 %v1036, %v1033
      %v1268 = vpack.c.b16 %v1037, %v1034
      %v1269 = vpack.c.b16 %v1038, %v1035
      %v1270 = vpack.c.b16 %v1042, %v1039
      %v1271 = vpack.c.b16 %v1043, %v1040
      %v1272 = vpack.c.b16 %v1044, %v1041
      %v1273 = vpack.c.b16 %v1048, %v1045
      %v1274 = vpack.c.b16 %v1049, %v1046
      %v1275 = vpack.c.b16 %v1050, %v1047
      %v1276 = vpack.c.b16 %v1054, %v1051
      %v1277 = vpack.c.b16 %v1055, %v1052
      %v1278 = vpack.c.b16 %v1056, %v1053
      %v1279 = vpack.c.b16 %v1060, %v1057
      %v1280 = vpack.c.b16 %v1061, %v1058
      %v1281 = vpack.c.b16 %v1062, %v1059
      %v1282 = vpack.c.b16 %v1066, %v1063
      %v1283 = vpack.c.b16 %v1067, %v1064
      %v1284 = vpack.c.b16 %v1068, %v1065
      %v1285 = vpack.c.b16 %v1072, %v1069
      %v1286 = vpack.c.b16 %v1073, %v1070
      %v1287 = vpack.c.b16 %v1074, %v1071
      %v1288 = vpack.c.b16 %v1078, %v1075
      %v1289 = vpack.c.b16 %v1079, %v1076
      %v1290 = vpack.c.b16 %v1080, %v1077
      %v1291 = vpack.c.b16 %v1084, %v1081
      %v1292 = vpack.c.b16 %v1085, %v1082
      %v1293 = vpack.c.b16 %v1086, %v1083
      %v1294 = vpack.c.b16 %v1090, %v1087
      %v1295 = vpack.c.b16 %v1091, %v1088
      %v1296 = vpack.c.b16 %v1092, %v1089
      %v1297 = vpack.c.b16 %v1096, %v1093
      %v1298 = vpack.c.b16 %v1097, %v1094
      %v1299 = vpack.c.b16 %v1098, %v1095
      %v1300 = vpack.c.b16 %v1102, %v1099
      %v1301 = vpack.c.b16 %v1103, %v1100
      %v1302 = vpack.c.b16 %v1104, %v1101
      %v1303 = vpack.c.b16 %v1108, %v1105
      %v1304 = vpack.c.b16 %v1109, %v1106
      %v1305 = vpack.c.b16 %v1110, %v1107
      %v1306 = vpack.c.b16 %v1114, %v1111
      %v1307 = vpack.c.b16 %v1115, %v1112
      %v1308 = vpack.c.b16 %v1116, %v1113
      %v1473 = vunpack.c.l.b16 %v434
      %v1474 = vunpack.c.l.b16 %v435
      %v1475 = vunpack.c.l.b16 %v436
      %v1476 = vunpack.c.l.b16 %v437
      %v1477 = vunpack.c.l.b16 %v438
      %v1478 = vunpack.c.l.b16 %v439
      %v1479 = vunpack.c.l.b16 %v440
      %v1480 = vunpack.c.l.b16 %v441
      %v1481 = vunpack.c.l.b16 %v442
      %v1482 = vunpack.c.l.b16 %v443
      %v1483 = vunpack.c.l.b16 %v444
      %v1484 = vunpack.c.l.b16 %v445
      %v1485 = vunpack.c.l.b16 %v446
      %v1486 = vunpack.c.l.b16 %v447
      %v1487 = vunpack.c.l.b16 %v448
      %v1488 = vunpack.c.l.b16 %v449
      %v1489 = vunpack.c.l.b16 %v450
      %v1490 = vunpack.c.l.b16 %v451
      %v1491 = vunpack.c.l.b16 %v452
      %v1492 = vunpack.c.l.b16 %v453
      %v1493 = vunpack.c.l.b16 %v454
      %v1494 = vunpack.c.l.b16 %v455
      %v1495 = vunpack.c.l.b16 %v456
      %v1496 = vunpack.c.l.b16 %v457
      %v1497 = vunpack.c.l.b16 %v458
      %v1498 = vunpack.c.l.b16 %v459
      %v1499 = vunpack.c.l.b16 %v460
      %v1500 = vunpack.c.l.b16 %v461
      %v1501 = vunpack.c.l.b16 %v462
      %v1502 = vunpack.c.l.b16 %v463
      %v1503 = vunpack.c.l.b16 %v464
      %v1504 = vunpack.c.l.b16 %v465
      %v1505 = vunpack.c.l.b16 %v466
      %v1506 = vunpack.c.l.b16 %v467
      %v1507 = vunpack.c.l.b16 %v468
      %v1508 = vunpack.c.l.b16 %v469
      %v1509 = vpack.c.b16 %v1474, %v1473
      %v1510 = vpack.c.b16 %v1476, %v1475
      %v1511 = vpack.c.b16 %v1478, %v1477
      %v1512 = vpack.c.b16 %v1480, %v1479
      %v1513 = vpack.c.b16 %v1482, %v1481
      %v1514 = vpack.c.b16 %v1484, %v1483
      %v1515 = vpack.c.b16 %v1486, %v1485
      %v1516 = vpack.c.b16 %v1488, %v1487
      %v1517 = vpack.c.b16 %v1490, %v1489
      %v1518 = vpack.c.b16 %v1492, %v1491
      %v1519 = vpack.c.b16 %v1494, %v1493
      %v1520 = vpack.c.b16 %v1496, %v1495
      %v1521 = vpack.c.b16 %v1498, %v1497
      %v1522 = vpack.c.b16 %v1500, %v1499
      %v1523 = vpack.c.b16 %v1502, %v1501
      %v1524 = vpack.c.b16 %v1504, %v1503
      %v1525 = vpack.c.b16 %v1506, %v1505
      %v1526 = vpack.c.b16 %v1508, %v1507
      %vm1545 = vcmask 261120
      %v1547 = vsel %vm1545, %v1119, 0
      %v1550 = vsel %vm1545, %v1122, 0
      %v1553 = vsel %vm1545, %v1125, 0
      %v1556 = vsel %vm1545, %v1128, 0
      %v1559 = vsel %vm1545, %v1131, 0
      %v1562 = vsel %vm1545, %v1134, 0
      %v1565 = vsel %vm1545, %v1137, 0
      %v1568 = vsel %vm1545, %v1140, 0
      %v1571 = vsel %vm1545, %v1143, 0
      %v1574 = vsel %vm1545, %v1146, 0
      %v1577 = vsel %vm1545, %v1149, 0
      %v1580 = vsel %vm1545, %v1152, 0
      %v1583 = vsel %vm1545, %v1155, 0
      %v1586 = vsel %vm1545, %v1158, 0
      %v1589 = vsel %vm1545, %v1161, 0
      %v1592 = vsel %vm1545, %v1164, 0
      %v1595 = vsel %vm1545, %v1167, 0
      %v1598 = vsel %vm1545, %v1170, 0
      %v1601 = vsel %vm1545, %v1173, 0
      %v1604 = vsel %vm1545, %v1176, 0
      %v1607 = vsel %vm1545, %v1179, 0
      %v1610 = vsel %vm1545, %v1182, 0
      %v1613 = vsel %vm1545, %v1185, 0
      %v1616 = vsel %vm1545, %v1188, 0
      %v1619 = vsel %vm1545, %v1191, 0
      %v1622 = vsel %vm1545, %v1194, 0
      %v1625 = vsel %vm1545, %v1197, 0
      %v1628 = vsel %vm1545, %v1200, 0
      %v1631 = vsel %vm1545, %v1203, 0
      %v1634 = vsel %vm1545, %v1206, 0
      %v1637 = vsel %vm1545, %v1209, 0
      %v1640 = vsel %vm1545, %v1212, 0
      %v1643 = vsel %vm1545, %v1215, 0
      %v1646 = vsel %vm1545, %v1218, 0
      %v1649 = vsel %vm1545, %v1221, 0
      %v1652 = vsel %vm1545, %v1224, 0
      %v1655 = vsel %vm1545, %v1227, 0
      %v1658 = vsel %vm1545, %v1230, 0
      %v1661 = vsel %vm1545, %v1233, 0
      %v1664 = vsel %vm1545, %v1236, 0
      %v1667 = vsel %vm1545, %v1239, 0
      %v1670 = vsel %vm1545, %v1242, 0
      %v1673 = vsel %vm1545, %v1245, 0
      %v1676 = vsel %vm1545, %v1248, 0
      %v1679 = vsel %vm1545, %v1251, 0
      %v1682 = vsel %vm1545, %v1254, 0
      %v1685 = vsel %vm1545, %v1257, 0
      %v1688 = vsel %vm1545, %v1260, 0
      %v1691 = vsel %vm1545, %v1263, 0
      %v1694 = vsel %vm1545, %v1266, 0
      %v1697 = vsel %vm1545, %v1269, 0
      %v1700 = vsel %vm1545, %v1272, 0
      %v1703 = vsel %vm1545, %v1275, 0
      %v1706 = vsel %vm1545, %v1278, 0
      %v1709 = vsel %vm1545, %v1281, 0
      %v1712 = vsel %vm1545, %v1284, 0
      %v1715 = vsel %vm1545, %v1287, 0
      %v1718 = vsel %vm1545, %v1290, 0
      %v1721 = vsel %vm1545, %v1293, 0
      %v1724 = vsel %vm1545, %v1296, 0
      %v1727 = vsel %vm1545, %v1299, 0
      %v1730 = vsel %vm1545, %v1302, 0
      %v1733 = vsel %vm1545, %v1305, 0
      %v1736 = vsel %vm1545, %v1308, 0
      %1738 = vmatprep.subr.bf16.mxu0 0
      %1739 = vmatpush1.bf16.msra.mxu0 %v1509
      %1740 = vmatprep.subr.bf16.mxu0 0
      %1741 = vmatpush1.bf16.msra.mxu0 %v1510
      %1742 = vmatprep.subr.bf16.mxu0 0
      %1743 = vmatpush1.bf16.msra.mxu0 %v1511
      %1744 = vmatprep.subr.bf16.mxu0 0
      %1745 = vmatpush1.bf16.msra.mxu0 %v1512
      %1746 = vmatprep.subr.bf16.mxu0 0
      %1747 = vmatpush1.bf16.msra.mxu0 %v1513
      %1748 = vmatprep.subr.bf16.mxu0 0
      %1749 = vmatpush1.bf16.msra.mxu0 %v1514
      %1750 = vmatprep.subr.bf16.mxu0 0
      %1751 = vmatpush1.bf16.msra.mxu0 %v1515
      %1752 = vmatprep.subr.bf16.mxu0 0
      %1753 = vmatpush1.bf16.msra.mxu0 %v1516
      %1754 = vmatprep.subr.bf16.mxu0 0
      %1755 = vmatpush1.bf16.msra.mxu0 %v1517
      %1756 = vmatprep.subr.bf16.mxu0 0
      %1757 = vmatpush1.bf16.msra.mxu0 %v1518
      %1758 = vmatprep.subr.bf16.mxu0 0
      %1759 = vmatpush1.bf16.msra.mxu0 %v1519
      %1760 = vmatprep.subr.bf16.mxu0 0
      %1761 = vmatpush1.bf16.msra.mxu0 %v1520
      %1762 = vmatprep.subr.bf16.mxu0 0
      %1763 = vmatpush1.bf16.msra.mxu0 %v1521
      %1764 = vmatprep.subr.bf16.mxu0 0
      %1765 = vmatpush1.bf16.msra.mxu0 %v1522
      %1766 = vmatprep.subr.bf16.mxu0 0
      %1767 = vmatpush1.bf16.msra.mxu0 %v1523
      %1768 = vmatprep.subr.bf16.mxu0 0
      %1769 = vmatpush1.bf16.msra.mxu0 %v1524
      %1770 = vmatprep.mubr.bf16.mxu0 %v1118
      %1771 = vmatmul.mubr.bf16.gmra.mrb[0].mxu0 %v1117
      %v1772 = vpop.f32.mrb[0].mxu0
      %v1773 = vadd.f32 %v475, %v1772
      %v1774 = vpop.f32.mrb[0].mxu0
      %v1775 = vpop.f32.mrb[0].mxu0
      %v1776 = vadd.f32 %v475, %v1775
      %v1777 = vpop.f32.mrb[0].mxu0
      %1778 = vmatprep.mubr.bf16.mxu0 %v1121
      %1779 = vmatmul.mubr.bf16.gmra.mrb[0].mxu0 %v1120
      %v1780 = vpop.f32.mrb[0].mxu0
      %v1781 = vadd.f32 %v475, %v1780
      %v1782 = vpop.f32.mrb[0].mxu0
      %v1783 = vpop.f32.mrb[0].mxu0
      %v1784 = vadd.f32 %v475, %v1783
      %v1785 = vpop.f32.mrb[0].mxu0
      %1786 = vmatprep.mubr.bf16.mxu0 %v1124
      %1787 = vmatmul.mubr.bf16.gmra.mrb[0].mxu0 %v1123
      %v1788 = vpop.f32.mrb[0].mxu0
      %v1789 = vadd.f32 %v475, %v1788
      %v1790 = vpop.f32.mrb[0].mxu0
      %v1791 = vpop.f32.mrb[0].mxu0
      %v1792 = vadd.f32 %v475, %v1791
      %v1793 = vpop.f32.mrb[0].mxu0
      %1794 = vmatprep.mubr.bf16.mxu0 %v1127
      %1795 = vmatmul.mubr.bf16.gmra.mrb[0].mxu0 %v1126
      %v1796 = vpop.f32.mrb[0].mxu0
      %v1797 = vadd.f32 %v475, %v1796
      %v1798 = vpop.f32.mrb[0].mxu0
      %v1799 = vpop.f32.mrb[0].mxu0
      %v1800 = vadd.f32 %v475, %v1799
      %v1801 = vpop.f32.mrb[0].mxu0
      %1802 = vmatprep.mubr.bf16.mxu0 %v1130
      %1803 = vmatmul.mubr.bf16.gmra.mrb[0].mxu0 %v1129
      %v1804 = vpop.f32.mrb[0].mxu0
      %v1805 = vadd.f32 %v475, %v1804
      %v1806 = vpop.f32.mrb[0].mxu0
      %v1807 = vpop.f32.mrb[0].mxu0
      %v1808 = vadd.f32 %v475, %v1807
      %v1809 = vpop.f32.mrb[0].mxu0
      %1810 = vmatprep.mubr.bf16.mxu0 %v1133
      %1811 = vmatmul.mubr.bf16.gmra.mrb[0].mxu0 %v1132
      %v1812 = vpop.f32.mrb[0].mxu0
      %v1813 = vadd.f32 %v475, %v1812
      %v1814 = vpop.f32.mrb[0].mxu0
      %v1815 = vpop.f32.mrb[0].mxu0
      %v1816 = vadd.f32 %v475, %v1815
      %v1817 = vpop.f32.mrb[0].mxu0
      %1818 = vmatprep.mubr.bf16.mxu0 %v1136
      %1819 = vmatmul.mubr.bf16.gmra.mrb[0].mxu0 %v1135
      %v1820 = vpop.f32.mrb[0].mxu0
      %v1821 = vadd.f32 %v475, %v1820
      %v1822 = vpop.f32.mrb[0].mxu0
      %v1823 = vpop.f32.mrb[0].mxu0
      %v1824 = vadd.f32 %v475, %v1823
      %v1825 = vpop.f32.mrb[0].mxu0
      %1826 = vmatprep.mubr.bf16.mxu0 %v1139
      %1827 = vmatmul.mubr.bf16.gmra.mrb[0].mxu0 %v1138
      %v1828 = vpop.f32.mrb[0].mxu0
      %v1829 = vadd.f32 %v475, %v1828
      %v1830 = vpop.f32.mrb[0].mxu0
      %v1831 = vpop.f32.mrb[0].mxu0
      %v1832 = vadd.f32 %v475, %v1831
      %v1833 = vpop.f32.mrb[0].mxu0
      %1834 = vmatprep.mubr.bf16.mxu0 %v1142
      %1835 = vmatmul.mubr.bf16.gmra.mrb[0].mxu0 %v1141
      %v1836 = vpop.f32.mrb[0].mxu0
      %v1837 = vadd.f32 %v475, %v1836
      %v1838 = vpop.f32.mrb[0].mxu0
      %v1839 = vpop.f32.mrb[0].mxu0
      %v1840 = vadd.f32 %v475, %v1839
      %v1841 = vpop.f32.mrb[0].mxu0
      %1842 = vmatprep.mubr.bf16.mxu0 %v1145
      %1843 = vmatmul.mubr.bf16.gmra.mrb[0].mxu0 %v1144
      %v1844 = vpop.f32.mrb[0].mxu0
      %v1845 = vadd.f32 %v475, %v1844
      %v1846 = vpop.f32.mrb[0].mxu0
      %v1847 = vpop.f32.mrb[0].mxu0
      %v1848 = vadd.f32 %v475, %v1847
      %v1849 = vpop.f32.mrb[0].mxu0
      %1850 = vmatprep.mubr.bf16.mxu0 %v1148
      %1851 = vmatmul.mubr.bf16.gmra.mrb[0].mxu0 %v1147
      %v1852 = vpop.f32.mrb[0].mxu0
      %v1853 = vadd.f32 %v475, %v1852
      %v1854 = vpop.f32.mrb[0].mxu0
      %v1855 = vpop.f32.mrb[0].mxu0
      %v1856 = vadd.f32 %v475, %v1855
      %v1857 = vpop.f32.mrb[0].mxu0
      %1858 = vmatprep.mubr.bf16.mxu0 %v1151
      %1859 = vmatmul.mubr.bf16.gmra.mrb[0].mxu0 %v1150
      %v1860 = vpop.f32.mrb[0].mxu0
      %v1861 = vadd.f32 %v475, %v1860
      %v1862 = vpop.f32.mrb[0].mxu0
      %v1863 = vpop.f32.mrb[0].mxu0
      %v1864 = vadd.f32 %v475, %v1863
      %v1865 = vpop.f32.mrb[0].mxu0
      %1866 = vmatprep.mubr.bf16.mxu0 %v1154
      %1867 = vmatmul.mubr.bf16.gmra.mrb[0].mxu0 %v1153
      %v1868 = vpop.f32.mrb[0].mxu0
      %v1869 = vadd.f32 %v475, %v1868
      %v1870 = vpop.f32.mrb[0].mxu0
      %v1871 = vpop.f32.mrb[0].mxu0
      %v1872 = vadd.f32 %v475, %v1871
      %v1873 = vpop.f32.mrb[0].mxu0
      %1874 = vmatprep.mubr.bf16.mxu0 %v1157
      %1875 = vmatmul.mubr.bf16.gmra.mrb[0].mxu0 %v1156
      %v1876 = vpop.f32.mrb[0].mxu0
      %v1877 = vadd.f32 %v475, %v1876
      %v1878 = vpop.f32.mrb[0].mxu0
      %v1879 = vpop.f32.mrb[0].mxu0
      %v1880 = vadd.f32 %v475, %v1879
      %v1881 = vpop.f32.mrb[0].mxu0
      %1882 = vmatprep.mubr.bf16.mxu0 %v1160
      %1883 = vmatmul.mubr.bf16.gmra.mrb[0].mxu0 %v1159
      %v1884 = vpop.f32.mrb[0].mxu0
      %v1885 = vadd.f32 %v475, %v1884
      %v1886 = vpop.f32.mrb[0].mxu0
      %v1887 = vpop.f32.mrb[0].mxu0
      %v1888 = vadd.f32 %v475, %v1887
      %v1889 = vpop.f32.mrb[0].mxu0
      %1890 = vmatprep.mubr.bf16.mxu0 %v1163
      %1891 = vmatmul.mubr.bf16.gmra.mrb[0].mxu0 %v1162
      %v1892 = vpop.f32.mrb[0].mxu0
      %v1893 = vadd.f32 %v475, %v1892
      %v1894 = vpop.f32.mrb[0].mxu0
      %v1895 = vpop.f32.mrb[0].mxu0
      %v1896 = vadd.f32 %v475, %v1895
      %v1897 = vpop.f32.mrb[0].mxu0
      %1898 = vmatprep.mubr.bf16.mxu0 %v1166
      %1899 = vmatmul.mubr.bf16.gmra.mrb[0].mxu0 %v1165
      %v1900 = vpop.f32.mrb[0].mxu0
      %v1901 = vadd.f32 %v475, %v1900
      %v1902 = vpop.f32.mrb[0].mxu0
      %v1903 = vpop.f32.mrb[0].mxu0
      %v1904 = vadd.f32 %v475, %v1903
      %v1905 = vpop.f32.mrb[0].mxu0
      %1906 = vmatprep.mubr.bf16.mxu0 %v1169
      %1907 = vmatmul.mubr.bf16.gmra.mrb[0].mxu0 %v1168
      %v1908 = vpop.f32.mrb[0].mxu0
      %v1909 = vadd.f32 %v475, %v1908
      %v1910 = vpop.f32.mrb[0].mxu0
      %v1911 = vpop.f32.mrb[0].mxu0
      %v1912 = vadd.f32 %v475, %v1911
      %v1913 = vpop.f32.mrb[0].mxu0
      %1914 = vmatprep.mubr.bf16.mxu0 %v1172
      %1915 = vmatmul.mubr.bf16.gmra.mrb[0].mxu0 %v1171
      %v1916 = vpop.f32.mrb[0].mxu0
      %v1917 = vadd.f32 %v475, %v1916
      %v1918 = vpop.f32.mrb[0].mxu0
      %v1919 = vpop.f32.mrb[0].mxu0
      %v1920 = vadd.f32 %v475, %v1919
      %v1921 = vpop.f32.mrb[0].mxu0
      %1922 = vmatprep.mubr.bf16.mxu0 %v1175
      %1923 = vmatmul.mubr.bf16.gmra.mrb[0].mxu0 %v1174
      %v1924 = vpop.f32.mrb[0].mxu0
      %v1925 = vadd.f32 %v475, %v1924
      %v1926 = vpop.f32.mrb[0].mxu0
      %v1927 = vpop.f32.mrb[0].mxu0
      %v1928 = vadd.f32 %v475, %v1927
      %v1929 = vpop.f32.mrb[0].mxu0
      %1930 = vmatprep.mubr.bf16.mxu0 %v1178
      %1931 = vmatmul.mubr.bf16.gmra.mrb[0].mxu0 %v1177
      %v1932 = vpop.f32.mrb[0].mxu0
      %v1933 = vadd.f32 %v475, %v1932
      %v1934 = vpop.f32.mrb[0].mxu0
      %v1935 = vpop.f32.mrb[0].mxu0
      %v1936 = vadd.f32 %v475, %v1935
      %v1937 = vpop.f32.mrb[0].mxu0
      %1938 = vmatprep.mubr.bf16.mxu0 %v1181
      %1939 = vmatmul.mubr.bf16.gmra.mrb[0].mxu0 %v1180
      %v1940 = vpop.f32.mrb[0].mxu0
      %v1941 = vadd.f32 %v475, %v1940
      %v1942 = vpop.f32.mrb[0].mxu0
      %v1943 = vpop.f32.mrb[0].mxu0
      %v1944 = vadd.f32 %v475, %v1943
      %v1945 = vpop.f32.mrb[0].mxu0
      %1946 = vmatprep.mubr.bf16.mxu0 %v1184
      %1947 = vmatmul.mubr.bf16.gmra.mrb[0].mxu0 %v1183
      %v1948 = vpop.f32.mrb[0].mxu0
      %v1949 = vadd.f32 %v475, %v1948
      %v1950 = vpop.f32.mrb[0].mxu0
      %v1951 = vpop.f32.mrb[0].mxu0
      %v1952 = vadd.f32 %v475, %v1951
      %v1953 = vpop.f32.mrb[0].mxu0
      %1954 = vmatprep.mubr.bf16.mxu0 %v1187
      %1955 = vmatmul.mubr.bf16.gmra.mrb[0].mxu0 %v1186
      %v1956 = vpop.f32.mrb[0].mxu0
      %v1957 = vadd.f32 %v475, %v1956
      %v1958 = vpop.f32.mrb[0].mxu0
      %v1959 = vpop.f32.mrb[0].mxu0
      %v1960 = vadd.f32 %v475, %v1959
      %v1961 = vpop.f32.mrb[0].mxu0
      %1962 = vmatprep.mubr.bf16.mxu0 %v1190
      %1963 = vmatmul.mubr.bf16.gmra.mrb[0].mxu0 %v1189
      %v1964 = vpop.f32.mrb[0].mxu0
      %v1965 = vadd.f32 %v475, %v1964
      %v1966 = vpop.f32.mrb[0].mxu0
      %v1967 = vpop.f32.mrb[0].mxu0
      %v1968 = vadd.f32 %v475, %v1967
      %v1969 = vpop.f32.mrb[0].mxu0
      %1970 = vmatprep.mubr.bf16.mxu0 %v1193
      %1971 = vmatmul.mubr.bf16.gmra.mrb[0].mxu0 %v1192
      %v1972 = vpop.f32.mrb[0].mxu0
      %v1973 = vadd.f32 %v475, %v1972
      %v1974 = vpop.f32.mrb[0].mxu0
      %v1975 = vpop.f32.mrb[0].mxu0
      %v1976 = vadd.f32 %v475, %v1975
      %v1977 = vpop.f32.mrb[0].mxu0
      %1978 = vmatprep.mubr.bf16.mxu0 %v1196
      %1979 = vmatmul.mubr.bf16.gmra.mrb[0].mxu0 %v1195
      %v1980 = vpop.f32.mrb[0].mxu0
      %v1981 = vadd.f32 %v475, %v1980
      %v1982 = vpop.f32.mrb[0].mxu0
      %v1983 = vpop.f32.mrb[0].mxu0
      %v1984 = vadd.f32 %v475, %v1983
      %v1985 = vpop.f32.mrb[0].mxu0
      %1986 = vmatprep.mubr.bf16.mxu0 %v1199
      %1987 = vmatmul.mubr.bf16.gmra.mrb[0].mxu0 %v1198
      %v1988 = vpop.f32.mrb[0].mxu0
      %v1989 = vadd.f32 %v475, %v1988
      %v1990 = vpop.f32.mrb[0].mxu0
      %v1991 = vpop.f32.mrb[0].mxu0
      %v1992 = vadd.f32 %v475, %v1991
      %v1993 = vpop.f32.mrb[0].mxu0
      %1994 = vmatprep.mubr.bf16.mxu0 %v1202
      %1995 = vmatmul.mubr.bf16.gmra.mrb[0].mxu0 %v1201
      %v1996 = vpop.f32.mrb[0].mxu0
      %v1997 = vadd.f32 %v475, %v1996
      %v1998 = vpop.f32.mrb[0].mxu0
      %v1999 = vpop.f32.mrb[0].mxu0
      %v2000 = vadd.f32 %v475, %v1999
      %v2001 = vpop.f32.mrb[0].mxu0
      %2002 = vmatprep.mubr.bf16.mxu0 %v1205
      %2003 = vmatmul.mubr.bf16.gmra.mrb[0].mxu0 %v1204
      %v2004 = vpop.f32.mrb[0].mxu0
      %v2005 = vadd.f32 %v475, %v2004
      %v2006 = vpop.f32.mrb[0].mxu0
      %v2007 = vpop.f32.mrb[0].mxu0
      %v2008 = vadd.f32 %v475, %v2007
      %v2009 = vpop.f32.mrb[0].mxu0
      %2010 = vmatprep.mubr.bf16.mxu0 %v1208
      %2011 = vmatmul.mubr.bf16.gmra.mrb[0].mxu0 %v1207
      %v2012 = vpop.f32.mrb[0].mxu0
      %v2013 = vadd.f32 %v475, %v2012
      %v2014 = vpop.f32.mrb[0].mxu0
      %v2015 = vpop.f32.mrb[0].mxu0
      %v2016 = vadd.f32 %v475, %v2015
      %v2017 = vpop.f32.mrb[0].mxu0
      %2018 = vmatprep.mubr.bf16.mxu0 %v1211
      %2019 = vmatmul.mubr.bf16.gmra.mrb[0].mxu0 %v1210
      %v2020 = vpop.f32.mrb[0].mxu0
      %v2021 = vadd.f32 %v475, %v2020
      %v2022 = vpop.f32.mrb[0].mxu0
      %v2023 = vpop.f32.mrb[0].mxu0
      %v2024 = vadd.f32 %v475, %v2023
      %v2025 = vpop.f32.mrb[0].mxu0
      %2026 = vmatprep.mubr.bf16.mxu0 %v1214
      %2027 = vmatmul.mubr.bf16.gmra.mrb[0].mxu0 %v1213
      %v2028 = vpop.f32.mrb[0].mxu0
      %v2029 = vadd.f32 %v475, %v2028
      %v2030 = vpop.f32.mrb[0].mxu0
      %v2031 = vpop.f32.mrb[0].mxu0
      %v2032 = vadd.f32 %v475, %v2031
      %v2033 = vpop.f32.mrb[0].mxu0
      %2034 = vmatprep.mubr.bf16.mxu0 %v1217
      %2035 = vmatmul.mubr.bf16.gmra.mrb[0].mxu0 %v1216
      %v2036 = vpop.f32.mrb[0].mxu0
      %v2037 = vadd.f32 %v475, %v2036
      %v2038 = vpop.f32.mrb[0].mxu0
      %v2039 = vpop.f32.mrb[0].mxu0
      %v2040 = vadd.f32 %v475, %v2039
      %v2041 = vpop.f32.mrb[0].mxu0
      %2042 = vmatprep.mubr.bf16.mxu0 %v1220
      %2043 = vmatmul.mubr.bf16.gmra.mrb[0].mxu0 %v1219
      %v2044 = vpop.f32.mrb[0].mxu0
      %v2045 = vadd.f32 %v475, %v2044
      %v2046 = vpop.f32.mrb[0].mxu0
      %v2047 = vpop.f32.mrb[0].mxu0
      %v2048 = vadd.f32 %v475, %v2047
      %v2049 = vpop.f32.mrb[0].mxu0
      %2050 = vmatprep.mubr.bf16.mxu0 %v1223
      %2051 = vmatmul.mubr.bf16.gmra.mrb[0].mxu0 %v1222
      %v2052 = vpop.f32.mrb[0].mxu0
      %v2053 = vadd.f32 %v475, %v2052
      %v2054 = vpop.f32.mrb[0].mxu0
      %v2055 = vpop.f32.mrb[0].mxu0
      %v2056 = vadd.f32 %v475, %v2055
      %v2057 = vpop.f32.mrb[0].mxu0
      %2058 = vmatprep.mubr.bf16.mxu0 %v1226
      %2059 = vmatmul.mubr.bf16.gmra.mrb[0].mxu0 %v1225
      %v2060 = vpop.f32.mrb[0].mxu0
      %v2061 = vadd.f32 %v475, %v2060
      %v2062 = vpop.f32.mrb[0].mxu0
      %v2063 = vpop.f32.mrb[0].mxu0
      %v2064 = vadd.f32 %v475, %v2063
      %v2065 = vpop.f32.mrb[0].mxu0
      %2066 = vmatprep.mubr.bf16.mxu0 %v1229
      %2067 = vmatmul.mubr.bf16.gmra.mrb[0].mxu0 %v1228
      %v2068 = vpop.f32.mrb[0].mxu0
      %v2069 = vadd.f32 %v475, %v2068
      %v2070 = vpop.f32.mrb[0].mxu0
      %v2071 = vpop.f32.mrb[0].mxu0
      %v2072 = vadd.f32 %v475, %v2071
      %v2073 = vpop.f32.mrb[0].mxu0
      %2074 = vmatprep.mubr.bf16.mxu0 %v1232
      %2075 = vmatmul.mubr.bf16.gmra.mrb[0].mxu0 %v1231
      %v2076 = vpop.f32.mrb[0].mxu0
      %v2077 = vadd.f32 %v475, %v2076
      %v2078 = vpop.f32.mrb[0].mxu0
      %v2079 = vpop.f32.mrb[0].mxu0
      %v2080 = vadd.f32 %v475, %v2079
      %v2081 = vpop.f32.mrb[0].mxu0
      %2082 = vmatprep.mubr.bf16.mxu0 %v1235
      %2083 = vmatmul.mubr.bf16.gmra.mrb[0].mxu0 %v1234
      %v2084 = vpop.f32.mrb[0].mxu0
      %v2085 = vadd.f32 %v475, %v2084
      %v2086 = vpop.f32.mrb[0].mxu0
      %v2087 = vpop.f32.mrb[0].mxu0
      %v2088 = vadd.f32 %v475, %v2087
      %v2089 = vpop.f32.mrb[0].mxu0
      %2090 = vmatprep.mubr.bf16.mxu0 %v1238
      %2091 = vmatmul.mubr.bf16.gmra.mrb[0].mxu0 %v1237
      %v2092 = vpop.f32.mrb[0].mxu0
      %v2093 = vadd.f32 %v475, %v2092
      %v2094 = vpop.f32.mrb[0].mxu0
      %v2095 = vpop.f32.mrb[0].mxu0
      %v2096 = vadd.f32 %v475, %v2095
      %v2097 = vpop.f32.mrb[0].mxu0
      %2098 = vmatprep.mubr.bf16.mxu0 %v1241
      %2099 = vmatmul.mubr.bf16.gmra.mrb[0].mxu0 %v1240
      %v2100 = vpop.f32.mrb[0].mxu0
      %v2101 = vadd.f32 %v475, %v2100
      %v2102 = vpop.f32.mrb[0].mxu0
      %v2103 = vpop.f32.mrb[0].mxu0
      %v2104 = vadd.f32 %v475, %v2103
      %v2105 = vpop.f32.mrb[0].mxu0
      %2106 = vmatprep.mubr.bf16.mxu0 %v1244
      %2107 = vmatmul.mubr.bf16.gmra.mrb[0].mxu0 %v1243
      %v2108 = vpop.f32.mrb[0].mxu0
      %v2109 = vadd.f32 %v475, %v2108
      %v2110 = vpop.f32.mrb[0].mxu0
      %v2111 = vpop.f32.mrb[0].mxu0
      %v2112 = vadd.f32 %v475, %v2111
      %v2113 = vpop.f32.mrb[0].mxu0
      %2114 = vmatprep.mubr.bf16.mxu0 %v1247
      %2115 = vmatmul.mubr.bf16.gmra.mrb[0].mxu0 %v1246
      %v2116 = vpop.f32.mrb[0].mxu0
      %v2117 = vadd.f32 %v475, %v2116
      %v2118 = vpop.f32.mrb[0].mxu0
      %v2119 = vpop.f32.mrb[0].mxu0
      %v2120 = vadd.f32 %v475, %v2119
      %v2121 = vpop.f32.mrb[0].mxu0
      %2122 = vmatprep.mubr.bf16.mxu0 %v1250
      %2123 = vmatmul.mubr.bf16.gmra.mrb[0].mxu0 %v1249
      %v2124 = vpop.f32.mrb[0].mxu0
      %v2125 = vadd.f32 %v475, %v2124
      %v2126 = vpop.f32.mrb[0].mxu0
      %v2127 = vpop.f32.mrb[0].mxu0
      %v2128 = vadd.f32 %v475, %v2127
      %v2129 = vpop.f32.mrb[0].mxu0
      %2130 = vmatprep.mubr.bf16.mxu0 %v1253
      %2131 = vmatmul.mubr.bf16.gmra.mrb[0].mxu0 %v1252
      %v2132 = vpop.f32.mrb[0].mxu0
      %v2133 = vadd.f32 %v475, %v2132
      %v2134 = vpop.f32.mrb[0].mxu0
      %v2135 = vpop.f32.mrb[0].mxu0
      %v2136 = vadd.f32 %v475, %v2135
      %v2137 = vpop.f32.mrb[0].mxu0
      %2138 = vmatprep.mubr.bf16.mxu0 %v1256
      %2139 = vmatmul.mubr.bf16.gmra.mrb[0].mxu0 %v1255
      %v2140 = vpop.f32.mrb[0].mxu0
      %v2141 = vadd.f32 %v475, %v2140
      %v2142 = vpop.f32.mrb[0].mxu0
      %v2143 = vpop.f32.mrb[0].mxu0
      %v2144 = vadd.f32 %v475, %v2143
      %v2145 = vpop.f32.mrb[0].mxu0
      %2146 = vmatprep.mubr.bf16.mxu0 %v1259
      %2147 = vmatmul.mubr.bf16.gmra.mrb[0].mxu0 %v1258
      %v2148 = vpop.f32.mrb[0].mxu0
      %v2149 = vadd.f32 %v475, %v2148
      %v2150 = vpop.f32.mrb[0].mxu0
      %v2151 = vpop.f32.mrb[0].mxu0
      %v2152 = vadd.f32 %v475, %v2151
      %v2153 = vpop.f32.mrb[0].mxu0
      %2154 = vmatprep.mubr.bf16.mxu0 %v1262
      %2155 = vmatmul.mubr.bf16.gmra.mrb[0].mxu0 %v1261
      %v2156 = vpop.f32.mrb[0].mxu0
      %v2157 = vadd.f32 %v475, %v2156
      %v2158 = vpop.f32.mrb[0].mxu0
      %v2159 = vpop.f32.mrb[0].mxu0
      %v2160 = vadd.f32 %v475, %v2159
      %v2161 = vpop.f32.mrb[0].mxu0
      %2162 = vmatprep.mubr.bf16.mxu0 %v1265
      %2163 = vmatmul.mubr.bf16.gmra.mrb[0].mxu0 %v1264
      %v2164 = vpop.f32.mrb[0].mxu0
      %v2165 = vadd.f32 %v475, %v2164
      %v2166 = vpop.f32.mrb[0].mxu0
      %v2167 = vpop.f32.mrb[0].mxu0
      %v2168 = vadd.f32 %v475, %v2167
      %v2169 = vpop.f32.mrb[0].mxu0
      %2170 = vmatprep.mubr.bf16.mxu0 %v1268
      %2171 = vmatmul.mubr.bf16.gmra.mrb[0].mxu0 %v1267
      %v2172 = vpop.f32.mrb[0].mxu0
      %v2173 = vadd.f32 %v475, %v2172
      %v2174 = vpop.f32.mrb[0].mxu0
      %v2175 = vpop.f32.mrb[0].mxu0
      %v2176 = vadd.f32 %v475, %v2175
      %v2177 = vpop.f32.mrb[0].mxu0
      %2178 = vmatprep.mubr.bf16.mxu0 %v1271
      %2179 = vmatmul.mubr.bf16.gmra.mrb[0].mxu0 %v1270
      %v2180 = vpop.f32.mrb[0].mxu0
      %v2181 = vadd.f32 %v475, %v2180
      %v2182 = vpop.f32.mrb[0].mxu0
      %v2183 = vpop.f32.mrb[0].mxu0
      %v2184 = vadd.f32 %v475, %v2183
      %v2185 = vpop.f32.mrb[0].mxu0
      %2186 = vmatprep.mubr.bf16.mxu0 %v1274
      %2187 = vmatmul.mubr.bf16.gmra.mrb[0].mxu0 %v1273
      %v2188 = vpop.f32.mrb[0].mxu0
      %v2189 = vadd.f32 %v475, %v2188
      %v2190 = vpop.f32.mrb[0].mxu0
      %v2191 = vpop.f32.mrb[0].mxu0
      %v2192 = vadd.f32 %v475, %v2191
      %v2193 = vpop.f32.mrb[0].mxu0
      %2194 = vmatprep.mubr.bf16.mxu0 %v1277
      %2195 = vmatmul.mubr.bf16.gmra.mrb[0].mxu0 %v1276
      %v2196 = vpop.f32.mrb[0].mxu0
      %v2197 = vadd.f32 %v475, %v2196
      %v2198 = vpop.f32.mrb[0].mxu0
      %v2199 = vpop.f32.mrb[0].mxu0
      %v2200 = vadd.f32 %v475, %v2199
      %v2201 = vpop.f32.mrb[0].mxu0
      %2202 = vmatprep.mubr.bf16.mxu0 %v1280
      %2203 = vmatmul.mubr.bf16.gmra.mrb[0].mxu0 %v1279
      %v2204 = vpop.f32.mrb[0].mxu0
      %v2205 = vadd.f32 %v475, %v2204
      %v2206 = vpop.f32.mrb[0].mxu0
      %v2207 = vpop.f32.mrb[0].mxu0
      %v2208 = vadd.f32 %v475, %v2207
      %v2209 = vpop.f32.mrb[0].mxu0
      %2210 = vmatprep.mubr.bf16.mxu0 %v1283
      %2211 = vmatmul.mubr.bf16.gmra.mrb[0].mxu0 %v1282
      %v2212 = vpop.f32.mrb[0].mxu0
      %v2213 = vadd.f32 %v475, %v2212
      %v2214 = vpop.f32.mrb[0].mxu0
      %v2215 = vpop.f32.mrb[0].mxu0
      %v2216 = vadd.f32 %v475, %v2215
      %v2217 = vpop.f32.mrb[0].mxu0
      %2218 = vmatprep.mubr.bf16.mxu0 %v1286
      %2219 = vmatmul.mubr.bf16.gmra.mrb[0].mxu0 %v1285
      %v2220 = vpop.f32.mrb[0].mxu0
      %v2221 = vadd.f32 %v475, %v2220
      %v2222 = vpop.f32.mrb[0].mxu0
      %v2223 = vpop.f32.mrb[0].mxu0
      %v2224 = vadd.f32 %v475, %v2223
      %v2225 = vpop.f32.mrb[0].mxu0
      %2226 = vmatprep.mubr.bf16.mxu0 %v1289
      %2227 = vmatmul.mubr.bf16.gmra.mrb[0].mxu0 %v1288
      %v2228 = vpop.f32.mrb[0].mxu0
      %v2229 = vadd.f32 %v475, %v2228
      %v2230 = vpop.f32.mrb[0].mxu0
      %v2231 = vpop.f32.mrb[0].mxu0
      %v2232 = vadd.f32 %v475, %v2231
      %v2233 = vpop.f32.mrb[0].mxu0
      %2234 = vmatprep.mubr.bf16.mxu0 %v1292
      %2235 = vmatmul.mubr.bf16.gmra.mrb[0].mxu0 %v1291
      %v2236 = vpop.f32.mrb[0].mxu0
      %v2237 = vadd.f32 %v475, %v2236
      %v2238 = vpop.f32.mrb[0].mxu0
      %v2239 = vpop.f32.mrb[0].mxu0
      %v2240 = vadd.f32 %v475, %v2239
      %v2241 = vpop.f32.mrb[0].mxu0
      %2242 = vmatprep.mubr.bf16.mxu0 %v1295
      %2243 = vmatmul.mubr.bf16.gmra.mrb[0].mxu0 %v1294
      %v2244 = vpop.f32.mrb[0].mxu0
      %v2245 = vadd.f32 %v475, %v2244
      %v2246 = vpop.f32.mrb[0].mxu0
      %v2247 = vpop.f32.mrb[0].mxu0
      %v2248 = vadd.f32 %v475, %v2247
      %v2249 = vpop.f32.mrb[0].mxu0
      %2250 = vmatprep.mubr.bf16.mxu0 %v1298
      %2251 = vmatmul.mubr.bf16.gmra.mrb[0].mxu0 %v1297
      %v2252 = vpop.f32.mrb[0].mxu0
      %v2253 = vadd.f32 %v475, %v2252
      %v2254 = vpop.f32.mrb[0].mxu0
      %v2255 = vpop.f32.mrb[0].mxu0
      %v2256 = vadd.f32 %v475, %v2255
      %v2257 = vpop.f32.mrb[0].mxu0
      %2258 = vmatprep.mubr.bf16.mxu0 %v1301
      %2259 = vmatmul.mubr.bf16.gmra.mrb[0].mxu0 %v1300
      %v2260 = vpop.f32.mrb[0].mxu0
      %v2261 = vadd.f32 %v475, %v2260
      %v2262 = vpop.f32.mrb[0].mxu0
      %v2263 = vpop.f32.mrb[0].mxu0
      %v2264 = vadd.f32 %v475, %v2263
      %v2265 = vpop.f32.mrb[0].mxu0
      %2266 = vmatprep.mubr.bf16.mxu0 %v1304
      %2267 = vmatmul.mubr.bf16.gmra.mrb[0].mxu0 %v1303
      %v2268 = vpop.f32.mrb[0].mxu0
      %v2269 = vadd.f32 %v475, %v2268
      %v2270 = vpop.f32.mrb[0].mxu0
      %v2271 = vpop.f32.mrb[0].mxu0
      %v2272 = vadd.f32 %v475, %v2271
      %v2273 = vpop.f32.mrb[0].mxu0
      %2274 = vmatprep.mubr.bf16.mxu0 %v1307
      %2275 = vmatmul.mubr.bf16.gmra.mrb[0].mxu0 %v1306
      %v2276 = vpop.f32.mrb[0].mxu0
      %v2277 = vadd.f32 %v475, %v2276
      %v2278 = vpop.f32.mrb[0].mxu0
      %v2279 = vpop.f32.mrb[0].mxu0
      %v2280 = vadd.f32 %v475, %v2279
      %v2281 = vpop.f32.mrb[0].mxu0
      %2282 = vdwg.mxu0
      %2283 = vmatprep.subr.bf16.mxu0 0
      %2284 = vmatpush1.bf16.msra.mxu0 %v1525
      %2285 = vmatprep.subr.bf16.mxu0 0
      %2286 = vmatpush1.bf16.msra.mxu0 %v1526
      %2287 = vmatprep.subr.bf16.mxu0 0
      %2288 = vmatpush1.bf16.msra.mxu0 0
      %2289 = vmatprep.subr.bf16.mxu0 0
      %2290 = vmatpush1.bf16.msra.mxu0 0
      %2291 = vmatprep.subr.bf16.mxu0 0
      %2292 = vmatpush1.bf16.msra.mxu0 0
      %2293 = vmatprep.subr.bf16.mxu0 0
      %2294 = vmatpush1.bf16.msra.mxu0 0
      %2295 = vmatprep.subr.bf16.mxu0 0
      %2296 = vmatpush1.bf16.msra.mxu0 0
      %2297 = vmatprep.subr.bf16.mxu0 0
      %2298 = vmatpush1.bf16.msra.mxu0 0
      %2299 = vmatprep.subr.bf16.mxu0 0
      %2300 = vmatpush1.bf16.msra.mxu0 0
      %2301 = vmatprep.subr.bf16.mxu0 0
      %2302 = vmatpush1.bf16.msra.mxu0 0
      %2303 = vmatprep.subr.bf16.mxu0 0
      %2304 = vmatpush1.bf16.msra.mxu0 0
      %2305 = vmatprep.subr.bf16.mxu0 0
      %2306 = vmatpush1.bf16.msra.mxu0 0
      %2307 = vmatprep.subr.bf16.mxu0 0
      %2308 = vmatpush1.bf16.msra.mxu0 0
      %2309 = vmatprep.subr.bf16.mxu0 0
      %2310 = vmatpush1.bf16.msra.mxu0 0
      %2311 = vmatprep.subr.bf16.mxu0 0
      %2312 = vmatpush1.bf16.msra.mxu0 0
      %2313 = vmatprep.subr.bf16.mxu0 0
      %2314 = vmatpush1.bf16.msra.mxu0 0
      %2315 = vmatprep.mubr.bf16.mxu0 0
      %2316 = vmatmul.mubr.bf16.gmra.mrb[0].mxu0 %v1547
      %v2317 = vpop.f32.mrb[0].mxu0
      %v2318 = vadd.f32 %v1773, %v2317
      %v2319 = vpop.f32.mrb[0].mxu0
      %v2320 = vpop.f32.mrb[0].mxu0
      %v2321 = vadd.f32 %v1776, %v2320
      %v2322 = vpop.f32.mrb[0].mxu0
      %2323 = vmatprep.mubr.bf16.mxu0 0
      %2324 = vmatmul.mubr.bf16.gmra.mrb[0].mxu0 %v1550
      %v2325 = vpop.f32.mrb[0].mxu0
      %v2326 = vadd.f32 %v1781, %v2325
      %v2327 = vpop.f32.mrb[0].mxu0
      %v2328 = vpop.f32.mrb[0].mxu0
      %v2329 = vadd.f32 %v1784, %v2328
      %v2330 = vpop.f32.mrb[0].mxu0
      %2331 = vmatprep.mubr.bf16.mxu0 0
      %2332 = vmatmul.mubr.bf16.gmra.mrb[0].mxu0 %v1553
      %v2333 = vpop.f32.mrb[0].mxu0
      %v2334 = vadd.f32 %v1789, %v2333
      %v2335 = vpop.f32.mrb[0].mxu0
      %v2336 = vpop.f32.mrb[0].mxu0
      %v2337 = vadd.f32 %v1792, %v2336
      %v2338 = vpop.f32.mrb[0].mxu0
      %2339 = vmatprep.mubr.bf16.mxu0 0
      %2340 = vmatmul.mubr.bf16.gmra.mrb[0].mxu0 %v1556
      %v2341 = vpop.f32.mrb[0].mxu0
      %v2342 = vadd.f32 %v1797, %v2341
      %v2343 = vpop.f32.mrb[0].mxu0
      %v2344 = vpop.f32.mrb[0].mxu0
      %v2345 = vadd.f32 %v1800, %v2344
      %v2346 = vpop.f32.mrb[0].mxu0
      %2347 = vmatprep.mubr.bf16.mxu0 0
      %2348 = vmatmul.mubr.bf16.gmra.mrb[0].mxu0 %v1559
      %v2349 = vpop.f32.mrb[0].mxu0
      %v2350 = vadd.f32 %v1805, %v2349
      %v2351 = vpop.f32.mrb[0].mxu0
      %v2352 = vpop.f32.mrb[0].mxu0
      %v2353 = vadd.f32 %v1808, %v2352
      %v2354 = vpop.f32.mrb[0].mxu0
      %2355 = vmatprep.mubr.bf16.mxu0 0
      %2356 = vmatmul.mubr.bf16.gmra.mrb[0].mxu0 %v1562
      %v2357 = vpop.f32.mrb[0].mxu0
      %v2358 = vadd.f32 %v1813, %v2357
      %v2359 = vpop.f32.mrb[0].mxu0
      %v2360 = vpop.f32.mrb[0].mxu0
      %v2361 = vadd.f32 %v1816, %v2360
      %v2362 = vpop.f32.mrb[0].mxu0
      %2363 = vmatprep.mubr.bf16.mxu0 0
      %2364 = vmatmul.mubr.bf16.gmra.mrb[0].mxu0 %v1565
      %v2365 = vpop.f32.mrb[0].mxu0
      %v2366 = vadd.f32 %v1821, %v2365
      %v2367 = vpop.f32.mrb[0].mxu0
      %v2368 = vpop.f32.mrb[0].mxu0
      %v2369 = vadd.f32 %v1824, %v2368
      %v2370 = vpop.f32.mrb[0].mxu0
      %2371 = vmatprep.mubr.bf16.mxu0 0
      %2372 = vmatmul.mubr.bf16.gmra.mrb[0].mxu0 %v1568
      %v2373 = vpop.f32.mrb[0].mxu0
      %v2374 = vadd.f32 %v1829, %v2373
      %v2375 = vpop.f32.mrb[0].mxu0
      %v2376 = vpop.f32.mrb[0].mxu0
      %v2377 = vadd.f32 %v1832, %v2376
      %v2378 = vpop.f32.mrb[0].mxu0
      %2379 = vmatprep.mubr.bf16.mxu0 0
      %2380 = vmatmul.mubr.bf16.gmra.mrb[0].mxu0 %v1571
      %v2381 = vpop.f32.mrb[0].mxu0
      %v2382 = vadd.f32 %v1837, %v2381
      %v2383 = vpop.f32.mrb[0].mxu0
      %v2384 = vpop.f32.mrb[0].mxu0
      %v2385 = vadd.f32 %v1840, %v2384
      %v2386 = vpop.f32.mrb[0].mxu0
      %2387 = vmatprep.mubr.bf16.mxu0 0
      %2388 = vmatmul.mubr.bf16.gmra.mrb[0].mxu0 %v1574
      %v2389 = vpop.f32.mrb[0].mxu0
      %v2390 = vadd.f32 %v1845, %v2389
      %v2391 = vpop.f32.mrb[0].mxu0
      %v2392 = vpop.f32.mrb[0].mxu0
      %v2393 = vadd.f32 %v1848, %v2392
      %v2394 = vpop.f32.mrb[0].mxu0
      %2395 = vmatprep.mubr.bf16.mxu0 0
      %2396 = vmatmul.mubr.bf16.gmra.mrb[0].mxu0 %v1577
      %v2397 = vpop.f32.mrb[0].mxu0
      %v2398 = vadd.f32 %v1853, %v2397
      %v2399 = vpop.f32.mrb[0].mxu0
      %v2400 = vpop.f32.mrb[0].mxu0
      %v2401 = vadd.f32 %v1856, %v2400
      %v2402 = vpop.f32.mrb[0].mxu0
      %2403 = vmatprep.mubr.bf16.mxu0 0
      %2404 = vmatmul.mubr.bf16.gmra.mrb[0].mxu0 %v1580
      %v2405 = vpop.f32.mrb[0].mxu0
      %v2406 = vadd.f32 %v1861, %v2405
      %v2407 = vpop.f32.mrb[0].mxu0
      %v2408 = vpop.f32.mrb[0].mxu0
      %v2409 = vadd.f32 %v1864, %v2408
      %v2410 = vpop.f32.mrb[0].mxu0
      %2411 = vmatprep.mubr.bf16.mxu0 0
      %2412 = vmatmul.mubr.bf16.gmra.mrb[0].mxu0 %v1583
      %v2413 = vpop.f32.mrb[0].mxu0
      %v2414 = vadd.f32 %v1869, %v2413
      %v2415 = vpop.f32.mrb[0].mxu0
      %v2416 = vpop.f32.mrb[0].mxu0
      %v2417 = vadd.f32 %v1872, %v2416
      %v2418 = vpop.f32.mrb[0].mxu0
      %2419 = vmatprep.mubr.bf16.mxu0 0
      %2420 = vmatmul.mubr.bf16.gmra.mrb[0].mxu0 %v1586
      %v2421 = vpop.f32.mrb[0].mxu0
      %v2422 = vadd.f32 %v1877, %v2421
      %v2423 = vpop.f32.mrb[0].mxu0
      %v2424 = vpop.f32.mrb[0].mxu0
      %v2425 = vadd.f32 %v1880, %v2424
      %v2426 = vpop.f32.mrb[0].mxu0
      %2427 = vmatprep.mubr.bf16.mxu0 0
      %2428 = vmatmul.mubr.bf16.gmra.mrb[0].mxu0 %v1589
      %v2429 = vpop.f32.mrb[0].mxu0
      %v2430 = vadd.f32 %v1885, %v2429
      %v2431 = vpop.f32.mrb[0].mxu0
      %v2432 = vpop.f32.mrb[0].mxu0
      %v2433 = vadd.f32 %v1888, %v2432
      %v2434 = vpop.f32.mrb[0].mxu0
      %2435 = vmatprep.mubr.bf16.mxu0 0
      %2436 = vmatmul.mubr.bf16.gmra.mrb[0].mxu0 %v1592
      %v2437 = vpop.f32.mrb[0].mxu0
      %v2438 = vadd.f32 %v1893, %v2437
      %v2439 = vpop.f32.mrb[0].mxu0
      %v2440 = vpop.f32.mrb[0].mxu0
      %v2441 = vadd.f32 %v1896, %v2440
      %v2442 = vpop.f32.mrb[0].mxu0
      %2443 = vmatprep.mubr.bf16.mxu0 0
      %2444 = vmatmul.mubr.bf16.gmra.mrb[0].mxu0 %v1595
      %v2445 = vpop.f32.mrb[0].mxu0
      %v2446 = vadd.f32 %v1901, %v2445
      %v2447 = vpop.f32.mrb[0].mxu0
      %v2448 = vpop.f32.mrb[0].mxu0
      %v2449 = vadd.f32 %v1904, %v2448
      %v2450 = vpop.f32.mrb[0].mxu0
      %2451 = vmatprep.mubr.bf16.mxu0 0
      %2452 = vmatmul.mubr.bf16.gmra.mrb[0].mxu0 %v1598
      %v2453 = vpop.f32.mrb[0].mxu0
      %v2454 = vadd.f32 %v1909, %v2453
      %v2455 = vpop.f32.mrb[0].mxu0
      %v2456 = vpop.f32.mrb[0].mxu0
      %v2457 = vadd.f32 %v1912, %v2456
      %v2458 = vpop.f32.mrb[0].mxu0
      %2459 = vmatprep.mubr.bf16.mxu0 0
      %2460 = vmatmul.mubr.bf16.gmra.mrb[0].mxu0 %v1601
      %v2461 = vpop.f32.mrb[0].mxu0
      %v2462 = vadd.f32 %v1917, %v2461
      %v2463 = vpop.f32.mrb[0].mxu0
      %v2464 = vpop.f32.mrb[0].mxu0
      %v2465 = vadd.f32 %v1920, %v2464
      %v2466 = vpop.f32.mrb[0].mxu0
      %2467 = vmatprep.mubr.bf16.mxu0 0
      %2468 = vmatmul.mubr.bf16.gmra.mrb[0].mxu0 %v1604
      %v2469 = vpop.f32.mrb[0].mxu0
      %v2470 = vadd.f32 %v1925, %v2469
      %v2471 = vpop.f32.mrb[0].mxu0
      %v2472 = vpop.f32.mrb[0].mxu0
      %v2473 = vadd.f32 %v1928, %v2472
      %v2474 = vpop.f32.mrb[0].mxu0
      %2475 = vmatprep.mubr.bf16.mxu0 0
      %2476 = vmatmul.mubr.bf16.gmra.mrb[0].mxu0 %v1607
      %v2477 = vpop.f32.mrb[0].mxu0
      %v2478 = vadd.f32 %v1933, %v2477
      %v2479 = vpop.f32.mrb[0].mxu0
      %v2480 = vpop.f32.mrb[0].mxu0
      %v2481 = vadd.f32 %v1936, %v2480
      %v2482 = vpop.f32.mrb[0].mxu0
      %2483 = vmatprep.mubr.bf16.mxu0 0
      %2484 = vmatmul.mubr.bf16.gmra.mrb[0].mxu0 %v1610
      %v2485 = vpop.f32.mrb[0].mxu0
      %v2486 = vadd.f32 %v1941, %v2485
      %v2487 = vpop.f32.mrb[0].mxu0
      %v2488 = vpop.f32.mrb[0].mxu0
      %v2489 = vadd.f32 %v1944, %v2488
      %v2490 = vpop.f32.mrb[0].mxu0
      %2491 = vmatprep.mubr.bf16.mxu0 0
      %2492 = vmatmul.mubr.bf16.gmra.mrb[0].mxu0 %v1613
      %v2493 = vpop.f32.mrb[0].mxu0
      %v2494 = vadd.f32 %v1949, %v2493
      %v2495 = vpop.f32.mrb[0].mxu0
      %v2496 = vpop.f32.mrb[0].mxu0
      %v2497 = vadd.f32 %v1952, %v2496
      %v2498 = vpop.f32.mrb[0].mxu0
      %2499 = vmatprep.mubr.bf16.mxu0 0
      %2500 = vmatmul.mubr.bf16.gmra.mrb[0].mxu0 %v1616
      %v2501 = vpop.f32.mrb[0].mxu0
      %v2502 = vadd.f32 %v1957, %v2501
      %v2503 = vpop.f32.mrb[0].mxu0
      %v2504 = vpop.f32.mrb[0].mxu0
      %v2505 = vadd.f32 %v1960, %v2504
      %v2506 = vpop.f32.mrb[0].mxu0
      %2507 = vmatprep.mubr.bf16.mxu0 0
      %2508 = vmatmul.mubr.bf16.gmra.mrb[0].mxu0 %v1619
      %v2509 = vpop.f32.mrb[0].mxu0
      %v2510 = vadd.f32 %v1965, %v2509
      %v2511 = vpop.f32.mrb[0].mxu0
      %v2512 = vpop.f32.mrb[0].mxu0
      %v2513 = vadd.f32 %v1968, %v2512
      %v2514 = vpop.f32.mrb[0].mxu0
      %2515 = vmatprep.mubr.bf16.mxu0 0
      %2516 = vmatmul.mubr.bf16.gmra.mrb[0].mxu0 %v1622
      %v2517 = vpop.f32.mrb[0].mxu0
      %v2518 = vadd.f32 %v1973, %v2517
      %v2519 = vpop.f32.mrb[0].mxu0
      %v2520 = vpop.f32.mrb[0].mxu0
      %v2521 = vadd.f32 %v1976, %v2520
      %v2522 = vpop.f32.mrb[0].mxu0
      %2523 = vmatprep.mubr.bf16.mxu0 0
      %2524 = vmatmul.mubr.bf16.gmra.mrb[0].mxu0 %v1625
      %v2525 = vpop.f32.mrb[0].mxu0
      %v2526 = vadd.f32 %v1981, %v2525
      %v2527 = vpop.f32.mrb[0].mxu0
      %v2528 = vpop.f32.mrb[0].mxu0
      %v2529 = vadd.f32 %v1984, %v2528
      %v2530 = vpop.f32.mrb[0].mxu0
      %2531 = vmatprep.mubr.bf16.mxu0 0
      %2532 = vmatmul.mubr.bf16.gmra.mrb[0].mxu0 %v1628
      %v2533 = vpop.f32.mrb[0].mxu0
      %v2534 = vadd.f32 %v1989, %v2533
      %v2535 = vpop.f32.mrb[0].mxu0
      %v2536 = vpop.f32.mrb[0].mxu0
      %v2537 = vadd.f32 %v1992, %v2536
      %v2538 = vpop.f32.mrb[0].mxu0
      %2539 = vmatprep.mubr.bf16.mxu0 0
      %2540 = vmatmul.mubr.bf16.gmra.mrb[0].mxu0 %v1631
      %v2541 = vpop.f32.mrb[0].mxu0
      %v2542 = vadd.f32 %v1997, %v2541
      %v2543 = vpop.f32.mrb[0].mxu0
      %v2544 = vpop.f32.mrb[0].mxu0
      %v2545 = vadd.f32 %v2000, %v2544
      %v2546 = vpop.f32.mrb[0].mxu0
      %2547 = vmatprep.mubr.bf16.mxu0 0
      %2548 = vmatmul.mubr.bf16.gmra.mrb[0].mxu0 %v1634
      %v2549 = vpop.f32.mrb[0].mxu0
      %v2550 = vadd.f32 %v2005, %v2549
      %v2551 = vpop.f32.mrb[0].mxu0
      %v2552 = vpop.f32.mrb[0].mxu0
      %v2553 = vadd.f32 %v2008, %v2552
      %v2554 = vpop.f32.mrb[0].mxu0
      %2555 = vmatprep.mubr.bf16.mxu0 0
      %2556 = vmatmul.mubr.bf16.gmra.mrb[0].mxu0 %v1637
      %v2557 = vpop.f32.mrb[0].mxu0
      %v2558 = vadd.f32 %v2013, %v2557
      %v2559 = vpop.f32.mrb[0].mxu0
      %v2560 = vpop.f32.mrb[0].mxu0
      %v2561 = vadd.f32 %v2016, %v2560
      %v2562 = vpop.f32.mrb[0].mxu0
      %2563 = vmatprep.mubr.bf16.mxu0 0
      %2564 = vmatmul.mubr.bf16.gmra.mrb[0].mxu0 %v1640
      %v2565 = vpop.f32.mrb[0].mxu0
      %v2566 = vadd.f32 %v2021, %v2565
      %v2567 = vpop.f32.mrb[0].mxu0
      %v2568 = vpop.f32.mrb[0].mxu0
      %v2569 = vadd.f32 %v2024, %v2568
      %v2570 = vpop.f32.mrb[0].mxu0
      %2571 = vmatprep.mubr.bf16.mxu0 0
      %2572 = vmatmul.mubr.bf16.gmra.mrb[0].mxu0 %v1643
      %v2573 = vpop.f32.mrb[0].mxu0
      %v2574 = vadd.f32 %v2029, %v2573
      %v2575 = vpop.f32.mrb[0].mxu0
      %v2576 = vpop.f32.mrb[0].mxu0
      %v2577 = vadd.f32 %v2032, %v2576
      %v2578 = vpop.f32.mrb[0].mxu0
      %2579 = vmatprep.mubr.bf16.mxu0 0
      %2580 = vmatmul.mubr.bf16.gmra.mrb[0].mxu0 %v1646
      %v2581 = vpop.f32.mrb[0].mxu0
      %v2582 = vadd.f32 %v2037, %v2581
      %v2583 = vpop.f32.mrb[0].mxu0
      %v2584 = vpop.f32.mrb[0].mxu0
      %v2585 = vadd.f32 %v2040, %v2584
      %v2586 = vpop.f32.mrb[0].mxu0
      %2587 = vmatprep.mubr.bf16.mxu0 0
      %2588 = vmatmul.mubr.bf16.gmra.mrb[0].mxu0 %v1649
      %v2589 = vpop.f32.mrb[0].mxu0
      %v2590 = vadd.f32 %v2045, %v2589
      %v2591 = vpop.f32.mrb[0].mxu0
      %v2592 = vpop.f32.mrb[0].mxu0
      %v2593 = vadd.f32 %v2048, %v2592
      %v2594 = vpop.f32.mrb[0].mxu0
      %2595 = vmatprep.mubr.bf16.mxu0 0
      %2596 = vmatmul.mubr.bf16.gmra.mrb[0].mxu0 %v1652
      %v2597 = vpop.f32.mrb[0].mxu0
      %v2598 = vadd.f32 %v2053, %v2597
      %v2599 = vpop.f32.mrb[0].mxu0
      %v2600 = vpop.f32.mrb[0].mxu0
      %v2601 = vadd.f32 %v2056, %v2600
      %v2602 = vpop.f32.mrb[0].mxu0
      %2603 = vmatprep.mubr.bf16.mxu0 0
      %2604 = vmatmul.mubr.bf16.gmra.mrb[0].mxu0 %v1655
      %v2605 = vpop.f32.mrb[0].mxu0
      %v2606 = vadd.f32 %v2061, %v2605
      %v2607 = vpop.f32.mrb[0].mxu0
      %v2608 = vpop.f32.mrb[0].mxu0
      %v2609 = vadd.f32 %v2064, %v2608
      %v2610 = vpop.f32.mrb[0].mxu0
      %2611 = vmatprep.mubr.bf16.mxu0 0
      %2612 = vmatmul.mubr.bf16.gmra.mrb[0].mxu0 %v1658
      %v2613 = vpop.f32.mrb[0].mxu0
      %v2614 = vadd.f32 %v2069, %v2613
      %v2615 = vpop.f32.mrb[0].mxu0
      %v2616 = vpop.f32.mrb[0].mxu0
      %v2617 = vadd.f32 %v2072, %v2616
      %v2618 = vpop.f32.mrb[0].mxu0
      %2619 = vmatprep.mubr.bf16.mxu0 0
      %2620 = vmatmul.mubr.bf16.gmra.mrb[0].mxu0 %v1661
      %v2621 = vpop.f32.mrb[0].mxu0
      %v2622 = vadd.f32 %v2077, %v2621
      %v2623 = vpop.f32.mrb[0].mxu0
      %v2624 = vpop.f32.mrb[0].mxu0
      %v2625 = vadd.f32 %v2080, %v2624
      %v2626 = vpop.f32.mrb[0].mxu0
      %2627 = vmatprep.mubr.bf16.mxu0 0
      %2628 = vmatmul.mubr.bf16.gmra.mrb[0].mxu0 %v1664
      %v2629 = vpop.f32.mrb[0].mxu0
      %v2630 = vadd.f32 %v2085, %v2629
      %v2631 = vpop.f32.mrb[0].mxu0
      %v2632 = vpop.f32.mrb[0].mxu0
      %v2633 = vadd.f32 %v2088, %v2632
      %v2634 = vpop.f32.mrb[0].mxu0
      %2635 = vmatprep.mubr.bf16.mxu0 0
      %2636 = vmatmul.mubr.bf16.gmra.mrb[0].mxu0 %v1667
      %v2637 = vpop.f32.mrb[0].mxu0
      %v2638 = vadd.f32 %v2093, %v2637
      %v2639 = vpop.f32.mrb[0].mxu0
      %v2640 = vpop.f32.mrb[0].mxu0
      %v2641 = vadd.f32 %v2096, %v2640
      %v2642 = vpop.f32.mrb[0].mxu0
      %2643 = vmatprep.mubr.bf16.mxu0 0
      %2644 = vmatmul.mubr.bf16.gmra.mrb[0].mxu0 %v1670
      %v2645 = vpop.f32.mrb[0].mxu0
      %v2646 = vadd.f32 %v2101, %v2645
      %v2647 = vpop.f32.mrb[0].mxu0
      %v2648 = vpop.f32.mrb[0].mxu0
      %v2649 = vadd.f32 %v2104, %v2648
      %v2650 = vpop.f32.mrb[0].mxu0
      %2651 = vmatprep.mubr.bf16.mxu0 0
      %2652 = vmatmul.mubr.bf16.gmra.mrb[0].mxu0 %v1673
      %v2653 = vpop.f32.mrb[0].mxu0
      %v2654 = vadd.f32 %v2109, %v2653
      %v2655 = vpop.f32.mrb[0].mxu0
      %v2656 = vpop.f32.mrb[0].mxu0
      %v2657 = vadd.f32 %v2112, %v2656
      %v2658 = vpop.f32.mrb[0].mxu0
      %2659 = vmatprep.mubr.bf16.mxu0 0
      %2660 = vmatmul.mubr.bf16.gmra.mrb[0].mxu0 %v1676
      %v2661 = vpop.f32.mrb[0].mxu0
      %v2662 = vadd.f32 %v2117, %v2661
      %v2663 = vpop.f32.mrb[0].mxu0
      %v2664 = vpop.f32.mrb[0].mxu0
      %v2665 = vadd.f32 %v2120, %v2664
      %v2666 = vpop.f32.mrb[0].mxu0
      %2667 = vmatprep.mubr.bf16.mxu0 0
      %2668 = vmatmul.mubr.bf16.gmra.mrb[0].mxu0 %v1679
      %v2669 = vpop.f32.mrb[0].mxu0
      %v2670 = vadd.f32 %v2125, %v2669
      %v2671 = vpop.f32.mrb[0].mxu0
      %v2672 = vpop.f32.mrb[0].mxu0
      %v2673 = vadd.f32 %v2128, %v2672
      %v2674 = vpop.f32.mrb[0].mxu0
      %2675 = vmatprep.mubr.bf16.mxu0 0
      %2676 = vmatmul.mubr.bf16.gmra.mrb[0].mxu0 %v1682
      %v2677 = vpop.f32.mrb[0].mxu0
      %v2678 = vadd.f32 %v2133, %v2677
      %v2679 = vpop.f32.mrb[0].mxu0
      %v2680 = vpop.f32.mrb[0].mxu0
      %v2681 = vadd.f32 %v2136, %v2680
      %v2682 = vpop.f32.mrb[0].mxu0
      %2683 = vmatprep.mubr.bf16.mxu0 0
      %2684 = vmatmul.mubr.bf16.gmra.mrb[0].mxu0 %v1685
      %v2685 = vpop.f32.mrb[0].mxu0
      %v2686 = vadd.f32 %v2141, %v2685
      %v2687 = vpop.f32.mrb[0].mxu0
      %v2688 = vpop.f32.mrb[0].mxu0
      %v2689 = vadd.f32 %v2144, %v2688
      %v2690 = vpop.f32.mrb[0].mxu0
      %2691 = vmatprep.mubr.bf16.mxu0 0
      %2692 = vmatmul.mubr.bf16.gmra.mrb[0].mxu0 %v1688
      %v2693 = vpop.f32.mrb[0].mxu0
      %v2694 = vadd.f32 %v2149, %v2693
      %v2695 = vpop.f32.mrb[0].mxu0
      %v2696 = vpop.f32.mrb[0].mxu0
      %v2697 = vadd.f32 %v2152, %v2696
      %v2698 = vpop.f32.mrb[0].mxu0
      %2699 = vmatprep.mubr.bf16.mxu0 0
      %2700 = vmatmul.mubr.bf16.gmra.mrb[0].mxu0 %v1691
      %v2701 = vpop.f32.mrb[0].mxu0
      %v2702 = vadd.f32 %v2157, %v2701
      %v2703 = vpop.f32.mrb[0].mxu0
      %v2704 = vpop.f32.mrb[0].mxu0
      %v2705 = vadd.f32 %v2160, %v2704
      %v2706 = vpop.f32.mrb[0].mxu0
      %2707 = vmatprep.mubr.bf16.mxu0 0
      %2708 = vmatmul.mubr.bf16.gmra.mrb[0].mxu0 %v1694
      %v2709 = vpop.f32.mrb[0].mxu0
      %v2710 = vadd.f32 %v2165, %v2709
      %v2711 = vpop.f32.mrb[0].mxu0
      %v2712 = vpop.f32.mrb[0].mxu0
      %v2713 = vadd.f32 %v2168, %v2712
      %v2714 = vpop.f32.mrb[0].mxu0
      %2715 = vmatprep.mubr.bf16.mxu0 0
      %2716 = vmatmul.mubr.bf16.gmra.mrb[0].mxu0 %v1697
      %v2717 = vpop.f32.mrb[0].mxu0
      %v2718 = vadd.f32 %v2173, %v2717
      %v2719 = vpop.f32.mrb[0].mxu0
      %v2720 = vpop.f32.mrb[0].mxu0
      %v2721 = vadd.f32 %v2176, %v2720
      %v2722 = vpop.f32.mrb[0].mxu0
      %2723 = vmatprep.mubr.bf16.mxu0 0
      %2724 = vmatmul.mubr.bf16.gmra.mrb[0].mxu0 %v1700
      %v2725 = vpop.f32.mrb[0].mxu0
      %v2726 = vadd.f32 %v2181, %v2725
      %v2727 = vpop.f32.mrb[0].mxu0
      %v2728 = vpop.f32.mrb[0].mxu0
      %v2729 = vadd.f32 %v2184, %v2728
      %v2730 = vpop.f32.mrb[0].mxu0
      %2731 = vmatprep.mubr.bf16.mxu0 0
      %2732 = vmatmul.mubr.bf16.gmra.mrb[0].mxu0 %v1703
      %v2733 = vpop.f32.mrb[0].mxu0
      %v2734 = vadd.f32 %v2189, %v2733
      %v2735 = vpop.f32.mrb[0].mxu0
      %v2736 = vpop.f32.mrb[0].mxu0
      %v2737 = vadd.f32 %v2192, %v2736
      %v2738 = vpop.f32.mrb[0].mxu0
      %2739 = vmatprep.mubr.bf16.mxu0 0
      %2740 = vmatmul.mubr.bf16.gmra.mrb[0].mxu0 %v1706
      %v2741 = vpop.f32.mrb[0].mxu0
      %v2742 = vadd.f32 %v2197, %v2741
      %v2743 = vpop.f32.mrb[0].mxu0
      %v2744 = vpop.f32.mrb[0].mxu0
      %v2745 = vadd.f32 %v2200, %v2744
      %v2746 = vpop.f32.mrb[0].mxu0
      %2747 = vmatprep.mubr.bf16.mxu0 0
      %2748 = vmatmul.mubr.bf16.gmra.mrb[0].mxu0 %v1709
      %v2749 = vpop.f32.mrb[0].mxu0
      %v2750 = vadd.f32 %v2205, %v2749
      %v2751 = vpop.f32.mrb[0].mxu0
      %v2752 = vpop.f32.mrb[0].mxu0
      %v2753 = vadd.f32 %v2208, %v2752
      %v2754 = vpop.f32.mrb[0].mxu0
      %2755 = vmatprep.mubr.bf16.mxu0 0
      %2756 = vmatmul.mubr.bf16.gmra.mrb[0].mxu0 %v1712
      %v2757 = vpop.f32.mrb[0].mxu0
      %v2758 = vadd.f32 %v2213, %v2757
      %v2759 = vpop.f32.mrb[0].mxu0
      %v2760 = vpop.f32.mrb[0].mxu0
      %v2761 = vadd.f32 %v2216, %v2760
      %v2762 = vpop.f32.mrb[0].mxu0
      %2763 = vmatprep.mubr.bf16.mxu0 0
      %2764 = vmatmul.mubr.bf16.gmra.mrb[0].mxu0 %v1715
      %v2765 = vpop.f32.mrb[0].mxu0
      %v2766 = vadd.f32 %v2221, %v2765
      %v2767 = vpop.f32.mrb[0].mxu0
      %v2768 = vpop.f32.mrb[0].mxu0
      %v2769 = vadd.f32 %v2224, %v2768
      %v2770 = vpop.f32.mrb[0].mxu0
      %2771 = vmatprep.mubr.bf16.mxu0 0
      %2772 = vmatmul.mubr.bf16.gmra.mrb[0].mxu0 %v1718
      %v2773 = vpop.f32.mrb[0].mxu0
      %v2774 = vadd.f32 %v2229, %v2773
      %v2775 = vpop.f32.mrb[0].mxu0
      %v2776 = vpop.f32.mrb[0].mxu0
      %v2777 = vadd.f32 %v2232, %v2776
      %v2778 = vpop.f32.mrb[0].mxu0
      %2779 = vmatprep.mubr.bf16.mxu0 0
      %2780 = vmatmul.mubr.bf16.gmra.mrb[0].mxu0 %v1721
      %v2781 = vpop.f32.mrb[0].mxu0
      %v2782 = vadd.f32 %v2237, %v2781
      %v2783 = vpop.f32.mrb[0].mxu0
      %v2784 = vpop.f32.mrb[0].mxu0
      %v2785 = vadd.f32 %v2240, %v2784
      %v2786 = vpop.f32.mrb[0].mxu0
      %2787 = vmatprep.mubr.bf16.mxu0 0
      %2788 = vmatmul.mubr.bf16.gmra.mrb[0].mxu0 %v1724
      %v2789 = vpop.f32.mrb[0].mxu0
      %v2790 = vadd.f32 %v2245, %v2789
      %v2791 = vpop.f32.mrb[0].mxu0
      %v2792 = vpop.f32.mrb[0].mxu0
      %v2793 = vadd.f32 %v2248, %v2792
      %v2794 = vpop.f32.mrb[0].mxu0
      %2795 = vmatprep.mubr.bf16.mxu0 0
      %2796 = vmatmul.mubr.bf16.gmra.mrb[0].mxu0 %v1727
      %v2797 = vpop.f32.mrb[0].mxu0
      %v2798 = vadd.f32 %v2253, %v2797
      %v2799 = vpop.f32.mrb[0].mxu0
      %v2800 = vpop.f32.mrb[0].mxu0
      %v2801 = vadd.f32 %v2256, %v2800
      %v2802 = vpop.f32.mrb[0].mxu0
      %2803 = vmatprep.mubr.bf16.mxu0 0
      %2804 = vmatmul.mubr.bf16.gmra.mrb[0].mxu0 %v1730
      %v2805 = vpop.f32.mrb[0].mxu0
      %v2806 = vadd.f32 %v2261, %v2805
      %v2807 = vpop.f32.mrb[0].mxu0
      %v2808 = vpop.f32.mrb[0].mxu0
      %v2809 = vadd.f32 %v2264, %v2808
      %v2810 = vpop.f32.mrb[0].mxu0
      %2811 = vmatprep.mubr.bf16.mxu0 0
      %2812 = vmatmul.mubr.bf16.gmra.mrb[0].mxu0 %v1733
      %v2813 = vpop.f32.mrb[0].mxu0
      %v2814 = vadd.f32 %v2269, %v2813
      %v2815 = vpop.f32.mrb[0].mxu0
      %v2816 = vpop.f32.mrb[0].mxu0
      %v2817 = vadd.f32 %v2272, %v2816
      %v2818 = vpop.f32.mrb[0].mxu0
      %2819 = vmatprep.mubr.bf16.mxu0 0
      %2820 = vmatmul.mubr.bf16.gmra.mrb[0].mxu0 %v1736
      %v2821 = vpop.f32.mrb[0].mxu0
      %v2822 = vadd.f32 %v2277, %v2821
      %v2823 = vpop.f32.mrb[0].mxu0
      %v2824 = vpop.f32.mrb[0].mxu0
      %v2825 = vadd.f32 %v2280, %v2824
      %v2826 = vpop.f32.mrb[0].mxu0
      %2827 = vdwg.mxu0
      %vm2828 = vcmask 31744
      %2829 = vst.msk [vmem:[%s175] sm:$0xff] %vm2828, %v2318
      %2830 = vst.msk [vmem:[%s175 + $0x8] sm:$0xff] %vm2828, %v2321
      %2831 = vst.msk [vmem:[%s175 + $0x10] sm:$0xff] %vm2828, %v2326
      %2832 = vst.msk [vmem:[%s175 + $0x18] sm:$0xff] %vm2828, %v2329
      %2833 = vst.msk [vmem:[%s175 + $0x20] sm:$0xff] %vm2828, %v2334
      %2834 = vst.msk [vmem:[%s175 + $0x28] sm:$0xff] %vm2828, %v2337
      %2835 = vst.msk [vmem:[%s175 + $0x30] sm:$0xff] %vm2828, %v2342
      %2836 = vst.msk [vmem:[%s175 + $0x38] sm:$0xff] %vm2828, %v2345
      %2837 = vst.msk [vmem:[%s175 + $0x40] sm:$0xff] %vm2828, %v2350
      %2838 = vst.msk [vmem:[%s175 + $0x48] sm:$0xff] %vm2828, %v2353
      %2839 = vst.msk [vmem:[%s175 + $0x50] sm:$0xff] %vm2828, %v2358
      %2840 = vst.msk [vmem:[%s175 + $0x58] sm:$0xff] %vm2828, %v2361
      %2841 = vst.msk [vmem:[%s175 + $0x60] sm:$0xff] %vm2828, %v2366
      %2842 = vst.msk [vmem:[%s175 + $0x68] sm:$0xff] %vm2828, %v2369
      %2843 = vst.msk [vmem:[%s175 + $0x70] sm:$0xff] %vm2828, %v2374
      %2844 = vst.msk [vmem:[%s175 + $0x78] sm:$0xff] %vm2828, %v2377
      %2845 = vst.msk [vmem:[%s175 + $0x80] sm:$0xff] %vm2828, %v2382
      %2846 = vst.msk [vmem:[%s175 + $0x88] sm:$0xff] %vm2828, %v2385
      %2847 = vst.msk [vmem:[%s175 + $0x90] sm:$0xff] %vm2828, %v2390
      %2848 = vst.msk [vmem:[%s175 + $0x98] sm:$0xff] %vm2828, %v2393
      %2849 = vst.msk [vmem:[%s175 + $0xa0] sm:$0xff] %vm2828, %v2398
      %2850 = vst.msk [vmem:[%s175 + $0xa8] sm:$0xff] %vm2828, %v2401
      %2851 = vst.msk [vmem:[%s175 + $0xb0] sm:$0xff] %vm2828, %v2406
      %2852 = vst.msk [vmem:[%s175 + $0xb8] sm:$0xff] %vm2828, %v2409
      %2853 = vst.msk [vmem:[%s175 + $0xc0] sm:$0xff] %vm2828, %v2414
      %2854 = vst.msk [vmem:[%s175 + $0xc8] sm:$0xff] %vm2828, %v2417
      %2855 = vst.msk [vmem:[%s175 + $0xd0] sm:$0xff] %vm2828, %v2422
      %2856 = vst.msk [vmem:[%s175 + $0xd8] sm:$0xff] %vm2828, %v2425
      %2857 = vst.msk [vmem:[%s175 + $0xe0] sm:$0xff] %vm2828, %v2430
      %2858 = vst.msk [vmem:[%s175 + $0xe8] sm:$0xff] %vm2828, %v2433
      %2859 = vst.msk [vmem:[%s175 + $0xf0] sm:$0xff] %vm2828, %v2438
      %2860 = vst.msk [vmem:[%s175 + $0xf8] sm:$0xff] %vm2828, %v2441
      %2861 = vst.msk [vmem:[%s175 + $0x100] sm:$0xff] %vm2828, %v2446
      %2862 = vst.msk [vmem:[%s175 + $0x108] sm:$0xff] %vm2828, %v2449
      %2863 = vst.msk [vmem:[%s175 + $0x110] sm:$0xff] %vm2828, %v2454
      %2864 = vst.msk [vmem:[%s175 + $0x118] sm:$0xff] %vm2828, %v2457
      %2865 = vst.msk [vmem:[%s175 + $0x120] sm:$0xff] %vm2828, %v2462
      %2866 = vst.msk [vmem:[%s175 + $0x128] sm:$0xff] %vm2828, %v2465
      %2867 = vst.msk [vmem:[%s175 + $0x130] sm:$0xff] %vm2828, %v2470
      %2868 = vst.msk [vmem:[%s175 + $0x138] sm:$0xff] %vm2828, %v2473
      %2869 = vst.msk [vmem:[%s175 + $0x140] sm:$0xff] %vm2828, %v2478
      %2870 = vst.msk [vmem:[%s175 + $0x148] sm:$0xff] %vm2828, %v2481
      %2871 = vst.msk [vmem:[%s175 + $0x150] sm:$0xff] %vm2828, %v2486
      %2872 = vst.msk [vmem:[%s175 + $0x158] sm:$0xff] %vm2828, %v2489
      %2873 = vst.msk [vmem:[%s175 + $0x160] sm:$0xff] %vm2828, %v2494
      %2874 = vst.msk [vmem:[%s175 + $0x168] sm:$0xff] %vm2828, %v2497
      %2875 = vst.msk [vmem:[%s175 + $0x170] sm:$0xff] %vm2828, %v2502
      %2876 = vst.msk [vmem:[%s175 + $0x178] sm:$0xff] %vm2828, %v2505
      %2877 = vst.msk [vmem:[%s175 + $0x180] sm:$0xff] %vm2828, %v2510
      %2878 = vst.msk [vmem:[%s175 + $0x188] sm:$0xff] %vm2828, %v2513
      %2879 = vst.msk [vmem:[%s175 + $0x190] sm:$0xff] %vm2828, %v2518
      %2880 = vst.msk [vmem:[%s175 + $0x198] sm:$0xff] %vm2828, %v2521
      %2881 = vst.msk [vmem:[%s175 + $0x1a0] sm:$0xff] %vm2828, %v2526
      %2882 = vst.msk [vmem:[%s175 + $0x1a8] sm:$0xff] %vm2828, %v2529
      %2883 = vst.msk [vmem:[%s175 + $0x1b0] sm:$0xff] %vm2828, %v2534
      %2884 = vst.msk [vmem:[%s175 + $0x1b8] sm:$0xff] %vm2828, %v2537
      %2885 = vst.msk [vmem:[%s175 + $0x1c0] sm:$0xff] %vm2828, %v2542
      %2886 = vst.msk [vmem:[%s175 + $0x1c8] sm:$0xff] %vm2828, %v2545
      %2887 = vst.msk [vmem:[%s175 + $0x1d0] sm:$0xff] %vm2828, %v2550
      %2888 = vst.msk [vmem:[%s175 + $0x1d8] sm:$0xff] %vm2828, %v2553
      %2889 = vst.msk [vmem:[%s175 + $0x1e0] sm:$0xff] %vm2828, %v2558
      %2890 = vst.msk [vmem:[%s175 + $0x1e8] sm:$0xff] %vm2828, %v2561
      %2891 = vst.msk [vmem:[%s175 + $0x1f0] sm:$0xff] %vm2828, %v2566
      %2892 = vst.msk [vmem:[%s175 + $0x1f8] sm:$0xff] %vm2828, %v2569
      %2893 = vst.msk [vmem:[%s175 + $0x200] sm:$0xff] %vm2828, %v2574
      %2894 = vst.msk [vmem:[%s175 + $0x208] sm:$0xff] %vm2828, %v2577
      %2895 = vst.msk [vmem:[%s175 + $0x210] sm:$0xff] %vm2828, %v2582
      %2896 = vst.msk [vmem:[%s175 + $0x218] sm:$0xff] %vm2828, %v2585
      %2897 = vst.msk [vmem:[%s175 + $0x220] sm:$0xff] %vm2828, %v2590
      %2898 = vst.msk [vmem:[%s175 + $0x228] sm:$0xff] %vm2828, %v2593
      %2899 = vst.msk [vmem:[%s175 + $0x230] sm:$0xff] %vm2828, %v2598
      %2900 = vst.msk [vmem:[%s175 + $0x238] sm:$0xff] %vm2828, %v2601
      %2901 = vst.msk [vmem:[%s175 + $0x240] sm:$0xff] %vm2828, %v2606
      %2902 = vst.msk [vmem:[%s175 + $0x248] sm:$0xff] %vm2828, %v2609
      %2903 = vst.msk [vmem:[%s175 + $0x250] sm:$0xff] %vm2828, %v2614
      %2904 = vst.msk [vmem:[%s175 + $0x258] sm:$0xff] %vm2828, %v2617
      %2905 = vst.msk [vmem:[%s175 + $0x260] sm:$0xff] %vm2828, %v2622
      %2906 = vst.msk [vmem:[%s175 + $0x268] sm:$0xff] %vm2828, %v2625
      %2907 = vst.msk [vmem:[%s175 + $0x270] sm:$0xff] %vm2828, %v2630
      %2908 = vst.msk [vmem:[%s175 + $0x278] sm:$0xff] %vm2828, %v2633
      %2909 = vst.msk [vmem:[%s175 + $0x280] sm:$0xff] %vm2828, %v2638
      %2910 = vst.msk [vmem:[%s175 + $0x288] sm:$0xff] %vm2828, %v2641
      %2911 = vst.msk [vmem:[%s175 + $0x290] sm:$0xff] %vm2828, %v2646
      %2912 = vst.msk [vmem:[%s175 + $0x298] sm:$0xff] %vm2828, %v2649
      %2913 = vst.msk [vmem:[%s175 + $0x2a0] sm:$0xff] %vm2828, %v2654
      %2914 = vst.msk [vmem:[%s175 + $0x2a8] sm:$0xff] %vm2828, %v2657
      %2915 = vst.msk [vmem:[%s175 + $0x2b0] sm:$0xff] %vm2828, %v2662
      %2916 = vst.msk [vmem:[%s175 + $0x2b8] sm:$0xff] %vm2828, %v2665
      %2917 = vst.msk [vmem:[%s175 + $0x2c0] sm:$0xff] %vm2828, %v2670
      %2918 = vst.msk [vmem:[%s175 + $0x2c8] sm:$0xff] %vm2828, %v2673
      %2919 = vst.msk [vmem:[%s175 + $0x2d0] sm:$0xff] %vm2828, %v2678
      %2920 = vst.msk [vmem:[%s175 + $0x2d8] sm:$0xff] %vm2828, %v2681
      %2921 = vst.msk [vmem:[%s175 + $0x2e0] sm:$0xff] %vm2828, %v2686
      %2922 = vst.msk [vmem:[%s175 + $0x2e8] sm:$0xff] %vm2828, %v2689
      %2923 = vst.msk [vmem:[%s175 + $0x2f0] sm:$0xff] %vm2828, %v2694
      %2924 = vst.msk [vmem:[%s175 + $0x2f8] sm:$0xff] %vm2828, %v2697
      %2925 = vst.msk [vmem:[%s175 + $0x300] sm:$0xff] %vm2828, %v2702
      %2926 = vst.msk [vmem:[%s175 + $0x308] sm:$0xff] %vm2828, %v2705
      %2927 = vst.msk [vmem:[%s175 + $0x310] sm:$0xff] %vm2828, %v2710
      %2928 = vst.msk [vmem:[%s175 + $0x318] sm:$0xff] %vm2828, %v2713
      %2929 = vst.msk [vmem:[%s175 + $0x320] sm:$0xff] %vm2828, %v2718
      %2930 = vst.msk [vmem:[%s175 + $0x328] sm:$0xff] %vm2828, %v2721
      %2931 = vst.msk [vmem:[%s175 + $0x330] sm:$0xff] %vm2828, %v2726
      %2932 = vst.msk [vmem:[%s175 + $0x338] sm:$0xff] %vm2828, %v2729
      %2933 = vst.msk [vmem:[%s175 + $0x340] sm:$0xff] %vm2828, %v2734
      %2934 = vst.msk [vmem:[%s175 + $0x348] sm:$0xff] %vm2828, %v2737
      %2935 = vst.msk [vmem:[%s175 + $0x350] sm:$0xff] %vm2828, %v2742
      %2936 = vst.msk [vmem:[%s175 + $0x358] sm:$0xff] %vm2828, %v2745
      %2937 = vst.msk [vmem:[%s175 + $0x360] sm:$0xff] %vm2828, %v2750
      %2938 = vst.msk [vmem:[%s175 + $0x368] sm:$0xff] %vm2828, %v2753
      %2939 = vst.msk [vmem:[%s175 + $0x370] sm:$0xff] %vm2828, %v2758
      %2940 = vst.msk [vmem:[%s175 + $0x378] sm:$0xff] %vm2828, %v2761
      %2941 = vst.msk [vmem:[%s175 + $0x380] sm:$0xff] %vm2828, %v2766
      %2942 = vst.msk [vmem:[%s175 + $0x388] sm:$0xff] %vm2828, %v2769
      %2943 = vst.msk [vmem:[%s175 + $0x390] sm:$0xff] %vm2828, %v2774
      %2944 = vst.msk [vmem:[%s175 + $0x398] sm:$0xff] %vm2828, %v2777
      %2945 = vst.msk [vmem:[%s175 + $0x3a0] sm:$0xff] %vm2828, %v2782
      %2946 = vst.msk [vmem:[%s175 + $0x3a8] sm:$0xff] %vm2828, %v2785
      %2947 = vst.msk [vmem:[%s175 + $0x3b0] sm:$0xff] %vm2828, %v2790
      %2948 = vst.msk [vmem:[%s175 + $0x3b8] sm:$0xff] %vm2828, %v2793
      %2949 = vst.msk [vmem:[%s175 + $0x3c0] sm:$0xff] %vm2828, %v2798
      %2950 = vst.msk [vmem:[%s175 + $0x3c8] sm:$0xff] %vm2828, %v2801
      %2951 = vst.msk [vmem:[%s175 + $0x3d0] sm:$0xff] %vm2828, %v2806
      %2952 = vst.msk [vmem:[%s175 + $0x3d8] sm:$0xff] %vm2828, %v2809
      %2953 = vst.msk [vmem:[%s175 + $0x3e0] sm:$0xff] %vm2828, %v2814
      %2954 = vst.msk [vmem:[%s175 + $0x3e8] sm:$0xff] %vm2828, %v2817
      %2955 = vst.msk [vmem:[%s175 + $0x3f0] sm:$0xff] %vm2828, %v2822
      %2956 = vst.msk [vmem:[%s175 + $0x3f8] sm:$0xff] %vm2828, %v2825
      %s2957 = smul.u32 128, %s14
      %p2958 = scmp.lt.s32.totalorder %s2957, 255
      %s2959 = scalar_select %p2958, %s2957, 255
      %s2960 = smul.addr %s2959, 8
      %s2961 = scalar_lea.vmem %s3, %s2960
      // Predicated region
      $region33: #{_lambda_.17} parent=31 // pred_check
        %p2962 = pneg %p100
      $region34: #{_lambda_.17} parent=31 // pred_check_branch
        %2964 = sbr.rel (%p2962) target = $region36
      $region35: #{_lambda_.17} parent=31 // pred_region
        %s2965 = smul.u32 128, %s14
      $region36: #{_lambda_.17} parent=31 // pred_fallthru
        _
    $region32: #{_lambda_.17} parent=5 // pred_fallthru
      _
    %p2966 = scmp.le.s32.totalorder 2, %s9
    // Predicated region
    $region37: #{_lambda_.17} parent=5 // pred_check
      %p2967 = pneg %p2966
    $region38: #{_lambda_.17} parent=5 // pred_check_branch
      %2969 = sbr.rel (%p2967) target = $region40
    $region39: #{_lambda_.17} parent=5 // pred_region
      %s2970 = ssub.s32 %s9, 2
      // Predicated region
      $region41: #{_lambda_.17} parent=39 // pred_check
        %p2971 = pneg %p106
      $region42: #{_lambda_.17} parent=39 // pred_check_branch
        %2973 = sbr.rel (%p2971) target = $region44
      $region43: #{_lambda_.17} parent=39 // pred_region
        %s2974 = smul.u32 128, %s15
        %p2975 = scmp.lt.s32.totalorder %s2974, 255
        %s2976 = scalar_select %p2975, %s2974, 255
        %s2977 = smul.addr %s2976, 8
        %s2978 = scalar_lea.vmem %s3, %s2977
      $region44: #{_lambda_.17} parent=39 // pred_fallthru
        _
    $region40: #{_lambda_.17} parent=5 // pred_fallthru
      _
  $region6: #{_lambda_.17} parent=0 // loop_footer
    %s13 = sadd.s32 1, %s9
  $region7: #{_lambda_.17} parent=0 // loop_footer_branch
    %8 = sbr.rel target = $region3
  $region8: #{_lambda_.17} parent=0 // loop_exit
    _

</llo_original>
